<compile_context>
chip_gen: v6e
topology: v6e:2x2x1
jax: 0.10.0
libtpu: 0.0.40
codegen_flags: <defaults>
</compile_context>

<pallas_src>
import functools

import jax
import jax.numpy as jnp
from jax.experimental import pallas as pl
from jax.experimental.pallas import tpu as pltpu


# ----------------------------------------------------------------------------
# Kernel 1: conv-as-matmul, transposed orientation (lane-dense output).
#   o(Cout, M) = relu( w(Cout, K) @ p(K, M) + b(Cout, 1) )
# ----------------------------------------------------------------------------
def _conv_mm_kernel(w_ref, p_ref, b_ref, o_ref, *, relu):
    acc = jnp.dot(w_ref[...], p_ref[...], preferred_element_type=jnp.float32)
    acc = acc + b_ref[...]
    if relu:
        acc = jnp.maximum(acc, 0.0)
    o_ref[...] = acc.astype(o_ref.dtype)


def conv_matmul(w, p, b, *, relu=True):
    """w: (Cout, K) bf16, p: (K, M) bf16, b: (Cout, 1) f32 -> (Cout, M) bf16."""
    cout, k = w.shape
    k2, m = p.shape
    assert k == k2
    kernel = functools.partial(_conv_mm_kernel, relu=relu)
    return pl.pallas_call(
        kernel,
        out_shape=jax.ShapeDtypeStruct((cout, m), jnp.bfloat16),
        grid_spec=pltpu.PrefetchScalarGridSpec(
            num_scalar_prefetch=0,
            grid=(1,),
            in_specs=[
                pl.BlockSpec((cout, k), lambda i: (0, 0)),
                pl.BlockSpec((k, m), lambda i: (0, 0)),
                pl.BlockSpec((cout, 1), lambda i: (0, 0)),
            ],
            out_specs=pl.BlockSpec((cout, m), lambda i: (0, 0)),
        ),
        compiler_params=pltpu.CompilerParams(
            dimension_semantics=("arbitrary",)),
    )(w, p, b)


# ----------------------------------------------------------------------------
# im2col (transposed, channels-first): XLA glue on tiny activations.
# TODO(synk): full trunk fusion would move this in-kernel (strided VMEM reads);
# kept as host-side slicing glue for lowering robustness at these tiny sizes.
# ----------------------------------------------------------------------------
def _im2col_t(x, kh, kw, stride, pad):
    """x: (C, N, H, W) -> patchesT (C*kh*kw, N*Ho*Wo), channel-major K order."""
    c, n, h, w = x.shape
    xp = jnp.pad(x, ((0, 0), (0, 0), (pad, pad), (pad, pad)))
    ho = (h + 2 * pad - kh) // stride + 1
    wo = (w + 2 * pad - kw) // stride + 1
    cols = []
    for i in range(kh):
        for j in range(kw):
            cols.append(xp[:, :, i:i + stride * ho:stride, j:j + stride * wo:stride])
    patches = jnp.stack(cols, axis=1)                     # (C, kh*kw, N, Ho, Wo)
    patches = patches.reshape(c * kh * kw, n * ho * wo)   # K index = c*kh*kw + i*kw + j
    return patches, ho, wo


def conv2d_relu(x, w2d, b, *, kh, kw, stride, pad, relu=True):
    """PyTorch-semantics Conv2d in channels-first layout.
    x: (Cin, N, H, W) bf16; w2d: (Cout, Cin*kh*kw) bf16; b: (Cout, 1) f32."""
    cin, n, h, w = x.shape
    patches, ho, wo = _im2col_t(x, kh, kw, stride, pad)
    out = conv_matmul(w2d, patches, b, relu=relu)         # (Cout, N*Ho*Wo)
    return out.reshape(w2d.shape[0], n, ho, wo)


# ----------------------------------------------------------------------------
# Kernel 2: fc (4096 -> 1024) + BOTH heads fused into the K-loop epilogue.
#   k-pipelined:  acc += x_blk @ w_blk            (f32 accumulator in VMEM)
#   at k == last: h1  = relu(acc + b)             (M, 1024) bf16
#                 z   = relu(h1 @ [ip1|sg1] + b1) (M, 512)  f32
#                 out = (z @ blkdiag(p2, s2) + b2) * 10      f32, (M, 50)
#                 pt  = out[:, :x_dim], sg = out[:, x_dim:]
# ----------------------------------------------------------------------------
def _fc_heads_kernel(x_ref, w_ref, b_ref, w1_ref, b1_ref, w2_ref, b2_ref,
                     pt_ref, sg_ref, acc_ref, *, x_dim):
    k = pl.program_id(0)

    @pl.when(k == 0)
    def _():
        acc_ref[...] = jnp.zeros_like(acc_ref)

    acc_ref[...] += jnp.dot(x_ref[...], w_ref[...],
                            preferred_element_type=jnp.float32)

    @pl.when(k == pl.num_programs(0) - 1)
    def _():
        h1 = jnp.maximum(acc_ref[...] + b_ref[...], 0.0).astype(jnp.bfloat16)
        z = jnp.dot(h1, w1_ref[...], preferred_element_type=jnp.float32)
        z = jnp.maximum(z + b1_ref[...], 0.0)                       # f32 (M, 512)
        out = jnp.dot(z, w2_ref[...], preferred_element_type=jnp.float32)
        out = (out + b2_ref[...]) * 10.0                            # f32 (M, 50)
        pt_ref[...] = out[:, :x_dim]
        sg_ref[...] = out[:, x_dim:]


def fc_heads(x, w, b, w1, b1, w2, b2, *, x_dim, tk=2048):
    """x: (M, 4096) bf16, w: (4096, 1024) bf16, b: (1, 1024) f32,
       w1: (1024, 512) bf16, b1: (1, 512) f32,
       w2: (512, x_dim+y_dim) f32 block-diagonal, b2: (1, x_dim+y_dim) f32."""
    m, kd = x.shape
    kd2, n = w.shape
    assert kd == kd2 and kd % tk == 0
    y_dim = w2.shape[1] - x_dim
    kernel = functools.partial(_fc_heads_kernel, x_dim=x_dim)
    return pl.pallas_call(
        kernel,
        out_shape=(jax.ShapeDtypeStruct((m, x_dim), jnp.float32),
                   jax.ShapeDtypeStruct((m, y_dim), jnp.float32)),
        grid_spec=pltpu.PrefetchScalarGridSpec(
            num_scalar_prefetch=0,
            grid=(kd // tk,),
            in_specs=[
                pl.BlockSpec((m, tk), lambda k: (0, k)),
                pl.BlockSpec((tk, n), lambda k: (k, 0)),
                pl.BlockSpec((1, n), lambda k: (0, 0)),
                pl.BlockSpec(w1.shape, lambda k: (0, 0)),
                pl.BlockSpec(b1.shape, lambda k: (0, 0)),
                pl.BlockSpec(w2.shape, lambda k: (0, 0)),
                pl.BlockSpec(b2.shape, lambda k: (0, 0)),
            ],
            out_specs=[pl.BlockSpec((m, x_dim), lambda k: (0, 0)),
                       pl.BlockSpec((m, y_dim), lambda k: (0, 0))],
            scratch_shapes=[pltpu.VMEM((m, n), jnp.float32)],
        ),
        compiler_params=pltpu.CompilerParams(
            dimension_semantics=("arbitrary",)),
    )(x, w, b, w1, b1, w2, b2)


# ----------------------------------------------------------------------------
# Parameters (deterministic synthetic init) & forward
# ----------------------------------------------------------------------------
def init_params(key, input_channels=1, x_dim=25, y_dim=25):
    ks = list(jax.random.split(key, 18))

    def conv_w(k, cout, cin, kh, kw):
        fan_in = cin * kh * kw
        w = jax.random.normal(k, (cout, cin, kh, kw), jnp.float32) / jnp.sqrt(fan_in)
        return w.reshape(cout, cin * kh * kw).astype(jnp.bfloat16)

    def lin_w(k, fin, fout, dtype=jnp.bfloat16):
        w = jax.random.normal(k, (fin, fout), jnp.float32) / jnp.sqrt(fin)
        return w.astype(dtype)

    def bias(k, shape):
        return 0.05 * jax.random.normal(k, shape, jnp.float32)

    ip1_w = lin_w(ks[10], 1024, 256)                       # bf16
    sg1_w = lin_w(ks[11], 1024, 256)                       # bf16
    ip1_b = bias(ks[12], (1, 256))
    sg1_b = bias(ks[13], (1, 256))
    p2_w = lin_w(ks[14], 256, x_dim, dtype=jnp.float32)    # f32 (accuracy; tiny)
    s2_w = lin_w(ks[15], 256, y_dim, dtype=jnp.float32)
    p2_b = bias(ks[16], (1, x_dim))
    s2_b = bias(ks[17], (1, y_dim))

    # Fused forms consumed by the Pallas fc+heads kernel.
    h1_w = jnp.concatenate([ip1_w, sg1_w], axis=1)         # (1024, 512) bf16
    h1_b = jnp.concatenate([ip1_b, sg1_b], axis=1)         # (1, 512) f32
    hd2_w = jnp.zeros((512, x_dim + y_dim), jnp.float32)   # block-diag (512, 50)
    hd2_w = hd2_w.at[:256, :x_dim].set(p2_w)
    hd2_w = hd2_w.at[256:, x_dim:].set(s2_w)
    hd2_b = jnp.concatenate([p2_b, s2_b], axis=1)          # (1, 50) f32

    return {
        "c1_w": conv_w(ks[0], 8, input_channels, 3, 3), "c1_b": bias(ks[1], (8, 1)),
        "c2_w": conv_w(ks[2], 32, 8, 4, 4),             "c2_b": bias(ks[3], (32, 1)),
        "c3_w": conv_w(ks[4], 64, 32, 4, 4),            "c3_b": bias(ks[5], (64, 1)),
        "c4_w": conv_w(ks[6], 256, 64, 3, 3),           "c4_b": bias(ks[7], (256, 1)),
        "fc_w": lin_w(ks[8], 4096, 1024),               "fc_b": bias(ks[9], (1, 1024)),
        # PyTorch-shaped head params (used by the pure-JAX reference)
        "ip1_w": ip1_w, "ip1_b": ip1_b, "sg1_w": sg1_w, "sg1_b": sg1_b,
        "p2_w": p2_w, "p2_b": p2_b, "s2_w": s2_w, "s2_b": s2_b,
        # Fused forms (used by the Pallas path)
        "h1_w": h1_w, "h1_b": h1_b, "hd2_w": hd2_w, "hd2_b": hd2_b,
    }


def conv_encoder_forward(params, x):
    """x: (N, 1, 28, 28) NCHW float32 -> (point3, segment3), each (N, 25) f32."""
    n = x.shape[0]
    # channels-first "CNHW" bf16 activations through the conv trunk
    h = jnp.transpose(x, (1, 0, 2, 3)).astype(jnp.bfloat16)                          # (1,  N, 28, 28)
    h = conv2d_relu(h, params["c1_w"], params["c1_b"], kh=3, kw=3, stride=1, pad=1)  # (8,  N, 28, 28)
    h = conv2d_relu(h, params["c2_w"], params["c2_b"], kh=4, kw=4, stride=2, pad=1)  # (32, N, 14, 14)
    h = conv2d_relu(h, params["c3_w"], params["c3_b"], kh=4, kw=4, stride=2, pad=1)  # (64, N,  7,  7)
    h = conv2d_relu(h, params["c4_w"], params["c4_b"], kh=3, kw=3, stride=2, pad=1)  # (256,N,  4,  4)

    # Flatten with PyTorch NCHW .view(N, -1) semantics: (C,N,H,W)->(N,C,H,W)->(N,4096)
    hf = jnp.transpose(h, (1, 0, 2, 3)).reshape(n, -1)                               # (N, 4096) bf16

    # Single pallas_call: fc -> relu -> both heads (Linear, ReLU, Linear, *10)
    pt, sg = fc_heads(hf, params["fc_w"], params["fc_b"],
                      params["h1_w"], params["h1_b"],
                      params["hd2_w"], params["hd2_b"],
                      x_dim=params["p2_w"].shape[1])
    return pt, sg


# ----------------------------------------------------------------------------
# Pure-JAX f32 reference (same numerical weight values) for validation.
# ----------------------------------------------------------------------------
def reference_forward(params, x):
    f32 = jnp.float32

    def conv(h, w2d, b, cin, kh, kw, stride):
        cout = w2d.shape[0]
        w = w2d.astype(f32).reshape(cout, cin, kh, kw)
        out = jax.lax.conv_general_dilated(
            h, w, window_strides=(stride, stride), padding=[(1, 1), (1, 1)],
            dimension_numbers=("NCHW", "OIHW", "NCHW"))
        return jax.nn.relu(out + b.reshape(1, cout, 1, 1))

    h = x.astype(f32)
    h = conv(h, params["c1_w"], params["c1_b"], 1, 3, 3, 1)
    h = conv(h, params["c2_w"], params["c2_b"], 8, 4, 4, 2)
    h = conv(h, params["c3_w"], params["c3_b"], 32, 4, 4, 2)
    h = conv(h, params["c4_w"], params["c4_b"], 64, 3, 3, 2)
    hf = h.reshape(x.shape[0], -1)
    h1 = jax.nn.relu(hf @ params["fc_w"].astype(f32) + params["fc_b"])
    p = jax.nn.relu(h1 @ params["ip1_w"].astype(f32) + params["ip1_b"])
    s = jax.nn.relu(h1 @ params["sg1_w"].astype(f32) + params["sg1_b"])
    pt = (p @ params["p2_w"] + params["p2_b"]) * 10.0
    sg = (s @ params["s2_w"] + params["s2_b"]) * 10.0
    return pt, sg


if __name__ == "__main__":
    key = jax.random.PRNGKey(0)
    pkey, xkey = jax.random.split(key)

    params = init_params(pkey, input_channels=1, x_dim=25, y_dim=25)
    # MNIST-like input (28x28 required so the flatten size is 4096 = 256*4*4).
    x = jax.random.normal(xkey, (2, 1, 28, 28), jnp.float32)

    fwd = jax.jit(conv_encoder_forward)
    point, segment = fwd(params, x)
    jax.block_until_ready((point, segment))

    assert point.shape == (2, 25), point.shape
    assert segment.shape == (2, 25), segment.shape
    assert point.dtype == jnp.float32 and segment.dtype == jnp.float32
    assert bool(jnp.all(jnp.isfinite(point))) and bool(jnp.all(jnp.isfinite(segment)))

    # Validate against the pure-JAX f32 reference (loose tolerance for bf16 activations).
    pt_ref, sg_ref = jax.jit(reference_forward)(params, x)
    jax.block_until_ready((pt_ref, sg_ref))
    scale = float(jnp.maximum(jnp.max(jnp.abs(pt_ref)), jnp.max(jnp.abs(sg_ref)))) + 1.0
    err = float(jnp.maximum(jnp.max(jnp.abs(point - pt_ref)),
                            jnp.max(jnp.abs(segment - sg_ref))))
    assert err <= 0.1 * scale, ("mismatch vs reference", err, scale)

    print("KERNEL_OK")
</pallas_src>

<mosaic_0001>
module attributes {stable_mosaic.version = 11 : i64} {
  func.func @_conv_mm_kernel(%arg0: i32, %arg1: memref<8x9xbf16, #tpu.memory_space<vmem>>, %arg2: memref<9x1568xbf16, #tpu.memory_space<vmem>>, %arg3: memref<8x1xf32, #tpu.memory_space<vmem>>, %arg4: memref<8x1568xbf16, #tpu.memory_space<vmem>>) attributes {dimension_semantics = [#tpu.dimension_semantics<arbitrary>], iteration_bounds = array<i64: 1>, scalar_prefetch = 0 : i64, scratch_operands = 0 : i64, tpu.core_type = #tpu.core_type<tc>, window_params = [{pipeline_mode = #tpu.pipeline_mode<synchronous>, transform_indices = @transform_0, window_bounds = array<i64: 8, 9>}, {pipeline_mode = #tpu.pipeline_mode<synchronous>, transform_indices = @transform_1, window_bounds = array<i64: 9, 1568>}, {pipeline_mode = #tpu.pipeline_mode<synchronous>, transform_indices = @transform_2, window_bounds = array<i64: 8, 1>}, {pipeline_mode = #tpu.pipeline_mode<synchronous>, transform_indices = @transform_3, window_bounds = array<i64: 8, 1568>}]} {
    %c0 = arith.constant 0 : index
    %c0_0 = arith.constant 0 : index
    %0 = vector.load %arg1[%c0, %c0_0] : memref<8x9xbf16, #tpu.memory_space<vmem>>, vector<8x9xbf16>
    %c0_1 = arith.constant 0 : index
    %c0_2 = arith.constant 0 : index
    %1 = vector.load %arg2[%c0_1, %c0_2] : memref<9x1568xbf16, #tpu.memory_space<vmem>>, vector<9x1568xbf16>
    %cst = arith.constant dense<0.000000e+00> : vector<8x1568xf32>
    %2 = tpu.matmul %0, %1, %cst {dimension_numbers = #tpu.dot_dimension_numbers<[1], [0], [0], [1], [0, 0, 1, 1], [], []>} : vector<8x9xbf16>, vector<9x1568xbf16>, vector<8x1568xf32> -> vector<8x1568xf32>
    %c0_3 = arith.constant 0 : index
    %c0_4 = arith.constant 0 : index
    %3 = vector.load %arg3[%c0_3, %c0_4] : memref<8x1xf32, #tpu.memory_space<vmem>>, vector<8x1xf32>
    %4 = vector.broadcast %3 : vector<8x1xf32> to vector<8x1568xf32>
    %5 = arith.addf %2, %4 : vector<8x1568xf32>
    %cst_5 = arith.constant 0.000000e+00 : f32
    %6 = vector.broadcast %cst_5 : f32 to vector<8x1568xf32>
    %7 = arith.maximumf %5, %6 : vector<8x1568xf32>
    %8 = arith.truncf %7 : vector<8x1568xf32> to vector<8x1568xbf16>
    %c0_6 = arith.constant 0 : index
    %c0_7 = arith.constant 0 : index
    %9 = vector.load %arg4[%c0_6, %c0_7] : memref<8x1568xbf16, #tpu.memory_space<vmem>>, vector<8x1568xbf16>
    tpu.vector_store %arg4[%c0_6, %c0_7], %8 {strides = array<i32>} : memref<8x1568xbf16, #tpu.memory_space<vmem>>, vector<8x1568xbf16>,
    return
  }
  func.func @transform_0(%arg0: i32) -> (i32, i32) {
    %c0_i32 = arith.constant 0 : i32
    %c0_i32_0 = arith.constant 0 : i32
    %c0_i32_1 = arith.constant 0 : i32
    return %c0_i32, %c0_i32_0 : i32, i32
  }
  func.func @transform_1(%arg0: i32) -> (i32, i32) {
    %c0_i32 = arith.constant 0 : i32
    %c0_i32_0 = arith.constant 0 : i32
    %c0_i32_1 = arith.constant 0 : i32
    return %c0_i32, %c0_i32_0 : i32, i32
  }
  func.func @transform_2(%arg0: i32) -> (i32, i32) {
    %c0_i32 = arith.constant 0 : i32
    %c0_i32_0 = arith.constant 0 : i32
    %c0_i32_1 = arith.constant 0 : i32
    return %c0_i32, %c0_i32_0 : i32, i32
  }
  func.func @transform_3(%arg0: i32) -> (i32, i32) {
    %c0_i32 = arith.constant 0 : i32
    %c0_i32_0 = arith.constant 0 : i32
    %c0_i32_1 = arith.constant 0 : i32
    return %c0_i32, %c0_i32_0 : i32, i32
  }
}

module attributes {stable_mosaic.version = 11 : i64} {
  func.func @_conv_mm_kernel(%arg0: i32, %arg1: memref<32x128xbf16, #tpu.memory_space<vmem>>, %arg2: memref<128x392xbf16, #tpu.memory_space<vmem>>, %arg3: memref<32x1xf32, #tpu.memory_space<vmem>>, %arg4: memref<32x392xbf16, #tpu.memory_space<vmem>>) attributes {dimension_semantics = [#tpu.dimension_semantics<arbitrary>], iteration_bounds = array<i64: 1>, scalar_prefetch = 0 : i64, scratch_operands = 0 : i64, tpu.core_type = #tpu.core_type<tc>, window_params = [{pipeline_mode = #tpu.pipeline_mode<synchronous>, transform_indices = @transform_0, window_bounds = array<i64: 32, 128>}, {pipeline_mode = #tpu.pipeline_mode<synchronous>, transform_indices = @transform_1, window_bounds = array<i64: 128, 392>}, {pipeline_mode = #tpu.pipeline_mode<synchronous>, transform_indices = @transform_2, window_bounds = array<i64: 32, 1>}, {pipeline_mode = #tpu.pipeline_mode<synchronous>, transform_indices = @transform_3, window_bounds = array<i64: 32, 392>}]} {
    %c0 = arith.constant 0 : index
    %c0_0 = arith.constant 0 : index
    %0 = vector.load %arg1[%c0, %c0_0] : memref<32x128xbf16, #tpu.memory_space<vmem>>, vector<32x128xbf16>
    %c0_1 = arith.constant 0 : index
    %c0_2 = arith.constant 0 : index
    %1 = vector.load %arg2[%c0_1, %c0_2] : memref<128x392xbf16, #tpu.memory_space<vmem>>, vector<128x392xbf16>
    %cst = arith.constant dense<0.000000e+00> : vector<32x392xf32>
    %2 = tpu.matmul %0, %1, %cst {dimension_numbers = #tpu.dot_dimension_numbers<[1], [0], [0], [1], [0, 0, 1, 1], [], []>} : vector<32x128xbf16>, vector<128x392xbf16>, vector<32x392xf32> -> vector<32x392xf32>
    %c0_3 = arith.constant 0 : index
    %c0_4 = arith.constant 0 : index
    %3 = vector.load %arg3[%c0_3, %c0_4] : memref<32x1xf32, #tpu.memory_space<vmem>>, vector<32x1xf32>
    %4 = vector.broadcast %3 : vector<32x1xf32> to vector<32x392xf32>
    %5 = arith.addf %2, %4 : vector<32x392xf32>
    %cst_5 = arith.constant 0.000000e+00 : f32
    %6 = vector.broadcast %cst_5 : f32 to vector<32x392xf32>
    %7 = arith.maximumf %5, %6 : vector<32x392xf32>
    %8 = arith.truncf %7 : vector<32x392xf32> to vector<32x392xbf16>
    %c0_6 = arith.constant 0 : index
    %c0_7 = arith.constant 0 : index
    %9 = vector.load %arg4[%c0_6, %c0_7] : memref<32x392xbf16, #tpu.memory_space<vmem>>, vector<32x392xbf16>
    tpu.vector_store %arg4[%c0_6, %c0_7], %8 {strides = array<i32>} : memref<32x392xbf16, #tpu.memory_space<vmem>>, vector<32x392xbf16>,
    return
  }
  func.func @transform_0(%arg0: i32) -> (i32, i32) {
    %c0_i32 = arith.constant 0 : i32
    %c0_i32_0 = arith.constant 0 : i32
    %c0_i32_1 = arith.constant 0 : i32
    return %c0_i32, %c0_i32_0 : i32, i32
  }
  func.func @transform_1(%arg0: i32) -> (i32, i32) {
    %c0_i32 = arith.constant 0 : i32
    %c0_i32_0 = arith.constant 0 : i32
    %c0_i32_1 = arith.constant 0 : i32
    return %c0_i32, %c0_i32_0 : i32, i32
  }
  func.func @transform_2(%arg0: i32) -> (i32, i32) {
    %c0_i32 = arith.constant 0 : i32
    %c0_i32_0 = arith.constant 0 : i32
    %c0_i32_1 = arith.constant 0 : i32
    return %c0_i32, %c0_i32_0 : i32, i32
  }
  func.func @transform_3(%arg0: i32) -> (i32, i32) {
    %c0_i32 = arith.constant 0 : i32
    %c0_i32_0 = arith.constant 0 : i32
    %c0_i32_1 = arith.constant 0 : i32
    return %c0_i32, %c0_i32_0 : i32, i32
  }
}

module attributes {stable_mosaic.version = 11 : i64} {
  func.func @_conv_mm_kernel(%arg0: i32, %arg1: memref<64x512xbf16, #tpu.memory_space<vmem>>, %arg2: memref<512x98xbf16, #tpu.memory_space<vmem>>, %arg3: memref<64x1xf32, #tpu.memory_space<vmem>>, %arg4: memref<64x98xbf16, #tpu.memory_space<vmem>>) attributes {dimension_semantics = [#tpu.dimension_semantics<arbitrary>], iteration_bounds = array<i64: 1>, scalar_prefetch = 0 : i64, scratch_operands = 0 : i64, tpu.core_type = #tpu.core_type<tc>, window_params = [{pipeline_mode = #tpu.pipeline_mode<synchronous>, transform_indices = @transform_0, window_bounds = array<i64: 64, 512>}, {pipeline_mode = #tpu.pipeline_mode<synchronous>, transform_indices = @transform_1, window_bounds = array<i64: 512, 98>}, {pipeline_mode = #tpu.pipeline_mode<synchronous>, transform_indices = @transform_2, window_bounds = array<i64: 64, 1>}, {pipeline_mode = #tpu.pipeline_mode<synchronous>, transform_indices = @transform_3, window_bounds = array<i64: 64, 98>}]} {
    %c0 = arith.constant 0 : index
    %c0_0 = arith.constant 0 : index
    %0 = vector.load %arg1[%c0, %c0_0] : memref<64x512xbf16, #tpu.memory_space<vmem>>, vector<64x512xbf16>
    %c0_1 = arith.constant 0 : index
    %c0_2 = arith.constant 0 : index
    %1 = vector.load %arg2[%c0_1, %c0_2] : memref<512x98xbf16, #tpu.memory_space<vmem>>, vector<512x98xbf16>
    %cst = arith.constant dense<0.000000e+00> : vector<64x98xf32>
    %2 = tpu.matmul %0, %1, %cst {dimension_numbers = #tpu.dot_dimension_numbers<[1], [0], [0], [1], [0, 0, 1, 1], [], []>} : vector<64x512xbf16>, vector<512x98xbf16>, vector<64x98xf32> -> vector<64x98xf32>
    %c0_3 = arith.constant 0 : index
    %c0_4 = arith.constant 0 : index
    %3 = vector.load %arg3[%c0_3, %c0_4] : memref<64x1xf32, #tpu.memory_space<vmem>>, vector<64x1xf32>
    %4 = vector.broadcast %3 : vector<64x1xf32> to vector<64x98xf32>
    %5 = arith.addf %2, %4 : vector<64x98xf32>
    %cst_5 = arith.constant 0.000000e+00 : f32
    %6 = vector.broadcast %cst_5 : f32 to vector<64x98xf32>
    %7 = arith.maximumf %5, %6 : vector<64x98xf32>
    %8 = arith.truncf %7 : vector<64x98xf32> to vector<64x98xbf16>
    %c0_6 = arith.constant 0 : index
    %c0_7 = arith.constant 0 : index
    %9 = vector.load %arg4[%c0_6, %c0_7] : memref<64x98xbf16, #tpu.memory_space<vmem>>, vector<64x98xbf16>
    tpu.vector_store %arg4[%c0_6, %c0_7], %8 {strides = array<i32>} : memref<64x98xbf16, #tpu.memory_space<vmem>>, vector<64x98xbf16>,
    return
  }
  func.func @transform_0(%arg0: i32) -> (i32, i32) {
    %c0_i32 = arith.constant 0 : i32
    %c0_i32_0 = arith.constant 0 : i32
    %c0_i32_1 = arith.constant 0 : i32
    return %c0_i32, %c0_i32_0 : i32, i32
  }
  func.func @transform_1(%arg0: i32) -> (i32, i32) {
    %c0_i32 = arith.constant 0 : i32
    %c0_i32_0 = arith.constant 0 : i32
    %c0_i32_1 = arith.constant 0 : i32
    return %c0_i32, %c0_i32_0 : i32, i32
  }
  func.func @transform_2(%arg0: i32) -> (i32, i32) {
    %c0_i32 = arith.constant 0 : i32
    %c0_i32_0 = arith.constant 0 : i32
    %c0_i32_1 = arith.constant 0 : i32
    return %c0_i32, %c0_i32_0 : i32, i32
  }
  func.func @transform_3(%arg0: i32) -> (i32, i32) {
    %c0_i32 = arith.constant 0 : i32
    %c0_i32_0 = arith.constant 0 : i32
    %c0_i32_1 = arith.constant 0 : i32
    return %c0_i32, %c0_i32_0 : i32, i32
  }
}

module attributes {stable_mosaic.version = 11 : i64} {
  func.func @_conv_mm_kernel(%arg0: i32, %arg1: memref<256x576xbf16, #tpu.memory_space<vmem>>, %arg2: memref<576x32xbf16, #tpu.memory_space<vmem>>, %arg3: memref<256x1xf32, #tpu.memory_space<vmem>>, %arg4: memref<256x32xbf16, #tpu.memory_space<vmem>>) attributes {dimension_semantics = [#tpu.dimension_semantics<arbitrary>], iteration_bounds = array<i64: 1>, scalar_prefetch = 0 : i64, scratch_operands = 0 : i64, tpu.core_type = #tpu.core_type<tc>, window_params = [{pipeline_mode = #tpu.pipeline_mode<synchronous>, transform_indices = @transform_0, window_bounds = array<i64: 256, 576>}, {pipeline_mode = #tpu.pipeline_mode<synchronous>, transform_indices = @transform_1, window_bounds = array<i64: 576, 32>}, {pipeline_mode = #tpu.pipeline_mode<synchronous>, transform_indices = @transform_2, window_bounds = array<i64: 256, 1>}, {pipeline_mode = #tpu.pipeline_mode<synchronous>, transform_indices = @transform_3, window_bounds = array<i64: 256, 32>}]} {
    %c0 = arith.constant 0 : index
    %c0_0 = arith.constant 0 : index
    %0 = vector.load %arg1[%c0, %c0_0] : memref<256x576xbf16, #tpu.memory_space<vmem>>, vector<256x576xbf16>
    %c0_1 = arith.constant 0 : index
    %c0_2 = arith.constant 0 : index
    %1 = vector.load %arg2[%c0_1, %c0_2] : memref<576x32xbf16, #tpu.memory_space<vmem>>, vector<576x32xbf16>
    %cst = arith.constant dense<0.000000e+00> : vector<256x32xf32>
    %2 = tpu.matmul %0, %1, %cst {dimension_numbers = #tpu.dot_dimension_numbers<[1], [0], [0], [1], [0, 0, 1, 1], [], []>} : vector<256x576xbf16>, vector<576x32xbf16>, vector<256x32xf32> -> vector<256x32xf32>
    %c0_3 = arith.constant 0 : index
    %c0_4 = arith.constant 0 : index
    %3 = vector.load %arg3[%c0_3, %c0_4] : memref<256x1xf32, #tpu.memory_space<vmem>>, vector<256x1xf32>
    %4 = vector.broadcast %3 : vector<256x1xf32> to vector<256x32xf32>
    %5 = arith.addf %2, %4 : vector<256x32xf32>
    %cst_5 = arith.constant 0.000000e+00 : f32
    %6 = vector.broadcast %cst_5 : f32 to vector<256x32xf32>
    %7 = arith.maximumf %5, %6 : vector<256x32xf32>
    %8 = arith.truncf %7 : vector<256x32xf32> to vector<256x32xbf16>
    %c0_6 = arith.constant 0 : index
    %c0_7 = arith.constant 0 : index
    %9 = vector.load %arg4[%c0_6, %c0_7] : memref<256x32xbf16, #tpu.memory_space<vmem>>, vector<256x32xbf16>
    tpu.vector_store %arg4[%c0_6, %c0_7], %8 {strides = array<i32>} : memref<256x32xbf16, #tpu.memory_space<vmem>>, vector<256x32xbf16>,
    return
  }
  func.func @transform_0(%arg0: i32) -> (i32, i32) {
    %c0_i32 = arith.constant 0 : i32
    %c0_i32_0 = arith.constant 0 : i32
    %c0_i32_1 = arith.constant 0 : i32
    return %c0_i32, %c0_i32_0 : i32, i32
  }
  func.func @transform_1(%arg0: i32) -> (i32, i32) {
    %c0_i32 = arith.constant 0 : i32
    %c0_i32_0 = arith.constant 0 : i32
    %c0_i32_1 = arith.constant 0 : i32
    return %c0_i32, %c0_i32_0 : i32, i32
  }
  func.func @transform_2(%arg0: i32) -> (i32, i32) {
    %c0_i32 = arith.constant 0 : i32
    %c0_i32_0 = arith.constant 0 : i32
    %c0_i32_1 = arith.constant 0 : i32
    return %c0_i32, %c0_i32_0 : i32, i32
  }
  func.func @transform_3(%arg0: i32) -> (i32, i32) {
    %c0_i32 = arith.constant 0 : i32
    %c0_i32_0 = arith.constant 0 : i32
    %c0_i32_1 = arith.constant 0 : i32
    return %c0_i32, %c0_i32_0 : i32, i32
  }
}

module attributes {stable_mosaic.version = 11 : i64} {
  func.func @_fc_heads_kernel(%arg0: i32, %arg1: memref<2x2048xbf16, #tpu.memory_space<vmem>>, %arg2: memref<2048x1024xbf16, #tpu.memory_space<vmem>>, %arg3: memref<1x1024xf32, #tpu.memory_space<vmem>>, %arg4: memref<1024x512xbf16, #tpu.memory_space<vmem>>, %arg5: memref<1x512xf32, #tpu.memory_space<vmem>>, %arg6: memref<512x50xf32, #tpu.memory_space<vmem>>, %arg7: memref<1x50xf32, #tpu.memory_space<vmem>>, %arg8: memref<2x25xf32, #tpu.memory_space<vmem>>, %arg9: memref<2x25xf32, #tpu.memory_space<vmem>>, %arg10: memref<2x1024xf32, #tpu.memory_space<vmem>>) attributes {dimension_semantics = [#tpu.dimension_semantics<arbitrary>], iteration_bounds = array<i64: 2>, scalar_prefetch = 0 : i64, scratch_operands = 1 : i64, tpu.core_type = #tpu.core_type<tc>, window_params = [{transform_indices = @transform_0, window_bounds = array<i64: 2, 2048>}, {transform_indices = @transform_1, window_bounds = array<i64: 2048, 1024>}, {pipeline_mode = #tpu.pipeline_mode<synchronous>, transform_indices = @transform_2, window_bounds = array<i64: 1, 1024>}, {pipeline_mode = #tpu.pipeline_mode<synchronous>, transform_indices = @transform_3, window_bounds = array<i64: 1024, 512>}, {pipeline_mode = #tpu.pipeline_mode<synchronous>, transform_indices = @transform_4, window_bounds = array<i64: 1, 512>}, {pipeline_mode = #tpu.pipeline_mode<synchronous>, transform_indices = @transform_5, window_bounds = array<i64: 512, 50>}, {pipeline_mode = #tpu.pipeline_mode<synchronous>, transform_indices = @transform_6, window_bounds = array<i64: 1, 50>}, {pipeline_mode = #tpu.pipeline_mode<synchronous>, transform_indices = @transform_7, window_bounds = array<i64: 2, 25>}, {pipeline_mode = #tpu.pipeline_mode<synchronous>, transform_indices = @transform_8, window_bounds = array<i64: 2, 25>}]} {
    %c0_i32 = arith.constant 0 : i32
    %0 = arith.cmpi eq, %arg0, %c0_i32 : i32
    %1 = arith.extui %0 : i1 to i32
    %c0_i32_0 = arith.constant 0 : i32
    %2 = arith.cmpi ne, %1, %c0_i32_0 : i32
    scf.if %2 {
      %cst_9 = arith.constant 0.000000e+00 : f32
      %12 = vector.broadcast %cst_9 : f32 to vector<2x1024xf32>
      %c0_10 = arith.constant 0 : index
      %c0_11 = arith.constant 0 : index
      %13 = vector.load %arg10[%c0_10, %c0_11] : memref<2x1024xf32, #tpu.memory_space<vmem>>, vector<2x1024xf32>
      tpu.vector_store %arg10[%c0_10, %c0_11], %12 {strides = array<i32>} : memref<2x1024xf32, #tpu.memory_space<vmem>>, vector<2x1024xf32>,
    } else {
    }
    %c0 = arith.constant 0 : index
    %c0_1 = arith.constant 0 : index
    %3 = vector.load %arg10[%c0, %c0_1] : memref<2x1024xf32, #tpu.memory_space<vmem>>, vector<2x1024xf32>
    %c0_2 = arith.constant 0 : index
    %c0_3 = arith.constant 0 : index
    %4 = vector.load %arg1[%c0_2, %c0_3] : memref<2x2048xbf16, #tpu.memory_space<vmem>>, vector<2x2048xbf16>
    %c0_4 = arith.constant 0 : index
    %c0_5 = arith.constant 0 : index
    %5 = vector.load %arg2[%c0_4, %c0_5] : memref<2048x1024xbf16, #tpu.memory_space<vmem>>, vector<2048x1024xbf16>
    %cst = arith.constant dense<0.000000e+00> : vector<2x1024xf32>
    %6 = tpu.matmul %4, %5, %cst {dimension_numbers = #tpu.dot_dimension_numbers<[1], [0], [0], [1], [0, 0, 1, 1], [], []>} : vector<2x2048xbf16>, vector<2048x1024xbf16>, vector<2x1024xf32> -> vector<2x1024xf32>
    %7 = arith.addf %3, %6 : vector<2x1024xf32>
    %c0_6 = arith.constant 0 : index
    %c0_7 = arith.constant 0 : index
    %8 = vector.load %arg10[%c0_6, %c0_7] : memref<2x1024xf32, #tpu.memory_space<vmem>>, vector<2x1024xf32>
    tpu.vector_store %arg10[%c0_6, %c0_7], %7 {strides = array<i32>} : memref<2x1024xf32, #tpu.memory_space<vmem>>, vector<2x1024xf32>,
    %c1_i32 = arith.constant 1 : i32
    %9 = arith.cmpi eq, %arg0, %c1_i32 : i32
    %10 = arith.extui %9 : i1 to i32
    %c0_i32_8 = arith.constant 0 : i32
    %11 = arith.cmpi ne, %10, %c0_i32_8 : i32
    scf.if %11 {
      %c0_9 = arith.constant 0 : index
      %c0_10 = arith.constant 0 : index
      %12 = vector.load %arg10[%c0_9, %c0_10] : memref<2x1024xf32, #tpu.memory_space<vmem>>, vector<2x1024xf32>
      %c0_11 = arith.constant 0 : index
      %c0_12 = arith.constant 0 : index
      %13 = vector.load %arg3[%c0_11, %c0_12] : memref<1x1024xf32, #tpu.memory_space<vmem>>, vector<1x1024xf32>
      %14 = vector.broadcast %13 : vector<1x1024xf32> to vector<2x1024xf32>
      %15 = arith.addf %12, %14 : vector<2x1024xf32>
      %cst_13 = arith.constant 0.000000e+00 : f32
      %16 = vector.broadcast %cst_13 : f32 to vector<2x1024xf32>
      %17 = arith.maximumf %15, %16 : vector<2x1024xf32>
      %18 = arith.truncf %17 : vector<2x1024xf32> to vector<2x1024xbf16>
      %c0_14 = arith.constant 0 : index
      %c0_15 = arith.constant 0 : index
      %19 = vector.load %arg4[%c0_14, %c0_15] : memref<1024x512xbf16, #tpu.memory_space<vmem>>, vector<1024x512xbf16>
      %cst_16 = arith.constant dense<0.000000e+00> : vector<2x512xf32>
      %20 = tpu.matmul %18, %19, %cst_16 {dimension_numbers = #tpu.dot_dimension_numbers<[1], [0], [0], [1], [0, 0, 1, 1], [], []>} : vector<2x1024xbf16>, vector<1024x512xbf16>, vector<2x512xf32> -> vector<2x512xf32>
      %c0_17 = arith.constant 0 : index
      %c0_18 = arith.constant 0 : index
      %21 = vector.load %arg5[%c0_17, %c0_18] : memref<1x512xf32, #tpu.memory_space<vmem>>, vector<1x512xf32>
      %22 = vector.broadcast %21 : vector<1x512xf32> to vector<2x512xf32>
      %23 = arith.addf %20, %22 : vector<2x512xf32>
      %cst_19 = arith.constant 0.000000e+00 : f32
      %24 = vector.broadcast %cst_19 : f32 to vector<2x512xf32>
      %25 = arith.maximumf %23, %24 : vector<2x512xf32>
      %c0_20 = arith.constant 0 : index
      %c0_21 = arith.constant 0 : index
      %26 = vector.load %arg6[%c0_20, %c0_21] : memref<512x50xf32, #tpu.memory_space<vmem>>, vector<512x50xf32>
      %cst_22 = arith.constant dense<0.000000e+00> : vector<2x50xf32>
      %27 = tpu.matmul %25, %26, %cst_22 {dimension_numbers = #tpu.dot_dimension_numbers<[1], [0], [0], [1], [0, 0, 1, 1], [], []>} : vector<2x512xf32>, vector<512x50xf32>, vector<2x50xf32> -> vector<2x50xf32>
      %c0_23 = arith.constant 0 : index
      %c0_24 = arith.constant 0 : index
      %28 = vector.load %arg7[%c0_23, %c0_24] : memref<1x50xf32, #tpu.memory_space<vmem>>, vector<1x50xf32>
      %29 = vector.broadcast %28 : vector<1x50xf32> to vector<2x50xf32>
      %30 = arith.addf %27, %29 : vector<2x50xf32>
      %cst_25 = arith.constant 1.000000e+01 : f32
      %31 = vector.broadcast %cst_25 : f32 to vector<2x50xf32>
      %32 = arith.mulf %30, %31 : vector<2x50xf32>
      %33 = vector.extract_strided_slice %32 {offsets = [0, 0], sizes = [2, 25], strides = [1, 1]} : vector<2x50xf32> to vector<2x25xf32>
      %c0_26 = arith.constant 0 : index
      %c0_27 = arith.constant 0 : index
      %34 = vector.load %arg8[%c0_26, %c0_27] : memref<2x25xf32, #tpu.memory_space<vmem>>, vector<2x25xf32>
      tpu.vector_store %arg8[%c0_26, %c0_27], %33 {strides = array<i32>} : memref<2x25xf32, #tpu.memory_space<vmem>>, vector<2x25xf32>,
      %35 = vector.extract_strided_slice %32 {offsets = [0, 25], sizes = [2, 25], strides = [1, 1]} : vector<2x50xf32> to vector<2x25xf32>
      %c0_28 = arith.constant 0 : index
      %c0_29 = arith.constant 0 : index
      %36 = vector.load %arg9[%c0_28, %c0_29] : memref<2x25xf32, #tpu.memory_space<vmem>>, vector<2x25xf32>
      tpu.vector_store %arg9[%c0_28, %c0_29], %35 {strides = array<i32>} : memref<2x25xf32, #tpu.memory_space<vmem>>, vector<2x25xf32>,
    } else {
    }
    return
  }
  func.func @transform_0(%arg0: i32) -> (i32, i32) {
    %c0_i32 = arith.constant 0 : i32
    %c0_i32_0 = arith.constant 0 : i32
    return %c0_i32, %arg0 : i32, i32
  }
  func.func @transform_1(%arg0: i32) -> (i32, i32) {
    %c0_i32 = arith.constant 0 : i32
    %c0_i32_0 = arith.constant 0 : i32
    return %arg0, %c0_i32 : i32, i32
  }
  func.func @transform_2(%arg0: i32) -> (i32, i32) {
    %c0_i32 = arith.constant 0 : i32
    %c0_i32_0 = arith.constant 0 : i32
    %c0_i32_1 = arith.constant 0 : i32
    return %c0_i32, %c0_i32_0 : i32, i32
  }
  func.func @transform_3(%arg0: i32) -> (i32, i32) {
    %c0_i32 = arith.constant 0 : i32
    %c0_i32_0 = arith.constant 0 : i32
    %c0_i32_1 = arith.constant 0 : i32
    return %c0_i32, %c0_i32_0 : i32, i32
  }
  func.func @transform_4(%arg0: i32) -> (i32, i32) {
    %c0_i32 = arith.constant 0 : i32
    %c0_i32_0 = arith.constant 0 : i32
    %c0_i32_1 = arith.constant 0 : i32
    return %c0_i32, %c0_i32_0 : i32, i32
  }
  func.func @transform_5(%arg0: i32) -> (i32, i32) {
    %c0_i32 = arith.constant 0 : i32
    %c0_i32_0 = arith.constant 0 : i32
    %c0_i32_1 = arith.constant 0 : i32
    return %c0_i32, %c0_i32_0 : i32, i32
  }
  func.func @transform_6(%arg0: i32) -> (i32, i32) {
    %c0_i32 = arith.constant 0 : i32
    %c0_i32_0 = arith.constant 0 : i32
    %c0_i32_1 = arith.constant 0 : i32
    return %c0_i32, %c0_i32_0 : i32, i32
  }
  func.func @transform_7(%arg0: i32) -> (i32, i32) {
    %c0_i32 = arith.constant 0 : i32
    %c0_i32_0 = arith.constant 0 : i32
    %c0_i32_1 = arith.constant 0 : i32
    return %c0_i32, %c0_i32_0 : i32, i32
  }
  func.func @transform_8(%arg0: i32) -> (i32, i32) {
    %c0_i32 = arith.constant 0 : i32
    %c0_i32_0 = arith.constant 0 : i32
    %c0_i32_1 = arith.constant 0 : i32
    return %c0_i32, %c0_i32_0 : i32, i32
  }
}

</mosaic_0001>

<llo_original>
// kernel: conv_encoder_forward.5
$region0: #{conv_encoder_forward.5}
  #allocation0 [shape = 'u32[]', space=smem, size = 0x4, offset = 0x4, fixed_abs, tag = 'smem constant byte address 0x4 - core index']
  #allocation1 [shape = 'u32[144,128]{1,0:T(1,128)}', space=vmem, size = 0x12000, scoped, tag = 'internal scratch']
  %s0 = inlined_call_operand.hbm [shape: bf16[8,9], index: 0, kind: input, shape index: {}]
  %s1 = inlined_call_operand.vmem [shape: bf16[9,1568], index: 1, kind: input, shape index: {}]
  %s2 = inlined_call_operand.vmem [shape: f32[8,1], index: 2, kind: input, shape index: {}]
  %s3 = inlined_call_operand.vmem [shape: bf16[8,1568], index: 3, kind: output, shape index: {}]
  %s4 = sld [smem:[#allocation0]]
  $region26: #{conv_encoder_forward.5} parent=0
    _
  %s6 = ssub.s32 1, %s4
  %s7 = scalar_select 0, %s6, %s4
  $region1: #{conv_encoder_forward.5} parent=0
    #allocation2 [shape = 'u8[2048]{0}', space=vmem, size = 0x800, scoped, tag = 'input window, operand 0, single buffered']
    #allocation3 [shape = 's32[1]{0}', space=sflag, size = 0x4, scoped, tag = 'scoped memory for conv_encoder_forward.5']
    %8 = vsyncpa [#allocation3], 0
    // Predicated region
    $region2: #{conv_encoder_forward.5} parent=1 // pred_check
      _
    $region3: #{conv_encoder_forward.5} parent=1 // pred_check_branch
      %10 = sbr.rel (0) target = $region5
    $region4: #{conv_encoder_forward.5} parent=1 // pred_region
      %s12 = ssub.s32 64, 64
      %13 = vsyncadd [#allocation3], %s12
      %s15 = sshll.u32 [#allocation2], 4
      %s16 = int_to_ptr.vmem [resolvable:$true] %s15
      %18 = dma.hbm_to_vmem [thread:$0]  %s0, 64, %s16, [#allocation3]
    $region5: #{conv_encoder_forward.5} parent=1 // pred_fallthru
      _
    // Predicated region
    $region6: #{conv_encoder_forward.5} parent=1 // pred_check
      _
    $region7: #{conv_encoder_forward.5} parent=1 // pred_check_branch
      %20 = sbr.rel (0) target = $region9
    $region8: #{conv_encoder_forward.5} parent=1 // pred_region
      _
    $region9: #{conv_encoder_forward.5} parent=1 // pred_fallthru
      _
    // Predicated region
    $region10: #{conv_encoder_forward.5} parent=1 // pred_check
      _
    $region11: #{conv_encoder_forward.5} parent=1 // pred_check_branch
      %22 = sbr.rel (0) target = $region13
    $region12: #{conv_encoder_forward.5} parent=1 // pred_region
      _
    $region13: #{conv_encoder_forward.5} parent=1 // pred_fallthru
      _
    // Predicated region
    $region14: #{conv_encoder_forward.5} parent=1 // pred_check
      _
    $region15: #{conv_encoder_forward.5} parent=1 // pred_check_branch
      %24 = sbr.rel (0) target = $region17
    $region16: #{conv_encoder_forward.5} parent=1 // pred_region
      %25 = dma.done [#allocation3], 64
    $region17: #{conv_encoder_forward.5} parent=1 // pred_fallthru
      _
    %v27 = vld [vmem:[#allocation2] sm:$0xf]
    %v28 = vld [vmem:[%s1] sm:$0xff]
    %v29 = vld [vmem:[%s1 + $0x8] sm:$0xff]
    %v30 = vld [vmem:[%s1 + $0x10] sm:$0xff]
    %v31 = vld [vmem:[%s1 + $0x18] sm:$0xff]
    %v32 = vld [vmem:[%s1 + $0x20] sm:$0xff]
    %v33 = vld [vmem:[%s1 + $0x28] sm:$0xff]
    %v34 = vld [vmem:[%s1 + $0x30] sm:$0xf]
    %v35 = vld [vmem:[%s1 + $0x34] sm:$0x11]
    %v36 = vld [vmem:[%s1 + $0x3c] sm:$0x11]
    %v37 = vld [vmem:[%s1 + $0x44] sm:$0x11]
    %v38 = vld [vmem:[%s1 + $0x4c] sm:$0x11]
    %v39 = vld [vmem:[%s1 + $0x54] sm:$0x11]
    %v40 = vld [vmem:[%s1 + $0x5c] sm:$0x11]
    %v41 = vld [vmem:[%s1 + $0x64] sm:$0x1]
    %v42 = vld [vmem:[%s2] sm:$0xff]
    %44 = vset.pattern.permute.xlu0 0
    %45 = vperm.xlu0 %44, %v42
    %v46 = vpop.permute.xlu0 %45
    %v62 = vunpack.c.l.b16 %v28
    %v63 = vunpack.c.h.b16 %v28
    %v64 = vunpack.c.l.b16 %v29
    %v65 = vunpack.c.h.b16 %v29
    %v66 = vunpack.c.l.b16 %v30
    %v67 = vunpack.c.h.b16 %v30
    %v68 = vunpack.c.l.b16 %v31
    %v69 = vunpack.c.h.b16 %v31
    %v70 = vunpack.c.l.b16 %v32
    %v71 = vunpack.c.h.b16 %v32
    %v72 = vunpack.c.l.b16 %v33
    %v73 = vunpack.c.h.b16 %v33
    %v74 = vunpack.c.l.b16 %v34
    %v75 = vunpack.c.l.b16 %v35
    %v76 = vunpack.c.h.b16 %v35
    %v77 = vunpack.c.l.b16 %v36
    %v78 = vunpack.c.h.b16 %v36
    %v79 = vunpack.c.l.b16 %v37
    %v80 = vunpack.c.h.b16 %v37
    %v81 = vunpack.c.l.b16 %v38
    %v82 = vunpack.c.h.b16 %v38
    %v83 = vunpack.c.l.b16 %v39
    %v84 = vunpack.c.h.b16 %v39
    %v85 = vunpack.c.l.b16 %v40
    %v86 = vunpack.c.h.b16 %v40
    %v87 = vunpack.c.l.b16 %v41
    %v88 = vpack.c.b16 %v75, %v62
    %v89 = vpack.c.b16 %v76, %v63
    %v90 = vpack.c.b16 %v77, %v64
    %v91 = vpack.c.b16 %v78, %v65
    %v92 = vpack.c.b16 %v79, %v66
    %v93 = vpack.c.b16 %v80, %v67
    %v94 = vpack.c.b16 %v81, %v68
    %v95 = vpack.c.b16 %v82, %v69
    %v96 = vpack.c.b16 %v83, %v70
    %v97 = vpack.c.b16 %v84, %v71
    %v98 = vpack.c.b16 %v85, %v72
    %v99 = vpack.c.b16 %v86, %v73
    %v100 = vpack.c.b16 %v87, %v74
    %vm101 = vcmask 72704
    %v103 = vsel %vm101, %v27, 0
    %vm105 = vcmask 1043456
    %vm106 = vcmask 1044480
    %v107 = vsel %vm105, 4294967295, 65535
    %v108 = vsel %vm106, %v107, 0
    %v110 = vand.u32 %v88, %v108
    %v113 = vand.u32 %v89, %v108
    %v116 = vand.u32 %v90, %v108
    %v119 = vand.u32 %v91, %v108
    %v122 = vand.u32 %v92, %v108
    %v125 = vand.u32 %v93, %v108
    %v128 = vand.u32 %v94, %v108
    %v131 = vand.u32 %v95, %v108
    %v134 = vand.u32 %v96, %v108
    %v137 = vand.u32 %v97, %v108
    %v140 = vand.u32 %v98, %v108
    %v143 = vand.u32 %v99, %v108
    %v146 = vand.u32 %v100, %v108
    %148 = vmatprep.subr.bf16.mxu0 0
    %149 = vmatpush1.bf16.msra.mxu0 0
    %150 = vmatprep.subr.bf16.mxu0 0
    %151 = vmatpush1.bf16.msra.mxu0 0
    %152 = vmatprep.subr.bf16.mxu0 0
    %153 = vmatpush1.bf16.msra.mxu0 0
    %154 = vmatprep.subr.bf16.mxu0 0
    %155 = vmatpush1.bf16.msra.mxu0 0
    %156 = vmatprep.subr.bf16.mxu0 0
    %157 = vmatpush1.bf16.msra.mxu0 0
    %158 = vmatprep.subr.bf16.mxu0 0
    %159 = vmatpush1.bf16.msra.mxu0 0
    %160 = vmatprep.subr.bf16.mxu0 0
    %161 = vmatpush1.bf16.msra.mxu0 0
    %162 = vmatprep.subr.bf16.mxu0 %v113
    %163 = vmatpush1.bf16.msra.mxu0 %v110
    %164 = vmatprep.subr.bf16.mxu0 0
    %165 = vmatpush2.bf16.msra.mxu0 0
    %166 = vmatprep.subr.bf16.mxu0 0
    %167 = vmatpush2.bf16.msra.mxu0 0
    %168 = vmatprep.subr.bf16.mxu0 0
    %169 = vmatpush2.bf16.msra.mxu0 0
    %170 = vmatprep.subr.bf16.mxu0 0
    %171 = vmatpush2.bf16.msra.mxu0 0
    %172 = vmatprep.subr.bf16.mxu0 0
    %173 = vmatpush2.bf16.msra.mxu0 0
    %174 = vmatprep.subr.bf16.mxu0 0
    %175 = vmatpush2.bf16.msra.mxu0 0
    %176 = vmatprep.subr.bf16.mxu0 0
    %177 = vmatpush2.bf16.msra.mxu0 0
    %178 = vmatprep.subr.bf16.mxu0 0
    %179 = vmatpush2.bf16.msra.mxu0 0
    %180 = vmatprep.mubr.bf16.mxu0 0
    %181 = vmatmul.mubr.bf16.gmra.mxu0 %v103
    %v182 = vpop.f32.mrf.mxu0
    %v183 = vadd.f32 %v46, %v182
    %v184 = vpop.f32.mrf.mxu0
    %v185 = vadd.f32 %v46, %v184
    %v186 = vpop.f32.mrf.mxu0
    %v187 = vpop.f32.mrf.mxu0
    %188 = vdwg.mxu0
    %189 = vmatprep.subr.bf16.mxu0 0
    %190 = vmatpush1.bf16.msra.mxu0 0
    %191 = vmatprep.subr.bf16.mxu0 0
    %192 = vmatpush1.bf16.msra.mxu0 0
    %193 = vmatprep.subr.bf16.mxu0 0
    %194 = vmatpush1.bf16.msra.mxu0 0
    %195 = vmatprep.subr.bf16.mxu0 0
    %196 = vmatpush1.bf16.msra.mxu0 0
    %197 = vmatprep.subr.bf16.mxu0 0
    %198 = vmatpush1.bf16.msra.mxu0 0
    %199 = vmatprep.subr.bf16.mxu0 0
    %200 = vmatpush1.bf16.msra.mxu0 0
    %201 = vmatprep.subr.bf16.mxu0 0
    %202 = vmatpush1.bf16.msra.mxu0 0
    %203 = vmatprep.subr.bf16.mxu0 %v119
    %204 = vmatpush1.bf16.msra.mxu0 %v116
    %205 = vmatprep.subr.bf16.mxu0 0
    %206 = vmatpush2.bf16.msra.mxu0 0
    %207 = vmatprep.subr.bf16.mxu0 0
    %208 = vmatpush2.bf16.msra.mxu0 0
    %209 = vmatprep.subr.bf16.mxu0 0
    %210 = vmatpush2.bf16.msra.mxu0 0
    %211 = vmatprep.subr.bf16.mxu0 0
    %212 = vmatpush2.bf16.msra.mxu0 0
    %213 = vmatprep.subr.bf16.mxu0 0
    %214 = vmatpush2.bf16.msra.mxu0 0
    %215 = vmatprep.subr.bf16.mxu0 0
    %216 = vmatpush2.bf16.msra.mxu0 0
    %217 = vmatprep.subr.bf16.mxu0 0
    %218 = vmatpush2.bf16.msra.mxu0 0
    %219 = vmatprep.subr.bf16.mxu0 0
    %220 = vmatpush2.bf16.msra.mxu0 0
    %221 = vmatprep.mubr.bf16.mxu0 0
    %222 = vmatmul.mubr.bf16.gmra.mxu0 %v103
    %v223 = vpop.f32.mrf.mxu0
    %v224 = vadd.f32 %v46, %v223
    %v225 = vpop.f32.mrf.mxu0
    %v226 = vadd.f32 %v46, %v225
    %v227 = vpop.f32.mrf.mxu0
    %v228 = vpop.f32.mrf.mxu0
    %229 = vdwg.mxu0
    %230 = vmatprep.subr.bf16.mxu0 0
    %231 = vmatpush1.bf16.msra.mxu0 0
    %232 = vmatprep.subr.bf16.mxu0 0
    %233 = vmatpush1.bf16.msra.mxu0 0
    %234 = vmatprep.subr.bf16.mxu0 0
    %235 = vmatpush1.bf16.msra.mxu0 0
    %236 = vmatprep.subr.bf16.mxu0 0
    %237 = vmatpush1.bf16.msra.mxu0 0
    %238 = vmatprep.subr.bf16.mxu0 0
    %239 = vmatpush1.bf16.msra.mxu0 0
    %240 = vmatprep.subr.bf16.mxu0 0
    %241 = vmatpush1.bf16.msra.mxu0 0
    %242 = vmatprep.subr.bf16.mxu0 0
    %243 = vmatpush1.bf16.msra.mxu0 0
    %244 = vmatprep.subr.bf16.mxu0 %v125
    %245 = vmatpush1.bf16.msra.mxu0 %v122
    %246 = vmatprep.subr.bf16.mxu0 0
    %247 = vmatpush2.bf16.msra.mxu0 0
    %248 = vmatprep.subr.bf16.mxu0 0
    %249 = vmatpush2.bf16.msra.mxu0 0
    %250 = vmatprep.subr.bf16.mxu0 0
    %251 = vmatpush2.bf16.msra.mxu0 0
    %252 = vmatprep.subr.bf16.mxu0 0
    %253 = vmatpush2.bf16.msra.mxu0 0
    %254 = vmatprep.subr.bf16.mxu0 0
    %255 = vmatpush2.bf16.msra.mxu0 0
    %256 = vmatprep.subr.bf16.mxu0 0
    %257 = vmatpush2.bf16.msra.mxu0 0
    %258 = vmatprep.subr.bf16.mxu0 0
    %259 = vmatpush2.bf16.msra.mxu0 0
    %260 = vmatprep.subr.bf16.mxu0 0
    %261 = vmatpush2.bf16.msra.mxu0 0
    %262 = vmatprep.mubr.bf16.mxu0 0
    %263 = vmatmul.mubr.bf16.gmra.mxu0 %v103
    %v264 = vpop.f32.mrf.mxu0
    %v265 = vadd.f32 %v46, %v264
    %v266 = vpop.f32.mrf.mxu0
    %v267 = vadd.f32 %v46, %v266
    %v268 = vpop.f32.mrf.mxu0
    %v269 = vpop.f32.mrf.mxu0
    %270 = vdwg.mxu0
    %271 = vmatprep.subr.bf16.mxu0 0
    %272 = vmatpush1.bf16.msra.mxu0 0
    %273 = vmatprep.subr.bf16.mxu0 0
    %274 = vmatpush1.bf16.msra.mxu0 0
    %275 = vmatprep.subr.bf16.mxu0 0
    %276 = vmatpush1.bf16.msra.mxu0 0
    %277 = vmatprep.subr.bf16.mxu0 0
    %278 = vmatpush1.bf16.msra.mxu0 0
    %279 = vmatprep.subr.bf16.mxu0 0
    %280 = vmatpush1.bf16.msra.mxu0 0
    %281 = vmatprep.subr.bf16.mxu0 0
    %282 = vmatpush1.bf16.msra.mxu0 0
    %283 = vmatprep.subr.bf16.mxu0 0
    %284 = vmatpush1.bf16.msra.mxu0 0
    %285 = vmatprep.subr.bf16.mxu0 %v131
    %286 = vmatpush1.bf16.msra.mxu0 %v128
    %287 = vmatprep.subr.bf16.mxu0 0
    %288 = vmatpush2.bf16.msra.mxu0 0
    %289 = vmatprep.subr.bf16.mxu0 0
    %290 = vmatpush2.bf16.msra.mxu0 0
    %291 = vmatprep.subr.bf16.mxu0 0
    %292 = vmatpush2.bf16.msra.mxu0 0
    %293 = vmatprep.subr.bf16.mxu0 0
    %294 = vmatpush2.bf16.msra.mxu0 0
    %295 = vmatprep.subr.bf16.mxu0 0
    %296 = vmatpush2.bf16.msra.mxu0 0
    %297 = vmatprep.subr.bf16.mxu0 0
    %298 = vmatpush2.bf16.msra.mxu0 0
    %299 = vmatprep.subr.bf16.mxu0 0
    %300 = vmatpush2.bf16.msra.mxu0 0
    %301 = vmatprep.subr.bf16.mxu0 0
    %302 = vmatpush2.bf16.msra.mxu0 0
    %303 = vmatprep.mubr.bf16.mxu0 0
    %304 = vmatmul.mubr.bf16.gmra.mxu0 %v103
    %v305 = vpop.f32.mrf.mxu0
    %v306 = vadd.f32 %v46, %v305
    %v307 = vpop.f32.mrf.mxu0
    %v308 = vadd.f32 %v46, %v307
    %v309 = vpop.f32.mrf.mxu0
    %v310 = vpop.f32.mrf.mxu0
    %311 = vdwg.mxu0
    %312 = vmatprep.subr.bf16.mxu0 0
    %313 = vmatpush1.bf16.msra.mxu0 0
    %314 = vmatprep.subr.bf16.mxu0 0
    %315 = vmatpush1.bf16.msra.mxu0 0
    %316 = vmatprep.subr.bf16.mxu0 0
    %317 = vmatpush1.bf16.msra.mxu0 0
    %318 = vmatprep.subr.bf16.mxu0 0
    %319 = vmatpush1.bf16.msra.mxu0 0
    %320 = vmatprep.subr.bf16.mxu0 0
    %321 = vmatpush1.bf16.msra.mxu0 0
    %322 = vmatprep.subr.bf16.mxu0 0
    %323 = vmatpush1.bf16.msra.mxu0 0
    %324 = vmatprep.subr.bf16.mxu0 0
    %325 = vmatpush1.bf16.msra.mxu0 0
    %326 = vmatprep.subr.bf16.mxu0 %v137
    %327 = vmatpush1.bf16.msra.mxu0 %v134
    %328 = vmatprep.subr.bf16.mxu0 0
    %329 = vmatpush2.bf16.msra.mxu0 0
    %330 = vmatprep.subr.bf16.mxu0 0
    %331 = vmatpush2.bf16.msra.mxu0 0
    %332 = vmatprep.subr.bf16.mxu0 0
    %333 = vmatpush2.bf16.msra.mxu0 0
    %334 = vmatprep.subr.bf16.mxu0 0
    %335 = vmatpush2.bf16.msra.mxu0 0
    %336 = vmatprep.subr.bf16.mxu0 0
    %337 = vmatpush2.bf16.msra.mxu0 0
    %338 = vmatprep.subr.bf16.mxu0 0
    %339 = vmatpush2.bf16.msra.mxu0 0
    %340 = vmatprep.subr.bf16.mxu0 0
    %341 = vmatpush2.bf16.msra.mxu0 0
    %342 = vmatprep.subr.bf16.mxu0 0
    %343 = vmatpush2.bf16.msra.mxu0 0
    %344 = vmatprep.mubr.bf16.mxu0 0
    %345 = vmatmul.mubr.bf16.gmra.mxu0 %v103
    %v346 = vpop.f32.mrf.mxu0
    %v347 = vadd.f32 %v46, %v346
    %v348 = vpop.f32.mrf.mxu0
    %v349 = vadd.f32 %v46, %v348
    %v350 = vpop.f32.mrf.mxu0
    %v351 = vpop.f32.mrf.mxu0
    %352 = vdwg.mxu0
    %353 = vmatprep.subr.bf16.mxu0 0
    %354 = vmatpush1.bf16.msra.mxu0 0
    %355 = vmatprep.subr.bf16.mxu0 0
    %356 = vmatpush1.bf16.msra.mxu0 0
    %357 = vmatprep.subr.bf16.mxu0 0
    %358 = vmatpush1.bf16.msra.mxu0 0
    %359 = vmatprep.subr.bf16.mxu0 0
    %360 = vmatpush1.bf16.msra.mxu0 0
    %361 = vmatprep.subr.bf16.mxu0 0
    %362 = vmatpush1.bf16.msra.mxu0 0
    %363 = vmatprep.subr.bf16.mxu0 0
    %364 = vmatpush1.bf16.msra.mxu0 0
    %365 = vmatprep.subr.bf16.mxu0 0
    %366 = vmatpush1.bf16.msra.mxu0 0
    %367 = vmatprep.subr.bf16.mxu0 %v143
    %368 = vmatpush1.bf16.msra.mxu0 %v140
    %369 = vmatprep.subr.bf16.mxu0 0
    %370 = vmatpush2.bf16.msra.mxu0 0
    %371 = vmatprep.subr.bf16.mxu0 0
    %372 = vmatpush2.bf16.msra.mxu0 0
    %373 = vmatprep.subr.bf16.mxu0 0
    %374 = vmatpush2.bf16.msra.mxu0 0
    %375 = vmatprep.subr.bf16.mxu0 0
    %376 = vmatpush2.bf16.msra.mxu0 0
    %377 = vmatprep.subr.bf16.mxu0 0
    %378 = vmatpush2.bf16.msra.mxu0 0
    %379 = vmatprep.subr.bf16.mxu0 0
    %380 = vmatpush2.bf16.msra.mxu0 0
    %381 = vmatprep.subr.bf16.mxu0 0
    %382 = vmatpush2.bf16.msra.mxu0 0
    %383 = vmatprep.subr.bf16.mxu0 0
    %384 = vmatpush2.bf16.msra.mxu0 0
    %385 = vmatprep.mubr.bf16.mxu0 0
    %386 = vmatmul.mubr.bf16.gmra.mxu0 %v103
    %v387 = vpop.f32.mrf.mxu0
    %v388 = vadd.f32 %v46, %v387
    %v389 = vpop.f32.mrf.mxu0
    %v390 = vadd.f32 %v46, %v389
    %v391 = vpop.f32.mrf.mxu0
    %v392 = vpop.f32.mrf.mxu0
    %393 = vdwg.mxu0
    %394 = vmatprep.subr.bf16.mxu0 0
    %395 = vmatpush1.bf16.msra.mxu0 0
    %396 = vmatprep.subr.bf16.mxu0 0
    %397 = vmatpush1.bf16.msra.mxu0 0
    %398 = vmatprep.subr.bf16.mxu0 0
    %399 = vmatpush1.bf16.msra.mxu0 0
    %400 = vmatprep.subr.bf16.mxu0 0
    %401 = vmatpush1.bf16.msra.mxu0 0
    %402 = vmatprep.subr.bf16.mxu0 0
    %403 = vmatpush1.bf16.msra.mxu0 0
    %404 = vmatprep.subr.bf16.mxu0 0
    %405 = vmatpush1.bf16.msra.mxu0 0
    %406 = vmatprep.subr.bf16.mxu0 0
    %407 = vmatpush1.bf16.msra.mxu0 0
    %408 = vmatprep.subr.bf16.mxu0 0
    %409 = vmatpush1.bf16.msra.mxu0 %v146
    %410 = vmatprep.subr.bf16.mxu0 0
    %411 = vmatpush2.bf16.msra.mxu0 0
    %412 = vmatprep.subr.bf16.mxu0 0
    %413 = vmatpush2.bf16.msra.mxu0 0
    %414 = vmatprep.subr.bf16.mxu0 0
    %415 = vmatpush2.bf16.msra.mxu0 0
    %416 = vmatprep.subr.bf16.mxu0 0
    %417 = vmatpush2.bf16.msra.mxu0 0
    %418 = vmatprep.subr.bf16.mxu0 0
    %419 = vmatpush2.bf16.msra.mxu0 0
    %420 = vmatprep.subr.bf16.mxu0 0
    %421 = vmatpush2.bf16.msra.mxu0 0
    %422 = vmatprep.subr.bf16.mxu0 0
    %423 = vmatpush2.bf16.msra.mxu0 0
    %424 = vmatprep.subr.bf16.mxu0 0
    %425 = vmatpush2.bf16.msra.mxu0 0
    %426 = vmatprep.mubr.bf16.mxu0 0
    %427 = vmatmul.mubr.bf16.gmra.mxu0 %v103
    %v428 = vpop.f32.mrf.mxu0
    %v429 = vadd.f32 %v46, %v428
    %v430 = vpop.f32.mrf.mxu0
    %v431 = vpop.f32.mrf.mxu0
    %v432 = vpop.f32.mrf.mxu0
    %433 = vdwg.mxu0
    %v434 = vmax.f32 %v183, 0.0
    %v435 = vmax.f32 %v185, 0.0
    %v436 = vmax.f32 %v224, 0.0
    %v437 = vmax.f32 %v226, 0.0
    %v438 = vmax.f32 %v265, 0.0
    %v439 = vmax.f32 %v267, 0.0
    %v440 = vmax.f32 %v306, 0.0
    %v441 = vmax.f32 %v308, 0.0
    %v442 = vmax.f32 %v347, 0.0
    %v443 = vmax.f32 %v349, 0.0
    %v444 = vmax.f32 %v388, 0.0
    %v445 = vmax.f32 %v390, 0.0
    %v446 = vmax.f32 %v429, 0.0
    %v447 = vpack.c.bf16 %v434, %v434
    %v448 = vpack.c.bf16 %v435, %v435
    %v449 = vpack.c.bf16 %v436, %v436
    %v450 = vpack.c.bf16 %v437, %v437
    %v451 = vpack.c.bf16 %v438, %v438
    %v452 = vpack.c.bf16 %v439, %v439
    %v453 = vpack.c.bf16 %v440, %v440
    %v454 = vpack.c.bf16 %v441, %v441
    %v455 = vpack.c.bf16 %v442, %v442
    %v456 = vpack.c.bf16 %v443, %v443
    %v457 = vpack.c.bf16 %v444, %v444
    %v458 = vpack.c.bf16 %v445, %v445
    %v459 = vpack.c.bf16 %v446, %v446
    %v473 = vunpack.c.l.b16 %v447
    %v474 = vunpack.c.l.b16 %v448
    %v475 = vunpack.c.l.b16 %v449
    %v476 = vunpack.c.l.b16 %v450
    %v477 = vunpack.c.l.b16 %v451
    %v478 = vunpack.c.l.b16 %v452
    %v479 = vunpack.c.l.b16 %v453
    %v480 = vunpack.c.l.b16 %v454
    %v481 = vunpack.c.l.b16 %v455
    %v482 = vunpack.c.l.b16 %v456
    %v483 = vunpack.c.l.b16 %v457
    %v484 = vunpack.c.l.b16 %v458
    %v485 = vunpack.c.l.b16 %v459
    %v486 = vpack.c.b16 %v474, %v473
    %v487 = vpack.c.b16 %v476, %v475
    %v488 = vpack.c.b16 %v478, %v477
    %v489 = vpack.c.b16 %v480, %v479
    %v490 = vpack.c.b16 %v482, %v481
    %v491 = vpack.c.b16 %v484, %v483
    %v492 = vpack.c.b16 %v485, %v485
    %500 = vst [vmem:[%s3] sm:$0xff] %v486
    %501 = vst [vmem:[%s3 + $0x8] sm:$0xff] %v487
    %502 = vst [vmem:[%s3 + $0x10] sm:$0xff] %v488
    %503 = vst [vmem:[%s3 + $0x18] sm:$0xff] %v489
    %504 = vst [vmem:[%s3 + $0x20] sm:$0xff] %v490
    %505 = vst [vmem:[%s3 + $0x28] sm:$0xff] %v491
    %vm506 = vcmask 257024
    %507 = vst.msk [vmem:[%s3 + $0x30] sm:$0xf] %vm506, %v492
    // Predicated region
    $region18: #{conv_encoder_forward.5} parent=1 // pred_check
      _
    $region19: #{conv_encoder_forward.5} parent=1 // pred_check_branch
      %509 = sbr.rel (0) target = $region21
    $region20: #{conv_encoder_forward.5} parent=1 // pred_region
      _
    $region21: #{conv_encoder_forward.5} parent=1 // pred_fallthru
      _
    // Predicated region
    $region22: #{conv_encoder_forward.5} parent=1 // pred_check
      _
    $region23: #{conv_encoder_forward.5} parent=1 // pred_check_branch
      %511 = sbr.rel (0) target = $region25
    $region24: #{conv_encoder_forward.5} parent=1 // pred_region
      _
    $region25: #{conv_encoder_forward.5} parent=1 // pred_fallthru
      _
    %512 = vsyncpa [#allocation3], 1

// kernel: conv_encoder_forward.6
$region0: #{conv_encoder_forward.6}
  #allocation0 [shape = 'u32[]', space=smem, size = 0x4, offset = 0x4, fixed_abs, tag = 'smem constant byte address 0x4 - core index']
  #allocation1 [shape = 'u32[144,128]{1,0:T(1,128)}', space=vmem, size = 0x12000, scoped, tag = 'internal scratch']
  %s0 = inlined_call_operand.vmem [shape: bf16[32,128], index: 0, kind: input, shape index: {}]
  %s1 = inlined_call_operand.vmem [shape: bf16[128,392], index: 1, kind: input, shape index: {}]
  %s2 = inlined_call_operand.vmem [shape: f32[32,1], index: 2, kind: input, shape index: {}]
  %s3 = inlined_call_operand.vmem [shape: bf16[32,392], index: 3, kind: output, shape index: {}]
  %s4 = sld [smem:[#allocation0]]
  $region22: #{conv_encoder_forward.6} parent=0
    _
  %s6 = ssub.s32 1, %s4
  %s7 = scalar_select 0, %s6, %s4
  // Predicated region
  $region2: #{conv_encoder_forward.6} parent=0 // pred_check
    _
  $region3: #{conv_encoder_forward.6} parent=0 // pred_check_branch
    %9 = sbr.rel (0) target = $region5
  $region4: #{conv_encoder_forward.6} parent=0 // pred_region
    _
  $region5: #{conv_encoder_forward.6} parent=0 // pred_fallthru
    _
  // Predicated region
  $region6: #{conv_encoder_forward.6} parent=0 // pred_check
    _
  $region7: #{conv_encoder_forward.6} parent=0 // pred_check_branch
    %11 = sbr.rel (0) target = $region9
  $region8: #{conv_encoder_forward.6} parent=0 // pred_region
    _
  $region9: #{conv_encoder_forward.6} parent=0 // pred_fallthru
    _
  // Predicated region
  $region10: #{conv_encoder_forward.6} parent=0 // pred_check
    _
  $region11: #{conv_encoder_forward.6} parent=0 // pred_check_branch
    %13 = sbr.rel (0) target = $region13
  $region12: #{conv_encoder_forward.6} parent=0 // pred_region
    _
  $region13: #{conv_encoder_forward.6} parent=0 // pred_fallthru
    _
  %v15 = vld [vmem:[%s0] sm:$0xf]
  %v16 = vld [vmem:[%s0 + $0x4] sm:$0xf]
  %v17 = vld [vmem:[%s0 + $0x8] sm:$0xf]
  %v18 = vld [vmem:[%s0 + $0xc] sm:$0xf]
  %v19 = vld [vmem:[%s1] sm:$0xff]
  %v20 = vld [vmem:[%s1 + $0x8] sm:$0xff]
  %v21 = vld [vmem:[%s1 + $0x10] sm:$0xff]
  %v22 = vld [vmem:[%s1 + $0x18] sm:$0xff]
  %v23 = vld [vmem:[%s1 + $0x20] sm:$0xff]
  %v24 = vld [vmem:[%s1 + $0x28] sm:$0xff]
  %v25 = vld [vmem:[%s1 + $0x30] sm:$0xff]
  %v26 = vld [vmem:[%s1 + $0x38] sm:$0xff]
  %v27 = vld [vmem:[%s1 + $0x40] sm:$0xff]
  %v28 = vld [vmem:[%s1 + $0x48] sm:$0xff]
  %v29 = vld [vmem:[%s1 + $0x50] sm:$0xff]
  %v30 = vld [vmem:[%s1 + $0x58] sm:$0xff]
  %v31 = vld [vmem:[%s1 + $0x60] sm:$0xff]
  %v32 = vld [vmem:[%s1 + $0x68] sm:$0xff]
  %v33 = vld [vmem:[%s1 + $0x70] sm:$0xff]
  %v34 = vld [vmem:[%s1 + $0x78] sm:$0xff]
  %v35 = vld [vmem:[%s1 + $0x80] sm:$0xff]
  %v36 = vld [vmem:[%s1 + $0x88] sm:$0xff]
  %v37 = vld [vmem:[%s1 + $0x90] sm:$0xff]
  %v38 = vld [vmem:[%s1 + $0x98] sm:$0xff]
  %v39 = vld [vmem:[%s1 + $0xa0] sm:$0xff]
  %v40 = vld [vmem:[%s1 + $0xa8] sm:$0xff]
  %v41 = vld [vmem:[%s1 + $0xb0] sm:$0xff]
  %v42 = vld [vmem:[%s1 + $0xb8] sm:$0xff]
  %v43 = vld [vmem:[%s1 + $0xc0] sm:$0xff]
  %v44 = vld [vmem:[%s1 + $0xc8] sm:$0xff]
  %v45 = vld [vmem:[%s1 + $0xd0] sm:$0xff]
  %v46 = vld [vmem:[%s1 + $0xd8] sm:$0xff]
  %v47 = vld [vmem:[%s1 + $0xe0] sm:$0xff]
  %v48 = vld [vmem:[%s1 + $0xe8] sm:$0xff]
  %v49 = vld [vmem:[%s1 + $0xf0] sm:$0xff]
  %v50 = vld [vmem:[%s1 + $0xf8] sm:$0xff]
  %v51 = vld [vmem:[%s2] sm:$0xff]
  %v52 = vld [vmem:[%s2 + $0x8] sm:$0xff]
  %v53 = vld [vmem:[%s2 + $0x10] sm:$0xff]
  %v54 = vld [vmem:[%s2 + $0x18] sm:$0xff]
  %56 = vset.pattern.permute.xlu0 0
  %57 = vperm.xlu0 %56, %v51
  %v58 = vpop.permute.xlu0 %57
  %61 = vset.pattern.permute.xlu0 0
  %62 = vperm.xlu0 %61, %v52
  %v63 = vpop.permute.xlu0 %62
  %66 = vset.pattern.permute.xlu0 0
  %67 = vperm.xlu0 %66, %v53
  %v68 = vpop.permute.xlu0 %67
  %71 = vset.pattern.permute.xlu0 0
  %72 = vperm.xlu0 %71, %v54
  %v73 = vpop.permute.xlu0 %72
  %v79 = vunpack.c.l.b16 %v15
  %v80 = vunpack.c.l.b16 %v16
  %v81 = vunpack.c.l.b16 %v17
  %v82 = vunpack.c.l.b16 %v18
  %v83 = vpack.c.b16 %v80, %v79
  %v84 = vpack.c.b16 %v82, %v81
  %v119 = vunpack.c.l.b16 %v19
  %v120 = vunpack.c.h.b16 %v19
  %v121 = vunpack.c.l.b16 %v20
  %v122 = vunpack.c.h.b16 %v20
  %v123 = vunpack.c.l.b16 %v21
  %v124 = vunpack.c.h.b16 %v21
  %v125 = vunpack.c.l.b16 %v22
  %v126 = vunpack.c.h.b16 %v22
  %v127 = vunpack.c.l.b16 %v23
  %v128 = vunpack.c.h.b16 %v23
  %v129 = vunpack.c.l.b16 %v24
  %v130 = vunpack.c.h.b16 %v24
  %v131 = vunpack.c.l.b16 %v25
  %v132 = vunpack.c.h.b16 %v25
  %v133 = vunpack.c.l.b16 %v26
  %v134 = vunpack.c.h.b16 %v26
  %v135 = vunpack.c.l.b16 %v27
  %v136 = vunpack.c.h.b16 %v27
  %v137 = vunpack.c.l.b16 %v28
  %v138 = vunpack.c.h.b16 %v28
  %v139 = vunpack.c.l.b16 %v29
  %v140 = vunpack.c.h.b16 %v29
  %v141 = vunpack.c.l.b16 %v30
  %v142 = vunpack.c.h.b16 %v30
  %v143 = vunpack.c.l.b16 %v31
  %v144 = vunpack.c.h.b16 %v31
  %v145 = vunpack.c.l.b16 %v32
  %v146 = vunpack.c.h.b16 %v32
  %v147 = vunpack.c.l.b16 %v33
  %v148 = vunpack.c.h.b16 %v33
  %v149 = vunpack.c.l.b16 %v34
  %v150 = vunpack.c.h.b16 %v34
  %v151 = vunpack.c.l.b16 %v35
  %v152 = vunpack.c.h.b16 %v35
  %v153 = vunpack.c.l.b16 %v36
  %v154 = vunpack.c.h.b16 %v36
  %v155 = vunpack.c.l.b16 %v37
  %v156 = vunpack.c.h.b16 %v37
  %v157 = vunpack.c.l.b16 %v38
  %v158 = vunpack.c.h.b16 %v38
  %v159 = vunpack.c.l.b16 %v39
  %v160 = vunpack.c.h.b16 %v39
  %v161 = vunpack.c.l.b16 %v40
  %v162 = vunpack.c.h.b16 %v40
  %v163 = vunpack.c.l.b16 %v41
  %v164 = vunpack.c.h.b16 %v41
  %v165 = vunpack.c.l.b16 %v42
  %v166 = vunpack.c.h.b16 %v42
  %v167 = vunpack.c.l.b16 %v43
  %v168 = vunpack.c.h.b16 %v43
  %v169 = vunpack.c.l.b16 %v44
  %v170 = vunpack.c.h.b16 %v44
  %v171 = vunpack.c.l.b16 %v45
  %v172 = vunpack.c.h.b16 %v45
  %v173 = vunpack.c.l.b16 %v46
  %v174 = vunpack.c.h.b16 %v46
  %v175 = vunpack.c.l.b16 %v47
  %v176 = vunpack.c.h.b16 %v47
  %v177 = vunpack.c.l.b16 %v48
  %v178 = vunpack.c.h.b16 %v48
  %v179 = vunpack.c.l.b16 %v49
  %v180 = vunpack.c.h.b16 %v49
  %v181 = vunpack.c.l.b16 %v50
  %v182 = vunpack.c.h.b16 %v50
  %v183 = vpack.c.b16 %v123, %v119
  %v184 = vpack.c.b16 %v124, %v120
  %v185 = vpack.c.b16 %v125, %v121
  %v186 = vpack.c.b16 %v126, %v122
  %v187 = vpack.c.b16 %v131, %v127
  %v188 = vpack.c.b16 %v132, %v128
  %v189 = vpack.c.b16 %v133, %v129
  %v190 = vpack.c.b16 %v134, %v130
  %v191 = vpack.c.b16 %v139, %v135
  %v192 = vpack.c.b16 %v140, %v136
  %v193 = vpack.c.b16 %v141, %v137
  %v194 = vpack.c.b16 %v142, %v138
  %v195 = vpack.c.b16 %v147, %v143
  %v196 = vpack.c.b16 %v148, %v144
  %v197 = vpack.c.b16 %v149, %v145
  %v198 = vpack.c.b16 %v150, %v146
  %v199 = vpack.c.b16 %v155, %v151
  %v200 = vpack.c.b16 %v156, %v152
  %v201 = vpack.c.b16 %v157, %v153
  %v202 = vpack.c.b16 %v158, %v154
  %v203 = vpack.c.b16 %v163, %v159
  %v204 = vpack.c.b16 %v164, %v160
  %v205 = vpack.c.b16 %v165, %v161
  %v206 = vpack.c.b16 %v166, %v162
  %v207 = vpack.c.b16 %v171, %v167
  %v208 = vpack.c.b16 %v172, %v168
  %v209 = vpack.c.b16 %v173, %v169
  %v210 = vpack.c.b16 %v174, %v170
  %v211 = vpack.c.b16 %v179, %v175
  %v212 = vpack.c.b16 %v180, %v176
  %v213 = vpack.c.b16 %v181, %v177
  %v214 = vpack.c.b16 %v182, %v178
  %247 = vmatprep.subr.bf16.mxu0 %v212
  %248 = vmatpush1.bf16.msra.mxu0 %v211
  %249 = vmatprep.subr.bf16.mxu0 %v208
  %250 = vmatpush1.bf16.msra.mxu0 %v207
  %251 = vmatprep.subr.bf16.mxu0 %v204
  %252 = vmatpush1.bf16.msra.mxu0 %v203
  %253 = vmatprep.subr.bf16.mxu0 %v200
  %254 = vmatpush1.bf16.msra.mxu0 %v199
  %255 = vmatprep.subr.bf16.mxu0 %v196
  %256 = vmatpush1.bf16.msra.mxu0 %v195
  %257 = vmatprep.subr.bf16.mxu0 %v192
  %258 = vmatpush1.bf16.msra.mxu0 %v191
  %259 = vmatprep.subr.bf16.mxu0 %v188
  %260 = vmatpush1.bf16.msra.mxu0 %v187
  %261 = vmatprep.subr.bf16.mxu0 %v184
  %262 = vmatpush1.bf16.msra.mxu0 %v183
  %263 = vmatprep.subr.bf16.mxu0 0
  %264 = vmatpush2.bf16.msra.mxu0 0
  %265 = vmatprep.subr.bf16.mxu0 0
  %266 = vmatpush2.bf16.msra.mxu0 0
  %267 = vmatprep.subr.bf16.mxu0 0
  %268 = vmatpush2.bf16.msra.mxu0 0
  %269 = vmatprep.subr.bf16.mxu0 0
  %270 = vmatpush2.bf16.msra.mxu0 0
  %271 = vmatprep.subr.bf16.mxu0 0
  %272 = vmatpush2.bf16.msra.mxu0 0
  %273 = vmatprep.subr.bf16.mxu0 0
  %274 = vmatpush2.bf16.msra.mxu0 0
  %275 = vmatprep.subr.bf16.mxu0 0
  %276 = vmatpush2.bf16.msra.mxu0 0
  %277 = vmatprep.subr.bf16.mxu0 0
  %278 = vmatpush2.bf16.msra.mxu0 0
  %279 = vmatprep.mubr.bf16.mxu0 0
  %280 = vmatmul.mubr.bf16.gmra.mxu0 %v83
  %v281 = vpop.f32.mrf.mxu0
  %v282 = vadd.f32 %v58, %v281
  %v283 = vpop.f32.mrf.mxu0
  %v284 = vadd.f32 %v58, %v283
  %v285 = vpop.f32.mrf.mxu0
  %v286 = vadd.f32 %v63, %v285
  %v287 = vpop.f32.mrf.mxu0
  %v288 = vadd.f32 %v63, %v287
  %289 = vmatprep.mubr.bf16.mxu0 0
  %290 = vmatmul.mubr.bf16.gmra.mxu0 %v84
  %v291 = vpop.f32.mrf.mxu0
  %v292 = vadd.f32 %v68, %v291
  %v293 = vpop.f32.mrf.mxu0
  %v294 = vadd.f32 %v68, %v293
  %v295 = vpop.f32.mrf.mxu0
  %v296 = vadd.f32 %v73, %v295
  %v297 = vpop.f32.mrf.mxu0
  %v298 = vadd.f32 %v73, %v297
  %299 = vdwg.mxu0
  %300 = vmatprep.subr.bf16.mxu0 %v214
  %301 = vmatpush1.bf16.msra.mxu0 %v213
  %302 = vmatprep.subr.bf16.mxu0 %v210
  %303 = vmatpush1.bf16.msra.mxu0 %v209
  %304 = vmatprep.subr.bf16.mxu0 %v206
  %305 = vmatpush1.bf16.msra.mxu0 %v205
  %306 = vmatprep.subr.bf16.mxu0 %v202
  %307 = vmatpush1.bf16.msra.mxu0 %v201
  %308 = vmatprep.subr.bf16.mxu0 %v198
  %309 = vmatpush1.bf16.msra.mxu0 %v197
  %310 = vmatprep.subr.bf16.mxu0 %v194
  %311 = vmatpush1.bf16.msra.mxu0 %v193
  %312 = vmatprep.subr.bf16.mxu0 %v190
  %313 = vmatpush1.bf16.msra.mxu0 %v189
  %314 = vmatprep.subr.bf16.mxu0 %v186
  %315 = vmatpush1.bf16.msra.mxu0 %v185
  %316 = vmatprep.subr.bf16.mxu0 0
  %317 = vmatpush2.bf16.msra.mxu0 0
  %318 = vmatprep.subr.bf16.mxu0 0
  %319 = vmatpush2.bf16.msra.mxu0 0
  %320 = vmatprep.subr.bf16.mxu0 0
  %321 = vmatpush2.bf16.msra.mxu0 0
  %322 = vmatprep.subr.bf16.mxu0 0
  %323 = vmatpush2.bf16.msra.mxu0 0
  %324 = vmatprep.subr.bf16.mxu0 0
  %325 = vmatpush2.bf16.msra.mxu0 0
  %326 = vmatprep.subr.bf16.mxu0 0
  %327 = vmatpush2.bf16.msra.mxu0 0
  %328 = vmatprep.subr.bf16.mxu0 0
  %329 = vmatpush2.bf16.msra.mxu0 0
  %330 = vmatprep.subr.bf16.mxu0 0
  %331 = vmatpush2.bf16.msra.mxu0 0
  %332 = vmatprep.mubr.bf16.mxu0 0
  %333 = vmatmul.mubr.bf16.gmra.mxu0 %v83
  %v334 = vpop.f32.mrf.mxu0
  %v335 = vadd.f32 %v58, %v334
  %v336 = vpop.f32.mrf.mxu0
  %v337 = vadd.f32 %v58, %v336
  %v338 = vpop.f32.mrf.mxu0
  %v339 = vadd.f32 %v63, %v338
  %v340 = vpop.f32.mrf.mxu0
  %v341 = vadd.f32 %v63, %v340
  %342 = vmatprep.mubr.bf16.mxu0 0
  %343 = vmatmul.mubr.bf16.gmra.mxu0 %v84
  %v344 = vpop.f32.mrf.mxu0
  %v345 = vadd.f32 %v68, %v344
  %v346 = vpop.f32.mrf.mxu0
  %v347 = vadd.f32 %v68, %v346
  %v348 = vpop.f32.mrf.mxu0
  %v349 = vadd.f32 %v73, %v348
  %v350 = vpop.f32.mrf.mxu0
  %v351 = vadd.f32 %v73, %v350
  %352 = vdwg.mxu0
  %v353 = vmax.f32 %v282, 0.0
  %v354 = vmax.f32 %v284, 0.0
  %v355 = vmax.f32 %v335, 0.0
  %v356 = vmax.f32 %v337, 0.0
  %v357 = vmax.f32 %v286, 0.0
  %v358 = vmax.f32 %v288, 0.0
  %v359 = vmax.f32 %v339, 0.0
  %v360 = vmax.f32 %v341, 0.0
  %v361 = vmax.f32 %v292, 0.0
  %v362 = vmax.f32 %v294, 0.0
  %v363 = vmax.f32 %v345, 0.0
  %v364 = vmax.f32 %v347, 0.0
  %v365 = vmax.f32 %v296, 0.0
  %v366 = vmax.f32 %v298, 0.0
  %v367 = vmax.f32 %v349, 0.0
  %v368 = vmax.f32 %v351, 0.0
  %v369 = vpack.c.bf16 %v357, %v353
  %v370 = vpack.c.bf16 %v358, %v354
  %v371 = vpack.c.bf16 %v359, %v355
  %v372 = vpack.c.bf16 %v360, %v356
  %v373 = vpack.c.bf16 %v365, %v361
  %v374 = vpack.c.bf16 %v366, %v362
  %v375 = vpack.c.bf16 %v367, %v363
  %v376 = vpack.c.bf16 %v368, %v364
  %v385 = vunpack.c.l.b16 %v369
  %v386 = vunpack.c.l.b16 %v370
  %v387 = vunpack.c.l.b16 %v371
  %v388 = vunpack.c.l.b16 %v372
  %v389 = vunpack.c.h.b16 %v369
  %v390 = vunpack.c.h.b16 %v370
  %v391 = vunpack.c.h.b16 %v371
  %v392 = vunpack.c.h.b16 %v372
  %v393 = vunpack.c.l.b16 %v373
  %v394 = vunpack.c.l.b16 %v374
  %v395 = vunpack.c.l.b16 %v375
  %v396 = vunpack.c.l.b16 %v376
  %v397 = vunpack.c.h.b16 %v373
  %v398 = vunpack.c.h.b16 %v374
  %v399 = vunpack.c.h.b16 %v375
  %v400 = vunpack.c.h.b16 %v376
  %v401 = vpack.c.b16 %v386, %v385
  %v402 = vpack.c.b16 %v388, %v387
  %v403 = vpack.c.b16 %v390, %v389
  %v404 = vpack.c.b16 %v392, %v391
  %v405 = vpack.c.b16 %v394, %v393
  %v406 = vpack.c.b16 %v396, %v395
  %v407 = vpack.c.b16 %v398, %v397
  %v408 = vpack.c.b16 %v400, %v399
  %417 = vst [vmem:[%s3] sm:$0xff] %v401
  %vm418 = vcmask 1043456
  %vm419 = vcmask 64516
  %vm420 = vmor %vm419, %vm418
  %421 = vst.msk [vmem:[%s3 + $0x8] sm:$0xff] %vm420, %v402
  %422 = vst [vmem:[%s3 + $0x10] sm:$0xff] %v403
  %423 = vst.msk [vmem:[%s3 + $0x18] sm:$0xff] %vm420, %v404
  %424 = vst [vmem:[%s3 + $0x20] sm:$0xff] %v405
  %425 = vst.msk [vmem:[%s3 + $0x28] sm:$0xff] %vm420, %v406
  %426 = vst [vmem:[%s3 + $0x30] sm:$0xff] %v407
  %427 = vst.msk [vmem:[%s3 + $0x38] sm:$0xff] %vm420, %v408
  // Predicated region
  $region14: #{conv_encoder_forward.6} parent=0 // pred_check
    _
  $region15: #{conv_encoder_forward.6} parent=0 // pred_check_branch
    %429 = sbr.rel (0) target = $region17
  $region16: #{conv_encoder_forward.6} parent=0 // pred_region
    _
  $region17: #{conv_encoder_forward.6} parent=0 // pred_fallthru
    _
  // Predicated region
  $region18: #{conv_encoder_forward.6} parent=0 // pred_check
    _
  $region19: #{conv_encoder_forward.6} parent=0 // pred_check_branch
    %431 = sbr.rel (0) target = $region21
  $region20: #{conv_encoder_forward.6} parent=0 // pred_region
    _
  $region21: #{conv_encoder_forward.6} parent=0 // pred_fallthru
    _

// kernel: conv_encoder_forward.7
$region0: #{conv_encoder_forward.7}
  #allocation0 [shape = 'u32[]', space=smem, size = 0x4, offset = 0x4, fixed_abs, tag = 'smem constant byte address 0x4 - core index']
  #allocation1 [shape = 'u32[144,128]{1,0:T(1,128)}', space=vmem, size = 0x12000, scoped, tag = 'internal scratch']
  %s0 = inlined_call_operand.vmem [shape: bf16[64,512], index: 0, kind: input, shape index: {}]
  %s1 = inlined_call_operand.vmem [shape: bf16[512,98], index: 1, kind: input, shape index: {}]
  %s2 = inlined_call_operand.vmem [shape: f32[64,1], index: 2, kind: input, shape index: {}]
  %s3 = inlined_call_operand.vmem [shape: bf16[64,98], index: 3, kind: output, shape index: {}]
  %s4 = sld [smem:[#allocation0]]
  $region22: #{conv_encoder_forward.7} parent=0
    _
  %s6 = ssub.s32 1, %s4
  %s7 = scalar_select 0, %s6, %s4
  // Predicated region
  $region2: #{conv_encoder_forward.7} parent=0 // pred_check
    _
  $region3: #{conv_encoder_forward.7} parent=0 // pred_check_branch
    %9 = sbr.rel (0) target = $region5
  $region4: #{conv_encoder_forward.7} parent=0 // pred_region
    _
  $region5: #{conv_encoder_forward.7} parent=0 // pred_fallthru
    _
  // Predicated region
  $region6: #{conv_encoder_forward.7} parent=0 // pred_check
    _
  $region7: #{conv_encoder_forward.7} parent=0 // pred_check_branch
    %11 = sbr.rel (0) target = $region9
  $region8: #{conv_encoder_forward.7} parent=0 // pred_region
    _
  $region9: #{conv_encoder_forward.7} parent=0 // pred_fallthru
    _
  // Predicated region
  $region10: #{conv_encoder_forward.7} parent=0 // pred_check
    _
  $region11: #{conv_encoder_forward.7} parent=0 // pred_check_branch
    %13 = sbr.rel (0) target = $region13
  $region12: #{conv_encoder_forward.7} parent=0 // pred_region
    _
  $region13: #{conv_encoder_forward.7} parent=0 // pred_fallthru
    _
  %v15 = vld [vmem:[%s0] sm:$0xff]
  %v16 = vld [vmem:[%s0 + $0x8] sm:$0xff]
  %v17 = vld [vmem:[%s0 + $0x10] sm:$0xff]
  %v18 = vld [vmem:[%s0 + $0x18] sm:$0xff]
  %v19 = vld [vmem:[%s0 + $0x20] sm:$0xff]
  %v20 = vld [vmem:[%s0 + $0x28] sm:$0xff]
  %v21 = vld [vmem:[%s0 + $0x30] sm:$0xff]
  %v22 = vld [vmem:[%s0 + $0x38] sm:$0xff]
  %v23 = vld [vmem:[%s0 + $0x40] sm:$0xff]
  %v24 = vld [vmem:[%s0 + $0x48] sm:$0xff]
  %v25 = vld [vmem:[%s0 + $0x50] sm:$0xff]
  %v26 = vld [vmem:[%s0 + $0x58] sm:$0xff]
  %v27 = vld [vmem:[%s0 + $0x60] sm:$0xff]
  %v28 = vld [vmem:[%s0 + $0x68] sm:$0xff]
  %v29 = vld [vmem:[%s0 + $0x70] sm:$0xff]
  %v30 = vld [vmem:[%s0 + $0x78] sm:$0xff]
  %v31 = vld [vmem:[%s1] sm:$0xf]
  %v32 = vld [vmem:[%s1 + $0x4] sm:$0xf]
  %v33 = vld [vmem:[%s1 + $0x8] sm:$0xf]
  %v34 = vld [vmem:[%s1 + $0xc] sm:$0xf]
  %v35 = vld [vmem:[%s1 + $0x10] sm:$0xf]
  %v36 = vld [vmem:[%s1 + $0x14] sm:$0xf]
  %v37 = vld [vmem:[%s1 + $0x18] sm:$0xf]
  %v38 = vld [vmem:[%s1 + $0x1c] sm:$0xf]
  %v39 = vld [vmem:[%s1 + $0x20] sm:$0xf]
  %v40 = vld [vmem:[%s1 + $0x24] sm:$0xf]
  %v41 = vld [vmem:[%s1 + $0x28] sm:$0xf]
  %v42 = vld [vmem:[%s1 + $0x2c] sm:$0xf]
  %v43 = vld [vmem:[%s1 + $0x30] sm:$0xf]
  %v44 = vld [vmem:[%s1 + $0x34] sm:$0xf]
  %v45 = vld [vmem:[%s1 + $0x38] sm:$0xf]
  %v46 = vld [vmem:[%s1 + $0x3c] sm:$0xf]
  %v47 = vld [vmem:[%s1 + $0x40] sm:$0xf]
  %v48 = vld [vmem:[%s1 + $0x44] sm:$0xf]
  %v49 = vld [vmem:[%s1 + $0x48] sm:$0xf]
  %v50 = vld [vmem:[%s1 + $0x4c] sm:$0xf]
  %v51 = vld [vmem:[%s1 + $0x50] sm:$0xf]
  %v52 = vld [vmem:[%s1 + $0x54] sm:$0xf]
  %v53 = vld [vmem:[%s1 + $0x58] sm:$0xf]
  %v54 = vld [vmem:[%s1 + $0x5c] sm:$0xf]
  %v55 = vld [vmem:[%s1 + $0x60] sm:$0xf]
  %v56 = vld [vmem:[%s1 + $0x64] sm:$0xf]
  %v57 = vld [vmem:[%s1 + $0x68] sm:$0xf]
  %v58 = vld [vmem:[%s1 + $0x6c] sm:$0xf]
  %v59 = vld [vmem:[%s1 + $0x70] sm:$0xf]
  %v60 = vld [vmem:[%s1 + $0x74] sm:$0xf]
  %v61 = vld [vmem:[%s1 + $0x78] sm:$0xf]
  %v62 = vld [vmem:[%s1 + $0x7c] sm:$0xf]
  %v63 = vld [vmem:[%s1 + $0x80] sm:$0xf]
  %v64 = vld [vmem:[%s1 + $0x84] sm:$0xf]
  %v65 = vld [vmem:[%s1 + $0x88] sm:$0xf]
  %v66 = vld [vmem:[%s1 + $0x8c] sm:$0xf]
  %v67 = vld [vmem:[%s1 + $0x90] sm:$0xf]
  %v68 = vld [vmem:[%s1 + $0x94] sm:$0xf]
  %v69 = vld [vmem:[%s1 + $0x98] sm:$0xf]
  %v70 = vld [vmem:[%s1 + $0x9c] sm:$0xf]
  %v71 = vld [vmem:[%s1 + $0xa0] sm:$0xf]
  %v72 = vld [vmem:[%s1 + $0xa4] sm:$0xf]
  %v73 = vld [vmem:[%s1 + $0xa8] sm:$0xf]
  %v74 = vld [vmem:[%s1 + $0xac] sm:$0xf]
  %v75 = vld [vmem:[%s1 + $0xb0] sm:$0xf]
  %v76 = vld [vmem:[%s1 + $0xb4] sm:$0xf]
  %v77 = vld [vmem:[%s1 + $0xb8] sm:$0xf]
  %v78 = vld [vmem:[%s1 + $0xbc] sm:$0xf]
  %v79 = vld [vmem:[%s1 + $0xc0] sm:$0xf]
  %v80 = vld [vmem:[%s1 + $0xc4] sm:$0xf]
  %v81 = vld [vmem:[%s1 + $0xc8] sm:$0xf]
  %v82 = vld [vmem:[%s1 + $0xcc] sm:$0xf]
  %v83 = vld [vmem:[%s1 + $0xd0] sm:$0xf]
  %v84 = vld [vmem:[%s1 + $0xd4] sm:$0xf]
  %v85 = vld [vmem:[%s1 + $0xd8] sm:$0xf]
  %v86 = vld [vmem:[%s1 + $0xdc] sm:$0xf]
  %v87 = vld [vmem:[%s1 + $0xe0] sm:$0xf]
  %v88 = vld [vmem:[%s1 + $0xe4] sm:$0xf]
  %v89 = vld [vmem:[%s1 + $0xe8] sm:$0xf]
  %v90 = vld [vmem:[%s1 + $0xec] sm:$0xf]
  %v91 = vld [vmem:[%s1 + $0xf0] sm:$0xf]
  %v92 = vld [vmem:[%s1 + $0xf4] sm:$0xf]
  %v93 = vld [vmem:[%s1 + $0xf8] sm:$0xf]
  %v94 = vld [vmem:[%s1 + $0xfc] sm:$0xf]
  %v95 = vld [vmem:[%s2] sm:$0xff]
  %v96 = vld [vmem:[%s2 + $0x8] sm:$0xff]
  %v97 = vld [vmem:[%s2 + $0x10] sm:$0xff]
  %v98 = vld [vmem:[%s2 + $0x18] sm:$0xff]
  %v99 = vld [vmem:[%s2 + $0x20] sm:$0xff]
  %v100 = vld [vmem:[%s2 + $0x28] sm:$0xff]
  %v101 = vld [vmem:[%s2 + $0x30] sm:$0xff]
  %v102 = vld [vmem:[%s2 + $0x38] sm:$0xff]
  %104 = vset.pattern.permute.xlu0 0
  %105 = vperm.xlu0 %104, %v95
  %v106 = vpop.permute.xlu0 %105
  %109 = vset.pattern.permute.xlu0 0
  %110 = vperm.xlu0 %109, %v96
  %v111 = vpop.permute.xlu0 %110
  %114 = vset.pattern.permute.xlu0 0
  %115 = vperm.xlu0 %114, %v97
  %v116 = vpop.permute.xlu0 %115
  %119 = vset.pattern.permute.xlu0 0
  %120 = vperm.xlu0 %119, %v98
  %v121 = vpop.permute.xlu0 %120
  %124 = vset.pattern.permute.xlu0 0
  %125 = vperm.xlu0 %124, %v99
  %v126 = vpop.permute.xlu0 %125
  %129 = vset.pattern.permute.xlu0 0
  %130 = vperm.xlu0 %129, %v100
  %v131 = vpop.permute.xlu0 %130
  %134 = vset.pattern.permute.xlu0 0
  %135 = vperm.xlu0 %134, %v101
  %v136 = vpop.permute.xlu0 %135
  %139 = vset.pattern.permute.xlu0 0
  %140 = vperm.xlu0 %139, %v102
  %v141 = vpop.permute.xlu0 %140
  %v159 = vunpack.c.l.b16 %v15
  %v160 = vunpack.c.h.b16 %v15
  %v161 = vunpack.c.l.b16 %v16
  %v162 = vunpack.c.h.b16 %v16
  %v163 = vunpack.c.l.b16 %v17
  %v164 = vunpack.c.h.b16 %v17
  %v165 = vunpack.c.l.b16 %v18
  %v166 = vunpack.c.h.b16 %v18
  %v167 = vunpack.c.l.b16 %v19
  %v168 = vunpack.c.h.b16 %v19
  %v169 = vunpack.c.l.b16 %v20
  %v170 = vunpack.c.h.b16 %v20
  %v171 = vunpack.c.l.b16 %v21
  %v172 = vunpack.c.h.b16 %v21
  %v173 = vunpack.c.l.b16 %v22
  %v174 = vunpack.c.h.b16 %v22
  %v175 = vunpack.c.l.b16 %v23
  %v176 = vunpack.c.h.b16 %v23
  %v177 = vunpack.c.l.b16 %v24
  %v178 = vunpack.c.h.b16 %v24
  %v179 = vunpack.c.l.b16 %v25
  %v180 = vunpack.c.h.b16 %v25
  %v181 = vunpack.c.l.b16 %v26
  %v182 = vunpack.c.h.b16 %v26
  %v183 = vunpack.c.l.b16 %v27
  %v184 = vunpack.c.h.b16 %v27
  %v185 = vunpack.c.l.b16 %v28
  %v186 = vunpack.c.h.b16 %v28
  %v187 = vunpack.c.l.b16 %v29
  %v188 = vunpack.c.h.b16 %v29
  %v189 = vunpack.c.l.b16 %v30
  %v190 = vunpack.c.h.b16 %v30
  %v191 = vpack.c.b16 %v163, %v159
  %v192 = vpack.c.b16 %v164, %v160
  %v193 = vpack.c.b16 %v165, %v161
  %v194 = vpack.c.b16 %v166, %v162
  %v195 = vpack.c.b16 %v171, %v167
  %v196 = vpack.c.b16 %v172, %v168
  %v197 = vpack.c.b16 %v173, %v169
  %v198 = vpack.c.b16 %v174, %v170
  %v199 = vpack.c.b16 %v179, %v175
  %v200 = vpack.c.b16 %v180, %v176
  %v201 = vpack.c.b16 %v181, %v177
  %v202 = vpack.c.b16 %v182, %v178
  %v203 = vpack.c.b16 %v187, %v183
  %v204 = vpack.c.b16 %v188, %v184
  %v205 = vpack.c.b16 %v189, %v185
  %v206 = vpack.c.b16 %v190, %v186
  %v287 = vunpack.c.l.b16 %v31
  %v288 = vunpack.c.l.b16 %v32
  %v289 = vunpack.c.l.b16 %v33
  %v290 = vunpack.c.l.b16 %v34
  %v291 = vunpack.c.l.b16 %v35
  %v292 = vunpack.c.l.b16 %v36
  %v293 = vunpack.c.l.b16 %v37
  %v294 = vunpack.c.l.b16 %v38
  %v295 = vunpack.c.l.b16 %v39
  %v296 = vunpack.c.l.b16 %v40
  %v297 = vunpack.c.l.b16 %v41
  %v298 = vunpack.c.l.b16 %v42
  %v299 = vunpack.c.l.b16 %v43
  %v300 = vunpack.c.l.b16 %v44
  %v301 = vunpack.c.l.b16 %v45
  %v302 = vunpack.c.l.b16 %v46
  %v303 = vunpack.c.l.b16 %v47
  %v304 = vunpack.c.l.b16 %v48
  %v305 = vunpack.c.l.b16 %v49
  %v306 = vunpack.c.l.b16 %v50
  %v307 = vunpack.c.l.b16 %v51
  %v308 = vunpack.c.l.b16 %v52
  %v309 = vunpack.c.l.b16 %v53
  %v310 = vunpack.c.l.b16 %v54
  %v311 = vunpack.c.l.b16 %v55
  %v312 = vunpack.c.l.b16 %v56
  %v313 = vunpack.c.l.b16 %v57
  %v314 = vunpack.c.l.b16 %v58
  %v315 = vunpack.c.l.b16 %v59
  %v316 = vunpack.c.l.b16 %v60
  %v317 = vunpack.c.l.b16 %v61
  %v318 = vunpack.c.l.b16 %v62
  %v319 = vunpack.c.l.b16 %v63
  %v320 = vunpack.c.l.b16 %v64
  %v321 = vunpack.c.l.b16 %v65
  %v322 = vunpack.c.l.b16 %v66
  %v323 = vunpack.c.l.b16 %v67
  %v324 = vunpack.c.l.b16 %v68
  %v325 = vunpack.c.l.b16 %v69
  %v326 = vunpack.c.l.b16 %v70
  %v327 = vunpack.c.l.b16 %v71
  %v328 = vunpack.c.l.b16 %v72
  %v329 = vunpack.c.l.b16 %v73
  %v330 = vunpack.c.l.b16 %v74
  %v331 = vunpack.c.l.b16 %v75
  %v332 = vunpack.c.l.b16 %v76
  %v333 = vunpack.c.l.b16 %v77
  %v334 = vunpack.c.l.b16 %v78
  %v335 = vunpack.c.l.b16 %v79
  %v336 = vunpack.c.l.b16 %v80
  %v337 = vunpack.c.l.b16 %v81
  %v338 = vunpack.c.l.b16 %v82
  %v339 = vunpack.c.l.b16 %v83
  %v340 = vunpack.c.l.b16 %v84
  %v341 = vunpack.c.l.b16 %v85
  %v342 = vunpack.c.l.b16 %v86
  %v343 = vunpack.c.l.b16 %v87
  %v344 = vunpack.c.l.b16 %v88
  %v345 = vunpack.c.l.b16 %v89
  %v346 = vunpack.c.l.b16 %v90
  %v347 = vunpack.c.l.b16 %v91
  %v348 = vunpack.c.l.b16 %v92
  %v349 = vunpack.c.l.b16 %v93
  %v350 = vunpack.c.l.b16 %v94
  %v351 = vpack.c.b16 %v288, %v287
  %v352 = vpack.c.b16 %v290, %v289
  %v353 = vpack.c.b16 %v292, %v291
  %v354 = vpack.c.b16 %v294, %v293
  %v355 = vpack.c.b16 %v296, %v295
  %v356 = vpack.c.b16 %v298, %v297
  %v357 = vpack.c.b16 %v300, %v299
  %v358 = vpack.c.b16 %v302, %v301
  %v359 = vpack.c.b16 %v304, %v303
  %v360 = vpack.c.b16 %v306, %v305
  %v361 = vpack.c.b16 %v308, %v307
  %v362 = vpack.c.b16 %v310, %v309
  %v363 = vpack.c.b16 %v312, %v311
  %v364 = vpack.c.b16 %v314, %v313
  %v365 = vpack.c.b16 %v316, %v315
  %v366 = vpack.c.b16 %v318, %v317
  %v367 = vpack.c.b16 %v320, %v319
  %v368 = vpack.c.b16 %v322, %v321
  %v369 = vpack.c.b16 %v324, %v323
  %v370 = vpack.c.b16 %v326, %v325
  %v371 = vpack.c.b16 %v328, %v327
  %v372 = vpack.c.b16 %v330, %v329
  %v373 = vpack.c.b16 %v332, %v331
  %v374 = vpack.c.b16 %v334, %v333
  %v375 = vpack.c.b16 %v336, %v335
  %v376 = vpack.c.b16 %v338, %v337
  %v377 = vpack.c.b16 %v340, %v339
  %v378 = vpack.c.b16 %v342, %v341
  %v379 = vpack.c.b16 %v344, %v343
  %v380 = vpack.c.b16 %v346, %v345
  %v381 = vpack.c.b16 %v348, %v347
  %v382 = vpack.c.b16 %v350, %v349
  %415 = vmatprep.subr.bf16.mxu0 0
  %416 = vmatpush1.bf16.msra.mxu0 %v358
  %417 = vmatprep.subr.bf16.mxu0 0
  %418 = vmatpush1.bf16.msra.mxu0 %v357
  %419 = vmatprep.subr.bf16.mxu0 0
  %420 = vmatpush1.bf16.msra.mxu0 %v356
  %421 = vmatprep.subr.bf16.mxu0 0
  %422 = vmatpush1.bf16.msra.mxu0 %v355
  %423 = vmatprep.subr.bf16.mxu0 0
  %424 = vmatpush1.bf16.msra.mxu0 %v354
  %425 = vmatprep.subr.bf16.mxu0 0
  %426 = vmatpush1.bf16.msra.mxu0 %v353
  %427 = vmatprep.subr.bf16.mxu0 0
  %428 = vmatpush1.bf16.msra.mxu0 %v352
  %429 = vmatprep.subr.bf16.mxu0 0
  %430 = vmatpush1.bf16.msra.mxu0 %v351
  %431 = vmatprep.subr.bf16.mxu0 0
  %432 = vmatpush2.bf16.msra.mxu0 %v366
  %433 = vmatprep.subr.bf16.mxu0 0
  %434 = vmatpush2.bf16.msra.mxu0 %v365
  %435 = vmatprep.subr.bf16.mxu0 0
  %436 = vmatpush2.bf16.msra.mxu0 %v364
  %437 = vmatprep.subr.bf16.mxu0 0
  %438 = vmatpush2.bf16.msra.mxu0 %v363
  %439 = vmatprep.subr.bf16.mxu0 0
  %440 = vmatpush2.bf16.msra.mxu0 %v362
  %441 = vmatprep.subr.bf16.mxu0 0
  %442 = vmatpush2.bf16.msra.mxu0 %v361
  %443 = vmatprep.subr.bf16.mxu0 0
  %444 = vmatpush2.bf16.msra.mxu0 %v360
  %445 = vmatprep.subr.bf16.mxu0 0
  %446 = vmatpush2.bf16.msra.mxu0 %v359
  %447 = vmatprep.mubr.bf16.mxu0 %v192
  %448 = vmatmul.mubr.bf16.gmra.mxu0 %v191
  %v449 = vpop.f32.mrf.mxu0
  %v450 = vadd.f32 %v106, %v449
  %v451 = vpop.f32.mrf.mxu0
  %v452 = vpop.f32.mrf.mxu0
  %v453 = vadd.f32 %v111, %v452
  %v454 = vpop.f32.mrf.mxu0
  %455 = vmatprep.mubr.bf16.mxu0 %v196
  %456 = vmatmul.mubr.bf16.gmra.mxu0 %v195
  %v457 = vpop.f32.mrf.mxu0
  %v458 = vadd.f32 %v116, %v457
  %v459 = vpop.f32.mrf.mxu0
  %v460 = vpop.f32.mrf.mxu0
  %v461 = vadd.f32 %v121, %v460
  %v462 = vpop.f32.mrf.mxu0
  %463 = vmatprep.mubr.bf16.mxu0 %v200
  %464 = vmatmul.mubr.bf16.gmra.mxu0 %v199
  %v465 = vpop.f32.mrf.mxu0
  %v466 = vadd.f32 %v126, %v465
  %v467 = vpop.f32.mrf.mxu0
  %v468 = vpop.f32.mrf.mxu0
  %v469 = vadd.f32 %v131, %v468
  %v470 = vpop.f32.mrf.mxu0
  %471 = vmatprep.mubr.bf16.mxu0 %v204
  %472 = vmatmul.mubr.bf16.gmra.mxu0 %v203
  %v473 = vpop.f32.mrf.mxu0
  %v474 = vadd.f32 %v136, %v473
  %v475 = vpop.f32.mrf.mxu0
  %v476 = vpop.f32.mrf.mxu0
  %v477 = vadd.f32 %v141, %v476
  %v478 = vpop.f32.mrf.mxu0
  %479 = vdwg.mxu0
  %480 = vmatprep.subr.bf16.mxu0 0
  %481 = vmatpush1.bf16.msra.mxu0 %v374
  %482 = vmatprep.subr.bf16.mxu0 0
  %483 = vmatpush1.bf16.msra.mxu0 %v373
  %484 = vmatprep.subr.bf16.mxu0 0
  %485 = vmatpush1.bf16.msra.mxu0 %v372
  %486 = vmatprep.subr.bf16.mxu0 0
  %487 = vmatpush1.bf16.msra.mxu0 %v371
  %488 = vmatprep.subr.bf16.mxu0 0
  %489 = vmatpush1.bf16.msra.mxu0 %v370
  %490 = vmatprep.subr.bf16.mxu0 0
  %491 = vmatpush1.bf16.msra.mxu0 %v369
  %492 = vmatprep.subr.bf16.mxu0 0
  %493 = vmatpush1.bf16.msra.mxu0 %v368
  %494 = vmatprep.subr.bf16.mxu0 0
  %495 = vmatpush1.bf16.msra.mxu0 %v367
  %496 = vmatprep.subr.bf16.mxu0 0
  %497 = vmatpush2.bf16.msra.mxu0 %v382
  %498 = vmatprep.subr.bf16.mxu0 0
  %499 = vmatpush2.bf16.msra.mxu0 %v381
  %500 = vmatprep.subr.bf16.mxu0 0
  %501 = vmatpush2.bf16.msra.mxu0 %v380
  %502 = vmatprep.subr.bf16.mxu0 0
  %503 = vmatpush2.bf16.msra.mxu0 %v379
  %504 = vmatprep.subr.bf16.mxu0 0
  %505 = vmatpush2.bf16.msra.mxu0 %v378
  %506 = vmatprep.subr.bf16.mxu0 0
  %507 = vmatpush2.bf16.msra.mxu0 %v377
  %508 = vmatprep.subr.bf16.mxu0 0
  %509 = vmatpush2.bf16.msra.mxu0 %v376
  %510 = vmatprep.subr.bf16.mxu0 0
  %511 = vmatpush2.bf16.msra.mxu0 %v375
  %512 = vmatprep.mubr.bf16.mxu0 %v194
  %513 = vmatmul.mubr.bf16.gmra.mxu0 %v193
  %v514 = vpop.f32.mrf.mxu0
  %v515 = vadd.f32 %v450, %v514
  %v516 = vpop.f32.mrf.mxu0
  %v517 = vpop.f32.mrf.mxu0
  %v518 = vadd.f32 %v453, %v517
  %v519 = vpop.f32.mrf.mxu0
  %520 = vmatprep.mubr.bf16.mxu0 %v198
  %521 = vmatmul.mubr.bf16.gmra.mxu0 %v197
  %v522 = vpop.f32.mrf.mxu0
  %v523 = vadd.f32 %v458, %v522
  %v524 = vpop.f32.mrf.mxu0
  %v525 = vpop.f32.mrf.mxu0
  %v526 = vadd.f32 %v461, %v525
  %v527 = vpop.f32.mrf.mxu0
  %528 = vmatprep.mubr.bf16.mxu0 %v202
  %529 = vmatmul.mubr.bf16.gmra.mxu0 %v201
  %v530 = vpop.f32.mrf.mxu0
  %v531 = vadd.f32 %v466, %v530
  %v532 = vpop.f32.mrf.mxu0
  %v533 = vpop.f32.mrf.mxu0
  %v534 = vadd.f32 %v469, %v533
  %v535 = vpop.f32.mrf.mxu0
  %536 = vmatprep.mubr.bf16.mxu0 %v206
  %537 = vmatmul.mubr.bf16.gmra.mxu0 %v205
  %v538 = vpop.f32.mrf.mxu0
  %v539 = vadd.f32 %v474, %v538
  %v540 = vpop.f32.mrf.mxu0
  %v541 = vpop.f32.mrf.mxu0
  %v542 = vadd.f32 %v477, %v541
  %v543 = vpop.f32.mrf.mxu0
  %544 = vdwg.mxu0
  %v545 = vmax.f32 %v515, 0.0
  %v546 = vmax.f32 %v518, 0.0
  %v547 = vmax.f32 %v523, 0.0
  %v548 = vmax.f32 %v526, 0.0
  %v549 = vmax.f32 %v531, 0.0
  %v550 = vmax.f32 %v534, 0.0
  %v551 = vmax.f32 %v539, 0.0
  %v552 = vmax.f32 %v542, 0.0
  %v553 = vpack.c.bf16 %v546, %v545
  %v554 = vpack.c.bf16 %v548, %v547
  %v555 = vpack.c.bf16 %v550, %v549
  %v556 = vpack.c.bf16 %v552, %v551
  %v561 = vunpack.c.l.b16 %v553
  %v562 = vunpack.c.h.b16 %v553
  %v563 = vunpack.c.l.b16 %v554
  %v564 = vunpack.c.h.b16 %v554
  %v565 = vunpack.c.l.b16 %v555
  %v566 = vunpack.c.h.b16 %v555
  %v567 = vunpack.c.l.b16 %v556
  %v568 = vunpack.c.h.b16 %v556
  %v569 = vpack.c.b16 %v561, %v561
  %v570 = vpack.c.b16 %v562, %v562
  %v571 = vpack.c.b16 %v563, %v563
  %v572 = vpack.c.b16 %v564, %v564
  %v573 = vpack.c.b16 %v565, %v565
  %v574 = vpack.c.b16 %v566, %v566
  %v575 = vpack.c.b16 %v567, %v567
  %v576 = vpack.c.b16 %v568, %v568
  %vm585 = vcmask 797696
  %586 = vst.msk [vmem:[%s3] sm:$0xf] %vm585, %v569
  %587 = vst.msk [vmem:[%s3 + $0x4] sm:$0xf] %vm585, %v570
  %588 = vst.msk [vmem:[%s3 + $0x8] sm:$0xf] %vm585, %v571
  %589 = vst.msk [vmem:[%s3 + $0xc] sm:$0xf] %vm585, %v572
  %590 = vst.msk [vmem:[%s3 + $0x10] sm:$0xf] %vm585, %v573
  %591 = vst.msk [vmem:[%s3 + $0x14] sm:$0xf] %vm585, %v574
  %592 = vst.msk [vmem:[%s3 + $0x18] sm:$0xf] %vm585, %v575
  %593 = vst.msk [vmem:[%s3 + $0x1c] sm:$0xf] %vm585, %v576
  // Predicated region
  $region14: #{conv_encoder_forward.7} parent=0 // pred_check
    _
  $region15: #{conv_encoder_forward.7} parent=0 // pred_check_branch
    %595 = sbr.rel (0) target = $region17
  $region16: #{conv_encoder_forward.7} parent=0 // pred_region
    _
  $region17: #{conv_encoder_forward.7} parent=0 // pred_fallthru
    _
  // Predicated region
  $region18: #{conv_encoder_forward.7} parent=0 // pred_check
    _
  $region19: #{conv_encoder_forward.7} parent=0 // pred_check_branch
    %597 = sbr.rel (0) target = $region21
  $region20: #{conv_encoder_forward.7} parent=0 // pred_region
    _
  $region21: #{conv_encoder_forward.7} parent=0 // pred_fallthru
    _

// kernel: conv_encoder_forward.8
$region0: #{conv_encoder_forward.8}
  #allocation0 [shape = 'u32[]', space=smem, size = 0x4, offset = 0x4, fixed_abs, tag = 'smem constant byte address 0x4 - core index']
  #allocation1 [shape = 'u32[144,128]{1,0:T(1,128)}', space=vmem, size = 0x12000, scoped, tag = 'internal scratch']
  %s0 = inlined_call_operand.vmem [shape: bf16[256,576], index: 0, kind: input, shape index: {}]
  %s1 = inlined_call_operand.vmem [shape: bf16[576,32], index: 1, kind: input, shape index: {}]
  %s2 = inlined_call_operand.vmem [shape: f32[256,1], index: 2, kind: input, shape index: {}]
  %s3 = inlined_call_operand.vmem [shape: bf16[256,32], index: 3, kind: output, shape index: {}]
  %s4 = sld [smem:[#allocation0]]
  $region22: #{conv_encoder_forward.8} parent=0
    _
  %s6 = ssub.s32 1, %s4
  %s7 = scalar_select 0, %s6, %s4
  // Predicated region
  $region2: #{conv_encoder_forward.8} parent=0 // pred_check
    _
  $region3: #{conv_encoder_forward.8} parent=0 // pred_check_branch
    %9 = sbr.rel (0) target = $region5
  $region4: #{conv_encoder_forward.8} parent=0 // pred_region
    _
  $region5: #{conv_encoder_forward.8} parent=0 // pred_fallthru
    _
  // Predicated region
  $region6: #{conv_encoder_forward.8} parent=0 // pred_check
    _
  $region7: #{conv_encoder_forward.8} parent=0 // pred_check_branch
    %11 = sbr.rel (0) target = $region9
  $region8: #{conv_encoder_forward.8} parent=0 // pred_region
    _
  $region9: #{conv_encoder_forward.8} parent=0 // pred_fallthru
    _
  // Predicated region
  $region10: #{conv_encoder_forward.8} parent=0 // pred_check
    _
  $region11: #{conv_encoder_forward.8} parent=0 // pred_check_branch
    %13 = sbr.rel (0) target = $region13
  $region12: #{conv_encoder_forward.8} parent=0 // pred_region
    _
  $region13: #{conv_encoder_forward.8} parent=0 // pred_fallthru
    _
  %v15 = vld [vmem:[%s0] sm:$0xff]
  %v16 = vld [vmem:[%s0 + $0x8] sm:$0xff]
  %v17 = vld [vmem:[%s0 + $0x10] sm:$0xf]
  %v18 = vld [vmem:[%s0 + $0x14] sm:$0xff]
  %v19 = vld [vmem:[%s0 + $0x1c] sm:$0xff]
  %v20 = vld [vmem:[%s0 + $0x24] sm:$0xf]
  %v21 = vld [vmem:[%s0 + $0x28] sm:$0xff]
  %v22 = vld [vmem:[%s0 + $0x30] sm:$0xff]
  %v23 = vld [vmem:[%s0 + $0x38] sm:$0xf]
  %v24 = vld [vmem:[%s0 + $0x3c] sm:$0xff]
  %v25 = vld [vmem:[%s0 + $0x44] sm:$0xff]
  %v26 = vld [vmem:[%s0 + $0x4c] sm:$0xf]
  %v27 = vld [vmem:[%s0 + $0x50] sm:$0xff]
  %v28 = vld [vmem:[%s0 + $0x58] sm:$0xff]
  %v29 = vld [vmem:[%s0 + $0x60] sm:$0xf]
  %v30 = vld [vmem:[%s0 + $0x64] sm:$0xff]
  %v31 = vld [vmem:[%s0 + $0x6c] sm:$0xff]
  %v32 = vld [vmem:[%s0 + $0x74] sm:$0xf]
  %v33 = vld [vmem:[%s0 + $0x78] sm:$0xff]
  %v34 = vld [vmem:[%s0 + $0x80] sm:$0xff]
  %v35 = vld [vmem:[%s0 + $0x88] sm:$0xf]
  %v36 = vld [vmem:[%s0 + $0x8c] sm:$0xff]
  %v37 = vld [vmem:[%s0 + $0x94] sm:$0xff]
  %v38 = vld [vmem:[%s0 + $0x9c] sm:$0xf]
  %v39 = vld [vmem:[%s0 + $0xa0] sm:$0xff]
  %v40 = vld [vmem:[%s0 + $0xa8] sm:$0xff]
  %v41 = vld [vmem:[%s0 + $0xb0] sm:$0xf]
  %v42 = vld [vmem:[%s0 + $0xb4] sm:$0xff]
  %v43 = vld [vmem:[%s0 + $0xbc] sm:$0xff]
  %v44 = vld [vmem:[%s0 + $0xc4] sm:$0xf]
  %v45 = vld [vmem:[%s0 + $0xc8] sm:$0xff]
  %v46 = vld [vmem:[%s0 + $0xd0] sm:$0xff]
  %v47 = vld [vmem:[%s0 + $0xd8] sm:$0xf]
  %v48 = vld [vmem:[%s0 + $0xdc] sm:$0xff]
  %v49 = vld [vmem:[%s0 + $0xe4] sm:$0xff]
  %v50 = vld [vmem:[%s0 + $0xec] sm:$0xf]
  %v51 = vld [vmem:[%s0 + $0xf0] sm:$0xff]
  %v52 = vld [vmem:[%s0 + $0xf8] sm:$0xff]
  %v53 = vld [vmem:[%s0 + $0x100] sm:$0xf]
  %v54 = vld [vmem:[%s0 + $0x104] sm:$0xff]
  %v55 = vld [vmem:[%s0 + $0x10c] sm:$0xff]
  %v56 = vld [vmem:[%s0 + $0x114] sm:$0xf]
  %v57 = vld [vmem:[%s0 + $0x118] sm:$0xff]
  %v58 = vld [vmem:[%s0 + $0x120] sm:$0xff]
  %v59 = vld [vmem:[%s0 + $0x128] sm:$0xf]
  %v60 = vld [vmem:[%s0 + $0x12c] sm:$0xff]
  %v61 = vld [vmem:[%s0 + $0x134] sm:$0xff]
  %v62 = vld [vmem:[%s0 + $0x13c] sm:$0xf]
  %v63 = vld [vmem:[%s0 + $0x140] sm:$0xff]
  %v64 = vld [vmem:[%s0 + $0x148] sm:$0xff]
  %v65 = vld [vmem:[%s0 + $0x150] sm:$0xf]
  %v66 = vld [vmem:[%s0 + $0x154] sm:$0xff]
  %v67 = vld [vmem:[%s0 + $0x15c] sm:$0xff]
  %v68 = vld [vmem:[%s0 + $0x164] sm:$0xf]
  %v69 = vld [vmem:[%s0 + $0x168] sm:$0xff]
  %v70 = vld [vmem:[%s0 + $0x170] sm:$0xff]
  %v71 = vld [vmem:[%s0 + $0x178] sm:$0xf]
  %v72 = vld [vmem:[%s0 + $0x17c] sm:$0xff]
  %v73 = vld [vmem:[%s0 + $0x184] sm:$0xff]
  %v74 = vld [vmem:[%s0 + $0x18c] sm:$0xf]
  %v75 = vld [vmem:[%s0 + $0x190] sm:$0xff]
  %v76 = vld [vmem:[%s0 + $0x198] sm:$0xff]
  %v77 = vld [vmem:[%s0 + $0x1a0] sm:$0xf]
  %v78 = vld [vmem:[%s0 + $0x1a4] sm:$0xff]
  %v79 = vld [vmem:[%s0 + $0x1ac] sm:$0xff]
  %v80 = vld [vmem:[%s0 + $0x1b4] sm:$0xf]
  %v81 = vld [vmem:[%s0 + $0x1b8] sm:$0xff]
  %v82 = vld [vmem:[%s0 + $0x1c0] sm:$0xff]
  %v83 = vld [vmem:[%s0 + $0x1c8] sm:$0xf]
  %v84 = vld [vmem:[%s0 + $0x1cc] sm:$0xff]
  %v85 = vld [vmem:[%s0 + $0x1d4] sm:$0xff]
  %v86 = vld [vmem:[%s0 + $0x1dc] sm:$0xf]
  %v87 = vld [vmem:[%s0 + $0x1e0] sm:$0xff]
  %v88 = vld [vmem:[%s0 + $0x1e8] sm:$0xff]
  %v89 = vld [vmem:[%s0 + $0x1f0] sm:$0xf]
  %v90 = vld [vmem:[%s0 + $0x1f4] sm:$0xff]
  %v91 = vld [vmem:[%s0 + $0x1fc] sm:$0xff]
  %v92 = vld [vmem:[%s0 + $0x204] sm:$0xf]
  %v93 = vld [vmem:[%s0 + $0x208] sm:$0xff]
  %v94 = vld [vmem:[%s0 + $0x210] sm:$0xff]
  %v95 = vld [vmem:[%s0 + $0x218] sm:$0xf]
  %v96 = vld [vmem:[%s0 + $0x21c] sm:$0xff]
  %v97 = vld [vmem:[%s0 + $0x224] sm:$0xff]
  %v98 = vld [vmem:[%s0 + $0x22c] sm:$0xf]
  %v99 = vld [vmem:[%s0 + $0x230] sm:$0xff]
  %v100 = vld [vmem:[%s0 + $0x238] sm:$0xff]
  %v101 = vld [vmem:[%s0 + $0x240] sm:$0xf]
  %v102 = vld [vmem:[%s0 + $0x244] sm:$0xff]
  %v103 = vld [vmem:[%s0 + $0x24c] sm:$0xff]
  %v104 = vld [vmem:[%s0 + $0x254] sm:$0xf]
  %v105 = vld [vmem:[%s0 + $0x258] sm:$0xff]
  %v106 = vld [vmem:[%s0 + $0x260] sm:$0xff]
  %v107 = vld [vmem:[%s0 + $0x268] sm:$0xf]
  %v108 = vld [vmem:[%s0 + $0x26c] sm:$0xff]
  %v109 = vld [vmem:[%s0 + $0x274] sm:$0xff]
  %v110 = vld [vmem:[%s0 + $0x27c] sm:$0xf]
  %v111 = vld [vmem:[%s1] sm:$0xf]
  %v112 = vld [vmem:[%s1 + $0x4] sm:$0xf]
  %v113 = vld [vmem:[%s1 + $0x8] sm:$0xf]
  %v114 = vld [vmem:[%s1 + $0xc] sm:$0xf]
  %v115 = vld [vmem:[%s1 + $0x10] sm:$0xf]
  %v116 = vld [vmem:[%s1 + $0x14] sm:$0xf]
  %v117 = vld [vmem:[%s1 + $0x18] sm:$0xf]
  %v118 = vld [vmem:[%s1 + $0x1c] sm:$0xf]
  %v119 = vld [vmem:[%s1 + $0x20] sm:$0xf]
  %v120 = vld [vmem:[%s1 + $0x24] sm:$0xf]
  %v121 = vld [vmem:[%s1 + $0x28] sm:$0xf]
  %v122 = vld [vmem:[%s1 + $0x2c] sm:$0xf]
  %v123 = vld [vmem:[%s1 + $0x30] sm:$0xf]
  %v124 = vld [vmem:[%s1 + $0x34] sm:$0xf]
  %v125 = vld [vmem:[%s1 + $0x38] sm:$0xf]
  %v126 = vld [vmem:[%s1 + $0x3c] sm:$0xf]
  %v127 = vld [vmem:[%s1 + $0x40] sm:$0xf]
  %v128 = vld [vmem:[%s1 + $0x44] sm:$0xf]
  %v129 = vld [vmem:[%s1 + $0x48] sm:$0xf]
  %v130 = vld [vmem:[%s1 + $0x4c] sm:$0xf]
  %v131 = vld [vmem:[%s1 + $0x50] sm:$0xf]
  %v132 = vld [vmem:[%s1 + $0x54] sm:$0xf]
  %v133 = vld [vmem:[%s1 + $0x58] sm:$0xf]
  %v134 = vld [vmem:[%s1 + $0x5c] sm:$0xf]
  %v135 = vld [vmem:[%s1 + $0x60] sm:$0xf]
  %v136 = vld [vmem:[%s1 + $0x64] sm:$0xf]
  %v137 = vld [vmem:[%s1 + $0x68] sm:$0xf]
  %v138 = vld [vmem:[%s1 + $0x6c] sm:$0xf]
  %v139 = vld [vmem:[%s1 + $0x70] sm:$0xf]
  %v140 = vld [vmem:[%s1 + $0x74] sm:$0xf]
  %v141 = vld [vmem:[%s1 + $0x78] sm:$0xf]
  %v142 = vld [vmem:[%s1 + $0x7c] sm:$0xf]
  %v143 = vld [vmem:[%s1 + $0x80] sm:$0xf]
  %v144 = vld [vmem:[%s1 + $0x84] sm:$0xf]
  %v145 = vld [vmem:[%s1 + $0x88] sm:$0xf]
  %v146 = vld [vmem:[%s1 + $0x8c] sm:$0xf]
  %v147 = vld [vmem:[%s1 + $0x90] sm:$0xf]
  %v148 = vld [vmem:[%s1 + $0x94] sm:$0xf]
  %v149 = vld [vmem:[%s1 + $0x98] sm:$0xf]
  %v150 = vld [vmem:[%s1 + $0x9c] sm:$0xf]
  %v151 = vld [vmem:[%s1 + $0xa0] sm:$0xf]
  %v152 = vld [vmem:[%s1 + $0xa4] sm:$0xf]
  %v153 = vld [vmem:[%s1 + $0xa8] sm:$0xf]
  %v154 = vld [vmem:[%s1 + $0xac] sm:$0xf]
  %v155 = vld [vmem:[%s1 + $0xb0] sm:$0xf]
  %v156 = vld [vmem:[%s1 + $0xb4] sm:$0xf]
  %v157 = vld [vmem:[%s1 + $0xb8] sm:$0xf]
  %v158 = vld [vmem:[%s1 + $0xbc] sm:$0xf]
  %v159 = vld [vmem:[%s1 + $0xc0] sm:$0xf]
  %v160 = vld [vmem:[%s1 + $0xc4] sm:$0xf]
  %v161 = vld [vmem:[%s1 + $0xc8] sm:$0xf]
  %v162 = vld [vmem:[%s1 + $0xcc] sm:$0xf]
  %v163 = vld [vmem:[%s1 + $0xd0] sm:$0xf]
  %v164 = vld [vmem:[%s1 + $0xd4] sm:$0xf]
  %v165 = vld [vmem:[%s1 + $0xd8] sm:$0xf]
  %v166 = vld [vmem:[%s1 + $0xdc] sm:$0xf]
  %v167 = vld [vmem:[%s1 + $0xe0] sm:$0xf]
  %v168 = vld [vmem:[%s1 + $0xe4] sm:$0xf]
  %v169 = vld [vmem:[%s1 + $0xe8] sm:$0xf]
  %v170 = vld [vmem:[%s1 + $0xec] sm:$0xf]
  %v171 = vld [vmem:[%s1 + $0xf0] sm:$0xf]
  %v172 = vld [vmem:[%s1 + $0xf4] sm:$0xf]
  %v173 = vld [vmem:[%s1 + $0xf8] sm:$0xf]
  %v174 = vld [vmem:[%s1 + $0xfc] sm:$0xf]
  %v175 = vld [vmem:[%s1 + $0x100] sm:$0xf]
  %v176 = vld [vmem:[%s1 + $0x104] sm:$0xf]
  %v177 = vld [vmem:[%s1 + $0x108] sm:$0xf]
  %v178 = vld [vmem:[%s1 + $0x10c] sm:$0xf]
  %v179 = vld [vmem:[%s1 + $0x110] sm:$0xf]
  %v180 = vld [vmem:[%s1 + $0x114] sm:$0xf]
  %v181 = vld [vmem:[%s1 + $0x118] sm:$0xf]
  %v182 = vld [vmem:[%s1 + $0x11c] sm:$0xf]
  %v183 = vld [vmem:[%s2] sm:$0xff]
  %v184 = vld [vmem:[%s2 + $0x8] sm:$0xff]
  %v185 = vld [vmem:[%s2 + $0x10] sm:$0xff]
  %v186 = vld [vmem:[%s2 + $0x18] sm:$0xff]
  %v187 = vld [vmem:[%s2 + $0x20] sm:$0xff]
  %v188 = vld [vmem:[%s2 + $0x28] sm:$0xff]
  %v189 = vld [vmem:[%s2 + $0x30] sm:$0xff]
  %v190 = vld [vmem:[%s2 + $0x38] sm:$0xff]
  %v191 = vld [vmem:[%s2 + $0x40] sm:$0xff]
  %v192 = vld [vmem:[%s2 + $0x48] sm:$0xff]
  %v193 = vld [vmem:[%s2 + $0x50] sm:$0xff]
  %v194 = vld [vmem:[%s2 + $0x58] sm:$0xff]
  %v195 = vld [vmem:[%s2 + $0x60] sm:$0xff]
  %v196 = vld [vmem:[%s2 + $0x68] sm:$0xff]
  %v197 = vld [vmem:[%s2 + $0x70] sm:$0xff]
  %v198 = vld [vmem:[%s2 + $0x78] sm:$0xff]
  %v199 = vld [vmem:[%s2 + $0x80] sm:$0xff]
  %v200 = vld [vmem:[%s2 + $0x88] sm:$0xff]
  %v201 = vld [vmem:[%s2 + $0x90] sm:$0xff]
  %v202 = vld [vmem:[%s2 + $0x98] sm:$0xff]
  %v203 = vld [vmem:[%s2 + $0xa0] sm:$0xff]
  %v204 = vld [vmem:[%s2 + $0xa8] sm:$0xff]
  %v205 = vld [vmem:[%s2 + $0xb0] sm:$0xff]
  %v206 = vld [vmem:[%s2 + $0xb8] sm:$0xff]
  %v207 = vld [vmem:[%s2 + $0xc0] sm:$0xff]
  %v208 = vld [vmem:[%s2 + $0xc8] sm:$0xff]
  %v209 = vld [vmem:[%s2 + $0xd0] sm:$0xff]
  %v210 = vld [vmem:[%s2 + $0xd8] sm:$0xff]
  %v211 = vld [vmem:[%s2 + $0xe0] sm:$0xff]
  %v212 = vld [vmem:[%s2 + $0xe8] sm:$0xff]
  %v213 = vld [vmem:[%s2 + $0xf0] sm:$0xff]
  %v214 = vld [vmem:[%s2 + $0xf8] sm:$0xff]
  %216 = vset.pattern.permute.xlu0 0
  %217 = vperm.xlu0 %216, %v183
  %v218 = vpop.permute.xlu0 %217
  %221 = vset.pattern.permute.xlu0 0
  %222 = vperm.xlu0 %221, %v184
  %v223 = vpop.permute.xlu0 %222
  %226 = vset.pattern.permute.xlu0 0
  %227 = vperm.xlu0 %226, %v185
  %v228 = vpop.permute.xlu0 %227
  %231 = vset.pattern.permute.xlu0 0
  %232 = vperm.xlu0 %231, %v186
  %v233 = vpop.permute.xlu0 %232
  %236 = vset.pattern.permute.xlu0 0
  %237 = vperm.xlu0 %236, %v187
  %v238 = vpop.permute.xlu0 %237
  %241 = vset.pattern.permute.xlu0 0
  %242 = vperm.xlu0 %241, %v188
  %v243 = vpop.permute.xlu0 %242
  %246 = vset.pattern.permute.xlu0 0
  %247 = vperm.xlu0 %246, %v189
  %v248 = vpop.permute.xlu0 %247
  %251 = vset.pattern.permute.xlu0 0
  %252 = vperm.xlu0 %251, %v190
  %v253 = vpop.permute.xlu0 %252
  %256 = vset.pattern.permute.xlu0 0
  %257 = vperm.xlu0 %256, %v191
  %v258 = vpop.permute.xlu0 %257
  %261 = vset.pattern.permute.xlu0 0
  %262 = vperm.xlu0 %261, %v192
  %v263 = vpop.permute.xlu0 %262
  %266 = vset.pattern.permute.xlu0 0
  %267 = vperm.xlu0 %266, %v193
  %v268 = vpop.permute.xlu0 %267
  %271 = vset.pattern.permute.xlu0 0
  %272 = vperm.xlu0 %271, %v194
  %v273 = vpop.permute.xlu0 %272
  %276 = vset.pattern.permute.xlu0 0
  %277 = vperm.xlu0 %276, %v195
  %v278 = vpop.permute.xlu0 %277
  %281 = vset.pattern.permute.xlu0 0
  %282 = vperm.xlu0 %281, %v196
  %v283 = vpop.permute.xlu0 %282
  %286 = vset.pattern.permute.xlu0 0
  %287 = vperm.xlu0 %286, %v197
  %v288 = vpop.permute.xlu0 %287
  %291 = vset.pattern.permute.xlu0 0
  %292 = vperm.xlu0 %291, %v198
  %v293 = vpop.permute.xlu0 %292
  %296 = vset.pattern.permute.xlu0 0
  %297 = vperm.xlu0 %296, %v199
  %v298 = vpop.permute.xlu0 %297
  %301 = vset.pattern.permute.xlu0 0
  %302 = vperm.xlu0 %301, %v200
  %v303 = vpop.permute.xlu0 %302
  %306 = vset.pattern.permute.xlu0 0
  %307 = vperm.xlu0 %306, %v201
  %v308 = vpop.permute.xlu0 %307
  %311 = vset.pattern.permute.xlu0 0
  %312 = vperm.xlu0 %311, %v202
  %v313 = vpop.permute.xlu0 %312
  %316 = vset.pattern.permute.xlu0 0
  %317 = vperm.xlu0 %316, %v203
  %v318 = vpop.permute.xlu0 %317
  %321 = vset.pattern.permute.xlu0 0
  %322 = vperm.xlu0 %321, %v204
  %v323 = vpop.permute.xlu0 %322
  %326 = vset.pattern.permute.xlu0 0
  %327 = vperm.xlu0 %326, %v205
  %v328 = vpop.permute.xlu0 %327
  %331 = vset.pattern.permute.xlu0 0
  %332 = vperm.xlu0 %331, %v206
  %v333 = vpop.permute.xlu0 %332
  %336 = vset.pattern.permute.xlu0 0
  %337 = vperm.xlu0 %336, %v207
  %v338 = vpop.permute.xlu0 %337
  %341 = vset.pattern.permute.xlu0 0
  %342 = vperm.xlu0 %341, %v208
  %v343 = vpop.permute.xlu0 %342
  %346 = vset.pattern.permute.xlu0 0
  %347 = vperm.xlu0 %346, %v209
  %v348 = vpop.permute.xlu0 %347
  %351 = vset.pattern.permute.xlu0 0
  %352 = vperm.xlu0 %351, %v210
  %v353 = vpop.permute.xlu0 %352
  %356 = vset.pattern.permute.xlu0 0
  %357 = vperm.xlu0 %356, %v211
  %v358 = vpop.permute.xlu0 %357
  %361 = vset.pattern.permute.xlu0 0
  %362 = vperm.xlu0 %361, %v212
  %v363 = vpop.permute.xlu0 %362
  %366 = vset.pattern.permute.xlu0 0
  %367 = vperm.xlu0 %366, %v213
  %v368 = vpop.permute.xlu0 %367
  %371 = vset.pattern.permute.xlu0 0
  %372 = vperm.xlu0 %371, %v214
  %v373 = vpop.permute.xlu0 %372
  %v471 = vunpack.c.l.b16 %v15
  %v472 = vunpack.c.h.b16 %v15
  %v473 = vunpack.c.l.b16 %v16
  %v474 = vunpack.c.h.b16 %v16
  %v475 = vunpack.c.l.b16 %v17
  %v476 = vunpack.c.l.b16 %v18
  %v477 = vunpack.c.h.b16 %v18
  %v478 = vunpack.c.l.b16 %v19
  %v479 = vunpack.c.h.b16 %v19
  %v480 = vunpack.c.l.b16 %v20
  %v481 = vunpack.c.l.b16 %v21
  %v482 = vunpack.c.h.b16 %v21
  %v483 = vunpack.c.l.b16 %v22
  %v484 = vunpack.c.h.b16 %v22
  %v485 = vunpack.c.l.b16 %v23
  %v486 = vunpack.c.l.b16 %v24
  %v487 = vunpack.c.h.b16 %v24
  %v488 = vunpack.c.l.b16 %v25
  %v489 = vunpack.c.h.b16 %v25
  %v490 = vunpack.c.l.b16 %v26
  %v491 = vunpack.c.l.b16 %v27
  %v492 = vunpack.c.h.b16 %v27
  %v493 = vunpack.c.l.b16 %v28
  %v494 = vunpack.c.h.b16 %v28
  %v495 = vunpack.c.l.b16 %v29
  %v496 = vunpack.c.l.b16 %v30
  %v497 = vunpack.c.h.b16 %v30
  %v498 = vunpack.c.l.b16 %v31
  %v499 = vunpack.c.h.b16 %v31
  %v500 = vunpack.c.l.b16 %v32
  %v501 = vunpack.c.l.b16 %v33
  %v502 = vunpack.c.h.b16 %v33
  %v503 = vunpack.c.l.b16 %v34
  %v504 = vunpack.c.h.b16 %v34
  %v505 = vunpack.c.l.b16 %v35
  %v506 = vunpack.c.l.b16 %v36
  %v507 = vunpack.c.h.b16 %v36
  %v508 = vunpack.c.l.b16 %v37
  %v509 = vunpack.c.h.b16 %v37
  %v510 = vunpack.c.l.b16 %v38
  %v511 = vunpack.c.l.b16 %v39
  %v512 = vunpack.c.h.b16 %v39
  %v513 = vunpack.c.l.b16 %v40
  %v514 = vunpack.c.h.b16 %v40
  %v515 = vunpack.c.l.b16 %v41
  %v516 = vunpack.c.l.b16 %v42
  %v517 = vunpack.c.h.b16 %v42
  %v518 = vunpack.c.l.b16 %v43
  %v519 = vunpack.c.h.b16 %v43
  %v520 = vunpack.c.l.b16 %v44
  %v521 = vunpack.c.l.b16 %v45
  %v522 = vunpack.c.h.b16 %v45
  %v523 = vunpack.c.l.b16 %v46
  %v524 = vunpack.c.h.b16 %v46
  %v525 = vunpack.c.l.b16 %v47
  %v526 = vunpack.c.l.b16 %v48
  %v527 = vunpack.c.h.b16 %v48
  %v528 = vunpack.c.l.b16 %v49
  %v529 = vunpack.c.h.b16 %v49
  %v530 = vunpack.c.l.b16 %v50
  %v531 = vunpack.c.l.b16 %v51
  %v532 = vunpack.c.h.b16 %v51
  %v533 = vunpack.c.l.b16 %v52
  %v534 = vunpack.c.h.b16 %v52
  %v535 = vunpack.c.l.b16 %v53
  %v536 = vunpack.c.l.b16 %v54
  %v537 = vunpack.c.h.b16 %v54
  %v538 = vunpack.c.l.b16 %v55
  %v539 = vunpack.c.h.b16 %v55
  %v540 = vunpack.c.l.b16 %v56
  %v541 = vunpack.c.l.b16 %v57
  %v542 = vunpack.c.h.b16 %v57
  %v543 = vunpack.c.l.b16 %v58
  %v544 = vunpack.c.h.b16 %v58
  %v545 = vunpack.c.l.b16 %v59
  %v546 = vunpack.c.l.b16 %v60
  %v547 = vunpack.c.h.b16 %v60
  %v548 = vunpack.c.l.b16 %v61
  %v549 = vunpack.c.h.b16 %v61
  %v550 = vunpack.c.l.b16 %v62
  %v551 = vunpack.c.l.b16 %v63
  %v552 = vunpack.c.h.b16 %v63
  %v553 = vunpack.c.l.b16 %v64
  %v554 = vunpack.c.h.b16 %v64
  %v555 = vunpack.c.l.b16 %v65
  %v556 = vunpack.c.l.b16 %v66
  %v557 = vunpack.c.h.b16 %v66
  %v558 = vunpack.c.l.b16 %v67
  %v559 = vunpack.c.h.b16 %v67
  %v560 = vunpack.c.l.b16 %v68
  %v561 = vunpack.c.l.b16 %v69
  %v562 = vunpack.c.h.b16 %v69
  %v563 = vunpack.c.l.b16 %v70
  %v564 = vunpack.c.h.b16 %v70
  %v565 = vunpack.c.l.b16 %v71
  %v566 = vunpack.c.l.b16 %v72
  %v567 = vunpack.c.h.b16 %v72
  %v568 = vunpack.c.l.b16 %v73
  %v569 = vunpack.c.h.b16 %v73
  %v570 = vunpack.c.l.b16 %v74
  %v571 = vunpack.c.l.b16 %v75
  %v572 = vunpack.c.h.b16 %v75
  %v573 = vunpack.c.l.b16 %v76
  %v574 = vunpack.c.h.b16 %v76
  %v575 = vunpack.c.l.b16 %v77
  %v576 = vunpack.c.l.b16 %v78
  %v577 = vunpack.c.h.b16 %v78
  %v578 = vunpack.c.l.b16 %v79
  %v579 = vunpack.c.h.b16 %v79
  %v580 = vunpack.c.l.b16 %v80
  %v581 = vunpack.c.l.b16 %v81
  %v582 = vunpack.c.h.b16 %v81
  %v583 = vunpack.c.l.b16 %v82
  %v584 = vunpack.c.h.b16 %v82
  %v585 = vunpack.c.l.b16 %v83
  %v586 = vunpack.c.l.b16 %v84
  %v587 = vunpack.c.h.b16 %v84
  %v588 = vunpack.c.l.b16 %v85
  %v589 = vunpack.c.h.b16 %v85
  %v590 = vunpack.c.l.b16 %v86
  %v591 = vunpack.c.l.b16 %v87
  %v592 = vunpack.c.h.b16 %v87
  %v593 = vunpack.c.l.b16 %v88
  %v594 = vunpack.c.h.b16 %v88
  %v595 = vunpack.c.l.b16 %v89
  %v596 = vunpack.c.l.b16 %v90
  %v597 = vunpack.c.h.b16 %v90
  %v598 = vunpack.c.l.b16 %v91
  %v599 = vunpack.c.h.b16 %v91
  %v600 = vunpack.c.l.b16 %v92
  %v601 = vunpack.c.l.b16 %v93
  %v602 = vunpack.c.h.b16 %v93
  %v603 = vunpack.c.l.b16 %v94
  %v604 = vunpack.c.h.b16 %v94
  %v605 = vunpack.c.l.b16 %v95
  %v606 = vunpack.c.l.b16 %v96
  %v607 = vunpack.c.h.b16 %v96
  %v608 = vunpack.c.l.b16 %v97
  %v609 = vunpack.c.h.b16 %v97
  %v610 = vunpack.c.l.b16 %v98
  %v611 = vunpack.c.l.b16 %v99
  %v612 = vunpack.c.h.b16 %v99
  %v613 = vunpack.c.l.b16 %v100
  %v614 = vunpack.c.h.b16 %v100
  %v615 = vunpack.c.l.b16 %v101
  %v616 = vunpack.c.l.b16 %v102
  %v617 = vunpack.c.h.b16 %v102
  %v618 = vunpack.c.l.b16 %v103
  %v619 = vunpack.c.h.b16 %v103
  %v620 = vunpack.c.l.b16 %v104
  %v621 = vunpack.c.l.b16 %v105
  %v622 = vunpack.c.h.b16 %v105
  %v623 = vunpack.c.l.b16 %v106
  %v624 = vunpack.c.h.b16 %v106
  %v625 = vunpack.c.l.b16 %v107
  %v626 = vunpack.c.l.b16 %v108
  %v627 = vunpack.c.h.b16 %v108
  %v628 = vunpack.c.l.b16 %v109
  %v629 = vunpack.c.h.b16 %v109
  %v630 = vunpack.c.l.b16 %v110
  %v631 = vpack.c.b16 %v476, %v471
  %v632 = vpack.c.b16 %v477, %v472
  %v633 = vpack.c.b16 %v478, %v473
  %v634 = vpack.c.b16 %v479, %v474
  %v635 = vpack.c.b16 %v480, %v475
  %v636 = vpack.c.b16 %v486, %v481
  %v637 = vpack.c.b16 %v487, %v482
  %v638 = vpack.c.b16 %v488, %v483
  %v639 = vpack.c.b16 %v489, %v484
  %v640 = vpack.c.b16 %v490, %v485
  %v641 = vpack.c.b16 %v496, %v491
  %v642 = vpack.c.b16 %v497, %v492
  %v643 = vpack.c.b16 %v498, %v493
  %v644 = vpack.c.b16 %v499, %v494
  %v645 = vpack.c.b16 %v500, %v495
  %v646 = vpack.c.b16 %v506, %v501
  %v647 = vpack.c.b16 %v507, %v502
  %v648 = vpack.c.b16 %v508, %v503
  %v649 = vpack.c.b16 %v509, %v504
  %v650 = vpack.c.b16 %v510, %v505
  %v651 = vpack.c.b16 %v516, %v511
  %v652 = vpack.c.b16 %v517, %v512
  %v653 = vpack.c.b16 %v518, %v513
  %v654 = vpack.c.b16 %v519, %v514
  %v655 = vpack.c.b16 %v520, %v515
  %v656 = vpack.c.b16 %v526, %v521
  %v657 = vpack.c.b16 %v527, %v522
  %v658 = vpack.c.b16 %v528, %v523
  %v659 = vpack.c.b16 %v529, %v524
  %v660 = vpack.c.b16 %v530, %v525
  %v661 = vpack.c.b16 %v536, %v531
  %v662 = vpack.c.b16 %v537, %v532
  %v663 = vpack.c.b16 %v538, %v533
  %v664 = vpack.c.b16 %v539, %v534
  %v665 = vpack.c.b16 %v540, %v535
  %v666 = vpack.c.b16 %v546, %v541
  %v667 = vpack.c.b16 %v547, %v542
  %v668 = vpack.c.b16 %v548, %v543
  %v669 = vpack.c.b16 %v549, %v544
  %v670 = vpack.c.b16 %v550, %v545
  %v671 = vpack.c.b16 %v556, %v551
  %v672 = vpack.c.b16 %v557, %v552
  %v673 = vpack.c.b16 %v558, %v553
  %v674 = vpack.c.b16 %v559, %v554
  %v675 = vpack.c.b16 %v560, %v555
  %v676 = vpack.c.b16 %v566, %v561
  %v677 = vpack.c.b16 %v567, %v562
  %v678 = vpack.c.b16 %v568, %v563
  %v679 = vpack.c.b16 %v569, %v564
  %v680 = vpack.c.b16 %v570, %v565
  %v681 = vpack.c.b16 %v576, %v571
  %v682 = vpack.c.b16 %v577, %v572
  %v683 = vpack.c.b16 %v578, %v573
  %v684 = vpack.c.b16 %v579, %v574
  %v685 = vpack.c.b16 %v580, %v575
  %v686 = vpack.c.b16 %v586, %v581
  %v687 = vpack.c.b16 %v587, %v582
  %v688 = vpack.c.b16 %v588, %v583
  %v689 = vpack.c.b16 %v589, %v584
  %v690 = vpack.c.b16 %v590, %v585
  %v691 = vpack.c.b16 %v596, %v591
  %v692 = vpack.c.b16 %v597, %v592
  %v693 = vpack.c.b16 %v598, %v593
  %v694 = vpack.c.b16 %v599, %v594
  %v695 = vpack.c.b16 %v600, %v595
  %v696 = vpack.c.b16 %v606, %v601
  %v697 = vpack.c.b16 %v607, %v602
  %v698 = vpack.c.b16 %v608, %v603
  %v699 = vpack.c.b16 %v609, %v604
  %v700 = vpack.c.b16 %v610, %v605
  %v701 = vpack.c.b16 %v616, %v611
  %v702 = vpack.c.b16 %v617, %v612
  %v703 = vpack.c.b16 %v618, %v613
  %v704 = vpack.c.b16 %v619, %v614
  %v705 = vpack.c.b16 %v620, %v615
  %v706 = vpack.c.b16 %v626, %v621
  %v707 = vpack.c.b16 %v627, %v622
  %v708 = vpack.c.b16 %v628, %v623
  %v709 = vpack.c.b16 %v629, %v624
  %v710 = vpack.c.b16 %v630, %v625
  %v847 = vunpack.c.l.b16 %v111
  %v848 = vunpack.c.l.b16 %v112
  %v849 = vunpack.c.l.b16 %v113
  %v850 = vunpack.c.l.b16 %v114
  %v851 = vunpack.c.l.b16 %v115
  %v852 = vunpack.c.l.b16 %v116
  %v853 = vunpack.c.l.b16 %v117
  %v854 = vunpack.c.l.b16 %v118
  %v855 = vunpack.c.l.b16 %v119
  %v856 = vunpack.c.l.b16 %v120
  %v857 = vunpack.c.l.b16 %v121
  %v858 = vunpack.c.l.b16 %v122
  %v859 = vunpack.c.l.b16 %v123
  %v860 = vunpack.c.l.b16 %v124
  %v861 = vunpack.c.l.b16 %v125
  %v862 = vunpack.c.l.b16 %v126
  %v863 = vunpack.c.l.b16 %v127
  %v864 = vunpack.c.l.b16 %v128
  %v865 = vunpack.c.l.b16 %v129
  %v866 = vunpack.c.l.b16 %v130
  %v867 = vunpack.c.l.b16 %v131
  %v868 = vunpack.c.l.b16 %v132
  %v869 = vunpack.c.l.b16 %v133
  %v870 = vunpack.c.l.b16 %v134
  %v871 = vunpack.c.l.b16 %v135
  %v872 = vunpack.c.l.b16 %v136
  %v873 = vunpack.c.l.b16 %v137
  %v874 = vunpack.c.l.b16 %v138
  %v875 = vunpack.c.l.b16 %v139
  %v876 = vunpack.c.l.b16 %v140
  %v877 = vunpack.c.l.b16 %v141
  %v878 = vunpack.c.l.b16 %v142
  %v879 = vunpack.c.l.b16 %v143
  %v880 = vunpack.c.l.b16 %v144
  %v881 = vunpack.c.l.b16 %v145
  %v882 = vunpack.c.l.b16 %v146
  %v883 = vunpack.c.l.b16 %v147
  %v884 = vunpack.c.l.b16 %v148
  %v885 = vunpack.c.l.b16 %v149
  %v886 = vunpack.c.l.b16 %v150
  %v887 = vunpack.c.l.b16 %v151
  %v888 = vunpack.c.l.b16 %v152
  %v889 = vunpack.c.l.b16 %v153
  %v890 = vunpack.c.l.b16 %v154
  %v891 = vunpack.c.l.b16 %v155
  %v892 = vunpack.c.l.b16 %v156
  %v893 = vunpack.c.l.b16 %v157
  %v894 = vunpack.c.l.b16 %v158
  %v895 = vunpack.c.l.b16 %v159
  %v896 = vunpack.c.l.b16 %v160
  %v897 = vunpack.c.l.b16 %v161
  %v898 = vunpack.c.l.b16 %v162
  %v899 = vunpack.c.l.b16 %v163
  %v900 = vunpack.c.l.b16 %v164
  %v901 = vunpack.c.l.b16 %v165
  %v902 = vunpack.c.l.b16 %v166
  %v903 = vunpack.c.l.b16 %v167
  %v904 = vunpack.c.l.b16 %v168
  %v905 = vunpack.c.l.b16 %v169
  %v906 = vunpack.c.l.b16 %v170
  %v907 = vunpack.c.l.b16 %v171
  %v908 = vunpack.c.l.b16 %v172
  %v909 = vunpack.c.l.b16 %v173
  %v910 = vunpack.c.l.b16 %v174
  %v911 = vunpack.c.l.b16 %v175
  %v912 = vunpack.c.l.b16 %v176
  %v913 = vunpack.c.l.b16 %v177
  %v914 = vunpack.c.l.b16 %v178
  %v915 = vunpack.c.l.b16 %v179
  %v916 = vunpack.c.l.b16 %v180
  %v917 = vunpack.c.l.b16 %v181
  %v918 = vunpack.c.l.b16 %v182
  %v919 = vpack.c.b16 %v848, %v847
  %v920 = vpack.c.b16 %v850, %v849
  %v921 = vpack.c.b16 %v852, %v851
  %v922 = vpack.c.b16 %v854, %v853
  %v923 = vpack.c.b16 %v856, %v855
  %v924 = vpack.c.b16 %v858, %v857
  %v925 = vpack.c.b16 %v860, %v859
  %v926 = vpack.c.b16 %v862, %v861
  %v927 = vpack.c.b16 %v864, %v863
  %v928 = vpack.c.b16 %v866, %v865
  %v929 = vpack.c.b16 %v868, %v867
  %v930 = vpack.c.b16 %v870, %v869
  %v931 = vpack.c.b16 %v872, %v871
  %v932 = vpack.c.b16 %v874, %v873
  %v933 = vpack.c.b16 %v876, %v875
  %v934 = vpack.c.b16 %v878, %v877
  %v935 = vpack.c.b16 %v880, %v879
  %v936 = vpack.c.b16 %v882, %v881
  %v937 = vpack.c.b16 %v884, %v883
  %v938 = vpack.c.b16 %v886, %v885
  %v939 = vpack.c.b16 %v888, %v887
  %v940 = vpack.c.b16 %v890, %v889
  %v941 = vpack.c.b16 %v892, %v891
  %v942 = vpack.c.b16 %v894, %v893
  %v943 = vpack.c.b16 %v896, %v895
  %v944 = vpack.c.b16 %v898, %v897
  %v945 = vpack.c.b16 %v900, %v899
  %v946 = vpack.c.b16 %v902, %v901
  %v947 = vpack.c.b16 %v904, %v903
  %v948 = vpack.c.b16 %v906, %v905
  %v949 = vpack.c.b16 %v908, %v907
  %v950 = vpack.c.b16 %v910, %v909
  %v951 = vpack.c.b16 %v912, %v911
  %v952 = vpack.c.b16 %v914, %v913
  %v953 = vpack.c.b16 %v916, %v915
  %v954 = vpack.c.b16 %v918, %v917
  %vm991 = vcmask 523264
  %v993 = vsel %vm991, %v635, 0
  %v996 = vsel %vm991, %v640, 0
  %v999 = vsel %vm991, %v645, 0
  %v1002 = vsel %vm991, %v650, 0
  %v1005 = vsel %vm991, %v655, 0
  %v1008 = vsel %vm991, %v660, 0
  %v1011 = vsel %vm991, %v665, 0
  %v1014 = vsel %vm991, %v670, 0
  %v1017 = vsel %vm991, %v675, 0
  %v1020 = vsel %vm991, %v680, 0
  %v1023 = vsel %vm991, %v685, 0
  %v1026 = vsel %vm991, %v690, 0
  %v1029 = vsel %vm991, %v695, 0
  %v1032 = vsel %vm991, %v700, 0
  %v1035 = vsel %vm991, %v705, 0
  %v1038 = vsel %vm991, %v710, 0
  %1040 = vmatprep.subr.bf16.mxu0 0
  %1041 = vmatpush1.bf16.msra.mxu0 %v926
  %1042 = vmatprep.subr.bf16.mxu0 0
  %1043 = vmatpush1.bf16.msra.mxu0 %v925
  %1044 = vmatprep.subr.bf16.mxu0 0
  %1045 = vmatpush1.bf16.msra.mxu0 %v924
  %1046 = vmatprep.subr.bf16.mxu0 0
  %1047 = vmatpush1.bf16.msra.mxu0 %v923
  %1048 = vmatprep.subr.bf16.mxu0 0
  %1049 = vmatpush1.bf16.msra.mxu0 %v922
  %1050 = vmatprep.subr.bf16.mxu0 0
  %1051 = vmatpush1.bf16.msra.mxu0 %v921
  %1052 = vmatprep.subr.bf16.mxu0 0
  %1053 = vmatpush1.bf16.msra.mxu0 %v920
  %1054 = vmatprep.subr.bf16.mxu0 0
  %1055 = vmatpush1.bf16.msra.mxu0 %v919
  %1056 = vmatprep.subr.bf16.mxu0 0
  %1057 = vmatpush2.bf16.msra.mxu0 %v934
  %1058 = vmatprep.subr.bf16.mxu0 0
  %1059 = vmatpush2.bf16.msra.mxu0 %v933
  %1060 = vmatprep.subr.bf16.mxu0 0
  %1061 = vmatpush2.bf16.msra.mxu0 %v932
  %1062 = vmatprep.subr.bf16.mxu0 0
  %1063 = vmatpush2.bf16.msra.mxu0 %v931
  %1064 = vmatprep.subr.bf16.mxu0 0
  %1065 = vmatpush2.bf16.msra.mxu0 %v930
  %1066 = vmatprep.subr.bf16.mxu0 0
  %1067 = vmatpush2.bf16.msra.mxu0 %v929
  %1068 = vmatprep.subr.bf16.mxu0 0
  %1069 = vmatpush2.bf16.msra.mxu0 %v928
  %1070 = vmatprep.subr.bf16.mxu0 0
  %1071 = vmatpush2.bf16.msra.mxu0 %v927
  %1072 = vmatprep.mubr.bf16.mxu0 %v632
  %1073 = vmatmul.mubr.bf16.gmra.mxu0 %v631
  %v1074 = vpop.f32.mrf.mxu0
  %v1075 = vadd.f32 %v218, %v1074
  %v1076 = vpop.f32.mrf.mxu0
  %v1077 = vpop.f32.mrf.mxu0
  %v1078 = vadd.f32 %v223, %v1077
  %v1079 = vpop.f32.mrf.mxu0
  %1080 = vmatprep.mubr.bf16.mxu0 %v637
  %1081 = vmatmul.mubr.bf16.gmra.mxu0 %v636
  %v1082 = vpop.f32.mrf.mxu0
  %v1083 = vadd.f32 %v228, %v1082
  %v1084 = vpop.f32.mrf.mxu0
  %v1085 = vpop.f32.mrf.mxu0
  %v1086 = vadd.f32 %v233, %v1085
  %v1087 = vpop.f32.mrf.mxu0
  %1088 = vmatprep.mubr.bf16.mxu0 %v642
  %1089 = vmatmul.mubr.bf16.gmra.mxu0 %v641
  %v1090 = vpop.f32.mrf.mxu0
  %v1091 = vadd.f32 %v238, %v1090
  %v1092 = vpop.f32.mrf.mxu0
  %v1093 = vpop.f32.mrf.mxu0
  %v1094 = vadd.f32 %v243, %v1093
  %v1095 = vpop.f32.mrf.mxu0
  %1096 = vmatprep.mubr.bf16.mxu0 %v647
  %1097 = vmatmul.mubr.bf16.gmra.mxu0 %v646
  %v1098 = vpop.f32.mrf.mxu0
  %v1099 = vadd.f32 %v248, %v1098
  %v1100 = vpop.f32.mrf.mxu0
  %v1101 = vpop.f32.mrf.mxu0
  %v1102 = vadd.f32 %v253, %v1101
  %v1103 = vpop.f32.mrf.mxu0
  %1104 = vmatprep.mubr.bf16.mxu0 %v652
  %1105 = vmatmul.mubr.bf16.gmra.mxu0 %v651
  %v1106 = vpop.f32.mrf.mxu0
  %v1107 = vadd.f32 %v258, %v1106
  %v1108 = vpop.f32.mrf.mxu0
  %v1109 = vpop.f32.mrf.mxu0
  %v1110 = vadd.f32 %v263, %v1109
  %v1111 = vpop.f32.mrf.mxu0
  %1112 = vmatprep.mubr.bf16.mxu0 %v657
  %1113 = vmatmul.mubr.bf16.gmra.mxu0 %v656
  %v1114 = vpop.f32.mrf.mxu0
  %v1115 = vadd.f32 %v268, %v1114
  %v1116 = vpop.f32.mrf.mxu0
  %v1117 = vpop.f32.mrf.mxu0
  %v1118 = vadd.f32 %v273, %v1117
  %v1119 = vpop.f32.mrf.mxu0
  %1120 = vmatprep.mubr.bf16.mxu0 %v662
  %1121 = vmatmul.mubr.bf16.gmra.mxu0 %v661
  %v1122 = vpop.f32.mrf.mxu0
  %v1123 = vadd.f32 %v278, %v1122
  %v1124 = vpop.f32.mrf.mxu0
  %v1125 = vpop.f32.mrf.mxu0
  %v1126 = vadd.f32 %v283, %v1125
  %v1127 = vpop.f32.mrf.mxu0
  %1128 = vmatprep.mubr.bf16.mxu0 %v667
  %1129 = vmatmul.mubr.bf16.gmra.mxu0 %v666
  %v1130 = vpop.f32.mrf.mxu0
  %v1131 = vadd.f32 %v288, %v1130
  %v1132 = vpop.f32.mrf.mxu0
  %v1133 = vpop.f32.mrf.mxu0
  %v1134 = vadd.f32 %v293, %v1133
  %v1135 = vpop.f32.mrf.mxu0
  %1136 = vmatprep.mubr.bf16.mxu0 %v672
  %1137 = vmatmul.mubr.bf16.gmra.mxu0 %v671
  %v1138 = vpop.f32.mrf.mxu0
  %v1139 = vadd.f32 %v298, %v1138
  %v1140 = vpop.f32.mrf.mxu0
  %v1141 = vpop.f32.mrf.mxu0
  %v1142 = vadd.f32 %v303, %v1141
  %v1143 = vpop.f32.mrf.mxu0
  %1144 = vmatprep.mubr.bf16.mxu0 %v677
  %1145 = vmatmul.mubr.bf16.gmra.mxu0 %v676
  %v1146 = vpop.f32.mrf.mxu0
  %v1147 = vadd.f32 %v308, %v1146
  %v1148 = vpop.f32.mrf.mxu0
  %v1149 = vpop.f32.mrf.mxu0
  %v1150 = vadd.f32 %v313, %v1149
  %v1151 = vpop.f32.mrf.mxu0
  %1152 = vmatprep.mubr.bf16.mxu0 %v682
  %1153 = vmatmul.mubr.bf16.gmra.mxu0 %v681
  %v1154 = vpop.f32.mrf.mxu0
  %v1155 = vadd.f32 %v318, %v1154
  %v1156 = vpop.f32.mrf.mxu0
  %v1157 = vpop.f32.mrf.mxu0
  %v1158 = vadd.f32 %v323, %v1157
  %v1159 = vpop.f32.mrf.mxu0
  %1160 = vmatprep.mubr.bf16.mxu0 %v687
  %1161 = vmatmul.mubr.bf16.gmra.mxu0 %v686
  %v1162 = vpop.f32.mrf.mxu0
  %v1163 = vadd.f32 %v328, %v1162
  %v1164 = vpop.f32.mrf.mxu0
  %v1165 = vpop.f32.mrf.mxu0
  %v1166 = vadd.f32 %v333, %v1165
  %v1167 = vpop.f32.mrf.mxu0
  %1168 = vmatprep.mubr.bf16.mxu0 %v692
  %1169 = vmatmul.mubr.bf16.gmra.mxu0 %v691
  %v1170 = vpop.f32.mrf.mxu0
  %v1171 = vadd.f32 %v338, %v1170
  %v1172 = vpop.f32.mrf.mxu0
  %v1173 = vpop.f32.mrf.mxu0
  %v1174 = vadd.f32 %v343, %v1173
  %v1175 = vpop.f32.mrf.mxu0
  %1176 = vmatprep.mubr.bf16.mxu0 %v697
  %1177 = vmatmul.mubr.bf16.gmra.mxu0 %v696
  %v1178 = vpop.f32.mrf.mxu0
  %v1179 = vadd.f32 %v348, %v1178
  %v1180 = vpop.f32.mrf.mxu0
  %v1181 = vpop.f32.mrf.mxu0
  %v1182 = vadd.f32 %v353, %v1181
  %v1183 = vpop.f32.mrf.mxu0
  %1184 = vmatprep.mubr.bf16.mxu0 %v702
  %1185 = vmatmul.mubr.bf16.gmra.mxu0 %v701
  %v1186 = vpop.f32.mrf.mxu0
  %v1187 = vadd.f32 %v358, %v1186
  %v1188 = vpop.f32.mrf.mxu0
  %v1189 = vpop.f32.mrf.mxu0
  %v1190 = vadd.f32 %v363, %v1189
  %v1191 = vpop.f32.mrf.mxu0
  %1192 = vmatprep.mubr.bf16.mxu0 %v707
  %1193 = vmatmul.mubr.bf16.gmra.mxu0 %v706
  %v1194 = vpop.f32.mrf.mxu0
  %v1195 = vadd.f32 %v368, %v1194
  %v1196 = vpop.f32.mrf.mxu0
  %v1197 = vpop.f32.mrf.mxu0
  %v1198 = vadd.f32 %v373, %v1197
  %v1199 = vpop.f32.mrf.mxu0
  %1200 = vdwg.mxu0
  %1201 = vmatprep.subr.bf16.mxu0 0
  %1202 = vmatpush1.bf16.msra.mxu0 %v942
  %1203 = vmatprep.subr.bf16.mxu0 0
  %1204 = vmatpush1.bf16.msra.mxu0 %v941
  %1205 = vmatprep.subr.bf16.mxu0 0
  %1206 = vmatpush1.bf16.msra.mxu0 %v940
  %1207 = vmatprep.subr.bf16.mxu0 0
  %1208 = vmatpush1.bf16.msra.mxu0 %v939
  %1209 = vmatprep.subr.bf16.mxu0 0
  %1210 = vmatpush1.bf16.msra.mxu0 %v938
  %1211 = vmatprep.subr.bf16.mxu0 0
  %1212 = vmatpush1.bf16.msra.mxu0 %v937
  %1213 = vmatprep.subr.bf16.mxu0 0
  %1214 = vmatpush1.bf16.msra.mxu0 %v936
  %1215 = vmatprep.subr.bf16.mxu0 0
  %1216 = vmatpush1.bf16.msra.mxu0 %v935
  %1217 = vmatprep.subr.bf16.mxu0 0
  %1218 = vmatpush2.bf16.msra.mxu0 %v950
  %1219 = vmatprep.subr.bf16.mxu0 0
  %1220 = vmatpush2.bf16.msra.mxu0 %v949
  %1221 = vmatprep.subr.bf16.mxu0 0
  %1222 = vmatpush2.bf16.msra.mxu0 %v948
  %1223 = vmatprep.subr.bf16.mxu0 0
  %1224 = vmatpush2.bf16.msra.mxu0 %v947
  %1225 = vmatprep.subr.bf16.mxu0 0
  %1226 = vmatpush2.bf16.msra.mxu0 %v946
  %1227 = vmatprep.subr.bf16.mxu0 0
  %1228 = vmatpush2.bf16.msra.mxu0 %v945
  %1229 = vmatprep.subr.bf16.mxu0 0
  %1230 = vmatpush2.bf16.msra.mxu0 %v944
  %1231 = vmatprep.subr.bf16.mxu0 0
  %1232 = vmatpush2.bf16.msra.mxu0 %v943
  %1233 = vmatprep.mubr.bf16.mxu0 %v634
  %1234 = vmatmul.mubr.bf16.gmra.mxu0 %v633
  %v1235 = vpop.f32.mrf.mxu0
  %v1236 = vadd.f32 %v1075, %v1235
  %v1237 = vpop.f32.mrf.mxu0
  %v1238 = vpop.f32.mrf.mxu0
  %v1239 = vadd.f32 %v1078, %v1238
  %v1240 = vpop.f32.mrf.mxu0
  %1241 = vmatprep.mubr.bf16.mxu0 %v639
  %1242 = vmatmul.mubr.bf16.gmra.mxu0 %v638
  %v1243 = vpop.f32.mrf.mxu0
  %v1244 = vadd.f32 %v1083, %v1243
  %v1245 = vpop.f32.mrf.mxu0
  %v1246 = vpop.f32.mrf.mxu0
  %v1247 = vadd.f32 %v1086, %v1246
  %v1248 = vpop.f32.mrf.mxu0
  %1249 = vmatprep.mubr.bf16.mxu0 %v644
  %1250 = vmatmul.mubr.bf16.gmra.mxu0 %v643
  %v1251 = vpop.f32.mrf.mxu0
  %v1252 = vadd.f32 %v1091, %v1251
  %v1253 = vpop.f32.mrf.mxu0
  %v1254 = vpop.f32.mrf.mxu0
  %v1255 = vadd.f32 %v1094, %v1254
  %v1256 = vpop.f32.mrf.mxu0
  %1257 = vmatprep.mubr.bf16.mxu0 %v649
  %1258 = vmatmul.mubr.bf16.gmra.mxu0 %v648
  %v1259 = vpop.f32.mrf.mxu0
  %v1260 = vadd.f32 %v1099, %v1259
  %v1261 = vpop.f32.mrf.mxu0
  %v1262 = vpop.f32.mrf.mxu0
  %v1263 = vadd.f32 %v1102, %v1262
  %v1264 = vpop.f32.mrf.mxu0
  %1265 = vmatprep.mubr.bf16.mxu0 %v654
  %1266 = vmatmul.mubr.bf16.gmra.mxu0 %v653
  %v1267 = vpop.f32.mrf.mxu0
  %v1268 = vadd.f32 %v1107, %v1267
  %v1269 = vpop.f32.mrf.mxu0
  %v1270 = vpop.f32.mrf.mxu0
  %v1271 = vadd.f32 %v1110, %v1270
  %v1272 = vpop.f32.mrf.mxu0
  %1273 = vmatprep.mubr.bf16.mxu0 %v659
  %1274 = vmatmul.mubr.bf16.gmra.mxu0 %v658
  %v1275 = vpop.f32.mrf.mxu0
  %v1276 = vadd.f32 %v1115, %v1275
  %v1277 = vpop.f32.mrf.mxu0
  %v1278 = vpop.f32.mrf.mxu0
  %v1279 = vadd.f32 %v1118, %v1278
  %v1280 = vpop.f32.mrf.mxu0
  %1281 = vmatprep.mubr.bf16.mxu0 %v664
  %1282 = vmatmul.mubr.bf16.gmra.mxu0 %v663
  %v1283 = vpop.f32.mrf.mxu0
  %v1284 = vadd.f32 %v1123, %v1283
  %v1285 = vpop.f32.mrf.mxu0
  %v1286 = vpop.f32.mrf.mxu0
  %v1287 = vadd.f32 %v1126, %v1286
  %v1288 = vpop.f32.mrf.mxu0
  %1289 = vmatprep.mubr.bf16.mxu0 %v669
  %1290 = vmatmul.mubr.bf16.gmra.mxu0 %v668
  %v1291 = vpop.f32.mrf.mxu0
  %v1292 = vadd.f32 %v1131, %v1291
  %v1293 = vpop.f32.mrf.mxu0
  %v1294 = vpop.f32.mrf.mxu0
  %v1295 = vadd.f32 %v1134, %v1294
  %v1296 = vpop.f32.mrf.mxu0
  %1297 = vmatprep.mubr.bf16.mxu0 %v674
  %1298 = vmatmul.mubr.bf16.gmra.mxu0 %v673
  %v1299 = vpop.f32.mrf.mxu0
  %v1300 = vadd.f32 %v1139, %v1299
  %v1301 = vpop.f32.mrf.mxu0
  %v1302 = vpop.f32.mrf.mxu0
  %v1303 = vadd.f32 %v1142, %v1302
  %v1304 = vpop.f32.mrf.mxu0
  %1305 = vmatprep.mubr.bf16.mxu0 %v679
  %1306 = vmatmul.mubr.bf16.gmra.mxu0 %v678
  %v1307 = vpop.f32.mrf.mxu0
  %v1308 = vadd.f32 %v1147, %v1307
  %v1309 = vpop.f32.mrf.mxu0
  %v1310 = vpop.f32.mrf.mxu0
  %v1311 = vadd.f32 %v1150, %v1310
  %v1312 = vpop.f32.mrf.mxu0
  %1313 = vmatprep.mubr.bf16.mxu0 %v684
  %1314 = vmatmul.mubr.bf16.gmra.mxu0 %v683
  %v1315 = vpop.f32.mrf.mxu0
  %v1316 = vadd.f32 %v1155, %v1315
  %v1317 = vpop.f32.mrf.mxu0
  %v1318 = vpop.f32.mrf.mxu0
  %v1319 = vadd.f32 %v1158, %v1318
  %v1320 = vpop.f32.mrf.mxu0
  %1321 = vmatprep.mubr.bf16.mxu0 %v689
  %1322 = vmatmul.mubr.bf16.gmra.mxu0 %v688
  %v1323 = vpop.f32.mrf.mxu0
  %v1324 = vadd.f32 %v1163, %v1323
  %v1325 = vpop.f32.mrf.mxu0
  %v1326 = vpop.f32.mrf.mxu0
  %v1327 = vadd.f32 %v1166, %v1326
  %v1328 = vpop.f32.mrf.mxu0
  %1329 = vmatprep.mubr.bf16.mxu0 %v694
  %1330 = vmatmul.mubr.bf16.gmra.mxu0 %v693
  %v1331 = vpop.f32.mrf.mxu0
  %v1332 = vadd.f32 %v1171, %v1331
  %v1333 = vpop.f32.mrf.mxu0
  %v1334 = vpop.f32.mrf.mxu0
  %v1335 = vadd.f32 %v1174, %v1334
  %v1336 = vpop.f32.mrf.mxu0
  %1337 = vmatprep.mubr.bf16.mxu0 %v699
  %1338 = vmatmul.mubr.bf16.gmra.mxu0 %v698
  %v1339 = vpop.f32.mrf.mxu0
  %v1340 = vadd.f32 %v1179, %v1339
  %v1341 = vpop.f32.mrf.mxu0
  %v1342 = vpop.f32.mrf.mxu0
  %v1343 = vadd.f32 %v1182, %v1342
  %v1344 = vpop.f32.mrf.mxu0
  %1345 = vmatprep.mubr.bf16.mxu0 %v704
  %1346 = vmatmul.mubr.bf16.gmra.mxu0 %v703
  %v1347 = vpop.f32.mrf.mxu0
  %v1348 = vadd.f32 %v1187, %v1347
  %v1349 = vpop.f32.mrf.mxu0
  %v1350 = vpop.f32.mrf.mxu0
  %v1351 = vadd.f32 %v1190, %v1350
  %v1352 = vpop.f32.mrf.mxu0
  %1353 = vmatprep.mubr.bf16.mxu0 %v709
  %1354 = vmatmul.mubr.bf16.gmra.mxu0 %v708
  %v1355 = vpop.f32.mrf.mxu0
  %v1356 = vadd.f32 %v1195, %v1355
  %v1357 = vpop.f32.mrf.mxu0
  %v1358 = vpop.f32.mrf.mxu0
  %v1359 = vadd.f32 %v1198, %v1358
  %v1360 = vpop.f32.mrf.mxu0
  %1361 = vdwg.mxu0
  %1362 = vmatprep.subr.bf16.mxu0 0
  %1363 = vmatpush1.bf16.msra.mxu0 0
  %1364 = vmatprep.subr.bf16.mxu0 0
  %1365 = vmatpush1.bf16.msra.mxu0 0
  %1366 = vmatprep.subr.bf16.mxu0 0
  %1367 = vmatpush1.bf16.msra.mxu0 0
  %1368 = vmatprep.subr.bf16.mxu0 0
  %1369 = vmatpush1.bf16.msra.mxu0 0
  %1370 = vmatprep.subr.bf16.mxu0 0
  %1371 = vmatpush1.bf16.msra.mxu0 %v954
  %1372 = vmatprep.subr.bf16.mxu0 0
  %1373 = vmatpush1.bf16.msra.mxu0 %v953
  %1374 = vmatprep.subr.bf16.mxu0 0
  %1375 = vmatpush1.bf16.msra.mxu0 %v952
  %1376 = vmatprep.subr.bf16.mxu0 0
  %1377 = vmatpush1.bf16.msra.mxu0 %v951
  %1378 = vmatprep.subr.bf16.mxu0 0
  %1379 = vmatpush2.bf16.msra.mxu0 0
  %1380 = vmatprep.subr.bf16.mxu0 0
  %1381 = vmatpush2.bf16.msra.mxu0 0
  %1382 = vmatprep.subr.bf16.mxu0 0
  %1383 = vmatpush2.bf16.msra.mxu0 0
  %1384 = vmatprep.subr.bf16.mxu0 0
  %1385 = vmatpush2.bf16.msra.mxu0 0
  %1386 = vmatprep.subr.bf16.mxu0 0
  %1387 = vmatpush2.bf16.msra.mxu0 0
  %1388 = vmatprep.subr.bf16.mxu0 0
  %1389 = vmatpush2.bf16.msra.mxu0 0
  %1390 = vmatprep.subr.bf16.mxu0 0
  %1391 = vmatpush2.bf16.msra.mxu0 0
  %1392 = vmatprep.subr.bf16.mxu0 0
  %1393 = vmatpush2.bf16.msra.mxu0 0
  %1394 = vmatprep.mubr.bf16.mxu0 0
  %1395 = vmatmul.mubr.bf16.gmra.mxu0 %v993
  %v1396 = vpop.f32.mrf.mxu0
  %v1397 = vadd.f32 %v1236, %v1396
  %v1398 = vpop.f32.mrf.mxu0
  %v1399 = vpop.f32.mrf.mxu0
  %v1400 = vadd.f32 %v1239, %v1399
  %v1401 = vpop.f32.mrf.mxu0
  %1402 = vmatprep.mubr.bf16.mxu0 0
  %1403 = vmatmul.mubr.bf16.gmra.mxu0 %v996
  %v1404 = vpop.f32.mrf.mxu0
  %v1405 = vadd.f32 %v1244, %v1404
  %v1406 = vpop.f32.mrf.mxu0
  %v1407 = vpop.f32.mrf.mxu0
  %v1408 = vadd.f32 %v1247, %v1407
  %v1409 = vpop.f32.mrf.mxu0
  %1410 = vmatprep.mubr.bf16.mxu0 0
  %1411 = vmatmul.mubr.bf16.gmra.mxu0 %v999
  %v1412 = vpop.f32.mrf.mxu0
  %v1413 = vadd.f32 %v1252, %v1412
  %v1414 = vpop.f32.mrf.mxu0
  %v1415 = vpop.f32.mrf.mxu0
  %v1416 = vadd.f32 %v1255, %v1415
  %v1417 = vpop.f32.mrf.mxu0
  %1418 = vmatprep.mubr.bf16.mxu0 0
  %1419 = vmatmul.mubr.bf16.gmra.mxu0 %v1002
  %v1420 = vpop.f32.mrf.mxu0
  %v1421 = vadd.f32 %v1260, %v1420
  %v1422 = vpop.f32.mrf.mxu0
  %v1423 = vpop.f32.mrf.mxu0
  %v1424 = vadd.f32 %v1263, %v1423
  %v1425 = vpop.f32.mrf.mxu0
  %1426 = vmatprep.mubr.bf16.mxu0 0
  %1427 = vmatmul.mubr.bf16.gmra.mxu0 %v1005
  %v1428 = vpop.f32.mrf.mxu0
  %v1429 = vadd.f32 %v1268, %v1428
  %v1430 = vpop.f32.mrf.mxu0
  %v1431 = vpop.f32.mrf.mxu0
  %v1432 = vadd.f32 %v1271, %v1431
  %v1433 = vpop.f32.mrf.mxu0
  %1434 = vmatprep.mubr.bf16.mxu0 0
  %1435 = vmatmul.mubr.bf16.gmra.mxu0 %v1008
  %v1436 = vpop.f32.mrf.mxu0
  %v1437 = vadd.f32 %v1276, %v1436
  %v1438 = vpop.f32.mrf.mxu0
  %v1439 = vpop.f32.mrf.mxu0
  %v1440 = vadd.f32 %v1279, %v1439
  %v1441 = vpop.f32.mrf.mxu0
  %1442 = vmatprep.mubr.bf16.mxu0 0
  %1443 = vmatmul.mubr.bf16.gmra.mxu0 %v1011
  %v1444 = vpop.f32.mrf.mxu0
  %v1445 = vadd.f32 %v1284, %v1444
  %v1446 = vpop.f32.mrf.mxu0
  %v1447 = vpop.f32.mrf.mxu0
  %v1448 = vadd.f32 %v1287, %v1447
  %v1449 = vpop.f32.mrf.mxu0
  %1450 = vmatprep.mubr.bf16.mxu0 0
  %1451 = vmatmul.mubr.bf16.gmra.mxu0 %v1014
  %v1452 = vpop.f32.mrf.mxu0
  %v1453 = vadd.f32 %v1292, %v1452
  %v1454 = vpop.f32.mrf.mxu0
  %v1455 = vpop.f32.mrf.mxu0
  %v1456 = vadd.f32 %v1295, %v1455
  %v1457 = vpop.f32.mrf.mxu0
  %1458 = vmatprep.mubr.bf16.mxu0 0
  %1459 = vmatmul.mubr.bf16.gmra.mxu0 %v1017
  %v1460 = vpop.f32.mrf.mxu0
  %v1461 = vadd.f32 %v1300, %v1460
  %v1462 = vpop.f32.mrf.mxu0
  %v1463 = vpop.f32.mrf.mxu0
  %v1464 = vadd.f32 %v1303, %v1463
  %v1465 = vpop.f32.mrf.mxu0
  %1466 = vmatprep.mubr.bf16.mxu0 0
  %1467 = vmatmul.mubr.bf16.gmra.mxu0 %v1020
  %v1468 = vpop.f32.mrf.mxu0
  %v1469 = vadd.f32 %v1308, %v1468
  %v1470 = vpop.f32.mrf.mxu0
  %v1471 = vpop.f32.mrf.mxu0
  %v1472 = vadd.f32 %v1311, %v1471
  %v1473 = vpop.f32.mrf.mxu0
  %1474 = vmatprep.mubr.bf16.mxu0 0
  %1475 = vmatmul.mubr.bf16.gmra.mxu0 %v1023
  %v1476 = vpop.f32.mrf.mxu0
  %v1477 = vadd.f32 %v1316, %v1476
  %v1478 = vpop.f32.mrf.mxu0
  %v1479 = vpop.f32.mrf.mxu0
  %v1480 = vadd.f32 %v1319, %v1479
  %v1481 = vpop.f32.mrf.mxu0
  %1482 = vmatprep.mubr.bf16.mxu0 0
  %1483 = vmatmul.mubr.bf16.gmra.mxu0 %v1026
  %v1484 = vpop.f32.mrf.mxu0
  %v1485 = vadd.f32 %v1324, %v1484
  %v1486 = vpop.f32.mrf.mxu0
  %v1487 = vpop.f32.mrf.mxu0
  %v1488 = vadd.f32 %v1327, %v1487
  %v1489 = vpop.f32.mrf.mxu0
  %1490 = vmatprep.mubr.bf16.mxu0 0
  %1491 = vmatmul.mubr.bf16.gmra.mxu0 %v1029
  %v1492 = vpop.f32.mrf.mxu0
  %v1493 = vadd.f32 %v1332, %v1492
  %v1494 = vpop.f32.mrf.mxu0
  %v1495 = vpop.f32.mrf.mxu0
  %v1496 = vadd.f32 %v1335, %v1495
  %v1497 = vpop.f32.mrf.mxu0
  %1498 = vmatprep.mubr.bf16.mxu0 0
  %1499 = vmatmul.mubr.bf16.gmra.mxu0 %v1032
  %v1500 = vpop.f32.mrf.mxu0
  %v1501 = vadd.f32 %v1340, %v1500
  %v1502 = vpop.f32.mrf.mxu0
  %v1503 = vpop.f32.mrf.mxu0
  %v1504 = vadd.f32 %v1343, %v1503
  %v1505 = vpop.f32.mrf.mxu0
  %1506 = vmatprep.mubr.bf16.mxu0 0
  %1507 = vmatmul.mubr.bf16.gmra.mxu0 %v1035
  %v1508 = vpop.f32.mrf.mxu0
  %v1509 = vadd.f32 %v1348, %v1508
  %v1510 = vpop.f32.mrf.mxu0
  %v1511 = vpop.f32.mrf.mxu0
  %v1512 = vadd.f32 %v1351, %v1511
  %v1513 = vpop.f32.mrf.mxu0
  %1514 = vmatprep.mubr.bf16.mxu0 0
  %1515 = vmatmul.mubr.bf16.gmra.mxu0 %v1038
  %v1516 = vpop.f32.mrf.mxu0
  %v1517 = vadd.f32 %v1356, %v1516
  %v1518 = vpop.f32.mrf.mxu0
  %v1519 = vpop.f32.mrf.mxu0
  %v1520 = vadd.f32 %v1359, %v1519
  %v1521 = vpop.f32.mrf.mxu0
  %1522 = vdwg.mxu0
  %v1523 = vmax.f32 %v1397, 0.0
  %v1524 = vmax.f32 %v1400, 0.0
  %v1525 = vmax.f32 %v1405, 0.0
  %v1526 = vmax.f32 %v1408, 0.0
  %v1527 = vmax.f32 %v1413, 0.0
  %v1528 = vmax.f32 %v1416, 0.0
  %v1529 = vmax.f32 %v1421, 0.0
  %v1530 = vmax.f32 %v1424, 0.0
  %v1531 = vmax.f32 %v1429, 0.0
  %v1532 = vmax.f32 %v1432, 0.0
  %v1533 = vmax.f32 %v1437, 0.0
  %v1534 = vmax.f32 %v1440, 0.0
  %v1535 = vmax.f32 %v1445, 0.0
  %v1536 = vmax.f32 %v1448, 0.0
  %v1537 = vmax.f32 %v1453, 0.0
  %v1538 = vmax.f32 %v1456, 0.0
  %v1539 = vmax.f32 %v1461, 0.0
  %v1540 = vmax.f32 %v1464, 0.0
  %v1541 = vmax.f32 %v1469, 0.0
  %v1542 = vmax.f32 %v1472, 0.0
  %v1543 = vmax.f32 %v1477, 0.0
  %v1544 = vmax.f32 %v1480, 0.0
  %v1545 = vmax.f32 %v1485, 0.0
  %v1546 = vmax.f32 %v1488, 0.0
  %v1547 = vmax.f32 %v1493, 0.0
  %v1548 = vmax.f32 %v1496, 0.0
  %v1549 = vmax.f32 %v1501, 0.0
  %v1550 = vmax.f32 %v1504, 0.0
  %v1551 = vmax.f32 %v1509, 0.0
  %v1552 = vmax.f32 %v1512, 0.0
  %v1553 = vmax.f32 %v1517, 0.0
  %v1554 = vmax.f32 %v1520, 0.0
  %v1555 = vpack.c.bf16 %v1524, %v1523
  %v1556 = vpack.c.bf16 %v1526, %v1525
  %v1557 = vpack.c.bf16 %v1528, %v1527
  %v1558 = vpack.c.bf16 %v1530, %v1529
  %v1559 = vpack.c.bf16 %v1532, %v1531
  %v1560 = vpack.c.bf16 %v1534, %v1533
  %v1561 = vpack.c.bf16 %v1536, %v1535
  %v1562 = vpack.c.bf16 %v1538, %v1537
  %v1563 = vpack.c.bf16 %v1540, %v1539
  %v1564 = vpack.c.bf16 %v1542, %v1541
  %v1565 = vpack.c.bf16 %v1544, %v1543
  %v1566 = vpack.c.bf16 %v1546, %v1545
  %v1567 = vpack.c.bf16 %v1548, %v1547
  %v1568 = vpack.c.bf16 %v1550, %v1549
  %v1569 = vpack.c.bf16 %v1552, %v1551
  %v1570 = vpack.c.bf16 %v1554, %v1553
  %v1587 = vunpack.c.l.b16 %v1555
  %v1588 = vunpack.c.h.b16 %v1555
  %v1589 = vunpack.c.l.b16 %v1556
  %v1590 = vunpack.c.h.b16 %v1556
  %v1591 = vunpack.c.l.b16 %v1557
  %v1592 = vunpack.c.h.b16 %v1557
  %v1593 = vunpack.c.l.b16 %v1558
  %v1594 = vunpack.c.h.b16 %v1558
  %v1595 = vunpack.c.l.b16 %v1559
  %v1596 = vunpack.c.h.b16 %v1559
  %v1597 = vunpack.c.l.b16 %v1560
  %v1598 = vunpack.c.h.b16 %v1560
  %v1599 = vunpack.c.l.b16 %v1561
  %v1600 = vunpack.c.h.b16 %v1561
  %v1601 = vunpack.c.l.b16 %v1562
  %v1602 = vunpack.c.h.b16 %v1562
  %v1603 = vunpack.c.l.b16 %v1563
  %v1604 = vunpack.c.h.b16 %v1563
  %v1605 = vunpack.c.l.b16 %v1564
  %v1606 = vunpack.c.h.b16 %v1564
  %v1607 = vunpack.c.l.b16 %v1565
  %v1608 = vunpack.c.h.b16 %v1565
  %v1609 = vunpack.c.l.b16 %v1566
  %v1610 = vunpack.c.h.b16 %v1566
  %v1611 = vunpack.c.l.b16 %v1567
  %v1612 = vunpack.c.h.b16 %v1567
  %v1613 = vunpack.c.l.b16 %v1568
  %v1614 = vunpack.c.h.b16 %v1568
  %v1615 = vunpack.c.l.b16 %v1569
  %v1616 = vunpack.c.h.b16 %v1569
  %v1617 = vunpack.c.l.b16 %v1570
  %v1618 = vunpack.c.h.b16 %v1570
  %v1619 = vpack.c.b16 %v1587, %v1587
  %v1620 = vpack.c.b16 %v1588, %v1588
  %v1621 = vpack.c.b16 %v1589, %v1589
  %v1622 = vpack.c.b16 %v1590, %v1590
  %v1623 = vpack.c.b16 %v1591, %v1591
  %v1624 = vpack.c.b16 %v1592, %v1592
  %v1625 = vpack.c.b16 %v1593, %v1593
  %v1626 = vpack.c.b16 %v1594, %v1594
  %v1627 = vpack.c.b16 %v1595, %v1595
  %v1628 = vpack.c.b16 %v1596, %v1596
  %v1629 = vpack.c.b16 %v1597, %v1597
  %v1630 = vpack.c.b16 %v1598, %v1598
  %v1631 = vpack.c.b16 %v1599, %v1599
  %v1632 = vpack.c.b16 %v1600, %v1600
  %v1633 = vpack.c.b16 %v1601, %v1601
  %v1634 = vpack.c.b16 %v1602, %v1602
  %v1635 = vpack.c.b16 %v1603, %v1603
  %v1636 = vpack.c.b16 %v1604, %v1604
  %v1637 = vpack.c.b16 %v1605, %v1605
  %v1638 = vpack.c.b16 %v1606, %v1606
  %v1639 = vpack.c.b16 %v1607, %v1607
  %v1640 = vpack.c.b16 %v1608, %v1608
  %v1641 = vpack.c.b16 %v1609, %v1609
  %v1642 = vpack.c.b16 %v1610, %v1610
  %v1643 = vpack.c.b16 %v1611, %v1611
  %v1644 = vpack.c.b16 %v1612, %v1612
  %v1645 = vpack.c.b16 %v1613, %v1613
  %v1646 = vpack.c.b16 %v1614, %v1614
  %v1647 = vpack.c.b16 %v1615, %v1615
  %v1648 = vpack.c.b16 %v1616, %v1616
  %v1649 = vpack.c.b16 %v1617, %v1617
  %v1650 = vpack.c.b16 %v1618, %v1618
  %vm1683 = vcmask 257024
  %1684 = vst.msk [vmem:[%s3] sm:$0xf] %vm1683, %v1619
  %1685 = vst.msk [vmem:[%s3 + $0x4] sm:$0xf] %vm1683, %v1620
  %1686 = vst.msk [vmem:[%s3 + $0x8] sm:$0xf] %vm1683, %v1621
  %1687 = vst.msk [vmem:[%s3 + $0xc] sm:$0xf] %vm1683, %v1622
  %1688 = vst.msk [vmem:[%s3 + $0x10] sm:$0xf] %vm1683, %v1623
  %1689 = vst.msk [vmem:[%s3 + $0x14] sm:$0xf] %vm1683, %v1624
  %1690 = vst.msk [vmem:[%s3 + $0x18] sm:$0xf] %vm1683, %v1625
  %1691 = vst.msk [vmem:[%s3 + $0x1c] sm:$0xf] %vm1683, %v1626
  %1692 = vst.msk [vmem:[%s3 + $0x20] sm:$0xf] %vm1683, %v1627
  %1693 = vst.msk [vmem:[%s3 + $0x24] sm:$0xf] %vm1683, %v1628
  %1694 = vst.msk [vmem:[%s3 + $0x28] sm:$0xf] %vm1683, %v1629
  %1695 = vst.msk [vmem:[%s3 + $0x2c] sm:$0xf] %vm1683, %v1630
  %1696 = vst.msk [vmem:[%s3 + $0x30] sm:$0xf] %vm1683, %v1631
  %1697 = vst.msk [vmem:[%s3 + $0x34] sm:$0xf] %vm1683, %v1632
  %1698 = vst.msk [vmem:[%s3 + $0x38] sm:$0xf] %vm1683, %v1633
  %1699 = vst.msk [vmem:[%s3 + $0x3c] sm:$0xf] %vm1683, %v1634
  %1700 = vst.msk [vmem:[%s3 + $0x40] sm:$0xf] %vm1683, %v1635
  %1701 = vst.msk [vmem:[%s3 + $0x44] sm:$0xf] %vm1683, %v1636
  %1702 = vst.msk [vmem:[%s3 + $0x48] sm:$0xf] %vm1683, %v1637
  %1703 = vst.msk [vmem:[%s3 + $0x4c] sm:$0xf] %vm1683, %v1638
  %1704 = vst.msk [vmem:[%s3 + $0x50] sm:$0xf] %vm1683, %v1639
  %1705 = vst.msk [vmem:[%s3 + $0x54] sm:$0xf] %vm1683, %v1640
  %1706 = vst.msk [vmem:[%s3 + $0x58] sm:$0xf] %vm1683, %v1641
  %1707 = vst.msk [vmem:[%s3 + $0x5c] sm:$0xf] %vm1683, %v1642
  %1708 = vst.msk [vmem:[%s3 + $0x60] sm:$0xf] %vm1683, %v1643
  %1709 = vst.msk [vmem:[%s3 + $0x64] sm:$0xf] %vm1683, %v1644
  %1710 = vst.msk [vmem:[%s3 + $0x68] sm:$0xf] %vm1683, %v1645
  %1711 = vst.msk [vmem:[%s3 + $0x6c] sm:$0xf] %vm1683, %v1646
  %1712 = vst.msk [vmem:[%s3 + $0x70] sm:$0xf] %vm1683, %v1647
  %1713 = vst.msk [vmem:[%s3 + $0x74] sm:$0xf] %vm1683, %v1648
  %1714 = vst.msk [vmem:[%s3 + $0x78] sm:$0xf] %vm1683, %v1649
  %1715 = vst.msk [vmem:[%s3 + $0x7c] sm:$0xf] %vm1683, %v1650
  // Predicated region
  $region14: #{conv_encoder_forward.8} parent=0 // pred_check
    _
  $region15: #{conv_encoder_forward.8} parent=0 // pred_check_branch
    %1717 = sbr.rel (0) target = $region17
  $region16: #{conv_encoder_forward.8} parent=0 // pred_region
    _
  $region17: #{conv_encoder_forward.8} parent=0 // pred_fallthru
    _
  // Predicated region
  $region18: #{conv_encoder_forward.8} parent=0 // pred_check
    _
  $region19: #{conv_encoder_forward.8} parent=0 // pred_check_branch
    %1719 = sbr.rel (0) target = $region21
  $region20: #{conv_encoder_forward.8} parent=0 // pred_region
    _
  $region21: #{conv_encoder_forward.8} parent=0 // pred_fallthru
    _

// kernel: conv_encoder_forward.9
$region0: #{conv_encoder_forward.9}
  #allocation0 [shape = 'u32[]', space=smem, size = 0x4, offset = 0x4, fixed_abs, tag = 'smem constant byte address 0x4 - core index']
  #allocation1 [shape = 'u32[144,128]{1,0:T(1,128)}', space=vmem, size = 0x12000, scoped, tag = 'internal scratch']
  #allocation2 [shape = 'f32[2,1024]{1,0:T(2,128)}', space=vmem, size = 0x2000, scoped, tag = 'scratch operand']
  %s0 = inlined_call_operand.vmem [shape: bf16[2,4096], index: 0, kind: input, shape index: {}]
  %s1 = inlined_call_operand.vmem [shape: bf16[4096,1024], index: 1, kind: input, shape index: {}]
  %s2 = inlined_call_operand.vmem [shape: f32[1,1024], index: 2, kind: input, shape index: {}]
  %s3 = inlined_call_operand.vmem [shape: bf16[1024,512], index: 3, kind: input, shape index: {}]
  %s4 = inlined_call_operand.vmem [shape: f32[1,512], index: 4, kind: input, shape index: {}]
  %s5 = inlined_call_operand.vmem [shape: f32[512,50], index: 5, kind: input, shape index: {}]
  %s6 = inlined_call_operand.vmem [shape: f32[1,50], index: 6, kind: input, shape index: {}]
  %s7 = inlined_call_operand.hbm [shape: f32[2,25], index: 7, kind: output, shape index: {0}]
  %s8 = inlined_call_operand.hbm [shape: f32[2,25], index: 8, kind: output, shape index: {1}]
  %9 = xla_tuple %s7, %s8
  %s10 = sld [smem:[#allocation0]]
  $region77: #{conv_encoder_forward.9} parent=0
    _
  %s12 = ssub.s32 1, %s10
  %s13 = scalar_select 0, %s12, %s10
  $region1: #{conv_encoder_forward.9} parent=0
    #allocation3 [shape = 'u8[1024]{0}', space=vmem, size = 0x400, scoped, tag = 'output window, operand 0, single buffered']
    #allocation4 [shape = 's32[2]{0}', space=sflag, size = 0x8, scoped, tag = 'scoped memory for conv_encoder_forward.9']
    #allocation5 [shape = 'u8[1024]{0}', space=vmem, size = 0x400, scoped, tag = 'output window, operand 1, single buffered']
    #allocation6 [shape = 's32[1]{0}', space=sflag, size = 0x4, scoped, tag = 'scoped memory for conv_encoder_forward.9']
    %14 = vsyncpa [#allocation4], 0
    %15 = vsyncpa [#allocation6], 0
    loop: start=0, step=1, limit=4
    $region2: #{conv_encoder_forward.9} parent=1 // loop_pre_header
      _
    $region3: #{conv_encoder_forward.9} parent=1 // loop_header
      %s17 = sphi 0, %s21
      %p18 = scmp.ge.s32.totalorder %s17, 4
      %s27 = sphi 0, %s29
      %s30 = sphi 0, %s27
      %s31 = sphi 0, %s30
      %s47 = sphi 0, %s31
      %s53 = sphi 0, %s55
      %s56 = sphi 0, %s53
      %s57 = sphi 0, %s56
      %s73 = sphi 0, %s57
      %s77 = sphi 0, %s77
      %s79 = sphi 0, %s77
      %s80 = sphi 0, %s79
      %s94 = sphi 0, %s80
      %s98 = sphi 0, %s98
      %s100 = sphi 0, %s98
      %s101 = sphi 0, %s100
      %s115 = sphi 0, %s101
      %s119 = sphi 0, %s119
      %s121 = sphi 0, %s119
      %s122 = sphi 0, %s121
      %s136 = sphi 0, %s122
      %s140 = sphi 0, %s140
      %s142 = sphi 0, %s140
      %s143 = sphi 0, %s142
      %s157 = sphi 0, %s143
      %s161 = sphi 0, %s161
      %s163 = sphi 0, %s161
      %s164 = sphi 0, %s163
      %s178 = sphi 0, %s164
      %s182 = sphi 0, %s182
      %s184 = sphi 0, %s182
      %s185 = sphi 0, %s184
      %s199 = sphi 0, %s185
      %s203 = sphi 0, %s203
      %s205 = sphi 0, %s203
      %s206 = sphi 0, %s205
      %s220 = sphi 0, %s206
    $region4: #{conv_encoder_forward.9} parent=1 // loop_header_branch
      %20 = sbr.rel (%p18) target = $region8
    $region5: #{conv_encoder_forward.9} parent=1 // loop_body
      %s22 = ssub.s32 %s17, 1
      %s23 = ssub.s32 %s17, 2
      %s24 = sadd.s32 %s17, 1
      %s25 = ssub.s32 %s17, %s24
      %p26 = scmp.eq.s32.totalorder %s25, 0
      %s28 = sadd.s32 %s27, 1
      %s29 = scalar_select %p26, %s27, %s28
      %p32 = pneg %p26
      %p33 = scmp.eq.s32.totalorder %s17, 1
      %p34 = por %p32, %p33
      %p35 = scmp.ne.s32.totalorder %s27, %s30
      %p36 = scmp.eq.s32.totalorder %s17, 0
      %p37 = por %p35, %p36
      %p38 = scmp.ne.s32.totalorder %s27, %s30
      %p39 = scmp.eq.s32.totalorder %s22, 1
      %p40 = por %p38, %p39
      %p41 = scmp.ne.s32.totalorder %s30, %s31
      %p42 = scmp.eq.s32.totalorder %s22, 0
      %p43 = por %p41, %p42
      %p44 = scmp.ne.s32.totalorder %s30, %s31
      %p45 = scmp.eq.s32.totalorder %s23, 1
      %p46 = por %p44, %p45
      %p48 = scmp.ne.s32.totalorder %s31, %s47
      %p49 = scmp.eq.s32.totalorder %s23, 0
      %p50 = por %p48, %p49
      %s51 = ssub.s32 %s17, %s24
      %p52 = scmp.eq.s32.totalorder %s51, 0
      %s54 = sadd.s32 %s53, 1
      %s55 = scalar_select %p52, %s53, %s54
      %p58 = pneg %p52
      %p59 = scmp.eq.s32.totalorder %s17, 1
      %p60 = por %p58, %p59
      %p61 = scmp.ne.s32.totalorder %s53, %s56
      %p62 = scmp.eq.s32.totalorder %s17, 0
      %p63 = por %p61, %p62
      %p64 = scmp.ne.s32.totalorder %s53, %s56
      %p65 = scmp.eq.s32.totalorder %s22, 1
      %p66 = por %p64, %p65
      %p67 = scmp.ne.s32.totalorder %s56, %s57
      %p68 = scmp.eq.s32.totalorder %s22, 0
      %p69 = por %p67, %p68
      %p70 = scmp.ne.s32.totalorder %s56, %s57
      %p71 = scmp.eq.s32.totalorder %s23, 1
      %p72 = por %p70, %p71
      %p74 = scmp.ne.s32.totalorder %s57, %s73
      %p75 = scmp.eq.s32.totalorder %s23, 0
      %p76 = por %p74, %p75
      %s78 = sadd.s32 %s77, 1
      %p81 = scmp.eq.s32.totalorder %s17, 1
      %p82 = scmp.ne.s32.totalorder %s77, %s79
      %p83 = scmp.eq.s32.totalorder %s17, 0
      %p84 = por %p82, %p83
      %p85 = scmp.ne.s32.totalorder %s77, %s79
      %p86 = scmp.eq.s32.totalorder %s22, 1
      %p87 = por %p85, %p86
      %p88 = scmp.ne.s32.totalorder %s79, %s80
      %p89 = scmp.eq.s32.totalorder %s22, 0
      %p90 = por %p88, %p89
      %p91 = scmp.ne.s32.totalorder %s79, %s80
      %p92 = scmp.eq.s32.totalorder %s23, 1
      %p93 = por %p91, %p92
      %p95 = scmp.ne.s32.totalorder %s80, %s94
      %p96 = scmp.eq.s32.totalorder %s23, 0
      %p97 = por %p95, %p96
      %s99 = sadd.s32 %s98, 1
      %p102 = scmp.eq.s32.totalorder %s17, 1
      %p103 = scmp.ne.s32.totalorder %s98, %s100
      %p104 = scmp.eq.s32.totalorder %s17, 0
      %p105 = por %p103, %p104
      %p106 = scmp.ne.s32.totalorder %s98, %s100
      %p107 = scmp.eq.s32.totalorder %s22, 1
      %p108 = por %p106, %p107
      %p109 = scmp.ne.s32.totalorder %s100, %s101
      %p110 = scmp.eq.s32.totalorder %s22, 0
      %p111 = por %p109, %p110
      %p112 = scmp.ne.s32.totalorder %s100, %s101
      %p113 = scmp.eq.s32.totalorder %s23, 1
      %p114 = por %p112, %p113
      %p116 = scmp.ne.s32.totalorder %s101, %s115
      %p117 = scmp.eq.s32.totalorder %s23, 0
      %p118 = por %p116, %p117
      %s120 = sadd.s32 %s119, 1
      %p123 = scmp.eq.s32.totalorder %s17, 1
      %p124 = scmp.ne.s32.totalorder %s119, %s121
      %p125 = scmp.eq.s32.totalorder %s17, 0
      %p126 = por %p124, %p125
      %p127 = scmp.ne.s32.totalorder %s119, %s121
      %p128 = scmp.eq.s32.totalorder %s22, 1
      %p129 = por %p127, %p128
      %p130 = scmp.ne.s32.totalorder %s121, %s122
      %p131 = scmp.eq.s32.totalorder %s22, 0
      %p132 = por %p130, %p131
      %p133 = scmp.ne.s32.totalorder %s121, %s122
      %p134 = scmp.eq.s32.totalorder %s23, 1
      %p135 = por %p133, %p134
      %p137 = scmp.ne.s32.totalorder %s122, %s136
      %p138 = scmp.eq.s32.totalorder %s23, 0
      %p139 = por %p137, %p138
      %s141 = sadd.s32 %s140, 1
      %p144 = scmp.eq.s32.totalorder %s17, 1
      %p145 = scmp.ne.s32.totalorder %s140, %s142
      %p146 = scmp.eq.s32.totalorder %s17, 0
      %p147 = por %p145, %p146
      %p148 = scmp.ne.s32.totalorder %s140, %s142
      %p149 = scmp.eq.s32.totalorder %s22, 1
      %p150 = por %p148, %p149
      %p151 = scmp.ne.s32.totalorder %s142, %s143
      %p152 = scmp.eq.s32.totalorder %s22, 0
      %p153 = por %p151, %p152
      %p154 = scmp.ne.s32.totalorder %s142, %s143
      %p155 = scmp.eq.s32.totalorder %s23, 1
      %p156 = por %p154, %p155
      %p158 = scmp.ne.s32.totalorder %s143, %s157
      %p159 = scmp.eq.s32.totalorder %s23, 0
      %p160 = por %p158, %p159
      %s162 = sadd.s32 %s161, 1
      %p165 = scmp.eq.s32.totalorder %s17, 1
      %p166 = scmp.ne.s32.totalorder %s161, %s163
      %p167 = scmp.eq.s32.totalorder %s17, 0
      %p168 = por %p166, %p167
      %p169 = scmp.ne.s32.totalorder %s161, %s163
      %p170 = scmp.eq.s32.totalorder %s22, 1
      %p171 = por %p169, %p170
      %p172 = scmp.ne.s32.totalorder %s163, %s164
      %p173 = scmp.eq.s32.totalorder %s22, 0
      %p174 = por %p172, %p173
      %p175 = scmp.ne.s32.totalorder %s163, %s164
      %p176 = scmp.eq.s32.totalorder %s23, 1
      %p177 = por %p175, %p176
      %p179 = scmp.ne.s32.totalorder %s164, %s178
      %p180 = scmp.eq.s32.totalorder %s23, 0
      %p181 = por %p179, %p180
      %s183 = sadd.s32 %s182, 1
      %p186 = scmp.eq.s32.totalorder %s17, 1
      %p187 = scmp.ne.s32.totalorder %s182, %s184
      %p188 = scmp.eq.s32.totalorder %s17, 0
      %p189 = por %p187, %p188
      %p190 = scmp.ne.s32.totalorder %s182, %s184
      %p191 = scmp.eq.s32.totalorder %s22, 1
      %p192 = por %p190, %p191
      %p193 = scmp.ne.s32.totalorder %s184, %s185
      %p194 = scmp.eq.s32.totalorder %s22, 0
      %p195 = por %p193, %p194
      %p196 = scmp.ne.s32.totalorder %s184, %s185
      %p197 = scmp.eq.s32.totalorder %s23, 1
      %p198 = por %p196, %p197
      %p200 = scmp.ne.s32.totalorder %s185, %s199
      %p201 = scmp.eq.s32.totalorder %s23, 0
      %p202 = por %p200, %p201
      %s204 = sadd.s32 %s203, 1
      %p207 = scmp.eq.s32.totalorder %s17, 1
      %p208 = scmp.ne.s32.totalorder %s203, %s205
      %p209 = scmp.eq.s32.totalorder %s17, 0
      %p210 = por %p208, %p209
      %p211 = scmp.ne.s32.totalorder %s203, %s205
      %p212 = scmp.eq.s32.totalorder %s22, 1
      %p213 = por %p211, %p212
      %p214 = scmp.ne.s32.totalorder %s205, %s206
      %p215 = scmp.eq.s32.totalorder %s22, 0
      %p216 = por %p214, %p215
      %p217 = scmp.ne.s32.totalorder %s205, %s206
      %p218 = scmp.eq.s32.totalorder %s23, 1
      %p219 = por %p217, %p218
      %p221 = scmp.ne.s32.totalorder %s206, %s220
      %p222 = scmp.eq.s32.totalorder %s23, 0
      %p223 = por %p221, %p222
      %p224 = scmp.le.s32.totalorder 1, %s17
      %p225 = scmp.lt.s32.totalorder %s17, 3
      %p226 = pnand %p224, %p225
      %p227 = pneg %p226
      // Predicated region
      $region9: #{conv_encoder_forward.9} parent=5 // pred_check
        _
      $region10: #{conv_encoder_forward.9} parent=5 // pred_check_branch
        %229 = sbr.rel (%p226) target = $region12
      $region11: #{conv_encoder_forward.9} parent=5 // pred_region
        %s230 = ssub.s32 %s17, 1
        // Predicated region
        $region13: #{conv_encoder_forward.9} parent=11 // pred_check
          %p231 = pneg %p90
        $region14: #{conv_encoder_forward.9} parent=11 // pred_check_branch
          %233 = sbr.rel (%p231) target = $region16
        $region15: #{conv_encoder_forward.9} parent=11 // pred_region
          _
        $region16: #{conv_encoder_forward.9} parent=11 // pred_fallthru
          _
        // Predicated region
        $region17: #{conv_encoder_forward.9} parent=11 // pred_check
          %p234 = pneg %p111
        $region18: #{conv_encoder_forward.9} parent=11 // pred_check_branch
          %236 = sbr.rel (%p234) target = $region20
        $region19: #{conv_encoder_forward.9} parent=11 // pred_region
          _
        $region20: #{conv_encoder_forward.9} parent=11 // pred_fallthru
          _
        // Predicated region
        $region21: #{conv_encoder_forward.9} parent=11 // pred_check
          %p237 = pneg %p132
        $region22: #{conv_encoder_forward.9} parent=11 // pred_check_branch
          %239 = sbr.rel (%p237) target = $region24
        $region23: #{conv_encoder_forward.9} parent=11 // pred_region
          _
        $region24: #{conv_encoder_forward.9} parent=11 // pred_fallthru
          _
        // Predicated region
        $region25: #{conv_encoder_forward.9} parent=11 // pred_check
          %p240 = pneg %p153
        $region26: #{conv_encoder_forward.9} parent=11 // pred_check_branch
          %242 = sbr.rel (%p240) target = $region28
        $region27: #{conv_encoder_forward.9} parent=11 // pred_region
          _
        $region28: #{conv_encoder_forward.9} parent=11 // pred_fallthru
          _
        // Predicated region
        $region29: #{conv_encoder_forward.9} parent=11 // pred_check
          %p243 = pneg %p174
        $region30: #{conv_encoder_forward.9} parent=11 // pred_check_branch
          %245 = sbr.rel (%p243) target = $region32
        $region31: #{conv_encoder_forward.9} parent=11 // pred_region
          _
        $region32: #{conv_encoder_forward.9} parent=11 // pred_fallthru
          _
      $region12: #{conv_encoder_forward.9} parent=5 // pred_fallthru
        _
      %p246 = scmp.lt.s32.totalorder %s17, 2
      // Predicated region
      $region33: #{conv_encoder_forward.9} parent=5 // pred_check
        %p247 = pneg %p246
      $region34: #{conv_encoder_forward.9} parent=5 // pred_check_branch
        %249 = sbr.rel (%p247) target = $region36
      $region35: #{conv_encoder_forward.9} parent=5 // pred_region
        // Predicated region
        $region37: #{conv_encoder_forward.9} parent=35 // pred_check
          %p250 = pneg %p37
        $region38: #{conv_encoder_forward.9} parent=35 // pred_check_branch
          %252 = sbr.rel (%p250) target = $region40
        $region39: #{conv_encoder_forward.9} parent=35 // pred_region
          %s253 = smul.u32 16, %s17
          %p254 = scmp.lt.s32.totalorder %s253, 31
          %s255 = scalar_select %p254, %s253, 31
          %s256 = scalar_lea.vmem %s0, %s255
          %s257 = smul.u32 16, %s17
        $region40: #{conv_encoder_forward.9} parent=35 // pred_fallthru
          _
        // Predicated region
        $region41: #{conv_encoder_forward.9} parent=35 // pred_check
          %p258 = pneg %p63
        $region42: #{conv_encoder_forward.9} parent=35 // pred_check_branch
          %260 = sbr.rel (%p258) target = $region44
        $region43: #{conv_encoder_forward.9} parent=35 // pred_region
          %s261 = smul.u32 256, %s17
          %p262 = scmp.lt.s32.totalorder %s261, 511
          %s263 = scalar_select %p262, %s261, 511
          %s264 = smul.addr %s263, 8
          %s265 = smul.addr %s264, 4
          %s266 = scalar_lea.vmem %s1, %s265
          %s267 = smul.u32 256, %s17
        $region44: #{conv_encoder_forward.9} parent=35 // pred_fallthru
          _
      $region36: #{conv_encoder_forward.9} parent=5 // pred_fallthru
        _
      %p268 = scmp.le.s32.totalorder 1, %s17
      %p269 = scmp.lt.s32.totalorder %s17, 3
      %p270 = pnand %p268, %p269
      %p271 = pneg %p270
      // Predicated region
      $region45: #{conv_encoder_forward.9} parent=5 // pred_check
        _
      $region46: #{conv_encoder_forward.9} parent=5 // pred_check_branch
        %273 = sbr.rel (%p270) target = $region48
      $region47: #{conv_encoder_forward.9} parent=5 // pred_region
        %s274 = ssub.s32 %s17, 1
        %s275 = smul.u32 16, %s22
        %p276 = scmp.lt.s32.totalorder %s275, 31
        %s277 = scalar_select %p276, %s275, 31
        %s278 = scalar_lea.vmem %s0, %s277
        %p279 = pneg %p43
        %p280 = pneg %p40
        %s281 = smul.u32 256, %s22
        %p282 = scmp.lt.s32.totalorder %s281, 511
        %s283 = scalar_select %p282, %s281, 511
        %s284 = smul.addr %s283, 8
        %s285 = smul.addr %s284, 4
        %s286 = scalar_lea.vmem %s1, %s285
        %p287 = pneg %p69
        %p288 = pneg %p66
        %p289 = pneg %p90
        %p290 = pneg %p87
        %p291 = pneg %p111
        %p292 = pneg %p108
        %p293 = pneg %p132
        %p294 = pneg %p129
        %p295 = pneg %p153
        %p296 = pneg %p150
        %p297 = pneg %p174
        %p298 = pneg %p171
        %p299 = pneg %p195
        %p300 = pneg %p192
        %p301 = pneg %p216
        %p302 = pneg %p213
        %s303 = smul.u32 16, %s22
        %p304 = scmp.lt.s32.totalorder %s303, 31
        %s305 = scalar_select %p304, %s303, 31
        %s306 = scalar_lea.vmem %s0, %s305
        %s307 = smul.u32 16, %s22
        %s308 = smul.u32 256, %s22
        %p309 = scmp.lt.s32.totalorder %s308, 511
        %s310 = scalar_select %p309, %s308, 511
        %s311 = smul.addr %s310, 8
        %s312 = smul.addr %s311, 4
        %s313 = scalar_lea.vmem %s1, %s312
        %s314 = smul.u32 256, %s22
        %p315 = scmp.eq.s32.totalorder %s22, 0
        // Predicated region
        $region49: #{conv_encoder_forward.9} parent=47 // pred_check
          %p316 = pneg %p315
        $region50: #{conv_encoder_forward.9} parent=47 // pred_check_branch
          %318 = sbr.rel (%p316) target = $region52
        $region51: #{conv_encoder_forward.9} parent=47 // pred_region
          %319 = vst [vmem:[#allocation2] sm:$0xff] 0.0
          %320 = vst [vmem:[#allocation2 + $0x8] sm:$0xff] 0.0
        $region52: #{conv_encoder_forward.9} parent=47 // pred_fallthru
          _
        %v321 = vld [vmem:[#allocation2] sm:$0xff]
        %v322 = vld [vmem:[#allocation2 + $0x8] sm:$0xff]
        %v323 = vld [vmem:[%s306] sm:$0xff]
        %v324 = vld [vmem:[%s306 + $0x8] sm:$0xff]
        %v325 = vld [vmem:[%s313] sm:$0xff]
        %v326 = vld [vmem:[%s313 + $0x8] sm:$0xff]
        %v327 = vld [vmem:[%s313 + $0x10] sm:$0xff]
        %v328 = vld [vmem:[%s313 + $0x18] sm:$0xff]
        %v329 = vld [vmem:[%s313 + $0x20] sm:$0xff]
        %v330 = vld [vmem:[%s313 + $0x28] sm:$0xff]
        %v331 = vld [vmem:[%s313 + $0x30] sm:$0xff]
        %v332 = vld [vmem:[%s313 + $0x38] sm:$0xff]
        %v333 = vld [vmem:[%s313 + $0x40] sm:$0xff]
        %v334 = vld [vmem:[%s313 + $0x48] sm:$0xff]
        %v335 = vld [vmem:[%s313 + $0x50] sm:$0xff]
        %v336 = vld [vmem:[%s313 + $0x58] sm:$0xff]
        %v337 = vld [vmem:[%s313 + $0x60] sm:$0xff]
        %v338 = vld [vmem:[%s313 + $0x68] sm:$0xff]
        %v339 = vld [vmem:[%s313 + $0x70] sm:$0xff]
        %v340 = vld [vmem:[%s313 + $0x78] sm:$0xff]
        %v341 = vld [vmem:[%s313 + $0x80] sm:$0xff]
        %v342 = vld [vmem:[%s313 + $0x88] sm:$0xff]
        %v343 = vld [vmem:[%s313 + $0x90] sm:$0xff]
        %v344 = vld [vmem:[%s313 + $0x98] sm:$0xff]
        %v345 = vld [vmem:[%s313 + $0xa0] sm:$0xff]
        %v346 = vld [vmem:[%s313 + $0xa8] sm:$0xff]
        %v347 = vld [vmem:[%s313 + $0xb0] sm:$0xff]
        %v348 = vld [vmem:[%s313 + $0xb8] sm:$0xff]
        %v349 = vld [vmem:[%s313 + $0xc0] sm:$0xff]
        %v350 = vld [vmem:[%s313 + $0xc8] sm:$0xff]
        %v351 = vld [vmem:[%s313 + $0xd0] sm:$0xff]
        %v352 = vld [vmem:[%s313 + $0xd8] sm:$0xff]
        %v353 = vld [vmem:[%s313 + $0xe0] sm:$0xff]
        %v354 = vld [vmem:[%s313 + $0xe8] sm:$0xff]
        %v355 = vld [vmem:[%s313 + $0xf0] sm:$0xff]
        %v356 = vld [vmem:[%s313 + $0xf8] sm:$0xff]
        %v357 = vld [vmem:[%s313 + $0x100] sm:$0xff]
        %v358 = vld [vmem:[%s313 + $0x108] sm:$0xff]
        %v359 = vld [vmem:[%s313 + $0x110] sm:$0xff]
        %v360 = vld [vmem:[%s313 + $0x118] sm:$0xff]
        %v361 = vld [vmem:[%s313 + $0x120] sm:$0xff]
        %v362 = vld [vmem:[%s313 + $0x128] sm:$0xff]
        %v363 = vld [vmem:[%s313 + $0x130] sm:$0xff]
        %v364 = vld [vmem:[%s313 + $0x138] sm:$0xff]
        %v365 = vld [vmem:[%s313 + $0x140] sm:$0xff]
        %v366 = vld [vmem:[%s313 + $0x148] sm:$0xff]
        %v367 = vld [vmem:[%s313 + $0x150] sm:$0xff]
        %v368 = vld [vmem:[%s313 + $0x158] sm:$0xff]
        %v369 = vld [vmem:[%s313 + $0x160] sm:$0xff]
        %v370 = vld [vmem:[%s313 + $0x168] sm:$0xff]
        %v371 = vld [vmem:[%s313 + $0x170] sm:$0xff]
        %v372 = vld [vmem:[%s313 + $0x178] sm:$0xff]
        %v373 = vld [vmem:[%s313 + $0x180] sm:$0xff]
        %v374 = vld [vmem:[%s313 + $0x188] sm:$0xff]
        %v375 = vld [vmem:[%s313 + $0x190] sm:$0xff]
        %v376 = vld [vmem:[%s313 + $0x198] sm:$0xff]
        %v377 = vld [vmem:[%s313 + $0x1a0] sm:$0xff]
        %v378 = vld [vmem:[%s313 + $0x1a8] sm:$0xff]
        %v379 = vld [vmem:[%s313 + $0x1b0] sm:$0xff]
        %v380 = vld [vmem:[%s313 + $0x1b8] sm:$0xff]
        %v381 = vld [vmem:[%s313 + $0x1c0] sm:$0xff]
        %v382 = vld [vmem:[%s313 + $0x1c8] sm:$0xff]
        %v383 = vld [vmem:[%s313 + $0x1d0] sm:$0xff]
        %v384 = vld [vmem:[%s313 + $0x1d8] sm:$0xff]
        %v385 = vld [vmem:[%s313 + $0x1e0] sm:$0xff]
        %v386 = vld [vmem:[%s313 + $0x1e8] sm:$0xff]
        %v387 = vld [vmem:[%s313 + $0x1f0] sm:$0xff]
        %v388 = vld [vmem:[%s313 + $0x1f8] sm:$0xff]
        %v389 = vld [vmem:[%s313 + $0x200] sm:$0xff]
        %v390 = vld [vmem:[%s313 + $0x208] sm:$0xff]
        %v391 = vld [vmem:[%s313 + $0x210] sm:$0xff]
        %v392 = vld [vmem:[%s313 + $0x218] sm:$0xff]
        %v393 = vld [vmem:[%s313 + $0x220] sm:$0xff]
        %v394 = vld [vmem:[%s313 + $0x228] sm:$0xff]
        %v395 = vld [vmem:[%s313 + $0x230] sm:$0xff]
        %v396 = vld [vmem:[%s313 + $0x238] sm:$0xff]
        %v397 = vld [vmem:[%s313 + $0x240] sm:$0xff]
        %v398 = vld [vmem:[%s313 + $0x248] sm:$0xff]
        %v399 = vld [vmem:[%s313 + $0x250] sm:$0xff]
        %v400 = vld [vmem:[%s313 + $0x258] sm:$0xff]
        %v401 = vld [vmem:[%s313 + $0x260] sm:$0xff]
        %v402 = vld [vmem:[%s313 + $0x268] sm:$0xff]
        %v403 = vld [vmem:[%s313 + $0x270] sm:$0xff]
        %v404 = vld [vmem:[%s313 + $0x278] sm:$0xff]
        %v405 = vld [vmem:[%s313 + $0x280] sm:$0xff]
        %v406 = vld [vmem:[%s313 + $0x288] sm:$0xff]
        %v407 = vld [vmem:[%s313 + $0x290] sm:$0xff]
        %v408 = vld [vmem:[%s313 + $0x298] sm:$0xff]
        %v409 = vld [vmem:[%s313 + $0x2a0] sm:$0xff]
        %v410 = vld [vmem:[%s313 + $0x2a8] sm:$0xff]
        %v411 = vld [vmem:[%s313 + $0x2b0] sm:$0xff]
        %v412 = vld [vmem:[%s313 + $0x2b8] sm:$0xff]
        %v413 = vld [vmem:[%s313 + $0x2c0] sm:$0xff]
        %v414 = vld [vmem:[%s313 + $0x2c8] sm:$0xff]
        %v415 = vld [vmem:[%s313 + $0x2d0] sm:$0xff]
        %v416 = vld [vmem:[%s313 + $0x2d8] sm:$0xff]
        %v417 = vld [vmem:[%s313 + $0x2e0] sm:$0xff]
        %v418 = vld [vmem:[%s313 + $0x2e8] sm:$0xff]
        %v419 = vld [vmem:[%s313 + $0x2f0] sm:$0xff]
        %v420 = vld [vmem:[%s313 + $0x2f8] sm:$0xff]
        %v421 = vld [vmem:[%s313 + $0x300] sm:$0xff]
        %v422 = vld [vmem:[%s313 + $0x308] sm:$0xff]
        %v423 = vld [vmem:[%s313 + $0x310] sm:$0xff]
        %v424 = vld [vmem:[%s313 + $0x318] sm:$0xff]
        %v425 = vld [vmem:[%s313 + $0x320] sm:$0xff]
        %v426 = vld [vmem:[%s313 + $0x328] sm:$0xff]
        %v427 = vld [vmem:[%s313 + $0x330] sm:$0xff]
        %v428 = vld [vmem:[%s313 + $0x338] sm:$0xff]
        %v429 = vld [vmem:[%s313 + $0x340] sm:$0xff]
        %v430 = vld [vmem:[%s313 + $0x348] sm:$0xff]
        %v431 = vld [vmem:[%s313 + $0x350] sm:$0xff]
        %v432 = vld [vmem:[%s313 + $0x358] sm:$0xff]
        %v433 = vld [vmem:[%s313 + $0x360] sm:$0xff]
        %v434 = vld [vmem:[%s313 + $0x368] sm:$0xff]
        %v435 = vld [vmem:[%s313 + $0x370] sm:$0xff]
        %v436 = vld [vmem:[%s313 + $0x378] sm:$0xff]
        %v437 = vld [vmem:[%s313 + $0x380] sm:$0xff]
        %v438 = vld [vmem:[%s313 + $0x388] sm:$0xff]
        %v439 = vld [vmem:[%s313 + $0x390] sm:$0xff]
        %v440 = vld [vmem:[%s313 + $0x398] sm:$0xff]
        %v441 = vld [vmem:[%s313 + $0x3a0] sm:$0xff]
        %v442 = vld [vmem:[%s313 + $0x3a8] sm:$0xff]
        %v443 = vld [vmem:[%s313 + $0x3b0] sm:$0xff]
        %v444 = vld [vmem:[%s313 + $0x3b8] sm:$0xff]
        %v445 = vld [vmem:[%s313 + $0x3c0] sm:$0xff]
        %v446 = vld [vmem:[%s313 + $0x3c8] sm:$0xff]
        %v447 = vld [vmem:[%s313 + $0x3d0] sm:$0xff]
        %v448 = vld [vmem:[%s313 + $0x3d8] sm:$0xff]
        %v449 = vld [vmem:[%s313 + $0x3e0] sm:$0xff]
        %v450 = vld [vmem:[%s313 + $0x3e8] sm:$0xff]
        %v451 = vld [vmem:[%s313 + $0x3f0] sm:$0xff]
        %v452 = vld [vmem:[%s313 + $0x3f8] sm:$0xff]
        %v453 = vld [vmem:[%s313 + $0x400] sm:$0xff]
        %v454 = vld [vmem:[%s313 + $0x408] sm:$0xff]
        %v455 = vld [vmem:[%s313 + $0x410] sm:$0xff]
        %v456 = vld [vmem:[%s313 + $0x418] sm:$0xff]
        %v457 = vld [vmem:[%s313 + $0x420] sm:$0xff]
        %v458 = vld [vmem:[%s313 + $0x428] sm:$0xff]
        %v459 = vld [vmem:[%s313 + $0x430] sm:$0xff]
        %v460 = vld [vmem:[%s313 + $0x438] sm:$0xff]
        %v461 = vld [vmem:[%s313 + $0x440] sm:$0xff]
        %v462 = vld [vmem:[%s313 + $0x448] sm:$0xff]
        %v463 = vld [vmem:[%s313 + $0x450] sm:$0xff]
        %v464 = vld [vmem:[%s313 + $0x458] sm:$0xff]
        %v465 = vld [vmem:[%s313 + $0x460] sm:$0xff]
        %v466 = vld [vmem:[%s313 + $0x468] sm:$0xff]
        %v467 = vld [vmem:[%s313 + $0x470] sm:$0xff]
        %v468 = vld [vmem:[%s313 + $0x478] sm:$0xff]
        %v469 = vld [vmem:[%s313 + $0x480] sm:$0xff]
        %v470 = vld [vmem:[%s313 + $0x488] sm:$0xff]
        %v471 = vld [vmem:[%s313 + $0x490] sm:$0xff]
        %v472 = vld [vmem:[%s313 + $0x498] sm:$0xff]
        %v473 = vld [vmem:[%s313 + $0x4a0] sm:$0xff]
        %v474 = vld [vmem:[%s313 + $0x4a8] sm:$0xff]
        %v475 = vld [vmem:[%s313 + $0x4b0] sm:$0xff]
        %v476 = vld [vmem:[%s313 + $0x4b8] sm:$0xff]
        %v477 = vld [vmem:[%s313 + $0x4c0] sm:$0xff]
        %v478 = vld [vmem:[%s313 + $0x4c8] sm:$0xff]
        %v479 = vld [vmem:[%s313 + $0x4d0] sm:$0xff]
        %v480 = vld [vmem:[%s313 + $0x4d8] sm:$0xff]
        %v481 = vld [vmem:[%s313 + $0x4e0] sm:$0xff]
        %v482 = vld [vmem:[%s313 + $0x4e8] sm:$0xff]
        %v483 = vld [vmem:[%s313 + $0x4f0] sm:$0xff]
        %v484 = vld [vmem:[%s313 + $0x4f8] sm:$0xff]
        %v485 = vld [vmem:[%s313 + $0x500] sm:$0xff]
        %v486 = vld [vmem:[%s313 + $0x508] sm:$0xff]
        %v487 = vld [vmem:[%s313 + $0x510] sm:$0xff]
        %v488 = vld [vmem:[%s313 + $0x518] sm:$0xff]
        %v489 = vld [vmem:[%s313 + $0x520] sm:$0xff]
        %v490 = vld [vmem:[%s313 + $0x528] sm:$0xff]
        %v491 = vld [vmem:[%s313 + $0x530] sm:$0xff]
        %v492 = vld [vmem:[%s313 + $0x538] sm:$0xff]
        %v493 = vld [vmem:[%s313 + $0x540] sm:$0xff]
        %v494 = vld [vmem:[%s313 + $0x548] sm:$0xff]
        %v495 = vld [vmem:[%s313 + $0x550] sm:$0xff]
        %v496 = vld [vmem:[%s313 + $0x558] sm:$0xff]
        %v497 = vld [vmem:[%s313 + $0x560] sm:$0xff]
        %v498 = vld [vmem:[%s313 + $0x568] sm:$0xff]
        %v499 = vld [vmem:[%s313 + $0x570] sm:$0xff]
        %v500 = vld [vmem:[%s313 + $0x578] sm:$0xff]
        %v501 = vld [vmem:[%s313 + $0x580] sm:$0xff]
        %v502 = vld [vmem:[%s313 + $0x588] sm:$0xff]
        %v503 = vld [vmem:[%s313 + $0x590] sm:$0xff]
        %v504 = vld [vmem:[%s313 + $0x598] sm:$0xff]
        %v505 = vld [vmem:[%s313 + $0x5a0] sm:$0xff]
        %v506 = vld [vmem:[%s313 + $0x5a8] sm:$0xff]
        %v507 = vld [vmem:[%s313 + $0x5b0] sm:$0xff]
        %v508 = vld [vmem:[%s313 + $0x5b8] sm:$0xff]
        %v509 = vld [vmem:[%s313 + $0x5c0] sm:$0xff]
        %v510 = vld [vmem:[%s313 + $0x5c8] sm:$0xff]
        %v511 = vld [vmem:[%s313 + $0x5d0] sm:$0xff]
        %v512 = vld [vmem:[%s313 + $0x5d8] sm:$0xff]
        %v513 = vld [vmem:[%s313 + $0x5e0] sm:$0xff]
        %v514 = vld [vmem:[%s313 + $0x5e8] sm:$0xff]
        %v515 = vld [vmem:[%s313 + $0x5f0] sm:$0xff]
        %v516 = vld [vmem:[%s313 + $0x5f8] sm:$0xff]
        %v517 = vld [vmem:[%s313 + $0x600] sm:$0xff]
        %v518 = vld [vmem:[%s313 + $0x608] sm:$0xff]
        %v519 = vld [vmem:[%s313 + $0x610] sm:$0xff]
        %v520 = vld [vmem:[%s313 + $0x618] sm:$0xff]
        %v521 = vld [vmem:[%s313 + $0x620] sm:$0xff]
        %v522 = vld [vmem:[%s313 + $0x628] sm:$0xff]
        %v523 = vld [vmem:[%s313 + $0x630] sm:$0xff]
        %v524 = vld [vmem:[%s313 + $0x638] sm:$0xff]
        %v525 = vld [vmem:[%s313 + $0x640] sm:$0xff]
        %v526 = vld [vmem:[%s313 + $0x648] sm:$0xff]
        %v527 = vld [vmem:[%s313 + $0x650] sm:$0xff]
        %v528 = vld [vmem:[%s313 + $0x658] sm:$0xff]
        %v529 = vld [vmem:[%s313 + $0x660] sm:$0xff]
        %v530 = vld [vmem:[%s313 + $0x668] sm:$0xff]
        %v531 = vld [vmem:[%s313 + $0x670] sm:$0xff]
        %v532 = vld [vmem:[%s313 + $0x678] sm:$0xff]
        %v533 = vld [vmem:[%s313 + $0x680] sm:$0xff]
        %v534 = vld [vmem:[%s313 + $0x688] sm:$0xff]
        %v535 = vld [vmem:[%s313 + $0x690] sm:$0xff]
        %v536 = vld [vmem:[%s313 + $0x698] sm:$0xff]
        %v537 = vld [vmem:[%s313 + $0x6a0] sm:$0xff]
        %v538 = vld [vmem:[%s313 + $0x6a8] sm:$0xff]
        %v539 = vld [vmem:[%s313 + $0x6b0] sm:$0xff]
        %v540 = vld [vmem:[%s313 + $0x6b8] sm:$0xff]
        %v541 = vld [vmem:[%s313 + $0x6c0] sm:$0xff]
        %v542 = vld [vmem:[%s313 + $0x6c8] sm:$0xff]
        %v543 = vld [vmem:[%s313 + $0x6d0] sm:$0xff]
        %v544 = vld [vmem:[%s313 + $0x6d8] sm:$0xff]
        %v545 = vld [vmem:[%s313 + $0x6e0] sm:$0xff]
        %v546 = vld [vmem:[%s313 + $0x6e8] sm:$0xff]
        %v547 = vld [vmem:[%s313 + $0x6f0] sm:$0xff]
        %v548 = vld [vmem:[%s313 + $0x6f8] sm:$0xff]
        %v549 = vld [vmem:[%s313 + $0x700] sm:$0xff]
        %v550 = vld [vmem:[%s313 + $0x708] sm:$0xff]
        %v551 = vld [vmem:[%s313 + $0x710] sm:$0xff]
        %v552 = vld [vmem:[%s313 + $0x718] sm:$0xff]
        %v553 = vld [vmem:[%s313 + $0x720] sm:$0xff]
        %v554 = vld [vmem:[%s313 + $0x728] sm:$0xff]
        %v555 = vld [vmem:[%s313 + $0x730] sm:$0xff]
        %v556 = vld [vmem:[%s313 + $0x738] sm:$0xff]
        %v557 = vld [vmem:[%s313 + $0x740] sm:$0xff]
        %v558 = vld [vmem:[%s313 + $0x748] sm:$0xff]
        %v559 = vld [vmem:[%s313 + $0x750] sm:$0xff]
        %v560 = vld [vmem:[%s313 + $0x758] sm:$0xff]
        %v561 = vld [vmem:[%s313 + $0x760] sm:$0xff]
        %v562 = vld [vmem:[%s313 + $0x768] sm:$0xff]
        %v563 = vld [vmem:[%s313 + $0x770] sm:$0xff]
        %v564 = vld [vmem:[%s313 + $0x778] sm:$0xff]
        %v565 = vld [vmem:[%s313 + $0x780] sm:$0xff]
        %v566 = vld [vmem:[%s313 + $0x788] sm:$0xff]
        %v567 = vld [vmem:[%s313 + $0x790] sm:$0xff]
        %v568 = vld [vmem:[%s313 + $0x798] sm:$0xff]
        %v569 = vld [vmem:[%s313 + $0x7a0] sm:$0xff]
        %v570 = vld [vmem:[%s313 + $0x7a8] sm:$0xff]
        %v571 = vld [vmem:[%s313 + $0x7b0] sm:$0xff]
        %v572 = vld [vmem:[%s313 + $0x7b8] sm:$0xff]
        %v573 = vld [vmem:[%s313 + $0x7c0] sm:$0xff]
        %v574 = vld [vmem:[%s313 + $0x7c8] sm:$0xff]
        %v575 = vld [vmem:[%s313 + $0x7d0] sm:$0xff]
        %v576 = vld [vmem:[%s313 + $0x7d8] sm:$0xff]
        %v577 = vld [vmem:[%s313 + $0x7e0] sm:$0xff]
        %v578 = vld [vmem:[%s313 + $0x7e8] sm:$0xff]
        %v579 = vld [vmem:[%s313 + $0x7f0] sm:$0xff]
        %v580 = vld [vmem:[%s313 + $0x7f8] sm:$0xff]
        %v581 = vld [vmem:[%s313 + $0x800] sm:$0xff]
        %v582 = vld [vmem:[%s313 + $0x808] sm:$0xff]
        %v583 = vld [vmem:[%s313 + $0x810] sm:$0xff]
        %v584 = vld [vmem:[%s313 + $0x818] sm:$0xff]
        %v585 = vld [vmem:[%s313 + $0x820] sm:$0xff]
        %v586 = vld [vmem:[%s313 + $0x828] sm:$0xff]
        %v587 = vld [vmem:[%s313 + $0x830] sm:$0xff]
        %v588 = vld [vmem:[%s313 + $0x838] sm:$0xff]
        %v589 = vld [vmem:[%s313 + $0x840] sm:$0xff]
        %v590 = vld [vmem:[%s313 + $0x848] sm:$0xff]
        %v591 = vld [vmem:[%s313 + $0x850] sm:$0xff]
        %v592 = vld [vmem:[%s313 + $0x858] sm:$0xff]
        %v593 = vld [vmem:[%s313 + $0x860] sm:$0xff]
        %v594 = vld [vmem:[%s313 + $0x868] sm:$0xff]
        %v595 = vld [vmem:[%s313 + $0x870] sm:$0xff]
        %v596 = vld [vmem:[%s313 + $0x878] sm:$0xff]
        %v597 = vld [vmem:[%s313 + $0x880] sm:$0xff]
        %v598 = vld [vmem:[%s313 + $0x888] sm:$0xff]
        %v599 = vld [vmem:[%s313 + $0x890] sm:$0xff]
        %v600 = vld [vmem:[%s313 + $0x898] sm:$0xff]
        %v601 = vld [vmem:[%s313 + $0x8a0] sm:$0xff]
        %v602 = vld [vmem:[%s313 + $0x8a8] sm:$0xff]
        %v603 = vld [vmem:[%s313 + $0x8b0] sm:$0xff]
        %v604 = vld [vmem:[%s313 + $0x8b8] sm:$0xff]
        %v605 = vld [vmem:[%s313 + $0x8c0] sm:$0xff]
        %v606 = vld [vmem:[%s313 + $0x8c8] sm:$0xff]
        %v607 = vld [vmem:[%s313 + $0x8d0] sm:$0xff]
        %v608 = vld [vmem:[%s313 + $0x8d8] sm:$0xff]
        %v609 = vld [vmem:[%s313 + $0x8e0] sm:$0xff]
        %v610 = vld [vmem:[%s313 + $0x8e8] sm:$0xff]
        %v611 = vld [vmem:[%s313 + $0x8f0] sm:$0xff]
        %v612 = vld [vmem:[%s313 + $0x8f8] sm:$0xff]
        %v613 = vld [vmem:[%s313 + $0x900] sm:$0xff]
        %v614 = vld [vmem:[%s313 + $0x908] sm:$0xff]
        %v615 = vld [vmem:[%s313 + $0x910] sm:$0xff]
        %v616 = vld [vmem:[%s313 + $0x918] sm:$0xff]
        %v617 = vld [vmem:[%s313 + $0x920] sm:$0xff]
        %v618 = vld [vmem:[%s313 + $0x928] sm:$0xff]
        %v619 = vld [vmem:[%s313 + $0x930] sm:$0xff]
        %v620 = vld [vmem:[%s313 + $0x938] sm:$0xff]
        %v621 = vld [vmem:[%s313 + $0x940] sm:$0xff]
        %v622 = vld [vmem:[%s313 + $0x948] sm:$0xff]
        %v623 = vld [vmem:[%s313 + $0x950] sm:$0xff]
        %v624 = vld [vmem:[%s313 + $0x958] sm:$0xff]
        %v625 = vld [vmem:[%s313 + $0x960] sm:$0xff]
        %v626 = vld [vmem:[%s313 + $0x968] sm:$0xff]
        %v627 = vld [vmem:[%s313 + $0x970] sm:$0xff]
        %v628 = vld [vmem:[%s313 + $0x978] sm:$0xff]
        %v629 = vld [vmem:[%s313 + $0x980] sm:$0xff]
        %v630 = vld [vmem:[%s313 + $0x988] sm:$0xff]
        %v631 = vld [vmem:[%s313 + $0x990] sm:$0xff]
        %v632 = vld [vmem:[%s313 + $0x998] sm:$0xff]
        %v633 = vld [vmem:[%s313 + $0x9a0] sm:$0xff]
        %v634 = vld [vmem:[%s313 + $0x9a8] sm:$0xff]
        %v635 = vld [vmem:[%s313 + $0x9b0] sm:$0xff]
        %v636 = vld [vmem:[%s313 + $0x9b8] sm:$0xff]
        %v637 = vld [vmem:[%s313 + $0x9c0] sm:$0xff]
        %v638 = vld [vmem:[%s313 + $0x9c8] sm:$0xff]
        %v639 = vld [vmem:[%s313 + $0x9d0] sm:$0xff]
        %v640 = vld [vmem:[%s313 + $0x9d8] sm:$0xff]
        %v641 = vld [vmem:[%s313 + $0x9e0] sm:$0xff]
        %v642 = vld [vmem:[%s313 + $0x9e8] sm:$0xff]
        %v643 = vld [vmem:[%s313 + $0x9f0] sm:$0xff]
        %v644 = vld [vmem:[%s313 + $0x9f8] sm:$0xff]
        %v645 = vld [vmem:[%s313 + $0xa00] sm:$0xff]
        %v646 = vld [vmem:[%s313 + $0xa08] sm:$0xff]
        %v647 = vld [vmem:[%s313 + $0xa10] sm:$0xff]
        %v648 = vld [vmem:[%s313 + $0xa18] sm:$0xff]
        %v649 = vld [vmem:[%s313 + $0xa20] sm:$0xff]
        %v650 = vld [vmem:[%s313 + $0xa28] sm:$0xff]
        %v651 = vld [vmem:[%s313 + $0xa30] sm:$0xff]
        %v652 = vld [vmem:[%s313 + $0xa38] sm:$0xff]
        %v653 = vld [vmem:[%s313 + $0xa40] sm:$0xff]
        %v654 = vld [vmem:[%s313 + $0xa48] sm:$0xff]
        %v655 = vld [vmem:[%s313 + $0xa50] sm:$0xff]
        %v656 = vld [vmem:[%s313 + $0xa58] sm:$0xff]
        %v657 = vld [vmem:[%s313 + $0xa60] sm:$0xff]
        %v658 = vld [vmem:[%s313 + $0xa68] sm:$0xff]
        %v659 = vld [vmem:[%s313 + $0xa70] sm:$0xff]
        %v660 = vld [vmem:[%s313 + $0xa78] sm:$0xff]
        %v661 = vld [vmem:[%s313 + $0xa80] sm:$0xff]
        %v662 = vld [vmem:[%s313 + $0xa88] sm:$0xff]
        %v663 = vld [vmem:[%s313 + $0xa90] sm:$0xff]
        %v664 = vld [vmem:[%s313 + $0xa98] sm:$0xff]
        %v665 = vld [vmem:[%s313 + $0xaa0] sm:$0xff]
        %v666 = vld [vmem:[%s313 + $0xaa8] sm:$0xff]
        %v667 = vld [vmem:[%s313 + $0xab0] sm:$0xff]
        %v668 = vld [vmem:[%s313 + $0xab8] sm:$0xff]
        %v669 = vld [vmem:[%s313 + $0xac0] sm:$0xff]
        %v670 = vld [vmem:[%s313 + $0xac8] sm:$0xff]
        %v671 = vld [vmem:[%s313 + $0xad0] sm:$0xff]
        %v672 = vld [vmem:[%s313 + $0xad8] sm:$0xff]
        %v673 = vld [vmem:[%s313 + $0xae0] sm:$0xff]
        %v674 = vld [vmem:[%s313 + $0xae8] sm:$0xff]
        %v675 = vld [vmem:[%s313 + $0xaf0] sm:$0xff]
        %v676 = vld [vmem:[%s313 + $0xaf8] sm:$0xff]
        %v677 = vld [vmem:[%s313 + $0xb00] sm:$0xff]
        %v678 = vld [vmem:[%s313 + $0xb08] sm:$0xff]
        %v679 = vld [vmem:[%s313 + $0xb10] sm:$0xff]
        %v680 = vld [vmem:[%s313 + $0xb18] sm:$0xff]
        %v681 = vld [vmem:[%s313 + $0xb20] sm:$0xff]
        %v682 = vld [vmem:[%s313 + $0xb28] sm:$0xff]
        %v683 = vld [vmem:[%s313 + $0xb30] sm:$0xff]
        %v684 = vld [vmem:[%s313 + $0xb38] sm:$0xff]
        %v685 = vld [vmem:[%s313 + $0xb40] sm:$0xff]
        %v686 = vld [vmem:[%s313 + $0xb48] sm:$0xff]
        %v687 = vld [vmem:[%s313 + $0xb50] sm:$0xff]
        %v688 = vld [vmem:[%s313 + $0xb58] sm:$0xff]
        %v689 = vld [vmem:[%s313 + $0xb60] sm:$0xff]
        %v690 = vld [vmem:[%s313 + $0xb68] sm:$0xff]
        %v691 = vld [vmem:[%s313 + $0xb70] sm:$0xff]
        %v692 = vld [vmem:[%s313 + $0xb78] sm:$0xff]
        %v693 = vld [vmem:[%s313 + $0xb80] sm:$0xff]
        %v694 = vld [vmem:[%s313 + $0xb88] sm:$0xff]
        %v695 = vld [vmem:[%s313 + $0xb90] sm:$0xff]
        %v696 = vld [vmem:[%s313 + $0xb98] sm:$0xff]
        %v697 = vld [vmem:[%s313 + $0xba0] sm:$0xff]
        %v698 = vld [vmem:[%s313 + $0xba8] sm:$0xff]
        %v699 = vld [vmem:[%s313 + $0xbb0] sm:$0xff]
        %v700 = vld [vmem:[%s313 + $0xbb8] sm:$0xff]
        %v701 = vld [vmem:[%s313 + $0xbc0] sm:$0xff]
        %v702 = vld [vmem:[%s313 + $0xbc8] sm:$0xff]
        %v703 = vld [vmem:[%s313 + $0xbd0] sm:$0xff]
        %v704 = vld [vmem:[%s313 + $0xbd8] sm:$0xff]
        %v705 = vld [vmem:[%s313 + $0xbe0] sm:$0xff]
        %v706 = vld [vmem:[%s313 + $0xbe8] sm:$0xff]
        %v707 = vld [vmem:[%s313 + $0xbf0] sm:$0xff]
        %v708 = vld [vmem:[%s313 + $0xbf8] sm:$0xff]
        %v709 = vld [vmem:[%s313 + $0xc00] sm:$0xff]
        %v710 = vld [vmem:[%s313 + $0xc08] sm:$0xff]
        %v711 = vld [vmem:[%s313 + $0xc10] sm:$0xff]
        %v712 = vld [vmem:[%s313 + $0xc18] sm:$0xff]
        %v713 = vld [vmem:[%s313 + $0xc20] sm:$0xff]
        %v714 = vld [vmem:[%s313 + $0xc28] sm:$0xff]
        %v715 = vld [vmem:[%s313 + $0xc30] sm:$0xff]
        %v716 = vld [vmem:[%s313 + $0xc38] sm:$0xff]
        %v717 = vld [vmem:[%s313 + $0xc40] sm:$0xff]
        %v718 = vld [vmem:[%s313 + $0xc48] sm:$0xff]
        %v719 = vld [vmem:[%s313 + $0xc50] sm:$0xff]
        %v720 = vld [vmem:[%s313 + $0xc58] sm:$0xff]
        %v721 = vld [vmem:[%s313 + $0xc60] sm:$0xff]
        %v722 = vld [vmem:[%s313 + $0xc68] sm:$0xff]
        %v723 = vld [vmem:[%s313 + $0xc70] sm:$0xff]
        %v724 = vld [vmem:[%s313 + $0xc78] sm:$0xff]
        %v725 = vld [vmem:[%s313 + $0xc80] sm:$0xff]
        %v726 = vld [vmem:[%s313 + $0xc88] sm:$0xff]
        %v727 = vld [vmem:[%s313 + $0xc90] sm:$0xff]
        %v728 = vld [vmem:[%s313 + $0xc98] sm:$0xff]
        %v729 = vld [vmem:[%s313 + $0xca0] sm:$0xff]
        %v730 = vld [vmem:[%s313 + $0xca8] sm:$0xff]
        %v731 = vld [vmem:[%s313 + $0xcb0] sm:$0xff]
        %v732 = vld [vmem:[%s313 + $0xcb8] sm:$0xff]
        %v733 = vld [vmem:[%s313 + $0xcc0] sm:$0xff]
        %v734 = vld [vmem:[%s313 + $0xcc8] sm:$0xff]
        %v735 = vld [vmem:[%s313 + $0xcd0] sm:$0xff]
        %v736 = vld [vmem:[%s313 + $0xcd8] sm:$0xff]
        %v737 = vld [vmem:[%s313 + $0xce0] sm:$0xff]
        %v738 = vld [vmem:[%s313 + $0xce8] sm:$0xff]
        %v739 = vld [vmem:[%s313 + $0xcf0] sm:$0xff]
        %v740 = vld [vmem:[%s313 + $0xcf8] sm:$0xff]
        %v741 = vld [vmem:[%s313 + $0xd00] sm:$0xff]
        %v742 = vld [vmem:[%s313 + $0xd08] sm:$0xff]
        %v743 = vld [vmem:[%s313 + $0xd10] sm:$0xff]
        %v744 = vld [vmem:[%s313 + $0xd18] sm:$0xff]
        %v745 = vld [vmem:[%s313 + $0xd20] sm:$0xff]
        %v746 = vld [vmem:[%s313 + $0xd28] sm:$0xff]
        %v747 = vld [vmem:[%s313 + $0xd30] sm:$0xff]
        %v748 = vld [vmem:[%s313 + $0xd38] sm:$0xff]
        %v749 = vld [vmem:[%s313 + $0xd40] sm:$0xff]
        %v750 = vld [vmem:[%s313 + $0xd48] sm:$0xff]
        %v751 = vld [vmem:[%s313 + $0xd50] sm:$0xff]
        %v752 = vld [vmem:[%s313 + $0xd58] sm:$0xff]
        %v753 = vld [vmem:[%s313 + $0xd60] sm:$0xff]
        %v754 = vld [vmem:[%s313 + $0xd68] sm:$0xff]
        %v755 = vld [vmem:[%s313 + $0xd70] sm:$0xff]
        %v756 = vld [vmem:[%s313 + $0xd78] sm:$0xff]
        %v757 = vld [vmem:[%s313 + $0xd80] sm:$0xff]
        %v758 = vld [vmem:[%s313 + $0xd88] sm:$0xff]
        %v759 = vld [vmem:[%s313 + $0xd90] sm:$0xff]
        %v760 = vld [vmem:[%s313 + $0xd98] sm:$0xff]
        %v761 = vld [vmem:[%s313 + $0xda0] sm:$0xff]
        %v762 = vld [vmem:[%s313 + $0xda8] sm:$0xff]
        %v763 = vld [vmem:[%s313 + $0xdb0] sm:$0xff]
        %v764 = vld [vmem:[%s313 + $0xdb8] sm:$0xff]
        %v765 = vld [vmem:[%s313 + $0xdc0] sm:$0xff]
        %v766 = vld [vmem:[%s313 + $0xdc8] sm:$0xff]
        %v767 = vld [vmem:[%s313 + $0xdd0] sm:$0xff]
        %v768 = vld [vmem:[%s313 + $0xdd8] sm:$0xff]
        %v769 = vld [vmem:[%s313 + $0xde0] sm:$0xff]
        %v770 = vld [vmem:[%s313 + $0xde8] sm:$0xff]
        %v771 = vld [vmem:[%s313 + $0xdf0] sm:$0xff]
        %v772 = vld [vmem:[%s313 + $0xdf8] sm:$0xff]
        %v773 = vld [vmem:[%s313 + $0xe00] sm:$0xff]
        %v774 = vld [vmem:[%s313 + $0xe08] sm:$0xff]
        %v775 = vld [vmem:[%s313 + $0xe10] sm:$0xff]
        %v776 = vld [vmem:[%s313 + $0xe18] sm:$0xff]
        %v777 = vld [vmem:[%s313 + $0xe20] sm:$0xff]
        %v778 = vld [vmem:[%s313 + $0xe28] sm:$0xff]
        %v779 = vld [vmem:[%s313 + $0xe30] sm:$0xff]
        %v780 = vld [vmem:[%s313 + $0xe38] sm:$0xff]
        %v781 = vld [vmem:[%s313 + $0xe40] sm:$0xff]
        %v782 = vld [vmem:[%s313 + $0xe48] sm:$0xff]
        %v783 = vld [vmem:[%s313 + $0xe50] sm:$0xff]
        %v784 = vld [vmem:[%s313 + $0xe58] sm:$0xff]
        %v785 = vld [vmem:[%s313 + $0xe60] sm:$0xff]
        %v786 = vld [vmem:[%s313 + $0xe68] sm:$0xff]
        %v787 = vld [vmem:[%s313 + $0xe70] sm:$0xff]
        %v788 = vld [vmem:[%s313 + $0xe78] sm:$0xff]
        %v789 = vld [vmem:[%s313 + $0xe80] sm:$0xff]
        %v790 = vld [vmem:[%s313 + $0xe88] sm:$0xff]
        %v791 = vld [vmem:[%s313 + $0xe90] sm:$0xff]
        %v792 = vld [vmem:[%s313 + $0xe98] sm:$0xff]
        %v793 = vld [vmem:[%s313 + $0xea0] sm:$0xff]
        %v794 = vld [vmem:[%s313 + $0xea8] sm:$0xff]
        %v795 = vld [vmem:[%s313 + $0xeb0] sm:$0xff]
        %v796 = vld [vmem:[%s313 + $0xeb8] sm:$0xff]
        %v797 = vld [vmem:[%s313 + $0xec0] sm:$0xff]
        %v798 = vld [vmem:[%s313 + $0xec8] sm:$0xff]
        %v799 = vld [vmem:[%s313 + $0xed0] sm:$0xff]
        %v800 = vld [vmem:[%s313 + $0xed8] sm:$0xff]
        %v801 = vld [vmem:[%s313 + $0xee0] sm:$0xff]
        %v802 = vld [vmem:[%s313 + $0xee8] sm:$0xff]
        %v803 = vld [vmem:[%s313 + $0xef0] sm:$0xff]
        %v804 = vld [vmem:[%s313 + $0xef8] sm:$0xff]
        %v805 = vld [vmem:[%s313 + $0xf00] sm:$0xff]
        %v806 = vld [vmem:[%s313 + $0xf08] sm:$0xff]
        %v807 = vld [vmem:[%s313 + $0xf10] sm:$0xff]
        %v808 = vld [vmem:[%s313 + $0xf18] sm:$0xff]
        %v809 = vld [vmem:[%s313 + $0xf20] sm:$0xff]
        %v810 = vld [vmem:[%s313 + $0xf28] sm:$0xff]
        %v811 = vld [vmem:[%s313 + $0xf30] sm:$0xff]
        %v812 = vld [vmem:[%s313 + $0xf38] sm:$0xff]
        %v813 = vld [vmem:[%s313 + $0xf40] sm:$0xff]
        %v814 = vld [vmem:[%s313 + $0xf48] sm:$0xff]
        %v815 = vld [vmem:[%s313 + $0xf50] sm:$0xff]
        %v816 = vld [vmem:[%s313 + $0xf58] sm:$0xff]
        %v817 = vld [vmem:[%s313 + $0xf60] sm:$0xff]
        %v818 = vld [vmem:[%s313 + $0xf68] sm:$0xff]
        %v819 = vld [vmem:[%s313 + $0xf70] sm:$0xff]
        %v820 = vld [vmem:[%s313 + $0xf78] sm:$0xff]
        %v821 = vld [vmem:[%s313 + $0xf80] sm:$0xff]
        %v822 = vld [vmem:[%s313 + $0xf88] sm:$0xff]
        %v823 = vld [vmem:[%s313 + $0xf90] sm:$0xff]
        %v824 = vld [vmem:[%s313 + $0xf98] sm:$0xff]
        %v825 = vld [vmem:[%s313 + $0xfa0] sm:$0xff]
        %v826 = vld [vmem:[%s313 + $0xfa8] sm:$0xff]
        %v827 = vld [vmem:[%s313 + $0xfb0] sm:$0xff]
        %v828 = vld [vmem:[%s313 + $0xfb8] sm:$0xff]
        %v829 = vld [vmem:[%s313 + $0xfc0] sm:$0xff]
        %v830 = vld [vmem:[%s313 + $0xfc8] sm:$0xff]
        %v831 = vld [vmem:[%s313 + $0xfd0] sm:$0xff]
        %v832 = vld [vmem:[%s313 + $0xfd8] sm:$0xff]
        %v833 = vld [vmem:[%s313 + $0xfe0] sm:$0xff]
        %v834 = vld [vmem:[%s313 + $0xfe8] sm:$0xff]
        %v835 = vld [vmem:[%s313 + $0xff0] sm:$0xff]
        %v836 = vld [vmem:[%s313 + $0xff8] sm:$0xff]
        %v837 = vld [vmem:[%s313 + $0x1000] sm:$0xff]
        %v838 = vld [vmem:[%s313 + $0x1008] sm:$0xff]
        %v839 = vld [vmem:[%s313 + $0x1010] sm:$0xff]
        %v840 = vld [vmem:[%s313 + $0x1018] sm:$0xff]
        %v841 = vld [vmem:[%s313 + $0x1020] sm:$0xff]
        %v842 = vld [vmem:[%s313 + $0x1028] sm:$0xff]
        %v843 = vld [vmem:[%s313 + $0x1030] sm:$0xff]
        %v844 = vld [vmem:[%s313 + $0x1038] sm:$0xff]
        %v845 = vld [vmem:[%s313 + $0x1040] sm:$0xff]
        %v846 = vld [vmem:[%s313 + $0x1048] sm:$0xff]
        %v847 = vld [vmem:[%s313 + $0x1050] sm:$0xff]
        %v848 = vld [vmem:[%s313 + $0x1058] sm:$0xff]
        %v849 = vld [vmem:[%s313 + $0x1060] sm:$0xff]
        %v850 = vld [vmem:[%s313 + $0x1068] sm:$0xff]
        %v851 = vld [vmem:[%s313 + $0x1070] sm:$0xff]
        %v852 = vld [vmem:[%s313 + $0x1078] sm:$0xff]
        %v853 = vld [vmem:[%s313 + $0x1080] sm:$0xff]
        %v854 = vld [vmem:[%s313 + $0x1088] sm:$0xff]
        %v855 = vld [vmem:[%s313 + $0x1090] sm:$0xff]
        %v856 = vld [vmem:[%s313 + $0x1098] sm:$0xff]
        %v857 = vld [vmem:[%s313 + $0x10a0] sm:$0xff]
        %v858 = vld [vmem:[%s313 + $0x10a8] sm:$0xff]
        %v859 = vld [vmem:[%s313 + $0x10b0] sm:$0xff]
        %v860 = vld [vmem:[%s313 + $0x10b8] sm:$0xff]
        %v861 = vld [vmem:[%s313 + $0x10c0] sm:$0xff]
        %v862 = vld [vmem:[%s313 + $0x10c8] sm:$0xff]
        %v863 = vld [vmem:[%s313 + $0x10d0] sm:$0xff]
        %v864 = vld [vmem:[%s313 + $0x10d8] sm:$0xff]
        %v865 = vld [vmem:[%s313 + $0x10e0] sm:$0xff]
        %v866 = vld [vmem:[%s313 + $0x10e8] sm:$0xff]
        %v867 = vld [vmem:[%s313 + $0x10f0] sm:$0xff]
        %v868 = vld [vmem:[%s313 + $0x10f8] sm:$0xff]
        %v869 = vld [vmem:[%s313 + $0x1100] sm:$0xff]
        %v870 = vld [vmem:[%s313 + $0x1108] sm:$0xff]
        %v871 = vld [vmem:[%s313 + $0x1110] sm:$0xff]
        %v872 = vld [vmem:[%s313 + $0x1118] sm:$0xff]
        %v873 = vld [vmem:[%s313 + $0x1120] sm:$0xff]
        %v874 = vld [vmem:[%s313 + $0x1128] sm:$0xff]
        %v875 = vld [vmem:[%s313 + $0x1130] sm:$0xff]
        %v876 = vld [vmem:[%s313 + $0x1138] sm:$0xff]
        %v877 = vld [vmem:[%s313 + $0x1140] sm:$0xff]
        %v878 = vld [vmem:[%s313 + $0x1148] sm:$0xff]
        %v879 = vld [vmem:[%s313 + $0x1150] sm:$0xff]
        %v880 = vld [vmem:[%s313 + $0x1158] sm:$0xff]
        %v881 = vld [vmem:[%s313 + $0x1160] sm:$0xff]
        %v882 = vld [vmem:[%s313 + $0x1168] sm:$0xff]
        %v883 = vld [vmem:[%s313 + $0x1170] sm:$0xff]
        %v884 = vld [vmem:[%s313 + $0x1178] sm:$0xff]
        %v885 = vld [vmem:[%s313 + $0x1180] sm:$0xff]
        %v886 = vld [vmem:[%s313 + $0x1188] sm:$0xff]
        %v887 = vld [vmem:[%s313 + $0x1190] sm:$0xff]
        %v888 = vld [vmem:[%s313 + $0x1198] sm:$0xff]
        %v889 = vld [vmem:[%s313 + $0x11a0] sm:$0xff]
        %v890 = vld [vmem:[%s313 + $0x11a8] sm:$0xff]
        %v891 = vld [vmem:[%s313 + $0x11b0] sm:$0xff]
        %v892 = vld [vmem:[%s313 + $0x11b8] sm:$0xff]
        %v893 = vld [vmem:[%s313 + $0x11c0] sm:$0xff]
        %v894 = vld [vmem:[%s313 + $0x11c8] sm:$0xff]
        %v895 = vld [vmem:[%s313 + $0x11d0] sm:$0xff]
        %v896 = vld [vmem:[%s313 + $0x11d8] sm:$0xff]
        %v897 = vld [vmem:[%s313 + $0x11e0] sm:$0xff]
        %v898 = vld [vmem:[%s313 + $0x11e8] sm:$0xff]
        %v899 = vld [vmem:[%s313 + $0x11f0] sm:$0xff]
        %v900 = vld [vmem:[%s313 + $0x11f8] sm:$0xff]
        %v901 = vld [vmem:[%s313 + $0x1200] sm:$0xff]
        %v902 = vld [vmem:[%s313 + $0x1208] sm:$0xff]
        %v903 = vld [vmem:[%s313 + $0x1210] sm:$0xff]
        %v904 = vld [vmem:[%s313 + $0x1218] sm:$0xff]
        %v905 = vld [vmem:[%s313 + $0x1220] sm:$0xff]
        %v906 = vld [vmem:[%s313 + $0x1228] sm:$0xff]
        %v907 = vld [vmem:[%s313 + $0x1230] sm:$0xff]
        %v908 = vld [vmem:[%s313 + $0x1238] sm:$0xff]
        %v909 = vld [vmem:[%s313 + $0x1240] sm:$0xff]
        %v910 = vld [vmem:[%s313 + $0x1248] sm:$0xff]
        %v911 = vld [vmem:[%s313 + $0x1250] sm:$0xff]
        %v912 = vld [vmem:[%s313 + $0x1258] sm:$0xff]
        %v913 = vld [vmem:[%s313 + $0x1260] sm:$0xff]
        %v914 = vld [vmem:[%s313 + $0x1268] sm:$0xff]
        %v915 = vld [vmem:[%s313 + $0x1270] sm:$0xff]
        %v916 = vld [vmem:[%s313 + $0x1278] sm:$0xff]
        %v917 = vld [vmem:[%s313 + $0x1280] sm:$0xff]
        %v918 = vld [vmem:[%s313 + $0x1288] sm:$0xff]
        %v919 = vld [vmem:[%s313 + $0x1290] sm:$0xff]
        %v920 = vld [vmem:[%s313 + $0x1298] sm:$0xff]
        %v921 = vld [vmem:[%s313 + $0x12a0] sm:$0xff]
        %v922 = vld [vmem:[%s313 + $0x12a8] sm:$0xff]
        %v923 = vld [vmem:[%s313 + $0x12b0] sm:$0xff]
        %v924 = vld [vmem:[%s313 + $0x12b8] sm:$0xff]
        %v925 = vld [vmem:[%s313 + $0x12c0] sm:$0xff]
        %v926 = vld [vmem:[%s313 + $0x12c8] sm:$0xff]
        %v927 = vld [vmem:[%s313 + $0x12d0] sm:$0xff]
        %v928 = vld [vmem:[%s313 + $0x12d8] sm:$0xff]
        %v929 = vld [vmem:[%s313 + $0x12e0] sm:$0xff]
        %v930 = vld [vmem:[%s313 + $0x12e8] sm:$0xff]
        %v931 = vld [vmem:[%s313 + $0x12f0] sm:$0xff]
        %v932 = vld [vmem:[%s313 + $0x12f8] sm:$0xff]
        %v933 = vld [vmem:[%s313 + $0x1300] sm:$0xff]
        %v934 = vld [vmem:[%s313 + $0x1308] sm:$0xff]
        %v935 = vld [vmem:[%s313 + $0x1310] sm:$0xff]
        %v936 = vld [vmem:[%s313 + $0x1318] sm:$0xff]
        %v937 = vld [vmem:[%s313 + $0x1320] sm:$0xff]
        %v938 = vld [vmem:[%s313 + $0x1328] sm:$0xff]
        %v939 = vld [vmem:[%s313 + $0x1330] sm:$0xff]
        %v940 = vld [vmem:[%s313 + $0x1338] sm:$0xff]
        %v941 = vld [vmem:[%s313 + $0x1340] sm:$0xff]
        %v942 = vld [vmem:[%s313 + $0x1348] sm:$0xff]
        %v943 = vld [vmem:[%s313 + $0x1350] sm:$0xff]
        %v944 = vld [vmem:[%s313 + $0x1358] sm:$0xff]
        %v945 = vld [vmem:[%s313 + $0x1360] sm:$0xff]
        %v946 = vld [vmem:[%s313 + $0x1368] sm:$0xff]
        %v947 = vld [vmem:[%s313 + $0x1370] sm:$0xff]
        %v948 = vld [vmem:[%s313 + $0x1378] sm:$0xff]
        %v949 = vld [vmem:[%s313 + $0x1380] sm:$0xff]
        %v950 = vld [vmem:[%s313 + $0x1388] sm:$0xff]
        %v951 = vld [vmem:[%s313 + $0x1390] sm:$0xff]
        %v952 = vld [vmem:[%s313 + $0x1398] sm:$0xff]
        %v953 = vld [vmem:[%s313 + $0x13a0] sm:$0xff]
        %v954 = vld [vmem:[%s313 + $0x13a8] sm:$0xff]
        %v955 = vld [vmem:[%s313 + $0x13b0] sm:$0xff]
        %v956 = vld [vmem:[%s313 + $0x13b8] sm:$0xff]
        %v957 = vld [vmem:[%s313 + $0x13c0] sm:$0xff]
        %v958 = vld [vmem:[%s313 + $0x13c8] sm:$0xff]
        %v959 = vld [vmem:[%s313 + $0x13d0] sm:$0xff]
        %v960 = vld [vmem:[%s313 + $0x13d8] sm:$0xff]
        %v961 = vld [vmem:[%s313 + $0x13e0] sm:$0xff]
        %v962 = vld [vmem:[%s313 + $0x13e8] sm:$0xff]
        %v963 = vld [vmem:[%s313 + $0x13f0] sm:$0xff]
        %v964 = vld [vmem:[%s313 + $0x13f8] sm:$0xff]
        %v965 = vld [vmem:[%s313 + $0x1400] sm:$0xff]
        %v966 = vld [vmem:[%s313 + $0x1408] sm:$0xff]
        %v967 = vld [vmem:[%s313 + $0x1410] sm:$0xff]
        %v968 = vld [vmem:[%s313 + $0x1418] sm:$0xff]
        %v969 = vld [vmem:[%s313 + $0x1420] sm:$0xff]
        %v970 = vld [vmem:[%s313 + $0x1428] sm:$0xff]
        %v971 = vld [vmem:[%s313 + $0x1430] sm:$0xff]
        %v972 = vld [vmem:[%s313 + $0x1438] sm:$0xff]
        %v973 = vld [vmem:[%s313 + $0x1440] sm:$0xff]
        %v974 = vld [vmem:[%s313 + $0x1448] sm:$0xff]
        %v975 = vld [vmem:[%s313 + $0x1450] sm:$0xff]
        %v976 = vld [vmem:[%s313 + $0x1458] sm:$0xff]
        %v977 = vld [vmem:[%s313 + $0x1460] sm:$0xff]
        %v978 = vld [vmem:[%s313 + $0x1468] sm:$0xff]
        %v979 = vld [vmem:[%s313 + $0x1470] sm:$0xff]
        %v980 = vld [vmem:[%s313 + $0x1478] sm:$0xff]
        %v981 = vld [vmem:[%s313 + $0x1480] sm:$0xff]
        %v982 = vld [vmem:[%s313 + $0x1488] sm:$0xff]
        %v983 = vld [vmem:[%s313 + $0x1490] sm:$0xff]
        %v984 = vld [vmem:[%s313 + $0x1498] sm:$0xff]
        %v985 = vld [vmem:[%s313 + $0x14a0] sm:$0xff]
        %v986 = vld [vmem:[%s313 + $0x14a8] sm:$0xff]
        %v987 = vld [vmem:[%s313 + $0x14b0] sm:$0xff]
        %v988 = vld [vmem:[%s313 + $0x14b8] sm:$0xff]
        %v989 = vld [vmem:[%s313 + $0x14c0] sm:$0xff]
        %v990 = vld [vmem:[%s313 + $0x14c8] sm:$0xff]
        %v991 = vld [vmem:[%s313 + $0x14d0] sm:$0xff]
        %v992 = vld [vmem:[%s313 + $0x14d8] sm:$0xff]
        %v993 = vld [vmem:[%s313 + $0x14e0] sm:$0xff]
        %v994 = vld [vmem:[%s313 + $0x14e8] sm:$0xff]
        %v995 = vld [vmem:[%s313 + $0x14f0] sm:$0xff]
        %v996 = vld [vmem:[%s313 + $0x14f8] sm:$0xff]
        %v997 = vld [vmem:[%s313 + $0x1500] sm:$0xff]
        %v998 = vld [vmem:[%s313 + $0x1508] sm:$0xff]
        %v999 = vld [vmem:[%s313 + $0x1510] sm:$0xff]
        %v1000 = vld [vmem:[%s313 + $0x1518] sm:$0xff]
        %v1001 = vld [vmem:[%s313 + $0x1520] sm:$0xff]
        %v1002 = vld [vmem:[%s313 + $0x1528] sm:$0xff]
        %v1003 = vld [vmem:[%s313 + $0x1530] sm:$0xff]
        %v1004 = vld [vmem:[%s313 + $0x1538] sm:$0xff]
        %v1005 = vld [vmem:[%s313 + $0x1540] sm:$0xff]
        %v1006 = vld [vmem:[%s313 + $0x1548] sm:$0xff]
        %v1007 = vld [vmem:[%s313 + $0x1550] sm:$0xff]
        %v1008 = vld [vmem:[%s313 + $0x1558] sm:$0xff]
        %v1009 = vld [vmem:[%s313 + $0x1560] sm:$0xff]
        %v1010 = vld [vmem:[%s313 + $0x1568] sm:$0xff]
        %v1011 = vld [vmem:[%s313 + $0x1570] sm:$0xff]
        %v1012 = vld [vmem:[%s313 + $0x1578] sm:$0xff]
        %v1013 = vld [vmem:[%s313 + $0x1580] sm:$0xff]
        %v1014 = vld [vmem:[%s313 + $0x1588] sm:$0xff]
        %v1015 = vld [vmem:[%s313 + $0x1590] sm:$0xff]
        %v1016 = vld [vmem:[%s313 + $0x1598] sm:$0xff]
        %v1017 = vld [vmem:[%s313 + $0x15a0] sm:$0xff]
        %v1018 = vld [vmem:[%s313 + $0x15a8] sm:$0xff]
        %v1019 = vld [vmem:[%s313 + $0x15b0] sm:$0xff]
        %v1020 = vld [vmem:[%s313 + $0x15b8] sm:$0xff]
        %v1021 = vld [vmem:[%s313 + $0x15c0] sm:$0xff]
        %v1022 = vld [vmem:[%s313 + $0x15c8] sm:$0xff]
        %v1023 = vld [vmem:[%s313 + $0x15d0] sm:$0xff]
        %v1024 = vld [vmem:[%s313 + $0x15d8] sm:$0xff]
        %v1025 = vld [vmem:[%s313 + $0x15e0] sm:$0xff]
        %v1026 = vld [vmem:[%s313 + $0x15e8] sm:$0xff]
        %v1027 = vld [vmem:[%s313 + $0x15f0] sm:$0xff]
        %v1028 = vld [vmem:[%s313 + $0x15f8] sm:$0xff]
        %v1029 = vld [vmem:[%s313 + $0x1600] sm:$0xff]
        %v1030 = vld [vmem:[%s313 + $0x1608] sm:$0xff]
        %v1031 = vld [vmem:[%s313 + $0x1610] sm:$0xff]
        %v1032 = vld [vmem:[%s313 + $0x1618] sm:$0xff]
        %v1033 = vld [vmem:[%s313 + $0x1620] sm:$0xff]
        %v1034 = vld [vmem:[%s313 + $0x1628] sm:$0xff]
        %v1035 = vld [vmem:[%s313 + $0x1630] sm:$0xff]
        %v1036 = vld [vmem:[%s313 + $0x1638] sm:$0xff]
        %v1037 = vld [vmem:[%s313 + $0x1640] sm:$0xff]
        %v1038 = vld [vmem:[%s313 + $0x1648] sm:$0xff]
        %v1039 = vld [vmem:[%s313 + $0x1650] sm:$0xff]
        %v1040 = vld [vmem:[%s313 + $0x1658] sm:$0xff]
        %v1041 = vld [vmem:[%s313 + $0x1660] sm:$0xff]
        %v1042 = vld [vmem:[%s313 + $0x1668] sm:$0xff]
        %v1043 = vld [vmem:[%s313 + $0x1670] sm:$0xff]
        %v1044 = vld [vmem:[%s313 + $0x1678] sm:$0xff]
        %v1045 = vld [vmem:[%s313 + $0x1680] sm:$0xff]
        %v1046 = vld [vmem:[%s313 + $0x1688] sm:$0xff]
        %v1047 = vld [vmem:[%s313 + $0x1690] sm:$0xff]
        %v1048 = vld [vmem:[%s313 + $0x1698] sm:$0xff]
        %v1049 = vld [vmem:[%s313 + $0x16a0] sm:$0xff]
        %v1050 = vld [vmem:[%s313 + $0x16a8] sm:$0xff]
        %v1051 = vld [vmem:[%s313 + $0x16b0] sm:$0xff]
        %v1052 = vld [vmem:[%s313 + $0x16b8] sm:$0xff]
        %v1053 = vld [vmem:[%s313 + $0x16c0] sm:$0xff]
        %v1054 = vld [vmem:[%s313 + $0x16c8] sm:$0xff]
        %v1055 = vld [vmem:[%s313 + $0x16d0] sm:$0xff]
        %v1056 = vld [vmem:[%s313 + $0x16d8] sm:$0xff]
        %v1057 = vld [vmem:[%s313 + $0x16e0] sm:$0xff]
        %v1058 = vld [vmem:[%s313 + $0x16e8] sm:$0xff]
        %v1059 = vld [vmem:[%s313 + $0x16f0] sm:$0xff]
        %v1060 = vld [vmem:[%s313 + $0x16f8] sm:$0xff]
        %v1061 = vld [vmem:[%s313 + $0x1700] sm:$0xff]
        %v1062 = vld [vmem:[%s313 + $0x1708] sm:$0xff]
        %v1063 = vld [vmem:[%s313 + $0x1710] sm:$0xff]
        %v1064 = vld [vmem:[%s313 + $0x1718] sm:$0xff]
        %v1065 = vld [vmem:[%s313 + $0x1720] sm:$0xff]
        %v1066 = vld [vmem:[%s313 + $0x1728] sm:$0xff]
        %v1067 = vld [vmem:[%s313 + $0x1730] sm:$0xff]
        %v1068 = vld [vmem:[%s313 + $0x1738] sm:$0xff]
        %v1069 = vld [vmem:[%s313 + $0x1740] sm:$0xff]
        %v1070 = vld [vmem:[%s313 + $0x1748] sm:$0xff]
        %v1071 = vld [vmem:[%s313 + $0x1750] sm:$0xff]
        %v1072 = vld [vmem:[%s313 + $0x1758] sm:$0xff]
        %v1073 = vld [vmem:[%s313 + $0x1760] sm:$0xff]
        %v1074 = vld [vmem:[%s313 + $0x1768] sm:$0xff]
        %v1075 = vld [vmem:[%s313 + $0x1770] sm:$0xff]
        %v1076 = vld [vmem:[%s313 + $0x1778] sm:$0xff]
        %v1077 = vld [vmem:[%s313 + $0x1780] sm:$0xff]
        %v1078 = vld [vmem:[%s313 + $0x1788] sm:$0xff]
        %v1079 = vld [vmem:[%s313 + $0x1790] sm:$0xff]
        %v1080 = vld [vmem:[%s313 + $0x1798] sm:$0xff]
        %v1081 = vld [vmem:[%s313 + $0x17a0] sm:$0xff]
        %v1082 = vld [vmem:[%s313 + $0x17a8] sm:$0xff]
        %v1083 = vld [vmem:[%s313 + $0x17b0] sm:$0xff]
        %v1084 = vld [vmem:[%s313 + $0x17b8] sm:$0xff]
        %v1085 = vld [vmem:[%s313 + $0x17c0] sm:$0xff]
        %v1086 = vld [vmem:[%s313 + $0x17c8] sm:$0xff]
        %v1087 = vld [vmem:[%s313 + $0x17d0] sm:$0xff]
        %v1088 = vld [vmem:[%s313 + $0x17d8] sm:$0xff]
        %v1089 = vld [vmem:[%s313 + $0x17e0] sm:$0xff]
        %v1090 = vld [vmem:[%s313 + $0x17e8] sm:$0xff]
        %v1091 = vld [vmem:[%s313 + $0x17f0] sm:$0xff]
        %v1092 = vld [vmem:[%s313 + $0x17f8] sm:$0xff]
        %v1093 = vld [vmem:[%s313 + $0x1800] sm:$0xff]
        %v1094 = vld [vmem:[%s313 + $0x1808] sm:$0xff]
        %v1095 = vld [vmem:[%s313 + $0x1810] sm:$0xff]
        %v1096 = vld [vmem:[%s313 + $0x1818] sm:$0xff]
        %v1097 = vld [vmem:[%s313 + $0x1820] sm:$0xff]
        %v1098 = vld [vmem:[%s313 + $0x1828] sm:$0xff]
        %v1099 = vld [vmem:[%s313 + $0x1830] sm:$0xff]
        %v1100 = vld [vmem:[%s313 + $0x1838] sm:$0xff]
        %v1101 = vld [vmem:[%s313 + $0x1840] sm:$0xff]
        %v1102 = vld [vmem:[%s313 + $0x1848] sm:$0xff]
        %v1103 = vld [vmem:[%s313 + $0x1850] sm:$0xff]
        %v1104 = vld [vmem:[%s313 + $0x1858] sm:$0xff]
        %v1105 = vld [vmem:[%s313 + $0x1860] sm:$0xff]
        %v1106 = vld [vmem:[%s313 + $0x1868] sm:$0xff]
        %v1107 = vld [vmem:[%s313 + $0x1870] sm:$0xff]
        %v1108 = vld [vmem:[%s313 + $0x1878] sm:$0xff]
        %v1109 = vld [vmem:[%s313 + $0x1880] sm:$0xff]
        %v1110 = vld [vmem:[%s313 + $0x1888] sm:$0xff]
        %v1111 = vld [vmem:[%s313 + $0x1890] sm:$0xff]
        %v1112 = vld [vmem:[%s313 + $0x1898] sm:$0xff]
        %v1113 = vld [vmem:[%s313 + $0x18a0] sm:$0xff]
        %v1114 = vld [vmem:[%s313 + $0x18a8] sm:$0xff]
        %v1115 = vld [vmem:[%s313 + $0x18b0] sm:$0xff]
        %v1116 = vld [vmem:[%s313 + $0x18b8] sm:$0xff]
        %v1117 = vld [vmem:[%s313 + $0x18c0] sm:$0xff]
        %v1118 = vld [vmem:[%s313 + $0x18c8] sm:$0xff]
        %v1119 = vld [vmem:[%s313 + $0x18d0] sm:$0xff]
        %v1120 = vld [vmem:[%s313 + $0x18d8] sm:$0xff]
        %v1121 = vld [vmem:[%s313 + $0x18e0] sm:$0xff]
        %v1122 = vld [vmem:[%s313 + $0x18e8] sm:$0xff]
        %v1123 = vld [vmem:[%s313 + $0x18f0] sm:$0xff]
        %v1124 = vld [vmem:[%s313 + $0x18f8] sm:$0xff]
        %v1125 = vld [vmem:[%s313 + $0x1900] sm:$0xff]
        %v1126 = vld [vmem:[%s313 + $0x1908] sm:$0xff]
        %v1127 = vld [vmem:[%s313 + $0x1910] sm:$0xff]
        %v1128 = vld [vmem:[%s313 + $0x1918] sm:$0xff]
        %v1129 = vld [vmem:[%s313 + $0x1920] sm:$0xff]
        %v1130 = vld [vmem:[%s313 + $0x1928] sm:$0xff]
        %v1131 = vld [vmem:[%s313 + $0x1930] sm:$0xff]
        %v1132 = vld [vmem:[%s313 + $0x1938] sm:$0xff]
        %v1133 = vld [vmem:[%s313 + $0x1940] sm:$0xff]
        %v1134 = vld [vmem:[%s313 + $0x1948] sm:$0xff]
        %v1135 = vld [vmem:[%s313 + $0x1950] sm:$0xff]
        %v1136 = vld [vmem:[%s313 + $0x1958] sm:$0xff]
        %v1137 = vld [vmem:[%s313 + $0x1960] sm:$0xff]
        %v1138 = vld [vmem:[%s313 + $0x1968] sm:$0xff]
        %v1139 = vld [vmem:[%s313 + $0x1970] sm:$0xff]
        %v1140 = vld [vmem:[%s313 + $0x1978] sm:$0xff]
        %v1141 = vld [vmem:[%s313 + $0x1980] sm:$0xff]
        %v1142 = vld [vmem:[%s313 + $0x1988] sm:$0xff]
        %v1143 = vld [vmem:[%s313 + $0x1990] sm:$0xff]
        %v1144 = vld [vmem:[%s313 + $0x1998] sm:$0xff]
        %v1145 = vld [vmem:[%s313 + $0x19a0] sm:$0xff]
        %v1146 = vld [vmem:[%s313 + $0x19a8] sm:$0xff]
        %v1147 = vld [vmem:[%s313 + $0x19b0] sm:$0xff]
        %v1148 = vld [vmem:[%s313 + $0x19b8] sm:$0xff]
        %v1149 = vld [vmem:[%s313 + $0x19c0] sm:$0xff]
        %v1150 = vld [vmem:[%s313 + $0x19c8] sm:$0xff]
        %v1151 = vld [vmem:[%s313 + $0x19d0] sm:$0xff]
        %v1152 = vld [vmem:[%s313 + $0x19d8] sm:$0xff]
        %v1153 = vld [vmem:[%s313 + $0x19e0] sm:$0xff]
        %v1154 = vld [vmem:[%s313 + $0x19e8] sm:$0xff]
        %v1155 = vld [vmem:[%s313 + $0x19f0] sm:$0xff]
        %v1156 = vld [vmem:[%s313 + $0x19f8] sm:$0xff]
        %v1157 = vld [vmem:[%s313 + $0x1a00] sm:$0xff]
        %v1158 = vld [vmem:[%s313 + $0x1a08] sm:$0xff]
        %v1159 = vld [vmem:[%s313 + $0x1a10] sm:$0xff]
        %v1160 = vld [vmem:[%s313 + $0x1a18] sm:$0xff]
        %v1161 = vld [vmem:[%s313 + $0x1a20] sm:$0xff]
        %v1162 = vld [vmem:[%s313 + $0x1a28] sm:$0xff]
        %v1163 = vld [vmem:[%s313 + $0x1a30] sm:$0xff]
        %v1164 = vld [vmem:[%s313 + $0x1a38] sm:$0xff]
        %v1165 = vld [vmem:[%s313 + $0x1a40] sm:$0xff]
        %v1166 = vld [vmem:[%s313 + $0x1a48] sm:$0xff]
        %v1167 = vld [vmem:[%s313 + $0x1a50] sm:$0xff]
        %v1168 = vld [vmem:[%s313 + $0x1a58] sm:$0xff]
        %v1169 = vld [vmem:[%s313 + $0x1a60] sm:$0xff]
        %v1170 = vld [vmem:[%s313 + $0x1a68] sm:$0xff]
        %v1171 = vld [vmem:[%s313 + $0x1a70] sm:$0xff]
        %v1172 = vld [vmem:[%s313 + $0x1a78] sm:$0xff]
        %v1173 = vld [vmem:[%s313 + $0x1a80] sm:$0xff]
        %v1174 = vld [vmem:[%s313 + $0x1a88] sm:$0xff]
        %v1175 = vld [vmem:[%s313 + $0x1a90] sm:$0xff]
        %v1176 = vld [vmem:[%s313 + $0x1a98] sm:$0xff]
        %v1177 = vld [vmem:[%s313 + $0x1aa0] sm:$0xff]
        %v1178 = vld [vmem:[%s313 + $0x1aa8] sm:$0xff]
        %v1179 = vld [vmem:[%s313 + $0x1ab0] sm:$0xff]
        %v1180 = vld [vmem:[%s313 + $0x1ab8] sm:$0xff]
        %v1181 = vld [vmem:[%s313 + $0x1ac0] sm:$0xff]
        %v1182 = vld [vmem:[%s313 + $0x1ac8] sm:$0xff]
        %v1183 = vld [vmem:[%s313 + $0x1ad0] sm:$0xff]
        %v1184 = vld [vmem:[%s313 + $0x1ad8] sm:$0xff]
        %v1185 = vld [vmem:[%s313 + $0x1ae0] sm:$0xff]
        %v1186 = vld [vmem:[%s313 + $0x1ae8] sm:$0xff]
        %v1187 = vld [vmem:[%s313 + $0x1af0] sm:$0xff]
        %v1188 = vld [vmem:[%s313 + $0x1af8] sm:$0xff]
        %v1189 = vld [vmem:[%s313 + $0x1b00] sm:$0xff]
        %v1190 = vld [vmem:[%s313 + $0x1b08] sm:$0xff]
        %v1191 = vld [vmem:[%s313 + $0x1b10] sm:$0xff]
        %v1192 = vld [vmem:[%s313 + $0x1b18] sm:$0xff]
        %v1193 = vld [vmem:[%s313 + $0x1b20] sm:$0xff]
        %v1194 = vld [vmem:[%s313 + $0x1b28] sm:$0xff]
        %v1195 = vld [vmem:[%s313 + $0x1b30] sm:$0xff]
        %v1196 = vld [vmem:[%s313 + $0x1b38] sm:$0xff]
        %v1197 = vld [vmem:[%s313 + $0x1b40] sm:$0xff]
        %v1198 = vld [vmem:[%s313 + $0x1b48] sm:$0xff]
        %v1199 = vld [vmem:[%s313 + $0x1b50] sm:$0xff]
        %v1200 = vld [vmem:[%s313 + $0x1b58] sm:$0xff]
        %v1201 = vld [vmem:[%s313 + $0x1b60] sm:$0xff]
        %v1202 = vld [vmem:[%s313 + $0x1b68] sm:$0xff]
        %v1203 = vld [vmem:[%s313 + $0x1b70] sm:$0xff]
        %v1204 = vld [vmem:[%s313 + $0x1b78] sm:$0xff]
        %v1205 = vld [vmem:[%s313 + $0x1b80] sm:$0xff]
        %v1206 = vld [vmem:[%s313 + $0x1b88] sm:$0xff]
        %v1207 = vld [vmem:[%s313 + $0x1b90] sm:$0xff]
        %v1208 = vld [vmem:[%s313 + $0x1b98] sm:$0xff]
        %v1209 = vld [vmem:[%s313 + $0x1ba0] sm:$0xff]
        %v1210 = vld [vmem:[%s313 + $0x1ba8] sm:$0xff]
        %v1211 = vld [vmem:[%s313 + $0x1bb0] sm:$0xff]
        %v1212 = vld [vmem:[%s313 + $0x1bb8] sm:$0xff]
        %v1213 = vld [vmem:[%s313 + $0x1bc0] sm:$0xff]
        %v1214 = vld [vmem:[%s313 + $0x1bc8] sm:$0xff]
        %v1215 = vld [vmem:[%s313 + $0x1bd0] sm:$0xff]
        %v1216 = vld [vmem:[%s313 + $0x1bd8] sm:$0xff]
        %v1217 = vld [vmem:[%s313 + $0x1be0] sm:$0xff]
        %v1218 = vld [vmem:[%s313 + $0x1be8] sm:$0xff]
        %v1219 = vld [vmem:[%s313 + $0x1bf0] sm:$0xff]
        %v1220 = vld [vmem:[%s313 + $0x1bf8] sm:$0xff]
        %v1221 = vld [vmem:[%s313 + $0x1c00] sm:$0xff]
        %v1222 = vld [vmem:[%s313 + $0x1c08] sm:$0xff]
        %v1223 = vld [vmem:[%s313 + $0x1c10] sm:$0xff]
        %v1224 = vld [vmem:[%s313 + $0x1c18] sm:$0xff]
        %v1225 = vld [vmem:[%s313 + $0x1c20] sm:$0xff]
        %v1226 = vld [vmem:[%s313 + $0x1c28] sm:$0xff]
        %v1227 = vld [vmem:[%s313 + $0x1c30] sm:$0xff]
        %v1228 = vld [vmem:[%s313 + $0x1c38] sm:$0xff]
        %v1229 = vld [vmem:[%s313 + $0x1c40] sm:$0xff]
        %v1230 = vld [vmem:[%s313 + $0x1c48] sm:$0xff]
        %v1231 = vld [vmem:[%s313 + $0x1c50] sm:$0xff]
        %v1232 = vld [vmem:[%s313 + $0x1c58] sm:$0xff]
        %v1233 = vld [vmem:[%s313 + $0x1c60] sm:$0xff]
        %v1234 = vld [vmem:[%s313 + $0x1c68] sm:$0xff]
        %v1235 = vld [vmem:[%s313 + $0x1c70] sm:$0xff]
        %v1236 = vld [vmem:[%s313 + $0x1c78] sm:$0xff]
        %v1237 = vld [vmem:[%s313 + $0x1c80] sm:$0xff]
        %v1238 = vld [vmem:[%s313 + $0x1c88] sm:$0xff]
        %v1239 = vld [vmem:[%s313 + $0x1c90] sm:$0xff]
        %v1240 = vld [vmem:[%s313 + $0x1c98] sm:$0xff]
        %v1241 = vld [vmem:[%s313 + $0x1ca0] sm:$0xff]
        %v1242 = vld [vmem:[%s313 + $0x1ca8] sm:$0xff]
        %v1243 = vld [vmem:[%s313 + $0x1cb0] sm:$0xff]
        %v1244 = vld [vmem:[%s313 + $0x1cb8] sm:$0xff]
        %v1245 = vld [vmem:[%s313 + $0x1cc0] sm:$0xff]
        %v1246 = vld [vmem:[%s313 + $0x1cc8] sm:$0xff]
        %v1247 = vld [vmem:[%s313 + $0x1cd0] sm:$0xff]
        %v1248 = vld [vmem:[%s313 + $0x1cd8] sm:$0xff]
        %v1249 = vld [vmem:[%s313 + $0x1ce0] sm:$0xff]
        %v1250 = vld [vmem:[%s313 + $0x1ce8] sm:$0xff]
        %v1251 = vld [vmem:[%s313 + $0x1cf0] sm:$0xff]
        %v1252 = vld [vmem:[%s313 + $0x1cf8] sm:$0xff]
        %v1253 = vld [vmem:[%s313 + $0x1d00] sm:$0xff]
        %v1254 = vld [vmem:[%s313 + $0x1d08] sm:$0xff]
        %v1255 = vld [vmem:[%s313 + $0x1d10] sm:$0xff]
        %v1256 = vld [vmem:[%s313 + $0x1d18] sm:$0xff]
        %v1257 = vld [vmem:[%s313 + $0x1d20] sm:$0xff]
        %v1258 = vld [vmem:[%s313 + $0x1d28] sm:$0xff]
        %v1259 = vld [vmem:[%s313 + $0x1d30] sm:$0xff]
        %v1260 = vld [vmem:[%s313 + $0x1d38] sm:$0xff]
        %v1261 = vld [vmem:[%s313 + $0x1d40] sm:$0xff]
        %v1262 = vld [vmem:[%s313 + $0x1d48] sm:$0xff]
        %v1263 = vld [vmem:[%s313 + $0x1d50] sm:$0xff]
        %v1264 = vld [vmem:[%s313 + $0x1d58] sm:$0xff]
        %v1265 = vld [vmem:[%s313 + $0x1d60] sm:$0xff]
        %v1266 = vld [vmem:[%s313 + $0x1d68] sm:$0xff]
        %v1267 = vld [vmem:[%s313 + $0x1d70] sm:$0xff]
        %v1268 = vld [vmem:[%s313 + $0x1d78] sm:$0xff]
        %v1269 = vld [vmem:[%s313 + $0x1d80] sm:$0xff]
        %v1270 = vld [vmem:[%s313 + $0x1d88] sm:$0xff]
        %v1271 = vld [vmem:[%s313 + $0x1d90] sm:$0xff]
        %v1272 = vld [vmem:[%s313 + $0x1d98] sm:$0xff]
        %v1273 = vld [vmem:[%s313 + $0x1da0] sm:$0xff]
        %v1274 = vld [vmem:[%s313 + $0x1da8] sm:$0xff]
        %v1275 = vld [vmem:[%s313 + $0x1db0] sm:$0xff]
        %v1276 = vld [vmem:[%s313 + $0x1db8] sm:$0xff]
        %v1277 = vld [vmem:[%s313 + $0x1dc0] sm:$0xff]
        %v1278 = vld [vmem:[%s313 + $0x1dc8] sm:$0xff]
        %v1279 = vld [vmem:[%s313 + $0x1dd0] sm:$0xff]
        %v1280 = vld [vmem:[%s313 + $0x1dd8] sm:$0xff]
        %v1281 = vld [vmem:[%s313 + $0x1de0] sm:$0xff]
        %v1282 = vld [vmem:[%s313 + $0x1de8] sm:$0xff]
        %v1283 = vld [vmem:[%s313 + $0x1df0] sm:$0xff]
        %v1284 = vld [vmem:[%s313 + $0x1df8] sm:$0xff]
        %v1285 = vld [vmem:[%s313 + $0x1e00] sm:$0xff]
        %v1286 = vld [vmem:[%s313 + $0x1e08] sm:$0xff]
        %v1287 = vld [vmem:[%s313 + $0x1e10] sm:$0xff]
        %v1288 = vld [vmem:[%s313 + $0x1e18] sm:$0xff]
        %v1289 = vld [vmem:[%s313 + $0x1e20] sm:$0xff]
        %v1290 = vld [vmem:[%s313 + $0x1e28] sm:$0xff]
        %v1291 = vld [vmem:[%s313 + $0x1e30] sm:$0xff]
        %v1292 = vld [vmem:[%s313 + $0x1e38] sm:$0xff]
        %v1293 = vld [vmem:[%s313 + $0x1e40] sm:$0xff]
        %v1294 = vld [vmem:[%s313 + $0x1e48] sm:$0xff]
        %v1295 = vld [vmem:[%s313 + $0x1e50] sm:$0xff]
        %v1296 = vld [vmem:[%s313 + $0x1e58] sm:$0xff]
        %v1297 = vld [vmem:[%s313 + $0x1e60] sm:$0xff]
        %v1298 = vld [vmem:[%s313 + $0x1e68] sm:$0xff]
        %v1299 = vld [vmem:[%s313 + $0x1e70] sm:$0xff]
        %v1300 = vld [vmem:[%s313 + $0x1e78] sm:$0xff]
        %v1301 = vld [vmem:[%s313 + $0x1e80] sm:$0xff]
        %v1302 = vld [vmem:[%s313 + $0x1e88] sm:$0xff]
        %v1303 = vld [vmem:[%s313 + $0x1e90] sm:$0xff]
        %v1304 = vld [vmem:[%s313 + $0x1e98] sm:$0xff]
        %v1305 = vld [vmem:[%s313 + $0x1ea0] sm:$0xff]
        %v1306 = vld [vmem:[%s313 + $0x1ea8] sm:$0xff]
        %v1307 = vld [vmem:[%s313 + $0x1eb0] sm:$0xff]
        %v1308 = vld [vmem:[%s313 + $0x1eb8] sm:$0xff]
        %v1309 = vld [vmem:[%s313 + $0x1ec0] sm:$0xff]
        %v1310 = vld [vmem:[%s313 + $0x1ec8] sm:$0xff]
        %v1311 = vld [vmem:[%s313 + $0x1ed0] sm:$0xff]
        %v1312 = vld [vmem:[%s313 + $0x1ed8] sm:$0xff]
        %v1313 = vld [vmem:[%s313 + $0x1ee0] sm:$0xff]
        %v1314 = vld [vmem:[%s313 + $0x1ee8] sm:$0xff]
        %v1315 = vld [vmem:[%s313 + $0x1ef0] sm:$0xff]
        %v1316 = vld [vmem:[%s313 + $0x1ef8] sm:$0xff]
        %v1317 = vld [vmem:[%s313 + $0x1f00] sm:$0xff]
        %v1318 = vld [vmem:[%s313 + $0x1f08] sm:$0xff]
        %v1319 = vld [vmem:[%s313 + $0x1f10] sm:$0xff]
        %v1320 = vld [vmem:[%s313 + $0x1f18] sm:$0xff]
        %v1321 = vld [vmem:[%s313 + $0x1f20] sm:$0xff]
        %v1322 = vld [vmem:[%s313 + $0x1f28] sm:$0xff]
        %v1323 = vld [vmem:[%s313 + $0x1f30] sm:$0xff]
        %v1324 = vld [vmem:[%s313 + $0x1f38] sm:$0xff]
        %v1325 = vld [vmem:[%s313 + $0x1f40] sm:$0xff]
        %v1326 = vld [vmem:[%s313 + $0x1f48] sm:$0xff]
        %v1327 = vld [vmem:[%s313 + $0x1f50] sm:$0xff]
        %v1328 = vld [vmem:[%s313 + $0x1f58] sm:$0xff]
        %v1329 = vld [vmem:[%s313 + $0x1f60] sm:$0xff]
        %v1330 = vld [vmem:[%s313 + $0x1f68] sm:$0xff]
        %v1331 = vld [vmem:[%s313 + $0x1f70] sm:$0xff]
        %v1332 = vld [vmem:[%s313 + $0x1f78] sm:$0xff]
        %v1333 = vld [vmem:[%s313 + $0x1f80] sm:$0xff]
        %v1334 = vld [vmem:[%s313 + $0x1f88] sm:$0xff]
        %v1335 = vld [vmem:[%s313 + $0x1f90] sm:$0xff]
        %v1336 = vld [vmem:[%s313 + $0x1f98] sm:$0xff]
        %v1337 = vld [vmem:[%s313 + $0x1fa0] sm:$0xff]
        %v1338 = vld [vmem:[%s313 + $0x1fa8] sm:$0xff]
        %v1339 = vld [vmem:[%s313 + $0x1fb0] sm:$0xff]
        %v1340 = vld [vmem:[%s313 + $0x1fb8] sm:$0xff]
        %v1341 = vld [vmem:[%s313 + $0x1fc0] sm:$0xff]
        %v1342 = vld [vmem:[%s313 + $0x1fc8] sm:$0xff]
        %v1343 = vld [vmem:[%s313 + $0x1fd0] sm:$0xff]
        %v1344 = vld [vmem:[%s313 + $0x1fd8] sm:$0xff]
        %v1345 = vld [vmem:[%s313 + $0x1fe0] sm:$0xff]
        %v1346 = vld [vmem:[%s313 + $0x1fe8] sm:$0xff]
        %v1347 = vld [vmem:[%s313 + $0x1ff0] sm:$0xff]
        %v1348 = vld [vmem:[%s313 + $0x1ff8] sm:$0xff]
        %v1351 = vcombine.high %v323, %v323
        %v1353 = vunpack.c.l.s4 1966171168
        %v1354 = vunpack.c.0.s8 %v1353
        %v1355 = vlaneseq
        %v1356 = vshrl.u32 %v1355, 7
        %v1357 = vsub.s32 %v1354, %v1356
        %v1358 = vrot.slane %v323, %v1357
        %v1360 = vunpack.c.l.s4 1966171168
        %v1361 = vunpack.c.0.s8 %v1360
        %v1362 = vlaneseq
        %v1363 = vshrl.u32 %v1362, 7
        %v1364 = vsub.s32 %v1361, %v1363
        %v1365 = vrot.slane %v1351, %v1364
        %v1366 = vcombine.high %v1358, %v1358
        %v1367 = vcombine.high %v1365, %v1365
        %v1369 = vunpack.c.l.s4 1966171168
        %v1370 = vunpack.c.0.s8 %v1369
        %v1371 = vlaneseq
        %v1372 = vshrl.u32 %v1371, 7
        %v1373 = vsub.s32 %v1370, %v1372
        %v1374 = vrot.slane %v1358, %v1373
        %v1376 = vunpack.c.l.s4 1966171168
        %v1377 = vunpack.c.0.s8 %v1376
        %v1378 = vlaneseq
        %v1379 = vshrl.u32 %v1378, 7
        %v1380 = vsub.s32 %v1377, %v1379
        %v1381 = vrot.slane %v1365, %v1380
        %v1383 = vunpack.c.l.s4 1966171168
        %v1384 = vunpack.c.0.s8 %v1383
        %v1385 = vlaneseq
        %v1386 = vshrl.u32 %v1385, 7
        %v1387 = vsub.s32 %v1384, %v1386
        %v1388 = vrot.slane %v1366, %v1387
        %v1390 = vunpack.c.l.s4 1966171168
        %v1391 = vunpack.c.0.s8 %v1390
        %v1392 = vlaneseq
        %v1393 = vshrl.u32 %v1392, 7
        %v1394 = vsub.s32 %v1391, %v1393
        %v1395 = vrot.slane %v1367, %v1394
        %v1396 = vcombine.high %v1374, %v1374
        %v1397 = vcombine.high %v1381, %v1381
        %v1398 = vcombine.high %v1388, %v1388
        %v1399 = vcombine.high %v1395, %v1395
        %v1400 = vcombine.high %v324, %v324
        %v1402 = vunpack.c.l.s4 1966171168
        %v1403 = vunpack.c.0.s8 %v1402
        %v1404 = vlaneseq
        %v1405 = vshrl.u32 %v1404, 7
        %v1406 = vsub.s32 %v1403, %v1405
        %v1407 = vrot.slane %v324, %v1406
        %v1409 = vunpack.c.l.s4 1966171168
        %v1410 = vunpack.c.0.s8 %v1409
        %v1411 = vlaneseq
        %v1412 = vshrl.u32 %v1411, 7
        %v1413 = vsub.s32 %v1410, %v1412
        %v1414 = vrot.slane %v1400, %v1413
        %v1415 = vcombine.high %v1407, %v1407
        %v1416 = vcombine.high %v1414, %v1414
        %v1418 = vunpack.c.l.s4 1966171168
        %v1419 = vunpack.c.0.s8 %v1418
        %v1420 = vlaneseq
        %v1421 = vshrl.u32 %v1420, 7
        %v1422 = vsub.s32 %v1419, %v1421
        %v1423 = vrot.slane %v1407, %v1422
        %v1425 = vunpack.c.l.s4 1966171168
        %v1426 = vunpack.c.0.s8 %v1425
        %v1427 = vlaneseq
        %v1428 = vshrl.u32 %v1427, 7
        %v1429 = vsub.s32 %v1426, %v1428
        %v1430 = vrot.slane %v1414, %v1429
        %v1432 = vunpack.c.l.s4 1966171168
        %v1433 = vunpack.c.0.s8 %v1432
        %v1434 = vlaneseq
        %v1435 = vshrl.u32 %v1434, 7
        %v1436 = vsub.s32 %v1433, %v1435
        %v1437 = vrot.slane %v1415, %v1436
        %v1439 = vunpack.c.l.s4 1966171168
        %v1440 = vunpack.c.0.s8 %v1439
        %v1441 = vlaneseq
        %v1442 = vshrl.u32 %v1441, 7
        %v1443 = vsub.s32 %v1440, %v1442
        %v1444 = vrot.slane %v1416, %v1443
        %v1445 = vcombine.high %v1423, %v1423
        %v1446 = vcombine.high %v1430, %v1430
        %v1447 = vcombine.high %v1437, %v1437
        %v1448 = vcombine.high %v1444, %v1444
        %v2489 = vunpack.c.l.b16 %v325
        %v2490 = vunpack.c.h.b16 %v325
        %v2491 = vunpack.c.l.b16 %v326
        %v2492 = vunpack.c.h.b16 %v326
        %v2493 = vunpack.c.l.b16 %v327
        %v2494 = vunpack.c.h.b16 %v327
        %v2495 = vunpack.c.l.b16 %v328
        %v2496 = vunpack.c.h.b16 %v328
        %v2497 = vunpack.c.l.b16 %v329
        %v2498 = vunpack.c.h.b16 %v329
        %v2499 = vunpack.c.l.b16 %v330
        %v2500 = vunpack.c.h.b16 %v330
        %v2501 = vunpack.c.l.b16 %v331
        %v2502 = vunpack.c.h.b16 %v331
        %v2503 = vunpack.c.l.b16 %v332
        %v2504 = vunpack.c.h.b16 %v332
        %v2505 = vunpack.c.l.b16 %v333
        %v2506 = vunpack.c.h.b16 %v333
        %v2507 = vunpack.c.l.b16 %v334
        %v2508 = vunpack.c.h.b16 %v334
        %v2509 = vunpack.c.l.b16 %v335
        %v2510 = vunpack.c.h.b16 %v335
        %v2511 = vunpack.c.l.b16 %v336
        %v2512 = vunpack.c.h.b16 %v336
        %v2513 = vunpack.c.l.b16 %v337
        %v2514 = vunpack.c.h.b16 %v337
        %v2515 = vunpack.c.l.b16 %v338
        %v2516 = vunpack.c.h.b16 %v338
        %v2517 = vunpack.c.l.b16 %v339
        %v2518 = vunpack.c.h.b16 %v339
        %v2519 = vunpack.c.l.b16 %v340
        %v2520 = vunpack.c.h.b16 %v340
        %v2521 = vunpack.c.l.b16 %v341
        %v2522 = vunpack.c.h.b16 %v341
        %v2523 = vunpack.c.l.b16 %v342
        %v2524 = vunpack.c.h.b16 %v342
        %v2525 = vunpack.c.l.b16 %v343
        %v2526 = vunpack.c.h.b16 %v343
        %v2527 = vunpack.c.l.b16 %v344
        %v2528 = vunpack.c.h.b16 %v344
        %v2529 = vunpack.c.l.b16 %v345
        %v2530 = vunpack.c.h.b16 %v345
        %v2531 = vunpack.c.l.b16 %v346
        %v2532 = vunpack.c.h.b16 %v346
        %v2533 = vunpack.c.l.b16 %v347
        %v2534 = vunpack.c.h.b16 %v347
        %v2535 = vunpack.c.l.b16 %v348
        %v2536 = vunpack.c.h.b16 %v348
        %v2537 = vunpack.c.l.b16 %v349
        %v2538 = vunpack.c.h.b16 %v349
        %v2539 = vunpack.c.l.b16 %v350
        %v2540 = vunpack.c.h.b16 %v350
        %v2541 = vunpack.c.l.b16 %v351
        %v2542 = vunpack.c.h.b16 %v351
        %v2543 = vunpack.c.l.b16 %v352
        %v2544 = vunpack.c.h.b16 %v352
        %v2545 = vunpack.c.l.b16 %v353
        %v2546 = vunpack.c.h.b16 %v353
        %v2547 = vunpack.c.l.b16 %v354
        %v2548 = vunpack.c.h.b16 %v354
        %v2549 = vunpack.c.l.b16 %v355
        %v2550 = vunpack.c.h.b16 %v355
        %v2551 = vunpack.c.l.b16 %v356
        %v2552 = vunpack.c.h.b16 %v356
        %v2553 = vunpack.c.l.b16 %v357
        %v2554 = vunpack.c.h.b16 %v357
        %v2555 = vunpack.c.l.b16 %v358
        %v2556 = vunpack.c.h.b16 %v358
        %v2557 = vunpack.c.l.b16 %v359
        %v2558 = vunpack.c.h.b16 %v359
        %v2559 = vunpack.c.l.b16 %v360
        %v2560 = vunpack.c.h.b16 %v360
        %v2561 = vunpack.c.l.b16 %v361
        %v2562 = vunpack.c.h.b16 %v361
        %v2563 = vunpack.c.l.b16 %v362
        %v2564 = vunpack.c.h.b16 %v362
        %v2565 = vunpack.c.l.b16 %v363
        %v2566 = vunpack.c.h.b16 %v363
        %v2567 = vunpack.c.l.b16 %v364
        %v2568 = vunpack.c.h.b16 %v364
        %v2569 = vunpack.c.l.b16 %v365
        %v2570 = vunpack.c.h.b16 %v365
        %v2571 = vunpack.c.l.b16 %v366
        %v2572 = vunpack.c.h.b16 %v366
        %v2573 = vunpack.c.l.b16 %v367
        %v2574 = vunpack.c.h.b16 %v367
        %v2575 = vunpack.c.l.b16 %v368
        %v2576 = vunpack.c.h.b16 %v368
        %v2577 = vunpack.c.l.b16 %v369
        %v2578 = vunpack.c.h.b16 %v369
        %v2579 = vunpack.c.l.b16 %v370
        %v2580 = vunpack.c.h.b16 %v370
        %v2581 = vunpack.c.l.b16 %v371
        %v2582 = vunpack.c.h.b16 %v371
        %v2583 = vunpack.c.l.b16 %v372
        %v2584 = vunpack.c.h.b16 %v372
        %v2585 = vunpack.c.l.b16 %v373
        %v2586 = vunpack.c.h.b16 %v373
        %v2587 = vunpack.c.l.b16 %v374
        %v2588 = vunpack.c.h.b16 %v374
        %v2589 = vunpack.c.l.b16 %v375
        %v2590 = vunpack.c.h.b16 %v375
        %v2591 = vunpack.c.l.b16 %v376
        %v2592 = vunpack.c.h.b16 %v376
        %v2593 = vunpack.c.l.b16 %v377
        %v2594 = vunpack.c.h.b16 %v377
        %v2595 = vunpack.c.l.b16 %v378
        %v2596 = vunpack.c.h.b16 %v378
        %v2597 = vunpack.c.l.b16 %v379
        %v2598 = vunpack.c.h.b16 %v379
        %v2599 = vunpack.c.l.b16 %v380
        %v2600 = vunpack.c.h.b16 %v380
        %v2601 = vunpack.c.l.b16 %v381
        %v2602 = vunpack.c.h.b16 %v381
        %v2603 = vunpack.c.l.b16 %v382
        %v2604 = vunpack.c.h.b16 %v382
        %v2605 = vunpack.c.l.b16 %v383
        %v2606 = vunpack.c.h.b16 %v383
        %v2607 = vunpack.c.l.b16 %v384
        %v2608 = vunpack.c.h.b16 %v384
        %v2609 = vunpack.c.l.b16 %v385
        %v2610 = vunpack.c.h.b16 %v385
        %v2611 = vunpack.c.l.b16 %v386
        %v2612 = vunpack.c.h.b16 %v386
        %v2613 = vunpack.c.l.b16 %v387
        %v2614 = vunpack.c.h.b16 %v387
        %v2615 = vunpack.c.l.b16 %v388
        %v2616 = vunpack.c.h.b16 %v388
        %v2617 = vunpack.c.l.b16 %v389
        %v2618 = vunpack.c.h.b16 %v389
        %v2619 = vunpack.c.l.b16 %v390
        %v2620 = vunpack.c.h.b16 %v390
        %v2621 = vunpack.c.l.b16 %v391
        %v2622 = vunpack.c.h.b16 %v391
        %v2623 = vunpack.c.l.b16 %v392
        %v2624 = vunpack.c.h.b16 %v392
        %v2625 = vunpack.c.l.b16 %v393
        %v2626 = vunpack.c.h.b16 %v393
        %v2627 = vunpack.c.l.b16 %v394
        %v2628 = vunpack.c.h.b16 %v394
        %v2629 = vunpack.c.l.b16 %v395
        %v2630 = vunpack.c.h.b16 %v395
        %v2631 = vunpack.c.l.b16 %v396
        %v2632 = vunpack.c.h.b16 %v396
        %v2633 = vunpack.c.l.b16 %v397
        %v2634 = vunpack.c.h.b16 %v397
        %v2635 = vunpack.c.l.b16 %v398
        %v2636 = vunpack.c.h.b16 %v398
        %v2637 = vunpack.c.l.b16 %v399
        %v2638 = vunpack.c.h.b16 %v399
        %v2639 = vunpack.c.l.b16 %v400
        %v2640 = vunpack.c.h.b16 %v400
        %v2641 = vunpack.c.l.b16 %v401
        %v2642 = vunpack.c.h.b16 %v401
        %v2643 = vunpack.c.l.b16 %v402
        %v2644 = vunpack.c.h.b16 %v402
        %v2645 = vunpack.c.l.b16 %v403
        %v2646 = vunpack.c.h.b16 %v403
        %v2647 = vunpack.c.l.b16 %v404
        %v2648 = vunpack.c.h.b16 %v404
        %v2649 = vunpack.c.l.b16 %v405
        %v2650 = vunpack.c.h.b16 %v405
        %v2651 = vunpack.c.l.b16 %v406
        %v2652 = vunpack.c.h.b16 %v406
        %v2653 = vunpack.c.l.b16 %v407
        %v2654 = vunpack.c.h.b16 %v407
        %v2655 = vunpack.c.l.b16 %v408
        %v2656 = vunpack.c.h.b16 %v408
        %v2657 = vunpack.c.l.b16 %v409
        %v2658 = vunpack.c.h.b16 %v409
        %v2659 = vunpack.c.l.b16 %v410
        %v2660 = vunpack.c.h.b16 %v410
        %v2661 = vunpack.c.l.b16 %v411
        %v2662 = vunpack.c.h.b16 %v411
        %v2663 = vunpack.c.l.b16 %v412
        %v2664 = vunpack.c.h.b16 %v412
        %v2665 = vunpack.c.l.b16 %v413
        %v2666 = vunpack.c.h.b16 %v413
        %v2667 = vunpack.c.l.b16 %v414
        %v2668 = vunpack.c.h.b16 %v414
        %v2669 = vunpack.c.l.b16 %v415
        %v2670 = vunpack.c.h.b16 %v415
        %v2671 = vunpack.c.l.b16 %v416
        %v2672 = vunpack.c.h.b16 %v416
        %v2673 = vunpack.c.l.b16 %v417
        %v2674 = vunpack.c.h.b16 %v417
        %v2675 = vunpack.c.l.b16 %v418
        %v2676 = vunpack.c.h.b16 %v418
        %v2677 = vunpack.c.l.b16 %v419
        %v2678 = vunpack.c.h.b16 %v419
        %v2679 = vunpack.c.l.b16 %v420
        %v2680 = vunpack.c.h.b16 %v420
        %v2681 = vunpack.c.l.b16 %v421
        %v2682 = vunpack.c.h.b16 %v421
        %v2683 = vunpack.c.l.b16 %v422
        %v2684 = vunpack.c.h.b16 %v422
        %v2685 = vunpack.c.l.b16 %v423
        %v2686 = vunpack.c.h.b16 %v423
        %v2687 = vunpack.c.l.b16 %v424
        %v2688 = vunpack.c.h.b16 %v424
        %v2689 = vunpack.c.l.b16 %v425
        %v2690 = vunpack.c.h.b16 %v425
        %v2691 = vunpack.c.l.b16 %v426
        %v2692 = vunpack.c.h.b16 %v426
        %v2693 = vunpack.c.l.b16 %v427
        %v2694 = vunpack.c.h.b16 %v427
        %v2695 = vunpack.c.l.b16 %v428
        %v2696 = vunpack.c.h.b16 %v428
        %v2697 = vunpack.c.l.b16 %v429
        %v2698 = vunpack.c.h.b16 %v429
        %v2699 = vunpack.c.l.b16 %v430
        %v2700 = vunpack.c.h.b16 %v430
        %v2701 = vunpack.c.l.b16 %v431
        %v2702 = vunpack.c.h.b16 %v431
        %v2703 = vunpack.c.l.b16 %v432
        %v2704 = vunpack.c.h.b16 %v432
        %v2705 = vunpack.c.l.b16 %v433
        %v2706 = vunpack.c.h.b16 %v433
        %v2707 = vunpack.c.l.b16 %v434
        %v2708 = vunpack.c.h.b16 %v434
        %v2709 = vunpack.c.l.b16 %v435
        %v2710 = vunpack.c.h.b16 %v435
        %v2711 = vunpack.c.l.b16 %v436
        %v2712 = vunpack.c.h.b16 %v436
        %v2713 = vunpack.c.l.b16 %v437
        %v2714 = vunpack.c.h.b16 %v437
        %v2715 = vunpack.c.l.b16 %v438
        %v2716 = vunpack.c.h.b16 %v438
        %v2717 = vunpack.c.l.b16 %v439
        %v2718 = vunpack.c.h.b16 %v439
        %v2719 = vunpack.c.l.b16 %v440
        %v2720 = vunpack.c.h.b16 %v440
        %v2721 = vunpack.c.l.b16 %v441
        %v2722 = vunpack.c.h.b16 %v441
        %v2723 = vunpack.c.l.b16 %v442
        %v2724 = vunpack.c.h.b16 %v442
        %v2725 = vunpack.c.l.b16 %v443
        %v2726 = vunpack.c.h.b16 %v443
        %v2727 = vunpack.c.l.b16 %v444
        %v2728 = vunpack.c.h.b16 %v444
        %v2729 = vunpack.c.l.b16 %v445
        %v2730 = vunpack.c.h.b16 %v445
        %v2731 = vunpack.c.l.b16 %v446
        %v2732 = vunpack.c.h.b16 %v446
        %v2733 = vunpack.c.l.b16 %v447
        %v2734 = vunpack.c.h.b16 %v447
        %v2735 = vunpack.c.l.b16 %v448
        %v2736 = vunpack.c.h.b16 %v448
        %v2737 = vunpack.c.l.b16 %v449
        %v2738 = vunpack.c.h.b16 %v449
        %v2739 = vunpack.c.l.b16 %v450
        %v2740 = vunpack.c.h.b16 %v450
        %v2741 = vunpack.c.l.b16 %v451
        %v2742 = vunpack.c.h.b16 %v451
        %v2743 = vunpack.c.l.b16 %v452
        %v2744 = vunpack.c.h.b16 %v452
        %v2745 = vunpack.c.l.b16 %v453
        %v2746 = vunpack.c.h.b16 %v453
        %v2747 = vunpack.c.l.b16 %v454
        %v2748 = vunpack.c.h.b16 %v454
        %v2749 = vunpack.c.l.b16 %v455
        %v2750 = vunpack.c.h.b16 %v455
        %v2751 = vunpack.c.l.b16 %v456
        %v2752 = vunpack.c.h.b16 %v456
        %v2753 = vunpack.c.l.b16 %v457
        %v2754 = vunpack.c.h.b16 %v457
        %v2755 = vunpack.c.l.b16 %v458
        %v2756 = vunpack.c.h.b16 %v458
        %v2757 = vunpack.c.l.b16 %v459
        %v2758 = vunpack.c.h.b16 %v459
        %v2759 = vunpack.c.l.b16 %v460
        %v2760 = vunpack.c.h.b16 %v460
        %v2761 = vunpack.c.l.b16 %v461
        %v2762 = vunpack.c.h.b16 %v461
        %v2763 = vunpack.c.l.b16 %v462
        %v2764 = vunpack.c.h.b16 %v462
        %v2765 = vunpack.c.l.b16 %v463
        %v2766 = vunpack.c.h.b16 %v463
        %v2767 = vunpack.c.l.b16 %v464
        %v2768 = vunpack.c.h.b16 %v464
        %v2769 = vunpack.c.l.b16 %v465
        %v2770 = vunpack.c.h.b16 %v465
        %v2771 = vunpack.c.l.b16 %v466
        %v2772 = vunpack.c.h.b16 %v466
        %v2773 = vunpack.c.l.b16 %v467
        %v2774 = vunpack.c.h.b16 %v467
        %v2775 = vunpack.c.l.b16 %v468
        %v2776 = vunpack.c.h.b16 %v468
        %v2777 = vunpack.c.l.b16 %v469
        %v2778 = vunpack.c.h.b16 %v469
        %v2779 = vunpack.c.l.b16 %v470
        %v2780 = vunpack.c.h.b16 %v470
        %v2781 = vunpack.c.l.b16 %v471
        %v2782 = vunpack.c.h.b16 %v471
        %v2783 = vunpack.c.l.b16 %v472
        %v2784 = vunpack.c.h.b16 %v472
        %v2785 = vunpack.c.l.b16 %v473
        %v2786 = vunpack.c.h.b16 %v473
        %v2787 = vunpack.c.l.b16 %v474
        %v2788 = vunpack.c.h.b16 %v474
        %v2789 = vunpack.c.l.b16 %v475
        %v2790 = vunpack.c.h.b16 %v475
        %v2791 = vunpack.c.l.b16 %v476
        %v2792 = vunpack.c.h.b16 %v476
        %v2793 = vunpack.c.l.b16 %v477
        %v2794 = vunpack.c.h.b16 %v477
        %v2795 = vunpack.c.l.b16 %v478
        %v2796 = vunpack.c.h.b16 %v478
        %v2797 = vunpack.c.l.b16 %v479
        %v2798 = vunpack.c.h.b16 %v479
        %v2799 = vunpack.c.l.b16 %v480
        %v2800 = vunpack.c.h.b16 %v480
        %v2801 = vunpack.c.l.b16 %v481
        %v2802 = vunpack.c.h.b16 %v481
        %v2803 = vunpack.c.l.b16 %v482
        %v2804 = vunpack.c.h.b16 %v482
        %v2805 = vunpack.c.l.b16 %v483
        %v2806 = vunpack.c.h.b16 %v483
        %v2807 = vunpack.c.l.b16 %v484
        %v2808 = vunpack.c.h.b16 %v484
        %v2809 = vunpack.c.l.b16 %v485
        %v2810 = vunpack.c.h.b16 %v485
        %v2811 = vunpack.c.l.b16 %v486
        %v2812 = vunpack.c.h.b16 %v486
        %v2813 = vunpack.c.l.b16 %v487
        %v2814 = vunpack.c.h.b16 %v487
        %v2815 = vunpack.c.l.b16 %v488
        %v2816 = vunpack.c.h.b16 %v488
        %v2817 = vunpack.c.l.b16 %v489
        %v2818 = vunpack.c.h.b16 %v489
        %v2819 = vunpack.c.l.b16 %v490
        %v2820 = vunpack.c.h.b16 %v490
        %v2821 = vunpack.c.l.b16 %v491
        %v2822 = vunpack.c.h.b16 %v491
        %v2823 = vunpack.c.l.b16 %v492
        %v2824 = vunpack.c.h.b16 %v492
        %v2825 = vunpack.c.l.b16 %v493
        %v2826 = vunpack.c.h.b16 %v493
        %v2827 = vunpack.c.l.b16 %v494
        %v2828 = vunpack.c.h.b16 %v494
        %v2829 = vunpack.c.l.b16 %v495
        %v2830 = vunpack.c.h.b16 %v495
        %v2831 = vunpack.c.l.b16 %v496
        %v2832 = vunpack.c.h.b16 %v496
        %v2833 = vunpack.c.l.b16 %v497
        %v2834 = vunpack.c.h.b16 %v497
        %v2835 = vunpack.c.l.b16 %v498
        %v2836 = vunpack.c.h.b16 %v498
        %v2837 = vunpack.c.l.b16 %v499
        %v2838 = vunpack.c.h.b16 %v499
        %v2839 = vunpack.c.l.b16 %v500
        %v2840 = vunpack.c.h.b16 %v500
        %v2841 = vunpack.c.l.b16 %v501
        %v2842 = vunpack.c.h.b16 %v501
        %v2843 = vunpack.c.l.b16 %v502
        %v2844 = vunpack.c.h.b16 %v502
        %v2845 = vunpack.c.l.b16 %v503
        %v2846 = vunpack.c.h.b16 %v503
        %v2847 = vunpack.c.l.b16 %v504
        %v2848 = vunpack.c.h.b16 %v504
        %v2849 = vunpack.c.l.b16 %v505
        %v2850 = vunpack.c.h.b16 %v505
        %v2851 = vunpack.c.l.b16 %v506
        %v2852 = vunpack.c.h.b16 %v506
        %v2853 = vunpack.c.l.b16 %v507
        %v2854 = vunpack.c.h.b16 %v507
        %v2855 = vunpack.c.l.b16 %v508
        %v2856 = vunpack.c.h.b16 %v508
        %v2857 = vunpack.c.l.b16 %v509
        %v2858 = vunpack.c.h.b16 %v509
        %v2859 = vunpack.c.l.b16 %v510
        %v2860 = vunpack.c.h.b16 %v510
        %v2861 = vunpack.c.l.b16 %v511
        %v2862 = vunpack.c.h.b16 %v511
        %v2863 = vunpack.c.l.b16 %v512
        %v2864 = vunpack.c.h.b16 %v512
        %v2865 = vunpack.c.l.b16 %v513
        %v2866 = vunpack.c.h.b16 %v513
        %v2867 = vunpack.c.l.b16 %v514
        %v2868 = vunpack.c.h.b16 %v514
        %v2869 = vunpack.c.l.b16 %v515
        %v2870 = vunpack.c.h.b16 %v515
        %v2871 = vunpack.c.l.b16 %v516
        %v2872 = vunpack.c.h.b16 %v516
        %v2873 = vunpack.c.l.b16 %v517
        %v2874 = vunpack.c.h.b16 %v517
        %v2875 = vunpack.c.l.b16 %v518
        %v2876 = vunpack.c.h.b16 %v518
        %v2877 = vunpack.c.l.b16 %v519
        %v2878 = vunpack.c.h.b16 %v519
        %v2879 = vunpack.c.l.b16 %v520
        %v2880 = vunpack.c.h.b16 %v520
        %v2881 = vunpack.c.l.b16 %v521
        %v2882 = vunpack.c.h.b16 %v521
        %v2883 = vunpack.c.l.b16 %v522
        %v2884 = vunpack.c.h.b16 %v522
        %v2885 = vunpack.c.l.b16 %v523
        %v2886 = vunpack.c.h.b16 %v523
        %v2887 = vunpack.c.l.b16 %v524
        %v2888 = vunpack.c.h.b16 %v524
        %v2889 = vunpack.c.l.b16 %v525
        %v2890 = vunpack.c.h.b16 %v525
        %v2891 = vunpack.c.l.b16 %v526
        %v2892 = vunpack.c.h.b16 %v526
        %v2893 = vunpack.c.l.b16 %v527
        %v2894 = vunpack.c.h.b16 %v527
        %v2895 = vunpack.c.l.b16 %v528
        %v2896 = vunpack.c.h.b16 %v528
        %v2897 = vunpack.c.l.b16 %v529
        %v2898 = vunpack.c.h.b16 %v529
        %v2899 = vunpack.c.l.b16 %v530
        %v2900 = vunpack.c.h.b16 %v530
        %v2901 = vunpack.c.l.b16 %v531
        %v2902 = vunpack.c.h.b16 %v531
        %v2903 = vunpack.c.l.b16 %v532
        %v2904 = vunpack.c.h.b16 %v532
        %v2905 = vunpack.c.l.b16 %v533
        %v2906 = vunpack.c.h.b16 %v533
        %v2907 = vunpack.c.l.b16 %v534
        %v2908 = vunpack.c.h.b16 %v534
        %v2909 = vunpack.c.l.b16 %v535
        %v2910 = vunpack.c.h.b16 %v535
        %v2911 = vunpack.c.l.b16 %v536
        %v2912 = vunpack.c.h.b16 %v536
        %v2913 = vunpack.c.l.b16 %v537
        %v2914 = vunpack.c.h.b16 %v537
        %v2915 = vunpack.c.l.b16 %v538
        %v2916 = vunpack.c.h.b16 %v538
        %v2917 = vunpack.c.l.b16 %v539
        %v2918 = vunpack.c.h.b16 %v539
        %v2919 = vunpack.c.l.b16 %v540
        %v2920 = vunpack.c.h.b16 %v540
        %v2921 = vunpack.c.l.b16 %v541
        %v2922 = vunpack.c.h.b16 %v541
        %v2923 = vunpack.c.l.b16 %v542
        %v2924 = vunpack.c.h.b16 %v542
        %v2925 = vunpack.c.l.b16 %v543
        %v2926 = vunpack.c.h.b16 %v543
        %v2927 = vunpack.c.l.b16 %v544
        %v2928 = vunpack.c.h.b16 %v544
        %v2929 = vunpack.c.l.b16 %v545
        %v2930 = vunpack.c.h.b16 %v545
        %v2931 = vunpack.c.l.b16 %v546
        %v2932 = vunpack.c.h.b16 %v546
        %v2933 = vunpack.c.l.b16 %v547
        %v2934 = vunpack.c.h.b16 %v547
        %v2935 = vunpack.c.l.b16 %v548
        %v2936 = vunpack.c.h.b16 %v548
        %v2937 = vunpack.c.l.b16 %v549
        %v2938 = vunpack.c.h.b16 %v549
        %v2939 = vunpack.c.l.b16 %v550
        %v2940 = vunpack.c.h.b16 %v550
        %v2941 = vunpack.c.l.b16 %v551
        %v2942 = vunpack.c.h.b16 %v551
        %v2943 = vunpack.c.l.b16 %v552
        %v2944 = vunpack.c.h.b16 %v552
        %v2945 = vunpack.c.l.b16 %v553
        %v2946 = vunpack.c.h.b16 %v553
        %v2947 = vunpack.c.l.b16 %v554
        %v2948 = vunpack.c.h.b16 %v554
        %v2949 = vunpack.c.l.b16 %v555
        %v2950 = vunpack.c.h.b16 %v555
        %v2951 = vunpack.c.l.b16 %v556
        %v2952 = vunpack.c.h.b16 %v556
        %v2953 = vunpack.c.l.b16 %v557
        %v2954 = vunpack.c.h.b16 %v557
        %v2955 = vunpack.c.l.b16 %v558
        %v2956 = vunpack.c.h.b16 %v558
        %v2957 = vunpack.c.l.b16 %v559
        %v2958 = vunpack.c.h.b16 %v559
        %v2959 = vunpack.c.l.b16 %v560
        %v2960 = vunpack.c.h.b16 %v560
        %v2961 = vunpack.c.l.b16 %v561
        %v2962 = vunpack.c.h.b16 %v561
        %v2963 = vunpack.c.l.b16 %v562
        %v2964 = vunpack.c.h.b16 %v562
        %v2965 = vunpack.c.l.b16 %v563
        %v2966 = vunpack.c.h.b16 %v563
        %v2967 = vunpack.c.l.b16 %v564
        %v2968 = vunpack.c.h.b16 %v564
        %v2969 = vunpack.c.l.b16 %v565
        %v2970 = vunpack.c.h.b16 %v565
        %v2971 = vunpack.c.l.b16 %v566
        %v2972 = vunpack.c.h.b16 %v566
        %v2973 = vunpack.c.l.b16 %v567
        %v2974 = vunpack.c.h.b16 %v567
        %v2975 = vunpack.c.l.b16 %v568
        %v2976 = vunpack.c.h.b16 %v568
        %v2977 = vunpack.c.l.b16 %v569
        %v2978 = vunpack.c.h.b16 %v569
        %v2979 = vunpack.c.l.b16 %v570
        %v2980 = vunpack.c.h.b16 %v570
        %v2981 = vunpack.c.l.b16 %v571
        %v2982 = vunpack.c.h.b16 %v571
        %v2983 = vunpack.c.l.b16 %v572
        %v2984 = vunpack.c.h.b16 %v572
        %v2985 = vunpack.c.l.b16 %v573
        %v2986 = vunpack.c.h.b16 %v573
        %v2987 = vunpack.c.l.b16 %v574
        %v2988 = vunpack.c.h.b16 %v574
        %v2989 = vunpack.c.l.b16 %v575
        %v2990 = vunpack.c.h.b16 %v575
        %v2991 = vunpack.c.l.b16 %v576
        %v2992 = vunpack.c.h.b16 %v576
        %v2993 = vunpack.c.l.b16 %v577
        %v2994 = vunpack.c.h.b16 %v577
        %v2995 = vunpack.c.l.b16 %v578
        %v2996 = vunpack.c.h.b16 %v578
        %v2997 = vunpack.c.l.b16 %v579
        %v2998 = vunpack.c.h.b16 %v579
        %v2999 = vunpack.c.l.b16 %v580
        %v3000 = vunpack.c.h.b16 %v580
        %v3001 = vunpack.c.l.b16 %v581
        %v3002 = vunpack.c.h.b16 %v581
        %v3003 = vunpack.c.l.b16 %v582
        %v3004 = vunpack.c.h.b16 %v582
        %v3005 = vunpack.c.l.b16 %v583
        %v3006 = vunpack.c.h.b16 %v583
        %v3007 = vunpack.c.l.b16 %v584
        %v3008 = vunpack.c.h.b16 %v584
        %v3009 = vunpack.c.l.b16 %v585
        %v3010 = vunpack.c.h.b16 %v585
        %v3011 = vunpack.c.l.b16 %v586
        %v3012 = vunpack.c.h.b16 %v586
        %v3013 = vunpack.c.l.b16 %v587
        %v3014 = vunpack.c.h.b16 %v587
        %v3015 = vunpack.c.l.b16 %v588
        %v3016 = vunpack.c.h.b16 %v588
        %v3017 = vunpack.c.l.b16 %v589
        %v3018 = vunpack.c.h.b16 %v589
        %v3019 = vunpack.c.l.b16 %v590
        %v3020 = vunpack.c.h.b16 %v590
        %v3021 = vunpack.c.l.b16 %v591
        %v3022 = vunpack.c.h.b16 %v591
        %v3023 = vunpack.c.l.b16 %v592
        %v3024 = vunpack.c.h.b16 %v592
        %v3025 = vunpack.c.l.b16 %v593
        %v3026 = vunpack.c.h.b16 %v593
        %v3027 = vunpack.c.l.b16 %v594
        %v3028 = vunpack.c.h.b16 %v594
        %v3029 = vunpack.c.l.b16 %v595
        %v3030 = vunpack.c.h.b16 %v595
        %v3031 = vunpack.c.l.b16 %v596
        %v3032 = vunpack.c.h.b16 %v596
        %v3033 = vunpack.c.l.b16 %v597
        %v3034 = vunpack.c.h.b16 %v597
        %v3035 = vunpack.c.l.b16 %v598
        %v3036 = vunpack.c.h.b16 %v598
        %v3037 = vunpack.c.l.b16 %v599
        %v3038 = vunpack.c.h.b16 %v599
        %v3039 = vunpack.c.l.b16 %v600
        %v3040 = vunpack.c.h.b16 %v600
        %v3041 = vunpack.c.l.b16 %v601
        %v3042 = vunpack.c.h.b16 %v601
        %v3043 = vunpack.c.l.b16 %v602
        %v3044 = vunpack.c.h.b16 %v602
        %v3045 = vunpack.c.l.b16 %v603
        %v3046 = vunpack.c.h.b16 %v603
        %v3047 = vunpack.c.l.b16 %v604
        %v3048 = vunpack.c.h.b16 %v604
        %v3049 = vunpack.c.l.b16 %v605
        %v3050 = vunpack.c.h.b16 %v605
        %v3051 = vunpack.c.l.b16 %v606
        %v3052 = vunpack.c.h.b16 %v606
        %v3053 = vunpack.c.l.b16 %v607
        %v3054 = vunpack.c.h.b16 %v607
        %v3055 = vunpack.c.l.b16 %v608
        %v3056 = vunpack.c.h.b16 %v608
        %v3057 = vunpack.c.l.b16 %v609
        %v3058 = vunpack.c.h.b16 %v609
        %v3059 = vunpack.c.l.b16 %v610
        %v3060 = vunpack.c.h.b16 %v610
        %v3061 = vunpack.c.l.b16 %v611
        %v3062 = vunpack.c.h.b16 %v611
        %v3063 = vunpack.c.l.b16 %v612
        %v3064 = vunpack.c.h.b16 %v612
        %v3065 = vunpack.c.l.b16 %v613
        %v3066 = vunpack.c.h.b16 %v613
        %v3067 = vunpack.c.l.b16 %v614
        %v3068 = vunpack.c.h.b16 %v614
        %v3069 = vunpack.c.l.b16 %v615
        %v3070 = vunpack.c.h.b16 %v615
        %v3071 = vunpack.c.l.b16 %v616
        %v3072 = vunpack.c.h.b16 %v616
        %v3073 = vunpack.c.l.b16 %v617
        %v3074 = vunpack.c.h.b16 %v617
        %v3075 = vunpack.c.l.b16 %v618
        %v3076 = vunpack.c.h.b16 %v618
        %v3077 = vunpack.c.l.b16 %v619
        %v3078 = vunpack.c.h.b16 %v619
        %v3079 = vunpack.c.l.b16 %v620
        %v3080 = vunpack.c.h.b16 %v620
        %v3081 = vunpack.c.l.b16 %v621
        %v3082 = vunpack.c.h.b16 %v621
        %v3083 = vunpack.c.l.b16 %v622
        %v3084 = vunpack.c.h.b16 %v622
        %v3085 = vunpack.c.l.b16 %v623
        %v3086 = vunpack.c.h.b16 %v623
        %v3087 = vunpack.c.l.b16 %v624
        %v3088 = vunpack.c.h.b16 %v624
        %v3089 = vunpack.c.l.b16 %v625
        %v3090 = vunpack.c.h.b16 %v625
        %v3091 = vunpack.c.l.b16 %v626
        %v3092 = vunpack.c.h.b16 %v626
        %v3093 = vunpack.c.l.b16 %v627
        %v3094 = vunpack.c.h.b16 %v627
        %v3095 = vunpack.c.l.b16 %v628
        %v3096 = vunpack.c.h.b16 %v628
        %v3097 = vunpack.c.l.b16 %v629
        %v3098 = vunpack.c.h.b16 %v629
        %v3099 = vunpack.c.l.b16 %v630
        %v3100 = vunpack.c.h.b16 %v630
        %v3101 = vunpack.c.l.b16 %v631
        %v3102 = vunpack.c.h.b16 %v631
        %v3103 = vunpack.c.l.b16 %v632
        %v3104 = vunpack.c.h.b16 %v632
        %v3105 = vunpack.c.l.b16 %v633
        %v3106 = vunpack.c.h.b16 %v633
        %v3107 = vunpack.c.l.b16 %v634
        %v3108 = vunpack.c.h.b16 %v634
        %v3109 = vunpack.c.l.b16 %v635
        %v3110 = vunpack.c.h.b16 %v635
        %v3111 = vunpack.c.l.b16 %v636
        %v3112 = vunpack.c.h.b16 %v636
        %v3113 = vunpack.c.l.b16 %v637
        %v3114 = vunpack.c.h.b16 %v637
        %v3115 = vunpack.c.l.b16 %v638
        %v3116 = vunpack.c.h.b16 %v638
        %v3117 = vunpack.c.l.b16 %v639
        %v3118 = vunpack.c.h.b16 %v639
        %v3119 = vunpack.c.l.b16 %v640
        %v3120 = vunpack.c.h.b16 %v640
        %v3121 = vunpack.c.l.b16 %v641
        %v3122 = vunpack.c.h.b16 %v641
        %v3123 = vunpack.c.l.b16 %v642
        %v3124 = vunpack.c.h.b16 %v642
        %v3125 = vunpack.c.l.b16 %v643
        %v3126 = vunpack.c.h.b16 %v643
        %v3127 = vunpack.c.l.b16 %v644
        %v3128 = vunpack.c.h.b16 %v644
        %v3129 = vunpack.c.l.b16 %v645
        %v3130 = vunpack.c.h.b16 %v645
        %v3131 = vunpack.c.l.b16 %v646
        %v3132 = vunpack.c.h.b16 %v646
        %v3133 = vunpack.c.l.b16 %v647
        %v3134 = vunpack.c.h.b16 %v647
        %v3135 = vunpack.c.l.b16 %v648
        %v3136 = vunpack.c.h.b16 %v648
        %v3137 = vunpack.c.l.b16 %v649
        %v3138 = vunpack.c.h.b16 %v649
        %v3139 = vunpack.c.l.b16 %v650
        %v3140 = vunpack.c.h.b16 %v650
        %v3141 = vunpack.c.l.b16 %v651
        %v3142 = vunpack.c.h.b16 %v651
        %v3143 = vunpack.c.l.b16 %v652
        %v3144 = vunpack.c.h.b16 %v652
        %v3145 = vunpack.c.l.b16 %v653
        %v3146 = vunpack.c.h.b16 %v653
        %v3147 = vunpack.c.l.b16 %v654
        %v3148 = vunpack.c.h.b16 %v654
        %v3149 = vunpack.c.l.b16 %v655
        %v3150 = vunpack.c.h.b16 %v655
        %v3151 = vunpack.c.l.b16 %v656
        %v3152 = vunpack.c.h.b16 %v656
        %v3153 = vunpack.c.l.b16 %v657
        %v3154 = vunpack.c.h.b16 %v657
        %v3155 = vunpack.c.l.b16 %v658
        %v3156 = vunpack.c.h.b16 %v658
        %v3157 = vunpack.c.l.b16 %v659
        %v3158 = vunpack.c.h.b16 %v659
        %v3159 = vunpack.c.l.b16 %v660
        %v3160 = vunpack.c.h.b16 %v660
        %v3161 = vunpack.c.l.b16 %v661
        %v3162 = vunpack.c.h.b16 %v661
        %v3163 = vunpack.c.l.b16 %v662
        %v3164 = vunpack.c.h.b16 %v662
        %v3165 = vunpack.c.l.b16 %v663
        %v3166 = vunpack.c.h.b16 %v663
        %v3167 = vunpack.c.l.b16 %v664
        %v3168 = vunpack.c.h.b16 %v664
        %v3169 = vunpack.c.l.b16 %v665
        %v3170 = vunpack.c.h.b16 %v665
        %v3171 = vunpack.c.l.b16 %v666
        %v3172 = vunpack.c.h.b16 %v666
        %v3173 = vunpack.c.l.b16 %v667
        %v3174 = vunpack.c.h.b16 %v667
        %v3175 = vunpack.c.l.b16 %v668
        %v3176 = vunpack.c.h.b16 %v668
        %v3177 = vunpack.c.l.b16 %v669
        %v3178 = vunpack.c.h.b16 %v669
        %v3179 = vunpack.c.l.b16 %v670
        %v3180 = vunpack.c.h.b16 %v670
        %v3181 = vunpack.c.l.b16 %v671
        %v3182 = vunpack.c.h.b16 %v671
        %v3183 = vunpack.c.l.b16 %v672
        %v3184 = vunpack.c.h.b16 %v672
        %v3185 = vunpack.c.l.b16 %v673
        %v3186 = vunpack.c.h.b16 %v673
        %v3187 = vunpack.c.l.b16 %v674
        %v3188 = vunpack.c.h.b16 %v674
        %v3189 = vunpack.c.l.b16 %v675
        %v3190 = vunpack.c.h.b16 %v675
        %v3191 = vunpack.c.l.b16 %v676
        %v3192 = vunpack.c.h.b16 %v676
        %v3193 = vunpack.c.l.b16 %v677
        %v3194 = vunpack.c.h.b16 %v677
        %v3195 = vunpack.c.l.b16 %v678
        %v3196 = vunpack.c.h.b16 %v678
        %v3197 = vunpack.c.l.b16 %v679
        %v3198 = vunpack.c.h.b16 %v679
        %v3199 = vunpack.c.l.b16 %v680
        %v3200 = vunpack.c.h.b16 %v680
        %v3201 = vunpack.c.l.b16 %v681
        %v3202 = vunpack.c.h.b16 %v681
        %v3203 = vunpack.c.l.b16 %v682
        %v3204 = vunpack.c.h.b16 %v682
        %v3205 = vunpack.c.l.b16 %v683
        %v3206 = vunpack.c.h.b16 %v683
        %v3207 = vunpack.c.l.b16 %v684
        %v3208 = vunpack.c.h.b16 %v684
        %v3209 = vunpack.c.l.b16 %v685
        %v3210 = vunpack.c.h.b16 %v685
        %v3211 = vunpack.c.l.b16 %v686
        %v3212 = vunpack.c.h.b16 %v686
        %v3213 = vunpack.c.l.b16 %v687
        %v3214 = vunpack.c.h.b16 %v687
        %v3215 = vunpack.c.l.b16 %v688
        %v3216 = vunpack.c.h.b16 %v688
        %v3217 = vunpack.c.l.b16 %v689
        %v3218 = vunpack.c.h.b16 %v689
        %v3219 = vunpack.c.l.b16 %v690
        %v3220 = vunpack.c.h.b16 %v690
        %v3221 = vunpack.c.l.b16 %v691
        %v3222 = vunpack.c.h.b16 %v691
        %v3223 = vunpack.c.l.b16 %v692
        %v3224 = vunpack.c.h.b16 %v692
        %v3225 = vunpack.c.l.b16 %v693
        %v3226 = vunpack.c.h.b16 %v693
        %v3227 = vunpack.c.l.b16 %v694
        %v3228 = vunpack.c.h.b16 %v694
        %v3229 = vunpack.c.l.b16 %v695
        %v3230 = vunpack.c.h.b16 %v695
        %v3231 = vunpack.c.l.b16 %v696
        %v3232 = vunpack.c.h.b16 %v696
        %v3233 = vunpack.c.l.b16 %v697
        %v3234 = vunpack.c.h.b16 %v697
        %v3235 = vunpack.c.l.b16 %v698
        %v3236 = vunpack.c.h.b16 %v698
        %v3237 = vunpack.c.l.b16 %v699
        %v3238 = vunpack.c.h.b16 %v699
        %v3239 = vunpack.c.l.b16 %v700
        %v3240 = vunpack.c.h.b16 %v700
        %v3241 = vunpack.c.l.b16 %v701
        %v3242 = vunpack.c.h.b16 %v701
        %v3243 = vunpack.c.l.b16 %v702
        %v3244 = vunpack.c.h.b16 %v702
        %v3245 = vunpack.c.l.b16 %v703
        %v3246 = vunpack.c.h.b16 %v703
        %v3247 = vunpack.c.l.b16 %v704
        %v3248 = vunpack.c.h.b16 %v704
        %v3249 = vunpack.c.l.b16 %v705
        %v3250 = vunpack.c.h.b16 %v705
        %v3251 = vunpack.c.l.b16 %v706
        %v3252 = vunpack.c.h.b16 %v706
        %v3253 = vunpack.c.l.b16 %v707
        %v3254 = vunpack.c.h.b16 %v707
        %v3255 = vunpack.c.l.b16 %v708
        %v3256 = vunpack.c.h.b16 %v708
        %v3257 = vunpack.c.l.b16 %v709
        %v3258 = vunpack.c.h.b16 %v709
        %v3259 = vunpack.c.l.b16 %v710
        %v3260 = vunpack.c.h.b16 %v710
        %v3261 = vunpack.c.l.b16 %v711
        %v3262 = vunpack.c.h.b16 %v711
        %v3263 = vunpack.c.l.b16 %v712
        %v3264 = vunpack.c.h.b16 %v712
        %v3265 = vunpack.c.l.b16 %v713
        %v3266 = vunpack.c.h.b16 %v713
        %v3267 = vunpack.c.l.b16 %v714
        %v3268 = vunpack.c.h.b16 %v714
        %v3269 = vunpack.c.l.b16 %v715
        %v3270 = vunpack.c.h.b16 %v715
        %v3271 = vunpack.c.l.b16 %v716
        %v3272 = vunpack.c.h.b16 %v716
        %v3273 = vunpack.c.l.b16 %v717
        %v3274 = vunpack.c.h.b16 %v717
        %v3275 = vunpack.c.l.b16 %v718
        %v3276 = vunpack.c.h.b16 %v718
        %v3277 = vunpack.c.l.b16 %v719
        %v3278 = vunpack.c.h.b16 %v719
        %v3279 = vunpack.c.l.b16 %v720
        %v3280 = vunpack.c.h.b16 %v720
        %v3281 = vunpack.c.l.b16 %v721
        %v3282 = vunpack.c.h.b16 %v721
        %v3283 = vunpack.c.l.b16 %v722
        %v3284 = vunpack.c.h.b16 %v722
        %v3285 = vunpack.c.l.b16 %v723
        %v3286 = vunpack.c.h.b16 %v723
        %v3287 = vunpack.c.l.b16 %v724
        %v3288 = vunpack.c.h.b16 %v724
        %v3289 = vunpack.c.l.b16 %v725
        %v3290 = vunpack.c.h.b16 %v725
        %v3291 = vunpack.c.l.b16 %v726
        %v3292 = vunpack.c.h.b16 %v726
        %v3293 = vunpack.c.l.b16 %v727
        %v3294 = vunpack.c.h.b16 %v727
        %v3295 = vunpack.c.l.b16 %v728
        %v3296 = vunpack.c.h.b16 %v728
        %v3297 = vunpack.c.l.b16 %v729
        %v3298 = vunpack.c.h.b16 %v729
        %v3299 = vunpack.c.l.b16 %v730
        %v3300 = vunpack.c.h.b16 %v730
        %v3301 = vunpack.c.l.b16 %v731
        %v3302 = vunpack.c.h.b16 %v731
        %v3303 = vunpack.c.l.b16 %v732
        %v3304 = vunpack.c.h.b16 %v732
        %v3305 = vunpack.c.l.b16 %v733
        %v3306 = vunpack.c.h.b16 %v733
        %v3307 = vunpack.c.l.b16 %v734
        %v3308 = vunpack.c.h.b16 %v734
        %v3309 = vunpack.c.l.b16 %v735
        %v3310 = vunpack.c.h.b16 %v735
        %v3311 = vunpack.c.l.b16 %v736
        %v3312 = vunpack.c.h.b16 %v736
        %v3313 = vunpack.c.l.b16 %v737
        %v3314 = vunpack.c.h.b16 %v737
        %v3315 = vunpack.c.l.b16 %v738
        %v3316 = vunpack.c.h.b16 %v738
        %v3317 = vunpack.c.l.b16 %v739
        %v3318 = vunpack.c.h.b16 %v739
        %v3319 = vunpack.c.l.b16 %v740
        %v3320 = vunpack.c.h.b16 %v740
        %v3321 = vunpack.c.l.b16 %v741
        %v3322 = vunpack.c.h.b16 %v741
        %v3323 = vunpack.c.l.b16 %v742
        %v3324 = vunpack.c.h.b16 %v742
        %v3325 = vunpack.c.l.b16 %v743
        %v3326 = vunpack.c.h.b16 %v743
        %v3327 = vunpack.c.l.b16 %v744
        %v3328 = vunpack.c.h.b16 %v744
        %v3329 = vunpack.c.l.b16 %v745
        %v3330 = vunpack.c.h.b16 %v745
        %v3331 = vunpack.c.l.b16 %v746
        %v3332 = vunpack.c.h.b16 %v746
        %v3333 = vunpack.c.l.b16 %v747
        %v3334 = vunpack.c.h.b16 %v747
        %v3335 = vunpack.c.l.b16 %v748
        %v3336 = vunpack.c.h.b16 %v748
        %v3337 = vunpack.c.l.b16 %v749
        %v3338 = vunpack.c.h.b16 %v749
        %v3339 = vunpack.c.l.b16 %v750
        %v3340 = vunpack.c.h.b16 %v750
        %v3341 = vunpack.c.l.b16 %v751
        %v3342 = vunpack.c.h.b16 %v751
        %v3343 = vunpack.c.l.b16 %v752
        %v3344 = vunpack.c.h.b16 %v752
        %v3345 = vunpack.c.l.b16 %v753
        %v3346 = vunpack.c.h.b16 %v753
        %v3347 = vunpack.c.l.b16 %v754
        %v3348 = vunpack.c.h.b16 %v754
        %v3349 = vunpack.c.l.b16 %v755
        %v3350 = vunpack.c.h.b16 %v755
        %v3351 = vunpack.c.l.b16 %v756
        %v3352 = vunpack.c.h.b16 %v756
        %v3353 = vunpack.c.l.b16 %v757
        %v3354 = vunpack.c.h.b16 %v757
        %v3355 = vunpack.c.l.b16 %v758
        %v3356 = vunpack.c.h.b16 %v758
        %v3357 = vunpack.c.l.b16 %v759
        %v3358 = vunpack.c.h.b16 %v759
        %v3359 = vunpack.c.l.b16 %v760
        %v3360 = vunpack.c.h.b16 %v760
        %v3361 = vunpack.c.l.b16 %v761
        %v3362 = vunpack.c.h.b16 %v761
        %v3363 = vunpack.c.l.b16 %v762
        %v3364 = vunpack.c.h.b16 %v762
        %v3365 = vunpack.c.l.b16 %v763
        %v3366 = vunpack.c.h.b16 %v763
        %v3367 = vunpack.c.l.b16 %v764
        %v3368 = vunpack.c.h.b16 %v764
        %v3369 = vunpack.c.l.b16 %v765
        %v3370 = vunpack.c.h.b16 %v765
        %v3371 = vunpack.c.l.b16 %v766
        %v3372 = vunpack.c.h.b16 %v766
        %v3373 = vunpack.c.l.b16 %v767
        %v3374 = vunpack.c.h.b16 %v767
        %v3375 = vunpack.c.l.b16 %v768
        %v3376 = vunpack.c.h.b16 %v768
        %v3377 = vunpack.c.l.b16 %v769
        %v3378 = vunpack.c.h.b16 %v769
        %v3379 = vunpack.c.l.b16 %v770
        %v3380 = vunpack.c.h.b16 %v770
        %v3381 = vunpack.c.l.b16 %v771
        %v3382 = vunpack.c.h.b16 %v771
        %v3383 = vunpack.c.l.b16 %v772
        %v3384 = vunpack.c.h.b16 %v772
        %v3385 = vunpack.c.l.b16 %v773
        %v3386 = vunpack.c.h.b16 %v773
        %v3387 = vunpack.c.l.b16 %v774
        %v3388 = vunpack.c.h.b16 %v774
        %v3389 = vunpack.c.l.b16 %v775
        %v3390 = vunpack.c.h.b16 %v775
        %v3391 = vunpack.c.l.b16 %v776
        %v3392 = vunpack.c.h.b16 %v776
        %v3393 = vunpack.c.l.b16 %v777
        %v3394 = vunpack.c.h.b16 %v777
        %v3395 = vunpack.c.l.b16 %v778
        %v3396 = vunpack.c.h.b16 %v778
        %v3397 = vunpack.c.l.b16 %v779
        %v3398 = vunpack.c.h.b16 %v779
        %v3399 = vunpack.c.l.b16 %v780
        %v3400 = vunpack.c.h.b16 %v780
        %v3401 = vunpack.c.l.b16 %v781
        %v3402 = vunpack.c.h.b16 %v781
        %v3403 = vunpack.c.l.b16 %v782
        %v3404 = vunpack.c.h.b16 %v782
        %v3405 = vunpack.c.l.b16 %v783
        %v3406 = vunpack.c.h.b16 %v783
        %v3407 = vunpack.c.l.b16 %v784
        %v3408 = vunpack.c.h.b16 %v784
        %v3409 = vunpack.c.l.b16 %v785
        %v3410 = vunpack.c.h.b16 %v785
        %v3411 = vunpack.c.l.b16 %v786
        %v3412 = vunpack.c.h.b16 %v786
        %v3413 = vunpack.c.l.b16 %v787
        %v3414 = vunpack.c.h.b16 %v787
        %v3415 = vunpack.c.l.b16 %v788
        %v3416 = vunpack.c.h.b16 %v788
        %v3417 = vunpack.c.l.b16 %v789
        %v3418 = vunpack.c.h.b16 %v789
        %v3419 = vunpack.c.l.b16 %v790
        %v3420 = vunpack.c.h.b16 %v790
        %v3421 = vunpack.c.l.b16 %v791
        %v3422 = vunpack.c.h.b16 %v791
        %v3423 = vunpack.c.l.b16 %v792
        %v3424 = vunpack.c.h.b16 %v792
        %v3425 = vunpack.c.l.b16 %v793
        %v3426 = vunpack.c.h.b16 %v793
        %v3427 = vunpack.c.l.b16 %v794
        %v3428 = vunpack.c.h.b16 %v794
        %v3429 = vunpack.c.l.b16 %v795
        %v3430 = vunpack.c.h.b16 %v795
        %v3431 = vunpack.c.l.b16 %v796
        %v3432 = vunpack.c.h.b16 %v796
        %v3433 = vunpack.c.l.b16 %v797
        %v3434 = vunpack.c.h.b16 %v797
        %v3435 = vunpack.c.l.b16 %v798
        %v3436 = vunpack.c.h.b16 %v798
        %v3437 = vunpack.c.l.b16 %v799
        %v3438 = vunpack.c.h.b16 %v799
        %v3439 = vunpack.c.l.b16 %v800
        %v3440 = vunpack.c.h.b16 %v800
        %v3441 = vunpack.c.l.b16 %v801
        %v3442 = vunpack.c.h.b16 %v801
        %v3443 = vunpack.c.l.b16 %v802
        %v3444 = vunpack.c.h.b16 %v802
        %v3445 = vunpack.c.l.b16 %v803
        %v3446 = vunpack.c.h.b16 %v803
        %v3447 = vunpack.c.l.b16 %v804
        %v3448 = vunpack.c.h.b16 %v804
        %v3449 = vunpack.c.l.b16 %v805
        %v3450 = vunpack.c.h.b16 %v805
        %v3451 = vunpack.c.l.b16 %v806
        %v3452 = vunpack.c.h.b16 %v806
        %v3453 = vunpack.c.l.b16 %v807
        %v3454 = vunpack.c.h.b16 %v807
        %v3455 = vunpack.c.l.b16 %v808
        %v3456 = vunpack.c.h.b16 %v808
        %v3457 = vunpack.c.l.b16 %v809
        %v3458 = vunpack.c.h.b16 %v809
        %v3459 = vunpack.c.l.b16 %v810
        %v3460 = vunpack.c.h.b16 %v810
        %v3461 = vunpack.c.l.b16 %v811
        %v3462 = vunpack.c.h.b16 %v811
        %v3463 = vunpack.c.l.b16 %v812
        %v3464 = vunpack.c.h.b16 %v812
        %v3465 = vunpack.c.l.b16 %v813
        %v3466 = vunpack.c.h.b16 %v813
        %v3467 = vunpack.c.l.b16 %v814
        %v3468 = vunpack.c.h.b16 %v814
        %v3469 = vunpack.c.l.b16 %v815
        %v3470 = vunpack.c.h.b16 %v815
        %v3471 = vunpack.c.l.b16 %v816
        %v3472 = vunpack.c.h.b16 %v816
        %v3473 = vunpack.c.l.b16 %v817
        %v3474 = vunpack.c.h.b16 %v817
        %v3475 = vunpack.c.l.b16 %v818
        %v3476 = vunpack.c.h.b16 %v818
        %v3477 = vunpack.c.l.b16 %v819
        %v3478 = vunpack.c.h.b16 %v819
        %v3479 = vunpack.c.l.b16 %v820
        %v3480 = vunpack.c.h.b16 %v820
        %v3481 = vunpack.c.l.b16 %v821
        %v3482 = vunpack.c.h.b16 %v821
        %v3483 = vunpack.c.l.b16 %v822
        %v3484 = vunpack.c.h.b16 %v822
        %v3485 = vunpack.c.l.b16 %v823
        %v3486 = vunpack.c.h.b16 %v823
        %v3487 = vunpack.c.l.b16 %v824
        %v3488 = vunpack.c.h.b16 %v824
        %v3489 = vunpack.c.l.b16 %v825
        %v3490 = vunpack.c.h.b16 %v825
        %v3491 = vunpack.c.l.b16 %v826
        %v3492 = vunpack.c.h.b16 %v826
        %v3493 = vunpack.c.l.b16 %v827
        %v3494 = vunpack.c.h.b16 %v827
        %v3495 = vunpack.c.l.b16 %v828
        %v3496 = vunpack.c.h.b16 %v828
        %v3497 = vunpack.c.l.b16 %v829
        %v3498 = vunpack.c.h.b16 %v829
        %v3499 = vunpack.c.l.b16 %v830
        %v3500 = vunpack.c.h.b16 %v830
        %v3501 = vunpack.c.l.b16 %v831
        %v3502 = vunpack.c.h.b16 %v831
        %v3503 = vunpack.c.l.b16 %v832
        %v3504 = vunpack.c.h.b16 %v832
        %v3505 = vunpack.c.l.b16 %v833
        %v3506 = vunpack.c.h.b16 %v833
        %v3507 = vunpack.c.l.b16 %v834
        %v3508 = vunpack.c.h.b16 %v834
        %v3509 = vunpack.c.l.b16 %v835
        %v3510 = vunpack.c.h.b16 %v835
        %v3511 = vunpack.c.l.b16 %v836
        %v3512 = vunpack.c.h.b16 %v836
        %v3513 = vunpack.c.l.b16 %v837
        %v3514 = vunpack.c.h.b16 %v837
        %v3515 = vunpack.c.l.b16 %v838
        %v3516 = vunpack.c.h.b16 %v838
        %v3517 = vunpack.c.l.b16 %v839
        %v3518 = vunpack.c.h.b16 %v839
        %v3519 = vunpack.c.l.b16 %v840
        %v3520 = vunpack.c.h.b16 %v840
        %v3521 = vunpack.c.l.b16 %v841
        %v3522 = vunpack.c.h.b16 %v841
        %v3523 = vunpack.c.l.b16 %v842
        %v3524 = vunpack.c.h.b16 %v842
        %v3525 = vunpack.c.l.b16 %v843
        %v3526 = vunpack.c.h.b16 %v843
        %v3527 = vunpack.c.l.b16 %v844
        %v3528 = vunpack.c.h.b16 %v844
        %v3529 = vunpack.c.l.b16 %v845
        %v3530 = vunpack.c.h.b16 %v845
        %v3531 = vunpack.c.l.b16 %v846
        %v3532 = vunpack.c.h.b16 %v846
        %v3533 = vunpack.c.l.b16 %v847
        %v3534 = vunpack.c.h.b16 %v847
        %v3535 = vunpack.c.l.b16 %v848
        %v3536 = vunpack.c.h.b16 %v848
        %v3537 = vunpack.c.l.b16 %v849
        %v3538 = vunpack.c.h.b16 %v849
        %v3539 = vunpack.c.l.b16 %v850
        %v3540 = vunpack.c.h.b16 %v850
        %v3541 = vunpack.c.l.b16 %v851
        %v3542 = vunpack.c.h.b16 %v851
        %v3543 = vunpack.c.l.b16 %v852
        %v3544 = vunpack.c.h.b16 %v852
        %v3545 = vunpack.c.l.b16 %v853
        %v3546 = vunpack.c.h.b16 %v853
        %v3547 = vunpack.c.l.b16 %v854
        %v3548 = vunpack.c.h.b16 %v854
        %v3549 = vunpack.c.l.b16 %v855
        %v3550 = vunpack.c.h.b16 %v855
        %v3551 = vunpack.c.l.b16 %v856
        %v3552 = vunpack.c.h.b16 %v856
        %v3553 = vunpack.c.l.b16 %v857
        %v3554 = vunpack.c.h.b16 %v857
        %v3555 = vunpack.c.l.b16 %v858
        %v3556 = vunpack.c.h.b16 %v858
        %v3557 = vunpack.c.l.b16 %v859
        %v3558 = vunpack.c.h.b16 %v859
        %v3559 = vunpack.c.l.b16 %v860
        %v3560 = vunpack.c.h.b16 %v860
        %v3561 = vunpack.c.l.b16 %v861
        %v3562 = vunpack.c.h.b16 %v861
        %v3563 = vunpack.c.l.b16 %v862
        %v3564 = vunpack.c.h.b16 %v862
        %v3565 = vunpack.c.l.b16 %v863
        %v3566 = vunpack.c.h.b16 %v863
        %v3567 = vunpack.c.l.b16 %v864
        %v3568 = vunpack.c.h.b16 %v864
        %v3569 = vunpack.c.l.b16 %v865
        %v3570 = vunpack.c.h.b16 %v865
        %v3571 = vunpack.c.l.b16 %v866
        %v3572 = vunpack.c.h.b16 %v866
        %v3573 = vunpack.c.l.b16 %v867
        %v3574 = vunpack.c.h.b16 %v867
        %v3575 = vunpack.c.l.b16 %v868
        %v3576 = vunpack.c.h.b16 %v868
        %v3577 = vunpack.c.l.b16 %v869
        %v3578 = vunpack.c.h.b16 %v869
        %v3579 = vunpack.c.l.b16 %v870
        %v3580 = vunpack.c.h.b16 %v870
        %v3581 = vunpack.c.l.b16 %v871
        %v3582 = vunpack.c.h.b16 %v871
        %v3583 = vunpack.c.l.b16 %v872
        %v3584 = vunpack.c.h.b16 %v872
        %v3585 = vunpack.c.l.b16 %v873
        %v3586 = vunpack.c.h.b16 %v873
        %v3587 = vunpack.c.l.b16 %v874
        %v3588 = vunpack.c.h.b16 %v874
        %v3589 = vunpack.c.l.b16 %v875
        %v3590 = vunpack.c.h.b16 %v875
        %v3591 = vunpack.c.l.b16 %v876
        %v3592 = vunpack.c.h.b16 %v876
        %v3593 = vunpack.c.l.b16 %v877
        %v3594 = vunpack.c.h.b16 %v877
        %v3595 = vunpack.c.l.b16 %v878
        %v3596 = vunpack.c.h.b16 %v878
        %v3597 = vunpack.c.l.b16 %v879
        %v3598 = vunpack.c.h.b16 %v879
        %v3599 = vunpack.c.l.b16 %v880
        %v3600 = vunpack.c.h.b16 %v880
        %v3601 = vunpack.c.l.b16 %v881
        %v3602 = vunpack.c.h.b16 %v881
        %v3603 = vunpack.c.l.b16 %v882
        %v3604 = vunpack.c.h.b16 %v882
        %v3605 = vunpack.c.l.b16 %v883
        %v3606 = vunpack.c.h.b16 %v883
        %v3607 = vunpack.c.l.b16 %v884
        %v3608 = vunpack.c.h.b16 %v884
        %v3609 = vunpack.c.l.b16 %v885
        %v3610 = vunpack.c.h.b16 %v885
        %v3611 = vunpack.c.l.b16 %v886
        %v3612 = vunpack.c.h.b16 %v886
        %v3613 = vunpack.c.l.b16 %v887
        %v3614 = vunpack.c.h.b16 %v887
        %v3615 = vunpack.c.l.b16 %v888
        %v3616 = vunpack.c.h.b16 %v888
        %v3617 = vunpack.c.l.b16 %v889
        %v3618 = vunpack.c.h.b16 %v889
        %v3619 = vunpack.c.l.b16 %v890
        %v3620 = vunpack.c.h.b16 %v890
        %v3621 = vunpack.c.l.b16 %v891
        %v3622 = vunpack.c.h.b16 %v891
        %v3623 = vunpack.c.l.b16 %v892
        %v3624 = vunpack.c.h.b16 %v892
        %v3625 = vunpack.c.l.b16 %v893
        %v3626 = vunpack.c.h.b16 %v893
        %v3627 = vunpack.c.l.b16 %v894
        %v3628 = vunpack.c.h.b16 %v894
        %v3629 = vunpack.c.l.b16 %v895
        %v3630 = vunpack.c.h.b16 %v895
        %v3631 = vunpack.c.l.b16 %v896
        %v3632 = vunpack.c.h.b16 %v896
        %v3633 = vunpack.c.l.b16 %v897
        %v3634 = vunpack.c.h.b16 %v897
        %v3635 = vunpack.c.l.b16 %v898
        %v3636 = vunpack.c.h.b16 %v898
        %v3637 = vunpack.c.l.b16 %v899
        %v3638 = vunpack.c.h.b16 %v899
        %v3639 = vunpack.c.l.b16 %v900
        %v3640 = vunpack.c.h.b16 %v900
        %v3641 = vunpack.c.l.b16 %v901
        %v3642 = vunpack.c.h.b16 %v901
        %v3643 = vunpack.c.l.b16 %v902
        %v3644 = vunpack.c.h.b16 %v902
        %v3645 = vunpack.c.l.b16 %v903
        %v3646 = vunpack.c.h.b16 %v903
        %v3647 = vunpack.c.l.b16 %v904
        %v3648 = vunpack.c.h.b16 %v904
        %v3649 = vunpack.c.l.b16 %v905
        %v3650 = vunpack.c.h.b16 %v905
        %v3651 = vunpack.c.l.b16 %v906
        %v3652 = vunpack.c.h.b16 %v906
        %v3653 = vunpack.c.l.b16 %v907
        %v3654 = vunpack.c.h.b16 %v907
        %v3655 = vunpack.c.l.b16 %v908
        %v3656 = vunpack.c.h.b16 %v908
        %v3657 = vunpack.c.l.b16 %v909
        %v3658 = vunpack.c.h.b16 %v909
        %v3659 = vunpack.c.l.b16 %v910
        %v3660 = vunpack.c.h.b16 %v910
        %v3661 = vunpack.c.l.b16 %v911
        %v3662 = vunpack.c.h.b16 %v911
        %v3663 = vunpack.c.l.b16 %v912
        %v3664 = vunpack.c.h.b16 %v912
        %v3665 = vunpack.c.l.b16 %v913
        %v3666 = vunpack.c.h.b16 %v913
        %v3667 = vunpack.c.l.b16 %v914
        %v3668 = vunpack.c.h.b16 %v914
        %v3669 = vunpack.c.l.b16 %v915
        %v3670 = vunpack.c.h.b16 %v915
        %v3671 = vunpack.c.l.b16 %v916
        %v3672 = vunpack.c.h.b16 %v916
        %v3673 = vunpack.c.l.b16 %v917
        %v3674 = vunpack.c.h.b16 %v917
        %v3675 = vunpack.c.l.b16 %v918
        %v3676 = vunpack.c.h.b16 %v918
        %v3677 = vunpack.c.l.b16 %v919
        %v3678 = vunpack.c.h.b16 %v919
        %v3679 = vunpack.c.l.b16 %v920
        %v3680 = vunpack.c.h.b16 %v920
        %v3681 = vunpack.c.l.b16 %v921
        %v3682 = vunpack.c.h.b16 %v921
        %v3683 = vunpack.c.l.b16 %v922
        %v3684 = vunpack.c.h.b16 %v922
        %v3685 = vunpack.c.l.b16 %v923
        %v3686 = vunpack.c.h.b16 %v923
        %v3687 = vunpack.c.l.b16 %v924
        %v3688 = vunpack.c.h.b16 %v924
        %v3689 = vunpack.c.l.b16 %v925
        %v3690 = vunpack.c.h.b16 %v925
        %v3691 = vunpack.c.l.b16 %v926
        %v3692 = vunpack.c.h.b16 %v926
        %v3693 = vunpack.c.l.b16 %v927
        %v3694 = vunpack.c.h.b16 %v927
        %v3695 = vunpack.c.l.b16 %v928
        %v3696 = vunpack.c.h.b16 %v928
        %v3697 = vunpack.c.l.b16 %v929
        %v3698 = vunpack.c.h.b16 %v929
        %v3699 = vunpack.c.l.b16 %v930
        %v3700 = vunpack.c.h.b16 %v930
        %v3701 = vunpack.c.l.b16 %v931
        %v3702 = vunpack.c.h.b16 %v931
        %v3703 = vunpack.c.l.b16 %v932
        %v3704 = vunpack.c.h.b16 %v932
        %v3705 = vunpack.c.l.b16 %v933
        %v3706 = vunpack.c.h.b16 %v933
        %v3707 = vunpack.c.l.b16 %v934
        %v3708 = vunpack.c.h.b16 %v934
        %v3709 = vunpack.c.l.b16 %v935
        %v3710 = vunpack.c.h.b16 %v935
        %v3711 = vunpack.c.l.b16 %v936
        %v3712 = vunpack.c.h.b16 %v936
        %v3713 = vunpack.c.l.b16 %v937
        %v3714 = vunpack.c.h.b16 %v937
        %v3715 = vunpack.c.l.b16 %v938
        %v3716 = vunpack.c.h.b16 %v938
        %v3717 = vunpack.c.l.b16 %v939
        %v3718 = vunpack.c.h.b16 %v939
        %v3719 = vunpack.c.l.b16 %v940
        %v3720 = vunpack.c.h.b16 %v940
        %v3721 = vunpack.c.l.b16 %v941
        %v3722 = vunpack.c.h.b16 %v941
        %v3723 = vunpack.c.l.b16 %v942
        %v3724 = vunpack.c.h.b16 %v942
        %v3725 = vunpack.c.l.b16 %v943
        %v3726 = vunpack.c.h.b16 %v943
        %v3727 = vunpack.c.l.b16 %v944
        %v3728 = vunpack.c.h.b16 %v944
        %v3729 = vunpack.c.l.b16 %v945
        %v3730 = vunpack.c.h.b16 %v945
        %v3731 = vunpack.c.l.b16 %v946
        %v3732 = vunpack.c.h.b16 %v946
        %v3733 = vunpack.c.l.b16 %v947
        %v3734 = vunpack.c.h.b16 %v947
        %v3735 = vunpack.c.l.b16 %v948
        %v3736 = vunpack.c.h.b16 %v948
        %v3737 = vunpack.c.l.b16 %v949
        %v3738 = vunpack.c.h.b16 %v949
        %v3739 = vunpack.c.l.b16 %v950
        %v3740 = vunpack.c.h.b16 %v950
        %v3741 = vunpack.c.l.b16 %v951
        %v3742 = vunpack.c.h.b16 %v951
        %v3743 = vunpack.c.l.b16 %v952
        %v3744 = vunpack.c.h.b16 %v952
        %v3745 = vunpack.c.l.b16 %v953
        %v3746 = vunpack.c.h.b16 %v953
        %v3747 = vunpack.c.l.b16 %v954
        %v3748 = vunpack.c.h.b16 %v954
        %v3749 = vunpack.c.l.b16 %v955
        %v3750 = vunpack.c.h.b16 %v955
        %v3751 = vunpack.c.l.b16 %v956
        %v3752 = vunpack.c.h.b16 %v956
        %v3753 = vunpack.c.l.b16 %v957
        %v3754 = vunpack.c.h.b16 %v957
        %v3755 = vunpack.c.l.b16 %v958
        %v3756 = vunpack.c.h.b16 %v958
        %v3757 = vunpack.c.l.b16 %v959
        %v3758 = vunpack.c.h.b16 %v959
        %v3759 = vunpack.c.l.b16 %v960
        %v3760 = vunpack.c.h.b16 %v960
        %v3761 = vunpack.c.l.b16 %v961
        %v3762 = vunpack.c.h.b16 %v961
        %v3763 = vunpack.c.l.b16 %v962
        %v3764 = vunpack.c.h.b16 %v962
        %v3765 = vunpack.c.l.b16 %v963
        %v3766 = vunpack.c.h.b16 %v963
        %v3767 = vunpack.c.l.b16 %v964
        %v3768 = vunpack.c.h.b16 %v964
        %v3769 = vunpack.c.l.b16 %v965
        %v3770 = vunpack.c.h.b16 %v965
        %v3771 = vunpack.c.l.b16 %v966
        %v3772 = vunpack.c.h.b16 %v966
        %v3773 = vunpack.c.l.b16 %v967
        %v3774 = vunpack.c.h.b16 %v967
        %v3775 = vunpack.c.l.b16 %v968
        %v3776 = vunpack.c.h.b16 %v968
        %v3777 = vunpack.c.l.b16 %v969
        %v3778 = vunpack.c.h.b16 %v969
        %v3779 = vunpack.c.l.b16 %v970
        %v3780 = vunpack.c.h.b16 %v970
        %v3781 = vunpack.c.l.b16 %v971
        %v3782 = vunpack.c.h.b16 %v971
        %v3783 = vunpack.c.l.b16 %v972
        %v3784 = vunpack.c.h.b16 %v972
        %v3785 = vunpack.c.l.b16 %v973
        %v3786 = vunpack.c.h.b16 %v973
        %v3787 = vunpack.c.l.b16 %v974
        %v3788 = vunpack.c.h.b16 %v974
        %v3789 = vunpack.c.l.b16 %v975
        %v3790 = vunpack.c.h.b16 %v975
        %v3791 = vunpack.c.l.b16 %v976
        %v3792 = vunpack.c.h.b16 %v976
        %v3793 = vunpack.c.l.b16 %v977
        %v3794 = vunpack.c.h.b16 %v977
        %v3795 = vunpack.c.l.b16 %v978
        %v3796 = vunpack.c.h.b16 %v978
        %v3797 = vunpack.c.l.b16 %v979
        %v3798 = vunpack.c.h.b16 %v979
        %v3799 = vunpack.c.l.b16 %v980
        %v3800 = vunpack.c.h.b16 %v980
        %v3801 = vunpack.c.l.b16 %v981
        %v3802 = vunpack.c.h.b16 %v981
        %v3803 = vunpack.c.l.b16 %v982
        %v3804 = vunpack.c.h.b16 %v982
        %v3805 = vunpack.c.l.b16 %v983
        %v3806 = vunpack.c.h.b16 %v983
        %v3807 = vunpack.c.l.b16 %v984
        %v3808 = vunpack.c.h.b16 %v984
        %v3809 = vunpack.c.l.b16 %v985
        %v3810 = vunpack.c.h.b16 %v985
        %v3811 = vunpack.c.l.b16 %v986
        %v3812 = vunpack.c.h.b16 %v986
        %v3813 = vunpack.c.l.b16 %v987
        %v3814 = vunpack.c.h.b16 %v987
        %v3815 = vunpack.c.l.b16 %v988
        %v3816 = vunpack.c.h.b16 %v988
        %v3817 = vunpack.c.l.b16 %v989
        %v3818 = vunpack.c.h.b16 %v989
        %v3819 = vunpack.c.l.b16 %v990
        %v3820 = vunpack.c.h.b16 %v990
        %v3821 = vunpack.c.l.b16 %v991
        %v3822 = vunpack.c.h.b16 %v991
        %v3823 = vunpack.c.l.b16 %v992
        %v3824 = vunpack.c.h.b16 %v992
        %v3825 = vunpack.c.l.b16 %v993
        %v3826 = vunpack.c.h.b16 %v993
        %v3827 = vunpack.c.l.b16 %v994
        %v3828 = vunpack.c.h.b16 %v994
        %v3829 = vunpack.c.l.b16 %v995
        %v3830 = vunpack.c.h.b16 %v995
        %v3831 = vunpack.c.l.b16 %v996
        %v3832 = vunpack.c.h.b16 %v996
        %v3833 = vunpack.c.l.b16 %v997
        %v3834 = vunpack.c.h.b16 %v997
        %v3835 = vunpack.c.l.b16 %v998
        %v3836 = vunpack.c.h.b16 %v998
        %v3837 = vunpack.c.l.b16 %v999
        %v3838 = vunpack.c.h.b16 %v999
        %v3839 = vunpack.c.l.b16 %v1000
        %v3840 = vunpack.c.h.b16 %v1000
        %v3841 = vunpack.c.l.b16 %v1001
        %v3842 = vunpack.c.h.b16 %v1001
        %v3843 = vunpack.c.l.b16 %v1002
        %v3844 = vunpack.c.h.b16 %v1002
        %v3845 = vunpack.c.l.b16 %v1003
        %v3846 = vunpack.c.h.b16 %v1003
        %v3847 = vunpack.c.l.b16 %v1004
        %v3848 = vunpack.c.h.b16 %v1004
        %v3849 = vunpack.c.l.b16 %v1005
        %v3850 = vunpack.c.h.b16 %v1005
        %v3851 = vunpack.c.l.b16 %v1006
        %v3852 = vunpack.c.h.b16 %v1006
        %v3853 = vunpack.c.l.b16 %v1007
        %v3854 = vunpack.c.h.b16 %v1007
        %v3855 = vunpack.c.l.b16 %v1008
        %v3856 = vunpack.c.h.b16 %v1008
        %v3857 = vunpack.c.l.b16 %v1009
        %v3858 = vunpack.c.h.b16 %v1009
        %v3859 = vunpack.c.l.b16 %v1010
        %v3860 = vunpack.c.h.b16 %v1010
        %v3861 = vunpack.c.l.b16 %v1011
        %v3862 = vunpack.c.h.b16 %v1011
        %v3863 = vunpack.c.l.b16 %v1012
        %v3864 = vunpack.c.h.b16 %v1012
        %v3865 = vunpack.c.l.b16 %v1013
        %v3866 = vunpack.c.h.b16 %v1013
        %v3867 = vunpack.c.l.b16 %v1014
        %v3868 = vunpack.c.h.b16 %v1014
        %v3869 = vunpack.c.l.b16 %v1015
        %v3870 = vunpack.c.h.b16 %v1015
        %v3871 = vunpack.c.l.b16 %v1016
        %v3872 = vunpack.c.h.b16 %v1016
        %v3873 = vunpack.c.l.b16 %v1017
        %v3874 = vunpack.c.h.b16 %v1017
        %v3875 = vunpack.c.l.b16 %v1018
        %v3876 = vunpack.c.h.b16 %v1018
        %v3877 = vunpack.c.l.b16 %v1019
        %v3878 = vunpack.c.h.b16 %v1019
        %v3879 = vunpack.c.l.b16 %v1020
        %v3880 = vunpack.c.h.b16 %v1020
        %v3881 = vunpack.c.l.b16 %v1021
        %v3882 = vunpack.c.h.b16 %v1021
        %v3883 = vunpack.c.l.b16 %v1022
        %v3884 = vunpack.c.h.b16 %v1022
        %v3885 = vunpack.c.l.b16 %v1023
        %v3886 = vunpack.c.h.b16 %v1023
        %v3887 = vunpack.c.l.b16 %v1024
        %v3888 = vunpack.c.h.b16 %v1024
        %v3889 = vunpack.c.l.b16 %v1025
        %v3890 = vunpack.c.h.b16 %v1025
        %v3891 = vunpack.c.l.b16 %v1026
        %v3892 = vunpack.c.h.b16 %v1026
        %v3893 = vunpack.c.l.b16 %v1027
        %v3894 = vunpack.c.h.b16 %v1027
        %v3895 = vunpack.c.l.b16 %v1028
        %v3896 = vunpack.c.h.b16 %v1028
        %v3897 = vunpack.c.l.b16 %v1029
        %v3898 = vunpack.c.h.b16 %v1029
        %v3899 = vunpack.c.l.b16 %v1030
        %v3900 = vunpack.c.h.b16 %v1030
        %v3901 = vunpack.c.l.b16 %v1031
        %v3902 = vunpack.c.h.b16 %v1031
        %v3903 = vunpack.c.l.b16 %v1032
        %v3904 = vunpack.c.h.b16 %v1032
        %v3905 = vunpack.c.l.b16 %v1033
        %v3906 = vunpack.c.h.b16 %v1033
        %v3907 = vunpack.c.l.b16 %v1034
        %v3908 = vunpack.c.h.b16 %v1034
        %v3909 = vunpack.c.l.b16 %v1035
        %v3910 = vunpack.c.h.b16 %v1035
        %v3911 = vunpack.c.l.b16 %v1036
        %v3912 = vunpack.c.h.b16 %v1036
        %v3913 = vunpack.c.l.b16 %v1037
        %v3914 = vunpack.c.h.b16 %v1037
        %v3915 = vunpack.c.l.b16 %v1038
        %v3916 = vunpack.c.h.b16 %v1038
        %v3917 = vunpack.c.l.b16 %v1039
        %v3918 = vunpack.c.h.b16 %v1039
        %v3919 = vunpack.c.l.b16 %v1040
        %v3920 = vunpack.c.h.b16 %v1040
        %v3921 = vunpack.c.l.b16 %v1041
        %v3922 = vunpack.c.h.b16 %v1041
        %v3923 = vunpack.c.l.b16 %v1042
        %v3924 = vunpack.c.h.b16 %v1042
        %v3925 = vunpack.c.l.b16 %v1043
        %v3926 = vunpack.c.h.b16 %v1043
        %v3927 = vunpack.c.l.b16 %v1044
        %v3928 = vunpack.c.h.b16 %v1044
        %v3929 = vunpack.c.l.b16 %v1045
        %v3930 = vunpack.c.h.b16 %v1045
        %v3931 = vunpack.c.l.b16 %v1046
        %v3932 = vunpack.c.h.b16 %v1046
        %v3933 = vunpack.c.l.b16 %v1047
        %v3934 = vunpack.c.h.b16 %v1047
        %v3935 = vunpack.c.l.b16 %v1048
        %v3936 = vunpack.c.h.b16 %v1048
        %v3937 = vunpack.c.l.b16 %v1049
        %v3938 = vunpack.c.h.b16 %v1049
        %v3939 = vunpack.c.l.b16 %v1050
        %v3940 = vunpack.c.h.b16 %v1050
        %v3941 = vunpack.c.l.b16 %v1051
        %v3942 = vunpack.c.h.b16 %v1051
        %v3943 = vunpack.c.l.b16 %v1052
        %v3944 = vunpack.c.h.b16 %v1052
        %v3945 = vunpack.c.l.b16 %v1053
        %v3946 = vunpack.c.h.b16 %v1053
        %v3947 = vunpack.c.l.b16 %v1054
        %v3948 = vunpack.c.h.b16 %v1054
        %v3949 = vunpack.c.l.b16 %v1055
        %v3950 = vunpack.c.h.b16 %v1055
        %v3951 = vunpack.c.l.b16 %v1056
        %v3952 = vunpack.c.h.b16 %v1056
        %v3953 = vunpack.c.l.b16 %v1057
        %v3954 = vunpack.c.h.b16 %v1057
        %v3955 = vunpack.c.l.b16 %v1058
        %v3956 = vunpack.c.h.b16 %v1058
        %v3957 = vunpack.c.l.b16 %v1059
        %v3958 = vunpack.c.h.b16 %v1059
        %v3959 = vunpack.c.l.b16 %v1060
        %v3960 = vunpack.c.h.b16 %v1060
        %v3961 = vunpack.c.l.b16 %v1061
        %v3962 = vunpack.c.h.b16 %v1061
        %v3963 = vunpack.c.l.b16 %v1062
        %v3964 = vunpack.c.h.b16 %v1062
        %v3965 = vunpack.c.l.b16 %v1063
        %v3966 = vunpack.c.h.b16 %v1063
        %v3967 = vunpack.c.l.b16 %v1064
        %v3968 = vunpack.c.h.b16 %v1064
        %v3969 = vunpack.c.l.b16 %v1065
        %v3970 = vunpack.c.h.b16 %v1065
        %v3971 = vunpack.c.l.b16 %v1066
        %v3972 = vunpack.c.h.b16 %v1066
        %v3973 = vunpack.c.l.b16 %v1067
        %v3974 = vunpack.c.h.b16 %v1067
        %v3975 = vunpack.c.l.b16 %v1068
        %v3976 = vunpack.c.h.b16 %v1068
        %v3977 = vunpack.c.l.b16 %v1069
        %v3978 = vunpack.c.h.b16 %v1069
        %v3979 = vunpack.c.l.b16 %v1070
        %v3980 = vunpack.c.h.b16 %v1070
        %v3981 = vunpack.c.l.b16 %v1071
        %v3982 = vunpack.c.h.b16 %v1071
        %v3983 = vunpack.c.l.b16 %v1072
        %v3984 = vunpack.c.h.b16 %v1072
        %v3985 = vunpack.c.l.b16 %v1073
        %v3986 = vunpack.c.h.b16 %v1073
        %v3987 = vunpack.c.l.b16 %v1074
        %v3988 = vunpack.c.h.b16 %v1074
        %v3989 = vunpack.c.l.b16 %v1075
        %v3990 = vunpack.c.h.b16 %v1075
        %v3991 = vunpack.c.l.b16 %v1076
        %v3992 = vunpack.c.h.b16 %v1076
        %v3993 = vunpack.c.l.b16 %v1077
        %v3994 = vunpack.c.h.b16 %v1077
        %v3995 = vunpack.c.l.b16 %v1078
        %v3996 = vunpack.c.h.b16 %v1078
        %v3997 = vunpack.c.l.b16 %v1079
        %v3998 = vunpack.c.h.b16 %v1079
        %v3999 = vunpack.c.l.b16 %v1080
        %v4000 = vunpack.c.h.b16 %v1080
        %v4001 = vunpack.c.l.b16 %v1081
        %v4002 = vunpack.c.h.b16 %v1081
        %v4003 = vunpack.c.l.b16 %v1082
        %v4004 = vunpack.c.h.b16 %v1082
        %v4005 = vunpack.c.l.b16 %v1083
        %v4006 = vunpack.c.h.b16 %v1083
        %v4007 = vunpack.c.l.b16 %v1084
        %v4008 = vunpack.c.h.b16 %v1084
        %v4009 = vunpack.c.l.b16 %v1085
        %v4010 = vunpack.c.h.b16 %v1085
        %v4011 = vunpack.c.l.b16 %v1086
        %v4012 = vunpack.c.h.b16 %v1086
        %v4013 = vunpack.c.l.b16 %v1087
        %v4014 = vunpack.c.h.b16 %v1087
        %v4015 = vunpack.c.l.b16 %v1088
        %v4016 = vunpack.c.h.b16 %v1088
        %v4017 = vunpack.c.l.b16 %v1089
        %v4018 = vunpack.c.h.b16 %v1089
        %v4019 = vunpack.c.l.b16 %v1090
        %v4020 = vunpack.c.h.b16 %v1090
        %v4021 = vunpack.c.l.b16 %v1091
        %v4022 = vunpack.c.h.b16 %v1091
        %v4023 = vunpack.c.l.b16 %v1092
        %v4024 = vunpack.c.h.b16 %v1092
        %v4025 = vunpack.c.l.b16 %v1093
        %v4026 = vunpack.c.h.b16 %v1093
        %v4027 = vunpack.c.l.b16 %v1094
        %v4028 = vunpack.c.h.b16 %v1094
        %v4029 = vunpack.c.l.b16 %v1095
        %v4030 = vunpack.c.h.b16 %v1095
        %v4031 = vunpack.c.l.b16 %v1096
        %v4032 = vunpack.c.h.b16 %v1096
        %v4033 = vunpack.c.l.b16 %v1097
        %v4034 = vunpack.c.h.b16 %v1097
        %v4035 = vunpack.c.l.b16 %v1098
        %v4036 = vunpack.c.h.b16 %v1098
        %v4037 = vunpack.c.l.b16 %v1099
        %v4038 = vunpack.c.h.b16 %v1099
        %v4039 = vunpack.c.l.b16 %v1100
        %v4040 = vunpack.c.h.b16 %v1100
        %v4041 = vunpack.c.l.b16 %v1101
        %v4042 = vunpack.c.h.b16 %v1101
        %v4043 = vunpack.c.l.b16 %v1102
        %v4044 = vunpack.c.h.b16 %v1102
        %v4045 = vunpack.c.l.b16 %v1103
        %v4046 = vunpack.c.h.b16 %v1103
        %v4047 = vunpack.c.l.b16 %v1104
        %v4048 = vunpack.c.h.b16 %v1104
        %v4049 = vunpack.c.l.b16 %v1105
        %v4050 = vunpack.c.h.b16 %v1105
        %v4051 = vunpack.c.l.b16 %v1106
        %v4052 = vunpack.c.h.b16 %v1106
        %v4053 = vunpack.c.l.b16 %v1107
        %v4054 = vunpack.c.h.b16 %v1107
        %v4055 = vunpack.c.l.b16 %v1108
        %v4056 = vunpack.c.h.b16 %v1108
        %v4057 = vunpack.c.l.b16 %v1109
        %v4058 = vunpack.c.h.b16 %v1109
        %v4059 = vunpack.c.l.b16 %v1110
        %v4060 = vunpack.c.h.b16 %v1110
        %v4061 = vunpack.c.l.b16 %v1111
        %v4062 = vunpack.c.h.b16 %v1111
        %v4063 = vunpack.c.l.b16 %v1112
        %v4064 = vunpack.c.h.b16 %v1112
        %v4065 = vunpack.c.l.b16 %v1113
        %v4066 = vunpack.c.h.b16 %v1113
        %v4067 = vunpack.c.l.b16 %v1114
        %v4068 = vunpack.c.h.b16 %v1114
        %v4069 = vunpack.c.l.b16 %v1115
        %v4070 = vunpack.c.h.b16 %v1115
        %v4071 = vunpack.c.l.b16 %v1116
        %v4072 = vunpack.c.h.b16 %v1116
        %v4073 = vunpack.c.l.b16 %v1117
        %v4074 = vunpack.c.h.b16 %v1117
        %v4075 = vunpack.c.l.b16 %v1118
        %v4076 = vunpack.c.h.b16 %v1118
        %v4077 = vunpack.c.l.b16 %v1119
        %v4078 = vunpack.c.h.b16 %v1119
        %v4079 = vunpack.c.l.b16 %v1120
        %v4080 = vunpack.c.h.b16 %v1120
        %v4081 = vunpack.c.l.b16 %v1121
        %v4082 = vunpack.c.h.b16 %v1121
        %v4083 = vunpack.c.l.b16 %v1122
        %v4084 = vunpack.c.h.b16 %v1122
        %v4085 = vunpack.c.l.b16 %v1123
        %v4086 = vunpack.c.h.b16 %v1123
        %v4087 = vunpack.c.l.b16 %v1124
        %v4088 = vunpack.c.h.b16 %v1124
        %v4089 = vunpack.c.l.b16 %v1125
        %v4090 = vunpack.c.h.b16 %v1125
        %v4091 = vunpack.c.l.b16 %v1126
        %v4092 = vunpack.c.h.b16 %v1126
        %v4093 = vunpack.c.l.b16 %v1127
        %v4094 = vunpack.c.h.b16 %v1127
        %v4095 = vunpack.c.l.b16 %v1128
        %v4096 = vunpack.c.h.b16 %v1128
        %v4097 = vunpack.c.l.b16 %v1129
        %v4098 = vunpack.c.h.b16 %v1129
        %v4099 = vunpack.c.l.b16 %v1130
        %v4100 = vunpack.c.h.b16 %v1130
        %v4101 = vunpack.c.l.b16 %v1131
        %v4102 = vunpack.c.h.b16 %v1131
        %v4103 = vunpack.c.l.b16 %v1132
        %v4104 = vunpack.c.h.b16 %v1132
        %v4105 = vunpack.c.l.b16 %v1133
        %v4106 = vunpack.c.h.b16 %v1133
        %v4107 = vunpack.c.l.b16 %v1134
        %v4108 = vunpack.c.h.b16 %v1134
        %v4109 = vunpack.c.l.b16 %v1135
        %v4110 = vunpack.c.h.b16 %v1135
        %v4111 = vunpack.c.l.b16 %v1136
        %v4112 = vunpack.c.h.b16 %v1136
        %v4113 = vunpack.c.l.b16 %v1137
        %v4114 = vunpack.c.h.b16 %v1137
        %v4115 = vunpack.c.l.b16 %v1138
        %v4116 = vunpack.c.h.b16 %v1138
        %v4117 = vunpack.c.l.b16 %v1139
        %v4118 = vunpack.c.h.b16 %v1139
        %v4119 = vunpack.c.l.b16 %v1140
        %v4120 = vunpack.c.h.b16 %v1140
        %v4121 = vunpack.c.l.b16 %v1141
        %v4122 = vunpack.c.h.b16 %v1141
        %v4123 = vunpack.c.l.b16 %v1142
        %v4124 = vunpack.c.h.b16 %v1142
        %v4125 = vunpack.c.l.b16 %v1143
        %v4126 = vunpack.c.h.b16 %v1143
        %v4127 = vunpack.c.l.b16 %v1144
        %v4128 = vunpack.c.h.b16 %v1144
        %v4129 = vunpack.c.l.b16 %v1145
        %v4130 = vunpack.c.h.b16 %v1145
        %v4131 = vunpack.c.l.b16 %v1146
        %v4132 = vunpack.c.h.b16 %v1146
        %v4133 = vunpack.c.l.b16 %v1147
        %v4134 = vunpack.c.h.b16 %v1147
        %v4135 = vunpack.c.l.b16 %v1148
        %v4136 = vunpack.c.h.b16 %v1148
        %v4137 = vunpack.c.l.b16 %v1149
        %v4138 = vunpack.c.h.b16 %v1149
        %v4139 = vunpack.c.l.b16 %v1150
        %v4140 = vunpack.c.h.b16 %v1150
        %v4141 = vunpack.c.l.b16 %v1151
        %v4142 = vunpack.c.h.b16 %v1151
        %v4143 = vunpack.c.l.b16 %v1152
        %v4144 = vunpack.c.h.b16 %v1152
        %v4145 = vunpack.c.l.b16 %v1153
        %v4146 = vunpack.c.h.b16 %v1153
        %v4147 = vunpack.c.l.b16 %v1154
        %v4148 = vunpack.c.h.b16 %v1154
        %v4149 = vunpack.c.l.b16 %v1155
        %v4150 = vunpack.c.h.b16 %v1155
        %v4151 = vunpack.c.l.b16 %v1156
        %v4152 = vunpack.c.h.b16 %v1156
        %v4153 = vunpack.c.l.b16 %v1157
        %v4154 = vunpack.c.h.b16 %v1157
        %v4155 = vunpack.c.l.b16 %v1158
        %v4156 = vunpack.c.h.b16 %v1158
        %v4157 = vunpack.c.l.b16 %v1159
        %v4158 = vunpack.c.h.b16 %v1159
        %v4159 = vunpack.c.l.b16 %v1160
        %v4160 = vunpack.c.h.b16 %v1160
        %v4161 = vunpack.c.l.b16 %v1161
        %v4162 = vunpack.c.h.b16 %v1161
        %v4163 = vunpack.c.l.b16 %v1162
        %v4164 = vunpack.c.h.b16 %v1162
        %v4165 = vunpack.c.l.b16 %v1163
        %v4166 = vunpack.c.h.b16 %v1163
        %v4167 = vunpack.c.l.b16 %v1164
        %v4168 = vunpack.c.h.b16 %v1164
        %v4169 = vunpack.c.l.b16 %v1165
        %v4170 = vunpack.c.h.b16 %v1165
        %v4171 = vunpack.c.l.b16 %v1166
        %v4172 = vunpack.c.h.b16 %v1166
        %v4173 = vunpack.c.l.b16 %v1167
        %v4174 = vunpack.c.h.b16 %v1167
        %v4175 = vunpack.c.l.b16 %v1168
        %v4176 = vunpack.c.h.b16 %v1168
        %v4177 = vunpack.c.l.b16 %v1169
        %v4178 = vunpack.c.h.b16 %v1169
        %v4179 = vunpack.c.l.b16 %v1170
        %v4180 = vunpack.c.h.b16 %v1170
        %v4181 = vunpack.c.l.b16 %v1171
        %v4182 = vunpack.c.h.b16 %v1171
        %v4183 = vunpack.c.l.b16 %v1172
        %v4184 = vunpack.c.h.b16 %v1172
        %v4185 = vunpack.c.l.b16 %v1173
        %v4186 = vunpack.c.h.b16 %v1173
        %v4187 = vunpack.c.l.b16 %v1174
        %v4188 = vunpack.c.h.b16 %v1174
        %v4189 = vunpack.c.l.b16 %v1175
        %v4190 = vunpack.c.h.b16 %v1175
        %v4191 = vunpack.c.l.b16 %v1176
        %v4192 = vunpack.c.h.b16 %v1176
        %v4193 = vunpack.c.l.b16 %v1177
        %v4194 = vunpack.c.h.b16 %v1177
        %v4195 = vunpack.c.l.b16 %v1178
        %v4196 = vunpack.c.h.b16 %v1178
        %v4197 = vunpack.c.l.b16 %v1179
        %v4198 = vunpack.c.h.b16 %v1179
        %v4199 = vunpack.c.l.b16 %v1180
        %v4200 = vunpack.c.h.b16 %v1180
        %v4201 = vunpack.c.l.b16 %v1181
        %v4202 = vunpack.c.h.b16 %v1181
        %v4203 = vunpack.c.l.b16 %v1182
        %v4204 = vunpack.c.h.b16 %v1182
        %v4205 = vunpack.c.l.b16 %v1183
        %v4206 = vunpack.c.h.b16 %v1183
        %v4207 = vunpack.c.l.b16 %v1184
        %v4208 = vunpack.c.h.b16 %v1184
        %v4209 = vunpack.c.l.b16 %v1185
        %v4210 = vunpack.c.h.b16 %v1185
        %v4211 = vunpack.c.l.b16 %v1186
        %v4212 = vunpack.c.h.b16 %v1186
        %v4213 = vunpack.c.l.b16 %v1187
        %v4214 = vunpack.c.h.b16 %v1187
        %v4215 = vunpack.c.l.b16 %v1188
        %v4216 = vunpack.c.h.b16 %v1188
        %v4217 = vunpack.c.l.b16 %v1189
        %v4218 = vunpack.c.h.b16 %v1189
        %v4219 = vunpack.c.l.b16 %v1190
        %v4220 = vunpack.c.h.b16 %v1190
        %v4221 = vunpack.c.l.b16 %v1191
        %v4222 = vunpack.c.h.b16 %v1191
        %v4223 = vunpack.c.l.b16 %v1192
        %v4224 = vunpack.c.h.b16 %v1192
        %v4225 = vunpack.c.l.b16 %v1193
        %v4226 = vunpack.c.h.b16 %v1193
        %v4227 = vunpack.c.l.b16 %v1194
        %v4228 = vunpack.c.h.b16 %v1194
        %v4229 = vunpack.c.l.b16 %v1195
        %v4230 = vunpack.c.h.b16 %v1195
        %v4231 = vunpack.c.l.b16 %v1196
        %v4232 = vunpack.c.h.b16 %v1196
        %v4233 = vunpack.c.l.b16 %v1197
        %v4234 = vunpack.c.h.b16 %v1197
        %v4235 = vunpack.c.l.b16 %v1198
        %v4236 = vunpack.c.h.b16 %v1198
        %v4237 = vunpack.c.l.b16 %v1199
        %v4238 = vunpack.c.h.b16 %v1199
        %v4239 = vunpack.c.l.b16 %v1200
        %v4240 = vunpack.c.h.b16 %v1200
        %v4241 = vunpack.c.l.b16 %v1201
        %v4242 = vunpack.c.h.b16 %v1201
        %v4243 = vunpack.c.l.b16 %v1202
        %v4244 = vunpack.c.h.b16 %v1202
        %v4245 = vunpack.c.l.b16 %v1203
        %v4246 = vunpack.c.h.b16 %v1203
        %v4247 = vunpack.c.l.b16 %v1204
        %v4248 = vunpack.c.h.b16 %v1204
        %v4249 = vunpack.c.l.b16 %v1205
        %v4250 = vunpack.c.h.b16 %v1205
        %v4251 = vunpack.c.l.b16 %v1206
        %v4252 = vunpack.c.h.b16 %v1206
        %v4253 = vunpack.c.l.b16 %v1207
        %v4254 = vunpack.c.h.b16 %v1207
        %v4255 = vunpack.c.l.b16 %v1208
        %v4256 = vunpack.c.h.b16 %v1208
        %v4257 = vunpack.c.l.b16 %v1209
        %v4258 = vunpack.c.h.b16 %v1209
        %v4259 = vunpack.c.l.b16 %v1210
        %v4260 = vunpack.c.h.b16 %v1210
        %v4261 = vunpack.c.l.b16 %v1211
        %v4262 = vunpack.c.h.b16 %v1211
        %v4263 = vunpack.c.l.b16 %v1212
        %v4264 = vunpack.c.h.b16 %v1212
        %v4265 = vunpack.c.l.b16 %v1213
        %v4266 = vunpack.c.h.b16 %v1213
        %v4267 = vunpack.c.l.b16 %v1214
        %v4268 = vunpack.c.h.b16 %v1214
        %v4269 = vunpack.c.l.b16 %v1215
        %v4270 = vunpack.c.h.b16 %v1215
        %v4271 = vunpack.c.l.b16 %v1216
        %v4272 = vunpack.c.h.b16 %v1216
        %v4273 = vunpack.c.l.b16 %v1217
        %v4274 = vunpack.c.h.b16 %v1217
        %v4275 = vunpack.c.l.b16 %v1218
        %v4276 = vunpack.c.h.b16 %v1218
        %v4277 = vunpack.c.l.b16 %v1219
        %v4278 = vunpack.c.h.b16 %v1219
        %v4279 = vunpack.c.l.b16 %v1220
        %v4280 = vunpack.c.h.b16 %v1220
        %v4281 = vunpack.c.l.b16 %v1221
        %v4282 = vunpack.c.h.b16 %v1221
        %v4283 = vunpack.c.l.b16 %v1222
        %v4284 = vunpack.c.h.b16 %v1222
        %v4285 = vunpack.c.l.b16 %v1223
        %v4286 = vunpack.c.h.b16 %v1223
        %v4287 = vunpack.c.l.b16 %v1224
        %v4288 = vunpack.c.h.b16 %v1224
        %v4289 = vunpack.c.l.b16 %v1225
        %v4290 = vunpack.c.h.b16 %v1225
        %v4291 = vunpack.c.l.b16 %v1226
        %v4292 = vunpack.c.h.b16 %v1226
        %v4293 = vunpack.c.l.b16 %v1227
        %v4294 = vunpack.c.h.b16 %v1227
        %v4295 = vunpack.c.l.b16 %v1228
        %v4296 = vunpack.c.h.b16 %v1228
        %v4297 = vunpack.c.l.b16 %v1229
        %v4298 = vunpack.c.h.b16 %v1229
        %v4299 = vunpack.c.l.b16 %v1230
        %v4300 = vunpack.c.h.b16 %v1230
        %v4301 = vunpack.c.l.b16 %v1231
        %v4302 = vunpack.c.h.b16 %v1231
        %v4303 = vunpack.c.l.b16 %v1232
        %v4304 = vunpack.c.h.b16 %v1232
        %v4305 = vunpack.c.l.b16 %v1233
        %v4306 = vunpack.c.h.b16 %v1233
        %v4307 = vunpack.c.l.b16 %v1234
        %v4308 = vunpack.c.h.b16 %v1234
        %v4309 = vunpack.c.l.b16 %v1235
        %v4310 = vunpack.c.h.b16 %v1235
        %v4311 = vunpack.c.l.b16 %v1236
        %v4312 = vunpack.c.h.b16 %v1236
        %v4313 = vunpack.c.l.b16 %v1237
        %v4314 = vunpack.c.h.b16 %v1237
        %v4315 = vunpack.c.l.b16 %v1238
        %v4316 = vunpack.c.h.b16 %v1238
        %v4317 = vunpack.c.l.b16 %v1239
        %v4318 = vunpack.c.h.b16 %v1239
        %v4319 = vunpack.c.l.b16 %v1240
        %v4320 = vunpack.c.h.b16 %v1240
        %v4321 = vunpack.c.l.b16 %v1241
        %v4322 = vunpack.c.h.b16 %v1241
        %v4323 = vunpack.c.l.b16 %v1242
        %v4324 = vunpack.c.h.b16 %v1242
        %v4325 = vunpack.c.l.b16 %v1243
        %v4326 = vunpack.c.h.b16 %v1243
        %v4327 = vunpack.c.l.b16 %v1244
        %v4328 = vunpack.c.h.b16 %v1244
        %v4329 = vunpack.c.l.b16 %v1245
        %v4330 = vunpack.c.h.b16 %v1245
        %v4331 = vunpack.c.l.b16 %v1246
        %v4332 = vunpack.c.h.b16 %v1246
        %v4333 = vunpack.c.l.b16 %v1247
        %v4334 = vunpack.c.h.b16 %v1247
        %v4335 = vunpack.c.l.b16 %v1248
        %v4336 = vunpack.c.h.b16 %v1248
        %v4337 = vunpack.c.l.b16 %v1249
        %v4338 = vunpack.c.h.b16 %v1249
        %v4339 = vunpack.c.l.b16 %v1250
        %v4340 = vunpack.c.h.b16 %v1250
        %v4341 = vunpack.c.l.b16 %v1251
        %v4342 = vunpack.c.h.b16 %v1251
        %v4343 = vunpack.c.l.b16 %v1252
        %v4344 = vunpack.c.h.b16 %v1252
        %v4345 = vunpack.c.l.b16 %v1253
        %v4346 = vunpack.c.h.b16 %v1253
        %v4347 = vunpack.c.l.b16 %v1254
        %v4348 = vunpack.c.h.b16 %v1254
        %v4349 = vunpack.c.l.b16 %v1255
        %v4350 = vunpack.c.h.b16 %v1255
        %v4351 = vunpack.c.l.b16 %v1256
        %v4352 = vunpack.c.h.b16 %v1256
        %v4353 = vunpack.c.l.b16 %v1257
        %v4354 = vunpack.c.h.b16 %v1257
        %v4355 = vunpack.c.l.b16 %v1258
        %v4356 = vunpack.c.h.b16 %v1258
        %v4357 = vunpack.c.l.b16 %v1259
        %v4358 = vunpack.c.h.b16 %v1259
        %v4359 = vunpack.c.l.b16 %v1260
        %v4360 = vunpack.c.h.b16 %v1260
        %v4361 = vunpack.c.l.b16 %v1261
        %v4362 = vunpack.c.h.b16 %v1261
        %v4363 = vunpack.c.l.b16 %v1262
        %v4364 = vunpack.c.h.b16 %v1262
        %v4365 = vunpack.c.l.b16 %v1263
        %v4366 = vunpack.c.h.b16 %v1263
        %v4367 = vunpack.c.l.b16 %v1264
        %v4368 = vunpack.c.h.b16 %v1264
        %v4369 = vunpack.c.l.b16 %v1265
        %v4370 = vunpack.c.h.b16 %v1265
        %v4371 = vunpack.c.l.b16 %v1266
        %v4372 = vunpack.c.h.b16 %v1266
        %v4373 = vunpack.c.l.b16 %v1267
        %v4374 = vunpack.c.h.b16 %v1267
        %v4375 = vunpack.c.l.b16 %v1268
        %v4376 = vunpack.c.h.b16 %v1268
        %v4377 = vunpack.c.l.b16 %v1269
        %v4378 = vunpack.c.h.b16 %v1269
        %v4379 = vunpack.c.l.b16 %v1270
        %v4380 = vunpack.c.h.b16 %v1270
        %v4381 = vunpack.c.l.b16 %v1271
        %v4382 = vunpack.c.h.b16 %v1271
        %v4383 = vunpack.c.l.b16 %v1272
        %v4384 = vunpack.c.h.b16 %v1272
        %v4385 = vunpack.c.l.b16 %v1273
        %v4386 = vunpack.c.h.b16 %v1273
        %v4387 = vunpack.c.l.b16 %v1274
        %v4388 = vunpack.c.h.b16 %v1274
        %v4389 = vunpack.c.l.b16 %v1275
        %v4390 = vunpack.c.h.b16 %v1275
        %v4391 = vunpack.c.l.b16 %v1276
        %v4392 = vunpack.c.h.b16 %v1276
        %v4393 = vunpack.c.l.b16 %v1277
        %v4394 = vunpack.c.h.b16 %v1277
        %v4395 = vunpack.c.l.b16 %v1278
        %v4396 = vunpack.c.h.b16 %v1278
        %v4397 = vunpack.c.l.b16 %v1279
        %v4398 = vunpack.c.h.b16 %v1279
        %v4399 = vunpack.c.l.b16 %v1280
        %v4400 = vunpack.c.h.b16 %v1280
        %v4401 = vunpack.c.l.b16 %v1281
        %v4402 = vunpack.c.h.b16 %v1281
        %v4403 = vunpack.c.l.b16 %v1282
        %v4404 = vunpack.c.h.b16 %v1282
        %v4405 = vunpack.c.l.b16 %v1283
        %v4406 = vunpack.c.h.b16 %v1283
        %v4407 = vunpack.c.l.b16 %v1284
        %v4408 = vunpack.c.h.b16 %v1284
        %v4409 = vunpack.c.l.b16 %v1285
        %v4410 = vunpack.c.h.b16 %v1285
        %v4411 = vunpack.c.l.b16 %v1286
        %v4412 = vunpack.c.h.b16 %v1286
        %v4413 = vunpack.c.l.b16 %v1287
        %v4414 = vunpack.c.h.b16 %v1287
        %v4415 = vunpack.c.l.b16 %v1288
        %v4416 = vunpack.c.h.b16 %v1288
        %v4417 = vunpack.c.l.b16 %v1289
        %v4418 = vunpack.c.h.b16 %v1289
        %v4419 = vunpack.c.l.b16 %v1290
        %v4420 = vunpack.c.h.b16 %v1290
        %v4421 = vunpack.c.l.b16 %v1291
        %v4422 = vunpack.c.h.b16 %v1291
        %v4423 = vunpack.c.l.b16 %v1292
        %v4424 = vunpack.c.h.b16 %v1292
        %v4425 = vunpack.c.l.b16 %v1293
        %v4426 = vunpack.c.h.b16 %v1293
        %v4427 = vunpack.c.l.b16 %v1294
        %v4428 = vunpack.c.h.b16 %v1294
        %v4429 = vunpack.c.l.b16 %v1295
        %v4430 = vunpack.c.h.b16 %v1295
        %v4431 = vunpack.c.l.b16 %v1296
        %v4432 = vunpack.c.h.b16 %v1296
        %v4433 = vunpack.c.l.b16 %v1297
        %v4434 = vunpack.c.h.b16 %v1297
        %v4435 = vunpack.c.l.b16 %v1298
        %v4436 = vunpack.c.h.b16 %v1298
        %v4437 = vunpack.c.l.b16 %v1299
        %v4438 = vunpack.c.h.b16 %v1299
        %v4439 = vunpack.c.l.b16 %v1300
        %v4440 = vunpack.c.h.b16 %v1300
        %v4441 = vunpack.c.l.b16 %v1301
        %v4442 = vunpack.c.h.b16 %v1301
        %v4443 = vunpack.c.l.b16 %v1302
        %v4444 = vunpack.c.h.b16 %v1302
        %v4445 = vunpack.c.l.b16 %v1303
        %v4446 = vunpack.c.h.b16 %v1303
        %v4447 = vunpack.c.l.b16 %v1304
        %v4448 = vunpack.c.h.b16 %v1304
        %v4449 = vunpack.c.l.b16 %v1305
        %v4450 = vunpack.c.h.b16 %v1305
        %v4451 = vunpack.c.l.b16 %v1306
        %v4452 = vunpack.c.h.b16 %v1306
        %v4453 = vunpack.c.l.b16 %v1307
        %v4454 = vunpack.c.h.b16 %v1307
        %v4455 = vunpack.c.l.b16 %v1308
        %v4456 = vunpack.c.h.b16 %v1308
        %v4457 = vunpack.c.l.b16 %v1309
        %v4458 = vunpack.c.h.b16 %v1309
        %v4459 = vunpack.c.l.b16 %v1310
        %v4460 = vunpack.c.h.b16 %v1310
        %v4461 = vunpack.c.l.b16 %v1311
        %v4462 = vunpack.c.h.b16 %v1311
        %v4463 = vunpack.c.l.b16 %v1312
        %v4464 = vunpack.c.h.b16 %v1312
        %v4465 = vunpack.c.l.b16 %v1313
        %v4466 = vunpack.c.h.b16 %v1313
        %v4467 = vunpack.c.l.b16 %v1314
        %v4468 = vunpack.c.h.b16 %v1314
        %v4469 = vunpack.c.l.b16 %v1315
        %v4470 = vunpack.c.h.b16 %v1315
        %v4471 = vunpack.c.l.b16 %v1316
        %v4472 = vunpack.c.h.b16 %v1316
        %v4473 = vunpack.c.l.b16 %v1317
        %v4474 = vunpack.c.h.b16 %v1317
        %v4475 = vunpack.c.l.b16 %v1318
        %v4476 = vunpack.c.h.b16 %v1318
        %v4477 = vunpack.c.l.b16 %v1319
        %v4478 = vunpack.c.h.b16 %v1319
        %v4479 = vunpack.c.l.b16 %v1320
        %v4480 = vunpack.c.h.b16 %v1320
        %v4481 = vunpack.c.l.b16 %v1321
        %v4482 = vunpack.c.h.b16 %v1321
        %v4483 = vunpack.c.l.b16 %v1322
        %v4484 = vunpack.c.h.b16 %v1322
        %v4485 = vunpack.c.l.b16 %v1323
        %v4486 = vunpack.c.h.b16 %v1323
        %v4487 = vunpack.c.l.b16 %v1324
        %v4488 = vunpack.c.h.b16 %v1324
        %v4489 = vunpack.c.l.b16 %v1325
        %v4490 = vunpack.c.h.b16 %v1325
        %v4491 = vunpack.c.l.b16 %v1326
        %v4492 = vunpack.c.h.b16 %v1326
        %v4493 = vunpack.c.l.b16 %v1327
        %v4494 = vunpack.c.h.b16 %v1327
        %v4495 = vunpack.c.l.b16 %v1328
        %v4496 = vunpack.c.h.b16 %v1328
        %v4497 = vunpack.c.l.b16 %v1329
        %v4498 = vunpack.c.h.b16 %v1329
        %v4499 = vunpack.c.l.b16 %v1330
        %v4500 = vunpack.c.h.b16 %v1330
        %v4501 = vunpack.c.l.b16 %v1331
        %v4502 = vunpack.c.h.b16 %v1331
        %v4503 = vunpack.c.l.b16 %v1332
        %v4504 = vunpack.c.h.b16 %v1332
        %v4505 = vunpack.c.l.b16 %v1333
        %v4506 = vunpack.c.h.b16 %v1333
        %v4507 = vunpack.c.l.b16 %v1334
        %v4508 = vunpack.c.h.b16 %v1334
        %v4509 = vunpack.c.l.b16 %v1335
        %v4510 = vunpack.c.h.b16 %v1335
        %v4511 = vunpack.c.l.b16 %v1336
        %v4512 = vunpack.c.h.b16 %v1336
        %v4513 = vunpack.c.l.b16 %v1337
        %v4514 = vunpack.c.h.b16 %v1337
        %v4515 = vunpack.c.l.b16 %v1338
        %v4516 = vunpack.c.h.b16 %v1338
        %v4517 = vunpack.c.l.b16 %v1339
        %v4518 = vunpack.c.h.b16 %v1339
        %v4519 = vunpack.c.l.b16 %v1340
        %v4520 = vunpack.c.h.b16 %v1340
        %v4521 = vunpack.c.l.b16 %v1341
        %v4522 = vunpack.c.h.b16 %v1341
        %v4523 = vunpack.c.l.b16 %v1342
        %v4524 = vunpack.c.h.b16 %v1342
        %v4525 = vunpack.c.l.b16 %v1343
        %v4526 = vunpack.c.h.b16 %v1343
        %v4527 = vunpack.c.l.b16 %v1344
        %v4528 = vunpack.c.h.b16 %v1344
        %v4529 = vunpack.c.l.b16 %v1345
        %v4530 = vunpack.c.h.b16 %v1345
        %v4531 = vunpack.c.l.b16 %v1346
        %v4532 = vunpack.c.h.b16 %v1346
        %v4533 = vunpack.c.l.b16 %v1347
        %v4534 = vunpack.c.h.b16 %v1347
        %v4535 = vunpack.c.l.b16 %v1348
        %v4536 = vunpack.c.h.b16 %v1348
        %v4537 = vpack.c.b16 %v2497, %v2489
        %v4538 = vpack.c.b16 %v2498, %v2490
        %v4539 = vpack.c.b16 %v2499, %v2491
        %v4540 = vpack.c.b16 %v2500, %v2492
        %v4541 = vpack.c.b16 %v2501, %v2493
        %v4542 = vpack.c.b16 %v2502, %v2494
        %v4543 = vpack.c.b16 %v2503, %v2495
        %v4544 = vpack.c.b16 %v2504, %v2496
        %v4545 = vpack.c.b16 %v2513, %v2505
        %v4546 = vpack.c.b16 %v2514, %v2506
        %v4547 = vpack.c.b16 %v2515, %v2507
        %v4548 = vpack.c.b16 %v2516, %v2508
        %v4549 = vpack.c.b16 %v2517, %v2509
        %v4550 = vpack.c.b16 %v2518, %v2510
        %v4551 = vpack.c.b16 %v2519, %v2511
        %v4552 = vpack.c.b16 %v2520, %v2512
        %v4553 = vpack.c.b16 %v2529, %v2521
        %v4554 = vpack.c.b16 %v2530, %v2522
        %v4555 = vpack.c.b16 %v2531, %v2523
        %v4556 = vpack.c.b16 %v2532, %v2524
        %v4557 = vpack.c.b16 %v2533, %v2525
        %v4558 = vpack.c.b16 %v2534, %v2526
        %v4559 = vpack.c.b16 %v2535, %v2527
        %v4560 = vpack.c.b16 %v2536, %v2528
        %v4561 = vpack.c.b16 %v2545, %v2537
        %v4562 = vpack.c.b16 %v2546, %v2538
        %v4563 = vpack.c.b16 %v2547, %v2539
        %v4564 = vpack.c.b16 %v2548, %v2540
        %v4565 = vpack.c.b16 %v2549, %v2541
        %v4566 = vpack.c.b16 %v2550, %v2542
        %v4567 = vpack.c.b16 %v2551, %v2543
        %v4568 = vpack.c.b16 %v2552, %v2544
        %v4569 = vpack.c.b16 %v2561, %v2553
        %v4570 = vpack.c.b16 %v2562, %v2554
        %v4571 = vpack.c.b16 %v2563, %v2555
        %v4572 = vpack.c.b16 %v2564, %v2556
        %v4573 = vpack.c.b16 %v2565, %v2557
        %v4574 = vpack.c.b16 %v2566, %v2558
        %v4575 = vpack.c.b16 %v2567, %v2559
        %v4576 = vpack.c.b16 %v2568, %v2560
        %v4577 = vpack.c.b16 %v2577, %v2569
        %v4578 = vpack.c.b16 %v2578, %v2570
        %v4579 = vpack.c.b16 %v2579, %v2571
        %v4580 = vpack.c.b16 %v2580, %v2572
        %v4581 = vpack.c.b16 %v2581, %v2573
        %v4582 = vpack.c.b16 %v2582, %v2574
        %v4583 = vpack.c.b16 %v2583, %v2575
        %v4584 = vpack.c.b16 %v2584, %v2576
        %v4585 = vpack.c.b16 %v2593, %v2585
        %v4586 = vpack.c.b16 %v2594, %v2586
        %v4587 = vpack.c.b16 %v2595, %v2587
        %v4588 = vpack.c.b16 %v2596, %v2588
        %v4589 = vpack.c.b16 %v2597, %v2589
        %v4590 = vpack.c.b16 %v2598, %v2590
        %v4591 = vpack.c.b16 %v2599, %v2591
        %v4592 = vpack.c.b16 %v2600, %v2592
        %v4593 = vpack.c.b16 %v2609, %v2601
        %v4594 = vpack.c.b16 %v2610, %v2602
        %v4595 = vpack.c.b16 %v2611, %v2603
        %v4596 = vpack.c.b16 %v2612, %v2604
        %v4597 = vpack.c.b16 %v2613, %v2605
        %v4598 = vpack.c.b16 %v2614, %v2606
        %v4599 = vpack.c.b16 %v2615, %v2607
        %v4600 = vpack.c.b16 %v2616, %v2608
        %v4601 = vpack.c.b16 %v2625, %v2617
        %v4602 = vpack.c.b16 %v2626, %v2618
        %v4603 = vpack.c.b16 %v2627, %v2619
        %v4604 = vpack.c.b16 %v2628, %v2620
        %v4605 = vpack.c.b16 %v2629, %v2621
        %v4606 = vpack.c.b16 %v2630, %v2622
        %v4607 = vpack.c.b16 %v2631, %v2623
        %v4608 = vpack.c.b16 %v2632, %v2624
        %v4609 = vpack.c.b16 %v2641, %v2633
        %v4610 = vpack.c.b16 %v2642, %v2634
        %v4611 = vpack.c.b16 %v2643, %v2635
        %v4612 = vpack.c.b16 %v2644, %v2636
        %v4613 = vpack.c.b16 %v2645, %v2637
        %v4614 = vpack.c.b16 %v2646, %v2638
        %v4615 = vpack.c.b16 %v2647, %v2639
        %v4616 = vpack.c.b16 %v2648, %v2640
        %v4617 = vpack.c.b16 %v2657, %v2649
        %v4618 = vpack.c.b16 %v2658, %v2650
        %v4619 = vpack.c.b16 %v2659, %v2651
        %v4620 = vpack.c.b16 %v2660, %v2652
        %v4621 = vpack.c.b16 %v2661, %v2653
        %v4622 = vpack.c.b16 %v2662, %v2654
        %v4623 = vpack.c.b16 %v2663, %v2655
        %v4624 = vpack.c.b16 %v2664, %v2656
        %v4625 = vpack.c.b16 %v2673, %v2665
        %v4626 = vpack.c.b16 %v2674, %v2666
        %v4627 = vpack.c.b16 %v2675, %v2667
        %v4628 = vpack.c.b16 %v2676, %v2668
        %v4629 = vpack.c.b16 %v2677, %v2669
        %v4630 = vpack.c.b16 %v2678, %v2670
        %v4631 = vpack.c.b16 %v2679, %v2671
        %v4632 = vpack.c.b16 %v2680, %v2672
        %v4633 = vpack.c.b16 %v2689, %v2681
        %v4634 = vpack.c.b16 %v2690, %v2682
        %v4635 = vpack.c.b16 %v2691, %v2683
        %v4636 = vpack.c.b16 %v2692, %v2684
        %v4637 = vpack.c.b16 %v2693, %v2685
        %v4638 = vpack.c.b16 %v2694, %v2686
        %v4639 = vpack.c.b16 %v2695, %v2687
        %v4640 = vpack.c.b16 %v2696, %v2688
        %v4641 = vpack.c.b16 %v2705, %v2697
        %v4642 = vpack.c.b16 %v2706, %v2698
        %v4643 = vpack.c.b16 %v2707, %v2699
        %v4644 = vpack.c.b16 %v2708, %v2700
        %v4645 = vpack.c.b16 %v2709, %v2701
        %v4646 = vpack.c.b16 %v2710, %v2702
        %v4647 = vpack.c.b16 %v2711, %v2703
        %v4648 = vpack.c.b16 %v2712, %v2704
        %v4649 = vpack.c.b16 %v2721, %v2713
        %v4650 = vpack.c.b16 %v2722, %v2714
        %v4651 = vpack.c.b16 %v2723, %v2715
        %v4652 = vpack.c.b16 %v2724, %v2716
        %v4653 = vpack.c.b16 %v2725, %v2717
        %v4654 = vpack.c.b16 %v2726, %v2718
        %v4655 = vpack.c.b16 %v2727, %v2719
        %v4656 = vpack.c.b16 %v2728, %v2720
        %v4657 = vpack.c.b16 %v2737, %v2729
        %v4658 = vpack.c.b16 %v2738, %v2730
        %v4659 = vpack.c.b16 %v2739, %v2731
        %v4660 = vpack.c.b16 %v2740, %v2732
        %v4661 = vpack.c.b16 %v2741, %v2733
        %v4662 = vpack.c.b16 %v2742, %v2734
        %v4663 = vpack.c.b16 %v2743, %v2735
        %v4664 = vpack.c.b16 %v2744, %v2736
        %v4665 = vpack.c.b16 %v2753, %v2745
        %v4666 = vpack.c.b16 %v2754, %v2746
        %v4667 = vpack.c.b16 %v2755, %v2747
        %v4668 = vpack.c.b16 %v2756, %v2748
        %v4669 = vpack.c.b16 %v2757, %v2749
        %v4670 = vpack.c.b16 %v2758, %v2750
        %v4671 = vpack.c.b16 %v2759, %v2751
        %v4672 = vpack.c.b16 %v2760, %v2752
        %v4673 = vpack.c.b16 %v2769, %v2761
        %v4674 = vpack.c.b16 %v2770, %v2762
        %v4675 = vpack.c.b16 %v2771, %v2763
        %v4676 = vpack.c.b16 %v2772, %v2764
        %v4677 = vpack.c.b16 %v2773, %v2765
        %v4678 = vpack.c.b16 %v2774, %v2766
        %v4679 = vpack.c.b16 %v2775, %v2767
        %v4680 = vpack.c.b16 %v2776, %v2768
        %v4681 = vpack.c.b16 %v2785, %v2777
        %v4682 = vpack.c.b16 %v2786, %v2778
        %v4683 = vpack.c.b16 %v2787, %v2779
        %v4684 = vpack.c.b16 %v2788, %v2780
        %v4685 = vpack.c.b16 %v2789, %v2781
        %v4686 = vpack.c.b16 %v2790, %v2782
        %v4687 = vpack.c.b16 %v2791, %v2783
        %v4688 = vpack.c.b16 %v2792, %v2784
        %v4689 = vpack.c.b16 %v2801, %v2793
        %v4690 = vpack.c.b16 %v2802, %v2794
        %v4691 = vpack.c.b16 %v2803, %v2795
        %v4692 = vpack.c.b16 %v2804, %v2796
        %v4693 = vpack.c.b16 %v2805, %v2797
        %v4694 = vpack.c.b16 %v2806, %v2798
        %v4695 = vpack.c.b16 %v2807, %v2799
        %v4696 = vpack.c.b16 %v2808, %v2800
        %v4697 = vpack.c.b16 %v2817, %v2809
        %v4698 = vpack.c.b16 %v2818, %v2810
        %v4699 = vpack.c.b16 %v2819, %v2811
        %v4700 = vpack.c.b16 %v2820, %v2812
        %v4701 = vpack.c.b16 %v2821, %v2813
        %v4702 = vpack.c.b16 %v2822, %v2814
        %v4703 = vpack.c.b16 %v2823, %v2815
        %v4704 = vpack.c.b16 %v2824, %v2816
        %v4705 = vpack.c.b16 %v2833, %v2825
        %v4706 = vpack.c.b16 %v2834, %v2826
        %v4707 = vpack.c.b16 %v2835, %v2827
        %v4708 = vpack.c.b16 %v2836, %v2828
        %v4709 = vpack.c.b16 %v2837, %v2829
        %v4710 = vpack.c.b16 %v2838, %v2830
        %v4711 = vpack.c.b16 %v2839, %v2831
        %v4712 = vpack.c.b16 %v2840, %v2832
        %v4713 = vpack.c.b16 %v2849, %v2841
        %v4714 = vpack.c.b16 %v2850, %v2842
        %v4715 = vpack.c.b16 %v2851, %v2843
        %v4716 = vpack.c.b16 %v2852, %v2844
        %v4717 = vpack.c.b16 %v2853, %v2845
        %v4718 = vpack.c.b16 %v2854, %v2846
        %v4719 = vpack.c.b16 %v2855, %v2847
        %v4720 = vpack.c.b16 %v2856, %v2848
        %v4721 = vpack.c.b16 %v2865, %v2857
        %v4722 = vpack.c.b16 %v2866, %v2858
        %v4723 = vpack.c.b16 %v2867, %v2859
        %v4724 = vpack.c.b16 %v2868, %v2860
        %v4725 = vpack.c.b16 %v2869, %v2861
        %v4726 = vpack.c.b16 %v2870, %v2862
        %v4727 = vpack.c.b16 %v2871, %v2863
        %v4728 = vpack.c.b16 %v2872, %v2864
        %v4729 = vpack.c.b16 %v2881, %v2873
        %v4730 = vpack.c.b16 %v2882, %v2874
        %v4731 = vpack.c.b16 %v2883, %v2875
        %v4732 = vpack.c.b16 %v2884, %v2876
        %v4733 = vpack.c.b16 %v2885, %v2877
        %v4734 = vpack.c.b16 %v2886, %v2878
        %v4735 = vpack.c.b16 %v2887, %v2879
        %v4736 = vpack.c.b16 %v2888, %v2880
        %v4737 = vpack.c.b16 %v2897, %v2889
        %v4738 = vpack.c.b16 %v2898, %v2890
        %v4739 = vpack.c.b16 %v2899, %v2891
        %v4740 = vpack.c.b16 %v2900, %v2892
        %v4741 = vpack.c.b16 %v2901, %v2893
        %v4742 = vpack.c.b16 %v2902, %v2894
        %v4743 = vpack.c.b16 %v2903, %v2895
        %v4744 = vpack.c.b16 %v2904, %v2896
        %v4745 = vpack.c.b16 %v2913, %v2905
        %v4746 = vpack.c.b16 %v2914, %v2906
        %v4747 = vpack.c.b16 %v2915, %v2907
        %v4748 = vpack.c.b16 %v2916, %v2908
        %v4749 = vpack.c.b16 %v2917, %v2909
        %v4750 = vpack.c.b16 %v2918, %v2910
        %v4751 = vpack.c.b16 %v2919, %v2911
        %v4752 = vpack.c.b16 %v2920, %v2912
        %v4753 = vpack.c.b16 %v2929, %v2921
        %v4754 = vpack.c.b16 %v2930, %v2922
        %v4755 = vpack.c.b16 %v2931, %v2923
        %v4756 = vpack.c.b16 %v2932, %v2924
        %v4757 = vpack.c.b16 %v2933, %v2925
        %v4758 = vpack.c.b16 %v2934, %v2926
        %v4759 = vpack.c.b16 %v2935, %v2927
        %v4760 = vpack.c.b16 %v2936, %v2928
        %v4761 = vpack.c.b16 %v2945, %v2937
        %v4762 = vpack.c.b16 %v2946, %v2938
        %v4763 = vpack.c.b16 %v2947, %v2939
        %v4764 = vpack.c.b16 %v2948, %v2940
        %v4765 = vpack.c.b16 %v2949, %v2941
        %v4766 = vpack.c.b16 %v2950, %v2942
        %v4767 = vpack.c.b16 %v2951, %v2943
        %v4768 = vpack.c.b16 %v2952, %v2944
        %v4769 = vpack.c.b16 %v2961, %v2953
        %v4770 = vpack.c.b16 %v2962, %v2954
        %v4771 = vpack.c.b16 %v2963, %v2955
        %v4772 = vpack.c.b16 %v2964, %v2956
        %v4773 = vpack.c.b16 %v2965, %v2957
        %v4774 = vpack.c.b16 %v2966, %v2958
        %v4775 = vpack.c.b16 %v2967, %v2959
        %v4776 = vpack.c.b16 %v2968, %v2960
        %v4777 = vpack.c.b16 %v2977, %v2969
        %v4778 = vpack.c.b16 %v2978, %v2970
        %v4779 = vpack.c.b16 %v2979, %v2971
        %v4780 = vpack.c.b16 %v2980, %v2972
        %v4781 = vpack.c.b16 %v2981, %v2973
        %v4782 = vpack.c.b16 %v2982, %v2974
        %v4783 = vpack.c.b16 %v2983, %v2975
        %v4784 = vpack.c.b16 %v2984, %v2976
        %v4785 = vpack.c.b16 %v2993, %v2985
        %v4786 = vpack.c.b16 %v2994, %v2986
        %v4787 = vpack.c.b16 %v2995, %v2987
        %v4788 = vpack.c.b16 %v2996, %v2988
        %v4789 = vpack.c.b16 %v2997, %v2989
        %v4790 = vpack.c.b16 %v2998, %v2990
        %v4791 = vpack.c.b16 %v2999, %v2991
        %v4792 = vpack.c.b16 %v3000, %v2992
        %v4793 = vpack.c.b16 %v3009, %v3001
        %v4794 = vpack.c.b16 %v3010, %v3002
        %v4795 = vpack.c.b16 %v3011, %v3003
        %v4796 = vpack.c.b16 %v3012, %v3004
        %v4797 = vpack.c.b16 %v3013, %v3005
        %v4798 = vpack.c.b16 %v3014, %v3006
        %v4799 = vpack.c.b16 %v3015, %v3007
        %v4800 = vpack.c.b16 %v3016, %v3008
        %v4801 = vpack.c.b16 %v3025, %v3017
        %v4802 = vpack.c.b16 %v3026, %v3018
        %v4803 = vpack.c.b16 %v3027, %v3019
        %v4804 = vpack.c.b16 %v3028, %v3020
        %v4805 = vpack.c.b16 %v3029, %v3021
        %v4806 = vpack.c.b16 %v3030, %v3022
        %v4807 = vpack.c.b16 %v3031, %v3023
        %v4808 = vpack.c.b16 %v3032, %v3024
        %v4809 = vpack.c.b16 %v3041, %v3033
        %v4810 = vpack.c.b16 %v3042, %v3034
        %v4811 = vpack.c.b16 %v3043, %v3035
        %v4812 = vpack.c.b16 %v3044, %v3036
        %v4813 = vpack.c.b16 %v3045, %v3037
        %v4814 = vpack.c.b16 %v3046, %v3038
        %v4815 = vpack.c.b16 %v3047, %v3039
        %v4816 = vpack.c.b16 %v3048, %v3040
        %v4817 = vpack.c.b16 %v3057, %v3049
        %v4818 = vpack.c.b16 %v3058, %v3050
        %v4819 = vpack.c.b16 %v3059, %v3051
        %v4820 = vpack.c.b16 %v3060, %v3052
        %v4821 = vpack.c.b16 %v3061, %v3053
        %v4822 = vpack.c.b16 %v3062, %v3054
        %v4823 = vpack.c.b16 %v3063, %v3055
        %v4824 = vpack.c.b16 %v3064, %v3056
        %v4825 = vpack.c.b16 %v3073, %v3065
        %v4826 = vpack.c.b16 %v3074, %v3066
        %v4827 = vpack.c.b16 %v3075, %v3067
        %v4828 = vpack.c.b16 %v3076, %v3068
        %v4829 = vpack.c.b16 %v3077, %v3069
        %v4830 = vpack.c.b16 %v3078, %v3070
        %v4831 = vpack.c.b16 %v3079, %v3071
        %v4832 = vpack.c.b16 %v3080, %v3072
        %v4833 = vpack.c.b16 %v3089, %v3081
        %v4834 = vpack.c.b16 %v3090, %v3082
        %v4835 = vpack.c.b16 %v3091, %v3083
        %v4836 = vpack.c.b16 %v3092, %v3084
        %v4837 = vpack.c.b16 %v3093, %v3085
        %v4838 = vpack.c.b16 %v3094, %v3086
        %v4839 = vpack.c.b16 %v3095, %v3087
        %v4840 = vpack.c.b16 %v3096, %v3088
        %v4841 = vpack.c.b16 %v3105, %v3097
        %v4842 = vpack.c.b16 %v3106, %v3098
        %v4843 = vpack.c.b16 %v3107, %v3099
        %v4844 = vpack.c.b16 %v3108, %v3100
        %v4845 = vpack.c.b16 %v3109, %v3101
        %v4846 = vpack.c.b16 %v3110, %v3102
        %v4847 = vpack.c.b16 %v3111, %v3103
        %v4848 = vpack.c.b16 %v3112, %v3104
        %v4849 = vpack.c.b16 %v3121, %v3113
        %v4850 = vpack.c.b16 %v3122, %v3114
        %v4851 = vpack.c.b16 %v3123, %v3115
        %v4852 = vpack.c.b16 %v3124, %v3116
        %v4853 = vpack.c.b16 %v3125, %v3117
        %v4854 = vpack.c.b16 %v3126, %v3118
        %v4855 = vpack.c.b16 %v3127, %v3119
        %v4856 = vpack.c.b16 %v3128, %v3120
        %v4857 = vpack.c.b16 %v3137, %v3129
        %v4858 = vpack.c.b16 %v3138, %v3130
        %v4859 = vpack.c.b16 %v3139, %v3131
        %v4860 = vpack.c.b16 %v3140, %v3132
        %v4861 = vpack.c.b16 %v3141, %v3133
        %v4862 = vpack.c.b16 %v3142, %v3134
        %v4863 = vpack.c.b16 %v3143, %v3135
        %v4864 = vpack.c.b16 %v3144, %v3136
        %v4865 = vpack.c.b16 %v3153, %v3145
        %v4866 = vpack.c.b16 %v3154, %v3146
        %v4867 = vpack.c.b16 %v3155, %v3147
        %v4868 = vpack.c.b16 %v3156, %v3148
        %v4869 = vpack.c.b16 %v3157, %v3149
        %v4870 = vpack.c.b16 %v3158, %v3150
        %v4871 = vpack.c.b16 %v3159, %v3151
        %v4872 = vpack.c.b16 %v3160, %v3152
        %v4873 = vpack.c.b16 %v3169, %v3161
        %v4874 = vpack.c.b16 %v3170, %v3162
        %v4875 = vpack.c.b16 %v3171, %v3163
        %v4876 = vpack.c.b16 %v3172, %v3164
        %v4877 = vpack.c.b16 %v3173, %v3165
        %v4878 = vpack.c.b16 %v3174, %v3166
        %v4879 = vpack.c.b16 %v3175, %v3167
        %v4880 = vpack.c.b16 %v3176, %v3168
        %v4881 = vpack.c.b16 %v3185, %v3177
        %v4882 = vpack.c.b16 %v3186, %v3178
        %v4883 = vpack.c.b16 %v3187, %v3179
        %v4884 = vpack.c.b16 %v3188, %v3180
        %v4885 = vpack.c.b16 %v3189, %v3181
        %v4886 = vpack.c.b16 %v3190, %v3182
        %v4887 = vpack.c.b16 %v3191, %v3183
        %v4888 = vpack.c.b16 %v3192, %v3184
        %v4889 = vpack.c.b16 %v3201, %v3193
        %v4890 = vpack.c.b16 %v3202, %v3194
        %v4891 = vpack.c.b16 %v3203, %v3195
        %v4892 = vpack.c.b16 %v3204, %v3196
        %v4893 = vpack.c.b16 %v3205, %v3197
        %v4894 = vpack.c.b16 %v3206, %v3198
        %v4895 = vpack.c.b16 %v3207, %v3199
        %v4896 = vpack.c.b16 %v3208, %v3200
        %v4897 = vpack.c.b16 %v3217, %v3209
        %v4898 = vpack.c.b16 %v3218, %v3210
        %v4899 = vpack.c.b16 %v3219, %v3211
        %v4900 = vpack.c.b16 %v3220, %v3212
        %v4901 = vpack.c.b16 %v3221, %v3213
        %v4902 = vpack.c.b16 %v3222, %v3214
        %v4903 = vpack.c.b16 %v3223, %v3215
        %v4904 = vpack.c.b16 %v3224, %v3216
        %v4905 = vpack.c.b16 %v3233, %v3225
        %v4906 = vpack.c.b16 %v3234, %v3226
        %v4907 = vpack.c.b16 %v3235, %v3227
        %v4908 = vpack.c.b16 %v3236, %v3228
        %v4909 = vpack.c.b16 %v3237, %v3229
        %v4910 = vpack.c.b16 %v3238, %v3230
        %v4911 = vpack.c.b16 %v3239, %v3231
        %v4912 = vpack.c.b16 %v3240, %v3232
        %v4913 = vpack.c.b16 %v3249, %v3241
        %v4914 = vpack.c.b16 %v3250, %v3242
        %v4915 = vpack.c.b16 %v3251, %v3243
        %v4916 = vpack.c.b16 %v3252, %v3244
        %v4917 = vpack.c.b16 %v3253, %v3245
        %v4918 = vpack.c.b16 %v3254, %v3246
        %v4919 = vpack.c.b16 %v3255, %v3247
        %v4920 = vpack.c.b16 %v3256, %v3248
        %v4921 = vpack.c.b16 %v3265, %v3257
        %v4922 = vpack.c.b16 %v3266, %v3258
        %v4923 = vpack.c.b16 %v3267, %v3259
        %v4924 = vpack.c.b16 %v3268, %v3260
        %v4925 = vpack.c.b16 %v3269, %v3261
        %v4926 = vpack.c.b16 %v3270, %v3262
        %v4927 = vpack.c.b16 %v3271, %v3263
        %v4928 = vpack.c.b16 %v3272, %v3264
        %v4929 = vpack.c.b16 %v3281, %v3273
        %v4930 = vpack.c.b16 %v3282, %v3274
        %v4931 = vpack.c.b16 %v3283, %v3275
        %v4932 = vpack.c.b16 %v3284, %v3276
        %v4933 = vpack.c.b16 %v3285, %v3277
        %v4934 = vpack.c.b16 %v3286, %v3278
        %v4935 = vpack.c.b16 %v3287, %v3279
        %v4936 = vpack.c.b16 %v3288, %v3280
        %v4937 = vpack.c.b16 %v3297, %v3289
        %v4938 = vpack.c.b16 %v3298, %v3290
        %v4939 = vpack.c.b16 %v3299, %v3291
        %v4940 = vpack.c.b16 %v3300, %v3292
        %v4941 = vpack.c.b16 %v3301, %v3293
        %v4942 = vpack.c.b16 %v3302, %v3294
        %v4943 = vpack.c.b16 %v3303, %v3295
        %v4944 = vpack.c.b16 %v3304, %v3296
        %v4945 = vpack.c.b16 %v3313, %v3305
        %v4946 = vpack.c.b16 %v3314, %v3306
        %v4947 = vpack.c.b16 %v3315, %v3307
        %v4948 = vpack.c.b16 %v3316, %v3308
        %v4949 = vpack.c.b16 %v3317, %v3309
        %v4950 = vpack.c.b16 %v3318, %v3310
        %v4951 = vpack.c.b16 %v3319, %v3311
        %v4952 = vpack.c.b16 %v3320, %v3312
        %v4953 = vpack.c.b16 %v3329, %v3321
        %v4954 = vpack.c.b16 %v3330, %v3322
        %v4955 = vpack.c.b16 %v3331, %v3323
        %v4956 = vpack.c.b16 %v3332, %v3324
        %v4957 = vpack.c.b16 %v3333, %v3325
        %v4958 = vpack.c.b16 %v3334, %v3326
        %v4959 = vpack.c.b16 %v3335, %v3327
        %v4960 = vpack.c.b16 %v3336, %v3328
        %v4961 = vpack.c.b16 %v3345, %v3337
        %v4962 = vpack.c.b16 %v3346, %v3338
        %v4963 = vpack.c.b16 %v3347, %v3339
        %v4964 = vpack.c.b16 %v3348, %v3340
        %v4965 = vpack.c.b16 %v3349, %v3341
        %v4966 = vpack.c.b16 %v3350, %v3342
        %v4967 = vpack.c.b16 %v3351, %v3343
        %v4968 = vpack.c.b16 %v3352, %v3344
        %v4969 = vpack.c.b16 %v3361, %v3353
        %v4970 = vpack.c.b16 %v3362, %v3354
        %v4971 = vpack.c.b16 %v3363, %v3355
        %v4972 = vpack.c.b16 %v3364, %v3356
        %v4973 = vpack.c.b16 %v3365, %v3357
        %v4974 = vpack.c.b16 %v3366, %v3358
        %v4975 = vpack.c.b16 %v3367, %v3359
        %v4976 = vpack.c.b16 %v3368, %v3360
        %v4977 = vpack.c.b16 %v3377, %v3369
        %v4978 = vpack.c.b16 %v3378, %v3370
        %v4979 = vpack.c.b16 %v3379, %v3371
        %v4980 = vpack.c.b16 %v3380, %v3372
        %v4981 = vpack.c.b16 %v3381, %v3373
        %v4982 = vpack.c.b16 %v3382, %v3374
        %v4983 = vpack.c.b16 %v3383, %v3375
        %v4984 = vpack.c.b16 %v3384, %v3376
        %v4985 = vpack.c.b16 %v3393, %v3385
        %v4986 = vpack.c.b16 %v3394, %v3386
        %v4987 = vpack.c.b16 %v3395, %v3387
        %v4988 = vpack.c.b16 %v3396, %v3388
        %v4989 = vpack.c.b16 %v3397, %v3389
        %v4990 = vpack.c.b16 %v3398, %v3390
        %v4991 = vpack.c.b16 %v3399, %v3391
        %v4992 = vpack.c.b16 %v3400, %v3392
        %v4993 = vpack.c.b16 %v3409, %v3401
        %v4994 = vpack.c.b16 %v3410, %v3402
        %v4995 = vpack.c.b16 %v3411, %v3403
        %v4996 = vpack.c.b16 %v3412, %v3404
        %v4997 = vpack.c.b16 %v3413, %v3405
        %v4998 = vpack.c.b16 %v3414, %v3406
        %v4999 = vpack.c.b16 %v3415, %v3407
        %v5000 = vpack.c.b16 %v3416, %v3408
        %v5001 = vpack.c.b16 %v3425, %v3417
        %v5002 = vpack.c.b16 %v3426, %v3418
        %v5003 = vpack.c.b16 %v3427, %v3419
        %v5004 = vpack.c.b16 %v3428, %v3420
        %v5005 = vpack.c.b16 %v3429, %v3421
        %v5006 = vpack.c.b16 %v3430, %v3422
        %v5007 = vpack.c.b16 %v3431, %v3423
        %v5008 = vpack.c.b16 %v3432, %v3424
        %v5009 = vpack.c.b16 %v3441, %v3433
        %v5010 = vpack.c.b16 %v3442, %v3434
        %v5011 = vpack.c.b16 %v3443, %v3435
        %v5012 = vpack.c.b16 %v3444, %v3436
        %v5013 = vpack.c.b16 %v3445, %v3437
        %v5014 = vpack.c.b16 %v3446, %v3438
        %v5015 = vpack.c.b16 %v3447, %v3439
        %v5016 = vpack.c.b16 %v3448, %v3440
        %v5017 = vpack.c.b16 %v3457, %v3449
        %v5018 = vpack.c.b16 %v3458, %v3450
        %v5019 = vpack.c.b16 %v3459, %v3451
        %v5020 = vpack.c.b16 %v3460, %v3452
        %v5021 = vpack.c.b16 %v3461, %v3453
        %v5022 = vpack.c.b16 %v3462, %v3454
        %v5023 = vpack.c.b16 %v3463, %v3455
        %v5024 = vpack.c.b16 %v3464, %v3456
        %v5025 = vpack.c.b16 %v3473, %v3465
        %v5026 = vpack.c.b16 %v3474, %v3466
        %v5027 = vpack.c.b16 %v3475, %v3467
        %v5028 = vpack.c.b16 %v3476, %v3468
        %v5029 = vpack.c.b16 %v3477, %v3469
        %v5030 = vpack.c.b16 %v3478, %v3470
        %v5031 = vpack.c.b16 %v3479, %v3471
        %v5032 = vpack.c.b16 %v3480, %v3472
        %v5033 = vpack.c.b16 %v3489, %v3481
        %v5034 = vpack.c.b16 %v3490, %v3482
        %v5035 = vpack.c.b16 %v3491, %v3483
        %v5036 = vpack.c.b16 %v3492, %v3484
        %v5037 = vpack.c.b16 %v3493, %v3485
        %v5038 = vpack.c.b16 %v3494, %v3486
        %v5039 = vpack.c.b16 %v3495, %v3487
        %v5040 = vpack.c.b16 %v3496, %v3488
        %v5041 = vpack.c.b16 %v3505, %v3497
        %v5042 = vpack.c.b16 %v3506, %v3498
        %v5043 = vpack.c.b16 %v3507, %v3499
        %v5044 = vpack.c.b16 %v3508, %v3500
        %v5045 = vpack.c.b16 %v3509, %v3501
        %v5046 = vpack.c.b16 %v3510, %v3502
        %v5047 = vpack.c.b16 %v3511, %v3503
        %v5048 = vpack.c.b16 %v3512, %v3504
        %v5049 = vpack.c.b16 %v3521, %v3513
        %v5050 = vpack.c.b16 %v3522, %v3514
        %v5051 = vpack.c.b16 %v3523, %v3515
        %v5052 = vpack.c.b16 %v3524, %v3516
        %v5053 = vpack.c.b16 %v3525, %v3517
        %v5054 = vpack.c.b16 %v3526, %v3518
        %v5055 = vpack.c.b16 %v3527, %v3519
        %v5056 = vpack.c.b16 %v3528, %v3520
        %v5057 = vpack.c.b16 %v3537, %v3529
        %v5058 = vpack.c.b16 %v3538, %v3530
        %v5059 = vpack.c.b16 %v3539, %v3531
        %v5060 = vpack.c.b16 %v3540, %v3532
        %v5061 = vpack.c.b16 %v3541, %v3533
        %v5062 = vpack.c.b16 %v3542, %v3534
        %v5063 = vpack.c.b16 %v3543, %v3535
        %v5064 = vpack.c.b16 %v3544, %v3536
        %v5065 = vpack.c.b16 %v3553, %v3545
        %v5066 = vpack.c.b16 %v3554, %v3546
        %v5067 = vpack.c.b16 %v3555, %v3547
        %v5068 = vpack.c.b16 %v3556, %v3548
        %v5069 = vpack.c.b16 %v3557, %v3549
        %v5070 = vpack.c.b16 %v3558, %v3550
        %v5071 = vpack.c.b16 %v3559, %v3551
        %v5072 = vpack.c.b16 %v3560, %v3552
        %v5073 = vpack.c.b16 %v3569, %v3561
        %v5074 = vpack.c.b16 %v3570, %v3562
        %v5075 = vpack.c.b16 %v3571, %v3563
        %v5076 = vpack.c.b16 %v3572, %v3564
        %v5077 = vpack.c.b16 %v3573, %v3565
        %v5078 = vpack.c.b16 %v3574, %v3566
        %v5079 = vpack.c.b16 %v3575, %v3567
        %v5080 = vpack.c.b16 %v3576, %v3568
        %v5081 = vpack.c.b16 %v3585, %v3577
        %v5082 = vpack.c.b16 %v3586, %v3578
        %v5083 = vpack.c.b16 %v3587, %v3579
        %v5084 = vpack.c.b16 %v3588, %v3580
        %v5085 = vpack.c.b16 %v3589, %v3581
        %v5086 = vpack.c.b16 %v3590, %v3582
        %v5087 = vpack.c.b16 %v3591, %v3583
        %v5088 = vpack.c.b16 %v3592, %v3584
        %v5089 = vpack.c.b16 %v3601, %v3593
        %v5090 = vpack.c.b16 %v3602, %v3594
        %v5091 = vpack.c.b16 %v3603, %v3595
        %v5092 = vpack.c.b16 %v3604, %v3596
        %v5093 = vpack.c.b16 %v3605, %v3597
        %v5094 = vpack.c.b16 %v3606, %v3598
        %v5095 = vpack.c.b16 %v3607, %v3599
        %v5096 = vpack.c.b16 %v3608, %v3600
        %v5097 = vpack.c.b16 %v3617, %v3609
        %v5098 = vpack.c.b16 %v3618, %v3610
        %v5099 = vpack.c.b16 %v3619, %v3611
        %v5100 = vpack.c.b16 %v3620, %v3612
        %v5101 = vpack.c.b16 %v3621, %v3613
        %v5102 = vpack.c.b16 %v3622, %v3614
        %v5103 = vpack.c.b16 %v3623, %v3615
        %v5104 = vpack.c.b16 %v3624, %v3616
        %v5105 = vpack.c.b16 %v3633, %v3625
        %v5106 = vpack.c.b16 %v3634, %v3626
        %v5107 = vpack.c.b16 %v3635, %v3627
        %v5108 = vpack.c.b16 %v3636, %v3628
        %v5109 = vpack.c.b16 %v3637, %v3629
        %v5110 = vpack.c.b16 %v3638, %v3630
        %v5111 = vpack.c.b16 %v3639, %v3631
        %v5112 = vpack.c.b16 %v3640, %v3632
        %v5113 = vpack.c.b16 %v3649, %v3641
        %v5114 = vpack.c.b16 %v3650, %v3642
        %v5115 = vpack.c.b16 %v3651, %v3643
        %v5116 = vpack.c.b16 %v3652, %v3644
        %v5117 = vpack.c.b16 %v3653, %v3645
        %v5118 = vpack.c.b16 %v3654, %v3646
        %v5119 = vpack.c.b16 %v3655, %v3647
        %v5120 = vpack.c.b16 %v3656, %v3648
        %v5121 = vpack.c.b16 %v3665, %v3657
        %v5122 = vpack.c.b16 %v3666, %v3658
        %v5123 = vpack.c.b16 %v3667, %v3659
        %v5124 = vpack.c.b16 %v3668, %v3660
        %v5125 = vpack.c.b16 %v3669, %v3661
        %v5126 = vpack.c.b16 %v3670, %v3662
        %v5127 = vpack.c.b16 %v3671, %v3663
        %v5128 = vpack.c.b16 %v3672, %v3664
        %v5129 = vpack.c.b16 %v3681, %v3673
        %v5130 = vpack.c.b16 %v3682, %v3674
        %v5131 = vpack.c.b16 %v3683, %v3675
        %v5132 = vpack.c.b16 %v3684, %v3676
        %v5133 = vpack.c.b16 %v3685, %v3677
        %v5134 = vpack.c.b16 %v3686, %v3678
        %v5135 = vpack.c.b16 %v3687, %v3679
        %v5136 = vpack.c.b16 %v3688, %v3680
        %v5137 = vpack.c.b16 %v3697, %v3689
        %v5138 = vpack.c.b16 %v3698, %v3690
        %v5139 = vpack.c.b16 %v3699, %v3691
        %v5140 = vpack.c.b16 %v3700, %v3692
        %v5141 = vpack.c.b16 %v3701, %v3693
        %v5142 = vpack.c.b16 %v3702, %v3694
        %v5143 = vpack.c.b16 %v3703, %v3695
        %v5144 = vpack.c.b16 %v3704, %v3696
        %v5145 = vpack.c.b16 %v3713, %v3705
        %v5146 = vpack.c.b16 %v3714, %v3706
        %v5147 = vpack.c.b16 %v3715, %v3707
        %v5148 = vpack.c.b16 %v3716, %v3708
        %v5149 = vpack.c.b16 %v3717, %v3709
        %v5150 = vpack.c.b16 %v3718, %v3710
        %v5151 = vpack.c.b16 %v3719, %v3711
        %v5152 = vpack.c.b16 %v3720, %v3712
        %v5153 = vpack.c.b16 %v3729, %v3721
        %v5154 = vpack.c.b16 %v3730, %v3722
        %v5155 = vpack.c.b16 %v3731, %v3723
        %v5156 = vpack.c.b16 %v3732, %v3724
        %v5157 = vpack.c.b16 %v3733, %v3725
        %v5158 = vpack.c.b16 %v3734, %v3726
        %v5159 = vpack.c.b16 %v3735, %v3727
        %v5160 = vpack.c.b16 %v3736, %v3728
        %v5161 = vpack.c.b16 %v3745, %v3737
        %v5162 = vpack.c.b16 %v3746, %v3738
        %v5163 = vpack.c.b16 %v3747, %v3739
        %v5164 = vpack.c.b16 %v3748, %v3740
        %v5165 = vpack.c.b16 %v3749, %v3741
        %v5166 = vpack.c.b16 %v3750, %v3742
        %v5167 = vpack.c.b16 %v3751, %v3743
        %v5168 = vpack.c.b16 %v3752, %v3744
        %v5169 = vpack.c.b16 %v3761, %v3753
        %v5170 = vpack.c.b16 %v3762, %v3754
        %v5171 = vpack.c.b16 %v3763, %v3755
        %v5172 = vpack.c.b16 %v3764, %v3756
        %v5173 = vpack.c.b16 %v3765, %v3757
        %v5174 = vpack.c.b16 %v3766, %v3758
        %v5175 = vpack.c.b16 %v3767, %v3759
        %v5176 = vpack.c.b16 %v3768, %v3760
        %v5177 = vpack.c.b16 %v3777, %v3769
        %v5178 = vpack.c.b16 %v3778, %v3770
        %v5179 = vpack.c.b16 %v3779, %v3771
        %v5180 = vpack.c.b16 %v3780, %v3772
        %v5181 = vpack.c.b16 %v3781, %v3773
        %v5182 = vpack.c.b16 %v3782, %v3774
        %v5183 = vpack.c.b16 %v3783, %v3775
        %v5184 = vpack.c.b16 %v3784, %v3776
        %v5185 = vpack.c.b16 %v3793, %v3785
        %v5186 = vpack.c.b16 %v3794, %v3786
        %v5187 = vpack.c.b16 %v3795, %v3787
        %v5188 = vpack.c.b16 %v3796, %v3788
        %v5189 = vpack.c.b16 %v3797, %v3789
        %v5190 = vpack.c.b16 %v3798, %v3790
        %v5191 = vpack.c.b16 %v3799, %v3791
        %v5192 = vpack.c.b16 %v3800, %v3792
        %v5193 = vpack.c.b16 %v3809, %v3801
        %v5194 = vpack.c.b16 %v3810, %v3802
        %v5195 = vpack.c.b16 %v3811, %v3803
        %v5196 = vpack.c.b16 %v3812, %v3804
        %v5197 = vpack.c.b16 %v3813, %v3805
        %v5198 = vpack.c.b16 %v3814, %v3806
        %v5199 = vpack.c.b16 %v3815, %v3807
        %v5200 = vpack.c.b16 %v3816, %v3808
        %v5201 = vpack.c.b16 %v3825, %v3817
        %v5202 = vpack.c.b16 %v3826, %v3818
        %v5203 = vpack.c.b16 %v3827, %v3819
        %v5204 = vpack.c.b16 %v3828, %v3820
        %v5205 = vpack.c.b16 %v3829, %v3821
        %v5206 = vpack.c.b16 %v3830, %v3822
        %v5207 = vpack.c.b16 %v3831, %v3823
        %v5208 = vpack.c.b16 %v3832, %v3824
        %v5209 = vpack.c.b16 %v3841, %v3833
        %v5210 = vpack.c.b16 %v3842, %v3834
        %v5211 = vpack.c.b16 %v3843, %v3835
        %v5212 = vpack.c.b16 %v3844, %v3836
        %v5213 = vpack.c.b16 %v3845, %v3837
        %v5214 = vpack.c.b16 %v3846, %v3838
        %v5215 = vpack.c.b16 %v3847, %v3839
        %v5216 = vpack.c.b16 %v3848, %v3840
        %v5217 = vpack.c.b16 %v3857, %v3849
        %v5218 = vpack.c.b16 %v3858, %v3850
        %v5219 = vpack.c.b16 %v3859, %v3851
        %v5220 = vpack.c.b16 %v3860, %v3852
        %v5221 = vpack.c.b16 %v3861, %v3853
        %v5222 = vpack.c.b16 %v3862, %v3854
        %v5223 = vpack.c.b16 %v3863, %v3855
        %v5224 = vpack.c.b16 %v3864, %v3856
        %v5225 = vpack.c.b16 %v3873, %v3865
        %v5226 = vpack.c.b16 %v3874, %v3866
        %v5227 = vpack.c.b16 %v3875, %v3867
        %v5228 = vpack.c.b16 %v3876, %v3868
        %v5229 = vpack.c.b16 %v3877, %v3869
        %v5230 = vpack.c.b16 %v3878, %v3870
        %v5231 = vpack.c.b16 %v3879, %v3871
        %v5232 = vpack.c.b16 %v3880, %v3872
        %v5233 = vpack.c.b16 %v3889, %v3881
        %v5234 = vpack.c.b16 %v3890, %v3882
        %v5235 = vpack.c.b16 %v3891, %v3883
        %v5236 = vpack.c.b16 %v3892, %v3884
        %v5237 = vpack.c.b16 %v3893, %v3885
        %v5238 = vpack.c.b16 %v3894, %v3886
        %v5239 = vpack.c.b16 %v3895, %v3887
        %v5240 = vpack.c.b16 %v3896, %v3888
        %v5241 = vpack.c.b16 %v3905, %v3897
        %v5242 = vpack.c.b16 %v3906, %v3898
        %v5243 = vpack.c.b16 %v3907, %v3899
        %v5244 = vpack.c.b16 %v3908, %v3900
        %v5245 = vpack.c.b16 %v3909, %v3901
        %v5246 = vpack.c.b16 %v3910, %v3902
        %v5247 = vpack.c.b16 %v3911, %v3903
        %v5248 = vpack.c.b16 %v3912, %v3904
        %v5249 = vpack.c.b16 %v3921, %v3913
        %v5250 = vpack.c.b16 %v3922, %v3914
        %v5251 = vpack.c.b16 %v3923, %v3915
        %v5252 = vpack.c.b16 %v3924, %v3916
        %v5253 = vpack.c.b16 %v3925, %v3917
        %v5254 = vpack.c.b16 %v3926, %v3918
        %v5255 = vpack.c.b16 %v3927, %v3919
        %v5256 = vpack.c.b16 %v3928, %v3920
        %v5257 = vpack.c.b16 %v3937, %v3929
        %v5258 = vpack.c.b16 %v3938, %v3930
        %v5259 = vpack.c.b16 %v3939, %v3931
        %v5260 = vpack.c.b16 %v3940, %v3932
        %v5261 = vpack.c.b16 %v3941, %v3933
        %v5262 = vpack.c.b16 %v3942, %v3934
        %v5263 = vpack.c.b16 %v3943, %v3935
        %v5264 = vpack.c.b16 %v3944, %v3936
        %v5265 = vpack.c.b16 %v3953, %v3945
        %v5266 = vpack.c.b16 %v3954, %v3946
        %v5267 = vpack.c.b16 %v3955, %v3947
        %v5268 = vpack.c.b16 %v3956, %v3948
        %v5269 = vpack.c.b16 %v3957, %v3949
        %v5270 = vpack.c.b16 %v3958, %v3950
        %v5271 = vpack.c.b16 %v3959, %v3951
        %v5272 = vpack.c.b16 %v3960, %v3952
        %v5273 = vpack.c.b16 %v3969, %v3961
        %v5274 = vpack.c.b16 %v3970, %v3962
        %v5275 = vpack.c.b16 %v3971, %v3963
        %v5276 = vpack.c.b16 %v3972, %v3964
        %v5277 = vpack.c.b16 %v3973, %v3965
        %v5278 = vpack.c.b16 %v3974, %v3966
        %v5279 = vpack.c.b16 %v3975, %v3967
        %v5280 = vpack.c.b16 %v3976, %v3968
        %v5281 = vpack.c.b16 %v3985, %v3977
        %v5282 = vpack.c.b16 %v3986, %v3978
        %v5283 = vpack.c.b16 %v3987, %v3979
        %v5284 = vpack.c.b16 %v3988, %v3980
        %v5285 = vpack.c.b16 %v3989, %v3981
        %v5286 = vpack.c.b16 %v3990, %v3982
        %v5287 = vpack.c.b16 %v3991, %v3983
        %v5288 = vpack.c.b16 %v3992, %v3984
        %v5289 = vpack.c.b16 %v4001, %v3993
        %v5290 = vpack.c.b16 %v4002, %v3994
        %v5291 = vpack.c.b16 %v4003, %v3995
        %v5292 = vpack.c.b16 %v4004, %v3996
        %v5293 = vpack.c.b16 %v4005, %v3997
        %v5294 = vpack.c.b16 %v4006, %v3998
        %v5295 = vpack.c.b16 %v4007, %v3999
        %v5296 = vpack.c.b16 %v4008, %v4000
        %v5297 = vpack.c.b16 %v4017, %v4009
        %v5298 = vpack.c.b16 %v4018, %v4010
        %v5299 = vpack.c.b16 %v4019, %v4011
        %v5300 = vpack.c.b16 %v4020, %v4012
        %v5301 = vpack.c.b16 %v4021, %v4013
        %v5302 = vpack.c.b16 %v4022, %v4014
        %v5303 = vpack.c.b16 %v4023, %v4015
        %v5304 = vpack.c.b16 %v4024, %v4016
        %v5305 = vpack.c.b16 %v4033, %v4025
        %v5306 = vpack.c.b16 %v4034, %v4026
        %v5307 = vpack.c.b16 %v4035, %v4027
        %v5308 = vpack.c.b16 %v4036, %v4028
        %v5309 = vpack.c.b16 %v4037, %v4029
        %v5310 = vpack.c.b16 %v4038, %v4030
        %v5311 = vpack.c.b16 %v4039, %v4031
        %v5312 = vpack.c.b16 %v4040, %v4032
        %v5313 = vpack.c.b16 %v4049, %v4041
        %v5314 = vpack.c.b16 %v4050, %v4042
        %v5315 = vpack.c.b16 %v4051, %v4043
        %v5316 = vpack.c.b16 %v4052, %v4044
        %v5317 = vpack.c.b16 %v4053, %v4045
        %v5318 = vpack.c.b16 %v4054, %v4046
        %v5319 = vpack.c.b16 %v4055, %v4047
        %v5320 = vpack.c.b16 %v4056, %v4048
        %v5321 = vpack.c.b16 %v4065, %v4057
        %v5322 = vpack.c.b16 %v4066, %v4058
        %v5323 = vpack.c.b16 %v4067, %v4059
        %v5324 = vpack.c.b16 %v4068, %v4060
        %v5325 = vpack.c.b16 %v4069, %v4061
        %v5326 = vpack.c.b16 %v4070, %v4062
        %v5327 = vpack.c.b16 %v4071, %v4063
        %v5328 = vpack.c.b16 %v4072, %v4064
        %v5329 = vpack.c.b16 %v4081, %v4073
        %v5330 = vpack.c.b16 %v4082, %v4074
        %v5331 = vpack.c.b16 %v4083, %v4075
        %v5332 = vpack.c.b16 %v4084, %v4076
        %v5333 = vpack.c.b16 %v4085, %v4077
        %v5334 = vpack.c.b16 %v4086, %v4078
        %v5335 = vpack.c.b16 %v4087, %v4079
        %v5336 = vpack.c.b16 %v4088, %v4080
        %v5337 = vpack.c.b16 %v4097, %v4089
        %v5338 = vpack.c.b16 %v4098, %v4090
        %v5339 = vpack.c.b16 %v4099, %v4091
        %v5340 = vpack.c.b16 %v4100, %v4092
        %v5341 = vpack.c.b16 %v4101, %v4093
        %v5342 = vpack.c.b16 %v4102, %v4094
        %v5343 = vpack.c.b16 %v4103, %v4095
        %v5344 = vpack.c.b16 %v4104, %v4096
        %v5345 = vpack.c.b16 %v4113, %v4105
        %v5346 = vpack.c.b16 %v4114, %v4106
        %v5347 = vpack.c.b16 %v4115, %v4107
        %v5348 = vpack.c.b16 %v4116, %v4108
        %v5349 = vpack.c.b16 %v4117, %v4109
        %v5350 = vpack.c.b16 %v4118, %v4110
        %v5351 = vpack.c.b16 %v4119, %v4111
        %v5352 = vpack.c.b16 %v4120, %v4112
        %v5353 = vpack.c.b16 %v4129, %v4121
        %v5354 = vpack.c.b16 %v4130, %v4122
        %v5355 = vpack.c.b16 %v4131, %v4123
        %v5356 = vpack.c.b16 %v4132, %v4124
        %v5357 = vpack.c.b16 %v4133, %v4125
        %v5358 = vpack.c.b16 %v4134, %v4126
        %v5359 = vpack.c.b16 %v4135, %v4127
        %v5360 = vpack.c.b16 %v4136, %v4128
        %v5361 = vpack.c.b16 %v4145, %v4137
        %v5362 = vpack.c.b16 %v4146, %v4138
        %v5363 = vpack.c.b16 %v4147, %v4139
        %v5364 = vpack.c.b16 %v4148, %v4140
        %v5365 = vpack.c.b16 %v4149, %v4141
        %v5366 = vpack.c.b16 %v4150, %v4142
        %v5367 = vpack.c.b16 %v4151, %v4143
        %v5368 = vpack.c.b16 %v4152, %v4144
        %v5369 = vpack.c.b16 %v4161, %v4153
        %v5370 = vpack.c.b16 %v4162, %v4154
        %v5371 = vpack.c.b16 %v4163, %v4155
        %v5372 = vpack.c.b16 %v4164, %v4156
        %v5373 = vpack.c.b16 %v4165, %v4157
        %v5374 = vpack.c.b16 %v4166, %v4158
        %v5375 = vpack.c.b16 %v4167, %v4159
        %v5376 = vpack.c.b16 %v4168, %v4160
        %v5377 = vpack.c.b16 %v4177, %v4169
        %v5378 = vpack.c.b16 %v4178, %v4170
        %v5379 = vpack.c.b16 %v4179, %v4171
        %v5380 = vpack.c.b16 %v4180, %v4172
        %v5381 = vpack.c.b16 %v4181, %v4173
        %v5382 = vpack.c.b16 %v4182, %v4174
        %v5383 = vpack.c.b16 %v4183, %v4175
        %v5384 = vpack.c.b16 %v4184, %v4176
        %v5385 = vpack.c.b16 %v4193, %v4185
        %v5386 = vpack.c.b16 %v4194, %v4186
        %v5387 = vpack.c.b16 %v4195, %v4187
        %v5388 = vpack.c.b16 %v4196, %v4188
        %v5389 = vpack.c.b16 %v4197, %v4189
        %v5390 = vpack.c.b16 %v4198, %v4190
        %v5391 = vpack.c.b16 %v4199, %v4191
        %v5392 = vpack.c.b16 %v4200, %v4192
        %v5393 = vpack.c.b16 %v4209, %v4201
        %v5394 = vpack.c.b16 %v4210, %v4202
        %v5395 = vpack.c.b16 %v4211, %v4203
        %v5396 = vpack.c.b16 %v4212, %v4204
        %v5397 = vpack.c.b16 %v4213, %v4205
        %v5398 = vpack.c.b16 %v4214, %v4206
        %v5399 = vpack.c.b16 %v4215, %v4207
        %v5400 = vpack.c.b16 %v4216, %v4208
        %v5401 = vpack.c.b16 %v4225, %v4217
        %v5402 = vpack.c.b16 %v4226, %v4218
        %v5403 = vpack.c.b16 %v4227, %v4219
        %v5404 = vpack.c.b16 %v4228, %v4220
        %v5405 = vpack.c.b16 %v4229, %v4221
        %v5406 = vpack.c.b16 %v4230, %v4222
        %v5407 = vpack.c.b16 %v4231, %v4223
        %v5408 = vpack.c.b16 %v4232, %v4224
        %v5409 = vpack.c.b16 %v4241, %v4233
        %v5410 = vpack.c.b16 %v4242, %v4234
        %v5411 = vpack.c.b16 %v4243, %v4235
        %v5412 = vpack.c.b16 %v4244, %v4236
        %v5413 = vpack.c.b16 %v4245, %v4237
        %v5414 = vpack.c.b16 %v4246, %v4238
        %v5415 = vpack.c.b16 %v4247, %v4239
        %v5416 = vpack.c.b16 %v4248, %v4240
        %v5417 = vpack.c.b16 %v4257, %v4249
        %v5418 = vpack.c.b16 %v4258, %v4250
        %v5419 = vpack.c.b16 %v4259, %v4251
        %v5420 = vpack.c.b16 %v4260, %v4252
        %v5421 = vpack.c.b16 %v4261, %v4253
        %v5422 = vpack.c.b16 %v4262, %v4254
        %v5423 = vpack.c.b16 %v4263, %v4255
        %v5424 = vpack.c.b16 %v4264, %v4256
        %v5425 = vpack.c.b16 %v4273, %v4265
        %v5426 = vpack.c.b16 %v4274, %v4266
        %v5427 = vpack.c.b16 %v4275, %v4267
        %v5428 = vpack.c.b16 %v4276, %v4268
        %v5429 = vpack.c.b16 %v4277, %v4269
        %v5430 = vpack.c.b16 %v4278, %v4270
        %v5431 = vpack.c.b16 %v4279, %v4271
        %v5432 = vpack.c.b16 %v4280, %v4272
        %v5433 = vpack.c.b16 %v4289, %v4281
        %v5434 = vpack.c.b16 %v4290, %v4282
        %v5435 = vpack.c.b16 %v4291, %v4283
        %v5436 = vpack.c.b16 %v4292, %v4284
        %v5437 = vpack.c.b16 %v4293, %v4285
        %v5438 = vpack.c.b16 %v4294, %v4286
        %v5439 = vpack.c.b16 %v4295, %v4287
        %v5440 = vpack.c.b16 %v4296, %v4288
        %v5441 = vpack.c.b16 %v4305, %v4297
        %v5442 = vpack.c.b16 %v4306, %v4298
        %v5443 = vpack.c.b16 %v4307, %v4299
        %v5444 = vpack.c.b16 %v4308, %v4300
        %v5445 = vpack.c.b16 %v4309, %v4301
        %v5446 = vpack.c.b16 %v4310, %v4302
        %v5447 = vpack.c.b16 %v4311, %v4303
        %v5448 = vpack.c.b16 %v4312, %v4304
        %v5449 = vpack.c.b16 %v4321, %v4313
        %v5450 = vpack.c.b16 %v4322, %v4314
        %v5451 = vpack.c.b16 %v4323, %v4315
        %v5452 = vpack.c.b16 %v4324, %v4316
        %v5453 = vpack.c.b16 %v4325, %v4317
        %v5454 = vpack.c.b16 %v4326, %v4318
        %v5455 = vpack.c.b16 %v4327, %v4319
        %v5456 = vpack.c.b16 %v4328, %v4320
        %v5457 = vpack.c.b16 %v4337, %v4329
        %v5458 = vpack.c.b16 %v4338, %v4330
        %v5459 = vpack.c.b16 %v4339, %v4331
        %v5460 = vpack.c.b16 %v4340, %v4332
        %v5461 = vpack.c.b16 %v4341, %v4333
        %v5462 = vpack.c.b16 %v4342, %v4334
        %v5463 = vpack.c.b16 %v4343, %v4335
        %v5464 = vpack.c.b16 %v4344, %v4336
        %v5465 = vpack.c.b16 %v4353, %v4345
        %v5466 = vpack.c.b16 %v4354, %v4346
        %v5467 = vpack.c.b16 %v4355, %v4347
        %v5468 = vpack.c.b16 %v4356, %v4348
        %v5469 = vpack.c.b16 %v4357, %v4349
        %v5470 = vpack.c.b16 %v4358, %v4350
        %v5471 = vpack.c.b16 %v4359, %v4351
        %v5472 = vpack.c.b16 %v4360, %v4352
        %v5473 = vpack.c.b16 %v4369, %v4361
        %v5474 = vpack.c.b16 %v4370, %v4362
        %v5475 = vpack.c.b16 %v4371, %v4363
        %v5476 = vpack.c.b16 %v4372, %v4364
        %v5477 = vpack.c.b16 %v4373, %v4365
        %v5478 = vpack.c.b16 %v4374, %v4366
        %v5479 = vpack.c.b16 %v4375, %v4367
        %v5480 = vpack.c.b16 %v4376, %v4368
        %v5481 = vpack.c.b16 %v4385, %v4377
        %v5482 = vpack.c.b16 %v4386, %v4378
        %v5483 = vpack.c.b16 %v4387, %v4379
        %v5484 = vpack.c.b16 %v4388, %v4380
        %v5485 = vpack.c.b16 %v4389, %v4381
        %v5486 = vpack.c.b16 %v4390, %v4382
        %v5487 = vpack.c.b16 %v4391, %v4383
        %v5488 = vpack.c.b16 %v4392, %v4384
        %v5489 = vpack.c.b16 %v4401, %v4393
        %v5490 = vpack.c.b16 %v4402, %v4394
        %v5491 = vpack.c.b16 %v4403, %v4395
        %v5492 = vpack.c.b16 %v4404, %v4396
        %v5493 = vpack.c.b16 %v4405, %v4397
        %v5494 = vpack.c.b16 %v4406, %v4398
        %v5495 = vpack.c.b16 %v4407, %v4399
        %v5496 = vpack.c.b16 %v4408, %v4400
        %v5497 = vpack.c.b16 %v4417, %v4409
        %v5498 = vpack.c.b16 %v4418, %v4410
        %v5499 = vpack.c.b16 %v4419, %v4411
        %v5500 = vpack.c.b16 %v4420, %v4412
        %v5501 = vpack.c.b16 %v4421, %v4413
        %v5502 = vpack.c.b16 %v4422, %v4414
        %v5503 = vpack.c.b16 %v4423, %v4415
        %v5504 = vpack.c.b16 %v4424, %v4416
        %v5505 = vpack.c.b16 %v4433, %v4425
        %v5506 = vpack.c.b16 %v4434, %v4426
        %v5507 = vpack.c.b16 %v4435, %v4427
        %v5508 = vpack.c.b16 %v4436, %v4428
        %v5509 = vpack.c.b16 %v4437, %v4429
        %v5510 = vpack.c.b16 %v4438, %v4430
        %v5511 = vpack.c.b16 %v4439, %v4431
        %v5512 = vpack.c.b16 %v4440, %v4432
        %v5513 = vpack.c.b16 %v4449, %v4441
        %v5514 = vpack.c.b16 %v4450, %v4442
        %v5515 = vpack.c.b16 %v4451, %v4443
        %v5516 = vpack.c.b16 %v4452, %v4444
        %v5517 = vpack.c.b16 %v4453, %v4445
        %v5518 = vpack.c.b16 %v4454, %v4446
        %v5519 = vpack.c.b16 %v4455, %v4447
        %v5520 = vpack.c.b16 %v4456, %v4448
        %v5521 = vpack.c.b16 %v4465, %v4457
        %v5522 = vpack.c.b16 %v4466, %v4458
        %v5523 = vpack.c.b16 %v4467, %v4459
        %v5524 = vpack.c.b16 %v4468, %v4460
        %v5525 = vpack.c.b16 %v4469, %v4461
        %v5526 = vpack.c.b16 %v4470, %v4462
        %v5527 = vpack.c.b16 %v4471, %v4463
        %v5528 = vpack.c.b16 %v4472, %v4464
        %v5529 = vpack.c.b16 %v4481, %v4473
        %v5530 = vpack.c.b16 %v4482, %v4474
        %v5531 = vpack.c.b16 %v4483, %v4475
        %v5532 = vpack.c.b16 %v4484, %v4476
        %v5533 = vpack.c.b16 %v4485, %v4477
        %v5534 = vpack.c.b16 %v4486, %v4478
        %v5535 = vpack.c.b16 %v4487, %v4479
        %v5536 = vpack.c.b16 %v4488, %v4480
        %v5537 = vpack.c.b16 %v4497, %v4489
        %v5538 = vpack.c.b16 %v4498, %v4490
        %v5539 = vpack.c.b16 %v4499, %v4491
        %v5540 = vpack.c.b16 %v4500, %v4492
        %v5541 = vpack.c.b16 %v4501, %v4493
        %v5542 = vpack.c.b16 %v4502, %v4494
        %v5543 = vpack.c.b16 %v4503, %v4495
        %v5544 = vpack.c.b16 %v4504, %v4496
        %v5545 = vpack.c.b16 %v4513, %v4505
        %v5546 = vpack.c.b16 %v4514, %v4506
        %v5547 = vpack.c.b16 %v4515, %v4507
        %v5548 = vpack.c.b16 %v4516, %v4508
        %v5549 = vpack.c.b16 %v4517, %v4509
        %v5550 = vpack.c.b16 %v4518, %v4510
        %v5551 = vpack.c.b16 %v4519, %v4511
        %v5552 = vpack.c.b16 %v4520, %v4512
        %v5553 = vpack.c.b16 %v4529, %v4521
        %v5554 = vpack.c.b16 %v4530, %v4522
        %v5555 = vpack.c.b16 %v4531, %v4523
        %v5556 = vpack.c.b16 %v4532, %v4524
        %v5557 = vpack.c.b16 %v4533, %v4525
        %v5558 = vpack.c.b16 %v4534, %v4526
        %v5559 = vpack.c.b16 %v4535, %v4527
        %v5560 = vpack.c.b16 %v4536, %v4528
        %6585 = vmatprep.subr.bf16.mxu0 %v4594
        %6586 = vmatpush1.bf16.msra.mxu0 %v4593
        %6587 = vmatprep.subr.bf16.mxu0 %v4586
        %6588 = vmatpush1.bf16.msra.mxu0 %v4585
        %6589 = vmatprep.subr.bf16.mxu0 %v4578
        %6590 = vmatpush1.bf16.msra.mxu0 %v4577
        %6591 = vmatprep.subr.bf16.mxu0 %v4570
        %6592 = vmatpush1.bf16.msra.mxu0 %v4569
        %6593 = vmatprep.subr.bf16.mxu0 %v4562
        %6594 = vmatpush1.bf16.msra.mxu0 %v4561
        %6595 = vmatprep.subr.bf16.mxu0 %v4554
        %6596 = vmatpush1.bf16.msra.mxu0 %v4553
        %6597 = vmatprep.subr.bf16.mxu0 %v4546
        %6598 = vmatpush1.bf16.msra.mxu0 %v4545
        %6599 = vmatprep.subr.bf16.mxu0 %v4538
        %6600 = vmatpush1.bf16.msra.mxu0 %v4537
        %6601 = vmatprep.subr.bf16.mxu0 %v4658
        %6602 = vmatpush2.bf16.msra.mxu0 %v4657
        %6603 = vmatprep.subr.bf16.mxu0 %v4650
        %6604 = vmatpush2.bf16.msra.mxu0 %v4649
        %6605 = vmatprep.subr.bf16.mxu0 %v4642
        %6606 = vmatpush2.bf16.msra.mxu0 %v4641
        %6607 = vmatprep.subr.bf16.mxu0 %v4634
        %6608 = vmatpush2.bf16.msra.mxu0 %v4633
        %6609 = vmatprep.subr.bf16.mxu0 %v4626
        %6610 = vmatpush2.bf16.msra.mxu0 %v4625
        %6611 = vmatprep.subr.bf16.mxu0 %v4618
        %6612 = vmatpush2.bf16.msra.mxu0 %v4617
        %6613 = vmatprep.subr.bf16.mxu0 %v4610
        %6614 = vmatpush2.bf16.msra.mxu0 %v4609
        %6615 = vmatprep.subr.bf16.mxu0 %v4602
        %6616 = vmatpush2.bf16.msra.mxu0 %v4601
        %6617 = vmatprep.mubr.bf16.mxu0 %v1388
        %6618 = vmatmul.mubr.bf16.gmra.mxu0 %v1374
        %v6619 = vpop.f32.mrf.mxu0
        %v6620 = vadd.f32 0.0, %v6619
        %v6621 = vpop.f32.mrf.mxu0
        %v6622 = vadd.f32 0.0, %v6621
        %v6623 = vpop.f32.mrf.mxu0
        %v6624 = vpop.f32.mrf.mxu0
        %6625 = vdwg.mxu0
        %6626 = vmatprep.subr.bf16.mxu0 %v4722
        %6627 = vmatpush1.bf16.msra.mxu0 %v4721
        %6628 = vmatprep.subr.bf16.mxu0 %v4714
        %6629 = vmatpush1.bf16.msra.mxu0 %v4713
        %6630 = vmatprep.subr.bf16.mxu0 %v4706
        %6631 = vmatpush1.bf16.msra.mxu0 %v4705
        %6632 = vmatprep.subr.bf16.mxu0 %v4698
        %6633 = vmatpush1.bf16.msra.mxu0 %v4697
        %6634 = vmatprep.subr.bf16.mxu0 %v4690
        %6635 = vmatpush1.bf16.msra.mxu0 %v4689
        %6636 = vmatprep.subr.bf16.mxu0 %v4682
        %6637 = vmatpush1.bf16.msra.mxu0 %v4681
        %6638 = vmatprep.subr.bf16.mxu0 %v4674
        %6639 = vmatpush1.bf16.msra.mxu0 %v4673
        %6640 = vmatprep.subr.bf16.mxu0 %v4666
        %6641 = vmatpush1.bf16.msra.mxu0 %v4665
        %6642 = vmatprep.subr.bf16.mxu0 %v4786
        %6643 = vmatpush2.bf16.msra.mxu0 %v4785
        %6644 = vmatprep.subr.bf16.mxu0 %v4778
        %6645 = vmatpush2.bf16.msra.mxu0 %v4777
        %6646 = vmatprep.subr.bf16.mxu0 %v4770
        %6647 = vmatpush2.bf16.msra.mxu0 %v4769
        %6648 = vmatprep.subr.bf16.mxu0 %v4762
        %6649 = vmatpush2.bf16.msra.mxu0 %v4761
        %6650 = vmatprep.subr.bf16.mxu0 %v4754
        %6651 = vmatpush2.bf16.msra.mxu0 %v4753
        %6652 = vmatprep.subr.bf16.mxu0 %v4746
        %6653 = vmatpush2.bf16.msra.mxu0 %v4745
        %6654 = vmatprep.subr.bf16.mxu0 %v4738
        %6655 = vmatpush2.bf16.msra.mxu0 %v4737
        %6656 = vmatprep.subr.bf16.mxu0 %v4730
        %6657 = vmatpush2.bf16.msra.mxu0 %v4729
        %6658 = vmatprep.mubr.bf16.mxu0 %v1398
        %6659 = vmatmul.mubr.bf16.gmra.mxu0 %v1396
        %v6660 = vpop.f32.mrf.mxu0
        %v6661 = vadd.f32 %v6620, %v6660
        %v6662 = vpop.f32.mrf.mxu0
        %v6663 = vadd.f32 %v6622, %v6662
        %v6664 = vpop.f32.mrf.mxu0
        %v6665 = vpop.f32.mrf.mxu0
        %6666 = vdwg.mxu0
        %6667 = vmatprep.subr.bf16.mxu0 %v4850
        %6668 = vmatpush1.bf16.msra.mxu0 %v4849
        %6669 = vmatprep.subr.bf16.mxu0 %v4842
        %6670 = vmatpush1.bf16.msra.mxu0 %v4841
        %6671 = vmatprep.subr.bf16.mxu0 %v4834
        %6672 = vmatpush1.bf16.msra.mxu0 %v4833
        %6673 = vmatprep.subr.bf16.mxu0 %v4826
        %6674 = vmatpush1.bf16.msra.mxu0 %v4825
        %6675 = vmatprep.subr.bf16.mxu0 %v4818
        %6676 = vmatpush1.bf16.msra.mxu0 %v4817
        %6677 = vmatprep.subr.bf16.mxu0 %v4810
        %6678 = vmatpush1.bf16.msra.mxu0 %v4809
        %6679 = vmatprep.subr.bf16.mxu0 %v4802
        %6680 = vmatpush1.bf16.msra.mxu0 %v4801
        %6681 = vmatprep.subr.bf16.mxu0 %v4794
        %6682 = vmatpush1.bf16.msra.mxu0 %v4793
        %6683 = vmatprep.subr.bf16.mxu0 %v4914
        %6684 = vmatpush2.bf16.msra.mxu0 %v4913
        %6685 = vmatprep.subr.bf16.mxu0 %v4906
        %6686 = vmatpush2.bf16.msra.mxu0 %v4905
        %6687 = vmatprep.subr.bf16.mxu0 %v4898
        %6688 = vmatpush2.bf16.msra.mxu0 %v4897
        %6689 = vmatprep.subr.bf16.mxu0 %v4890
        %6690 = vmatpush2.bf16.msra.mxu0 %v4889
        %6691 = vmatprep.subr.bf16.mxu0 %v4882
        %6692 = vmatpush2.bf16.msra.mxu0 %v4881
        %6693 = vmatprep.subr.bf16.mxu0 %v4874
        %6694 = vmatpush2.bf16.msra.mxu0 %v4873
        %6695 = vmatprep.subr.bf16.mxu0 %v4866
        %6696 = vmatpush2.bf16.msra.mxu0 %v4865
        %6697 = vmatprep.subr.bf16.mxu0 %v4858
        %6698 = vmatpush2.bf16.msra.mxu0 %v4857
        %6699 = vmatprep.mubr.bf16.mxu0 %v1395
        %6700 = vmatmul.mubr.bf16.gmra.mxu0 %v1381
        %v6701 = vpop.f32.mrf.mxu0
        %v6702 = vadd.f32 %v6661, %v6701
        %v6703 = vpop.f32.mrf.mxu0
        %v6704 = vadd.f32 %v6663, %v6703
        %v6705 = vpop.f32.mrf.mxu0
        %v6706 = vpop.f32.mrf.mxu0
        %6707 = vdwg.mxu0
        %6708 = vmatprep.subr.bf16.mxu0 %v4978
        %6709 = vmatpush1.bf16.msra.mxu0 %v4977
        %6710 = vmatprep.subr.bf16.mxu0 %v4970
        %6711 = vmatpush1.bf16.msra.mxu0 %v4969
        %6712 = vmatprep.subr.bf16.mxu0 %v4962
        %6713 = vmatpush1.bf16.msra.mxu0 %v4961
        %6714 = vmatprep.subr.bf16.mxu0 %v4954
        %6715 = vmatpush1.bf16.msra.mxu0 %v4953
        %6716 = vmatprep.subr.bf16.mxu0 %v4946
        %6717 = vmatpush1.bf16.msra.mxu0 %v4945
        %6718 = vmatprep.subr.bf16.mxu0 %v4938
        %6719 = vmatpush1.bf16.msra.mxu0 %v4937
        %6720 = vmatprep.subr.bf16.mxu0 %v4930
        %6721 = vmatpush1.bf16.msra.mxu0 %v4929
        %6722 = vmatprep.subr.bf16.mxu0 %v4922
        %6723 = vmatpush1.bf16.msra.mxu0 %v4921
        %6724 = vmatprep.subr.bf16.mxu0 %v5042
        %6725 = vmatpush2.bf16.msra.mxu0 %v5041
        %6726 = vmatprep.subr.bf16.mxu0 %v5034
        %6727 = vmatpush2.bf16.msra.mxu0 %v5033
        %6728 = vmatprep.subr.bf16.mxu0 %v5026
        %6729 = vmatpush2.bf16.msra.mxu0 %v5025
        %6730 = vmatprep.subr.bf16.mxu0 %v5018
        %6731 = vmatpush2.bf16.msra.mxu0 %v5017
        %6732 = vmatprep.subr.bf16.mxu0 %v5010
        %6733 = vmatpush2.bf16.msra.mxu0 %v5009
        %6734 = vmatprep.subr.bf16.mxu0 %v5002
        %6735 = vmatpush2.bf16.msra.mxu0 %v5001
        %6736 = vmatprep.subr.bf16.mxu0 %v4994
        %6737 = vmatpush2.bf16.msra.mxu0 %v4993
        %6738 = vmatprep.subr.bf16.mxu0 %v4986
        %6739 = vmatpush2.bf16.msra.mxu0 %v4985
        %6740 = vmatprep.mubr.bf16.mxu0 %v1399
        %6741 = vmatmul.mubr.bf16.gmra.mxu0 %v1397
        %v6742 = vpop.f32.mrf.mxu0
        %v6743 = vadd.f32 %v6702, %v6742
        %v6744 = vpop.f32.mrf.mxu0
        %v6745 = vadd.f32 %v6704, %v6744
        %v6746 = vpop.f32.mrf.mxu0
        %v6747 = vpop.f32.mrf.mxu0
        %6748 = vdwg.mxu0
        %6749 = vmatprep.subr.bf16.mxu0 %v5106
        %6750 = vmatpush1.bf16.msra.mxu0 %v5105
        %6751 = vmatprep.subr.bf16.mxu0 %v5098
        %6752 = vmatpush1.bf16.msra.mxu0 %v5097
        %6753 = vmatprep.subr.bf16.mxu0 %v5090
        %6754 = vmatpush1.bf16.msra.mxu0 %v5089
        %6755 = vmatprep.subr.bf16.mxu0 %v5082
        %6756 = vmatpush1.bf16.msra.mxu0 %v5081
        %6757 = vmatprep.subr.bf16.mxu0 %v5074
        %6758 = vmatpush1.bf16.msra.mxu0 %v5073
        %6759 = vmatprep.subr.bf16.mxu0 %v5066
        %6760 = vmatpush1.bf16.msra.mxu0 %v5065
        %6761 = vmatprep.subr.bf16.mxu0 %v5058
        %6762 = vmatpush1.bf16.msra.mxu0 %v5057
        %6763 = vmatprep.subr.bf16.mxu0 %v5050
        %6764 = vmatpush1.bf16.msra.mxu0 %v5049
        %6765 = vmatprep.subr.bf16.mxu0 %v5170
        %6766 = vmatpush2.bf16.msra.mxu0 %v5169
        %6767 = vmatprep.subr.bf16.mxu0 %v5162
        %6768 = vmatpush2.bf16.msra.mxu0 %v5161
        %6769 = vmatprep.subr.bf16.mxu0 %v5154
        %6770 = vmatpush2.bf16.msra.mxu0 %v5153
        %6771 = vmatprep.subr.bf16.mxu0 %v5146
        %6772 = vmatpush2.bf16.msra.mxu0 %v5145
        %6773 = vmatprep.subr.bf16.mxu0 %v5138
        %6774 = vmatpush2.bf16.msra.mxu0 %v5137
        %6775 = vmatprep.subr.bf16.mxu0 %v5130
        %6776 = vmatpush2.bf16.msra.mxu0 %v5129
        %6777 = vmatprep.subr.bf16.mxu0 %v5122
        %6778 = vmatpush2.bf16.msra.mxu0 %v5121
        %6779 = vmatprep.subr.bf16.mxu0 %v5114
        %6780 = vmatpush2.bf16.msra.mxu0 %v5113
        %6781 = vmatprep.mubr.bf16.mxu0 %v1437
        %6782 = vmatmul.mubr.bf16.gmra.mxu0 %v1423
        %v6783 = vpop.f32.mrf.mxu0
        %v6784 = vadd.f32 %v6743, %v6783
        %v6785 = vpop.f32.mrf.mxu0
        %v6786 = vadd.f32 %v6745, %v6785
        %v6787 = vpop.f32.mrf.mxu0
        %v6788 = vpop.f32.mrf.mxu0
        %6789 = vdwg.mxu0
        %6790 = vmatprep.subr.bf16.mxu0 %v5234
        %6791 = vmatpush1.bf16.msra.mxu0 %v5233
        %6792 = vmatprep.subr.bf16.mxu0 %v5226
        %6793 = vmatpush1.bf16.msra.mxu0 %v5225
        %6794 = vmatprep.subr.bf16.mxu0 %v5218
        %6795 = vmatpush1.bf16.msra.mxu0 %v5217
        %6796 = vmatprep.subr.bf16.mxu0 %v5210
        %6797 = vmatpush1.bf16.msra.mxu0 %v5209
        %6798 = vmatprep.subr.bf16.mxu0 %v5202
        %6799 = vmatpush1.bf16.msra.mxu0 %v5201
        %6800 = vmatprep.subr.bf16.mxu0 %v5194
        %6801 = vmatpush1.bf16.msra.mxu0 %v5193
        %6802 = vmatprep.subr.bf16.mxu0 %v5186
        %6803 = vmatpush1.bf16.msra.mxu0 %v5185
        %6804 = vmatprep.subr.bf16.mxu0 %v5178
        %6805 = vmatpush1.bf16.msra.mxu0 %v5177
        %6806 = vmatprep.subr.bf16.mxu0 %v5298
        %6807 = vmatpush2.bf16.msra.mxu0 %v5297
        %6808 = vmatprep.subr.bf16.mxu0 %v5290
        %6809 = vmatpush2.bf16.msra.mxu0 %v5289
        %6810 = vmatprep.subr.bf16.mxu0 %v5282
        %6811 = vmatpush2.bf16.msra.mxu0 %v5281
        %6812 = vmatprep.subr.bf16.mxu0 %v5274
        %6813 = vmatpush2.bf16.msra.mxu0 %v5273
        %6814 = vmatprep.subr.bf16.mxu0 %v5266
        %6815 = vmatpush2.bf16.msra.mxu0 %v5265
        %6816 = vmatprep.subr.bf16.mxu0 %v5258
        %6817 = vmatpush2.bf16.msra.mxu0 %v5257
        %6818 = vmatprep.subr.bf16.mxu0 %v5250
        %6819 = vmatpush2.bf16.msra.mxu0 %v5249
        %6820 = vmatprep.subr.bf16.mxu0 %v5242
        %6821 = vmatpush2.bf16.msra.mxu0 %v5241
        %6822 = vmatprep.mubr.bf16.mxu0 %v1447
        %6823 = vmatmul.mubr.bf16.gmra.mxu0 %v1445
        %v6824 = vpop.f32.mrf.mxu0
        %v6825 = vadd.f32 %v6784, %v6824
        %v6826 = vpop.f32.mrf.mxu0
        %v6827 = vadd.f32 %v6786, %v6826
        %v6828 = vpop.f32.mrf.mxu0
        %v6829 = vpop.f32.mrf.mxu0
        %6830 = vdwg.mxu0
        %6831 = vmatprep.subr.bf16.mxu0 %v5362
        %6832 = vmatpush1.bf16.msra.mxu0 %v5361
        %6833 = vmatprep.subr.bf16.mxu0 %v5354
        %6834 = vmatpush1.bf16.msra.mxu0 %v5353
        %6835 = vmatprep.subr.bf16.mxu0 %v5346
        %6836 = vmatpush1.bf16.msra.mxu0 %v5345
        %6837 = vmatprep.subr.bf16.mxu0 %v5338
        %6838 = vmatpush1.bf16.msra.mxu0 %v5337
        %6839 = vmatprep.subr.bf16.mxu0 %v5330
        %6840 = vmatpush1.bf16.msra.mxu0 %v5329
        %6841 = vmatprep.subr.bf16.mxu0 %v5322
        %6842 = vmatpush1.bf16.msra.mxu0 %v5321
        %6843 = vmatprep.subr.bf16.mxu0 %v5314
        %6844 = vmatpush1.bf16.msra.mxu0 %v5313
        %6845 = vmatprep.subr.bf16.mxu0 %v5306
        %6846 = vmatpush1.bf16.msra.mxu0 %v5305
        %6847 = vmatprep.subr.bf16.mxu0 %v5426
        %6848 = vmatpush2.bf16.msra.mxu0 %v5425
        %6849 = vmatprep.subr.bf16.mxu0 %v5418
        %6850 = vmatpush2.bf16.msra.mxu0 %v5417
        %6851 = vmatprep.subr.bf16.mxu0 %v5410
        %6852 = vmatpush2.bf16.msra.mxu0 %v5409
        %6853 = vmatprep.subr.bf16.mxu0 %v5402
        %6854 = vmatpush2.bf16.msra.mxu0 %v5401
        %6855 = vmatprep.subr.bf16.mxu0 %v5394
        %6856 = vmatpush2.bf16.msra.mxu0 %v5393
        %6857 = vmatprep.subr.bf16.mxu0 %v5386
        %6858 = vmatpush2.bf16.msra.mxu0 %v5385
        %6859 = vmatprep.subr.bf16.mxu0 %v5378
        %6860 = vmatpush2.bf16.msra.mxu0 %v5377
        %6861 = vmatprep.subr.bf16.mxu0 %v5370
        %6862 = vmatpush2.bf16.msra.mxu0 %v5369
        %6863 = vmatprep.mubr.bf16.mxu0 %v1444
        %6864 = vmatmul.mubr.bf16.gmra.mxu0 %v1430
        %v6865 = vpop.f32.mrf.mxu0
        %v6866 = vadd.f32 %v6825, %v6865
        %v6867 = vpop.f32.mrf.mxu0
        %v6868 = vadd.f32 %v6827, %v6867
        %v6869 = vpop.f32.mrf.mxu0
        %v6870 = vpop.f32.mrf.mxu0
        %6871 = vdwg.mxu0
        %6872 = vmatprep.subr.bf16.mxu0 %v5490
        %6873 = vmatpush1.bf16.msra.mxu0 %v5489
        %6874 = vmatprep.subr.bf16.mxu0 %v5482
        %6875 = vmatpush1.bf16.msra.mxu0 %v5481
        %6876 = vmatprep.subr.bf16.mxu0 %v5474
        %6877 = vmatpush1.bf16.msra.mxu0 %v5473
        %6878 = vmatprep.subr.bf16.mxu0 %v5466
        %6879 = vmatpush1.bf16.msra.mxu0 %v5465
        %6880 = vmatprep.subr.bf16.mxu0 %v5458
        %6881 = vmatpush1.bf16.msra.mxu0 %v5457
        %6882 = vmatprep.subr.bf16.mxu0 %v5450
        %6883 = vmatpush1.bf16.msra.mxu0 %v5449
        %6884 = vmatprep.subr.bf16.mxu0 %v5442
        %6885 = vmatpush1.bf16.msra.mxu0 %v5441
        %6886 = vmatprep.subr.bf16.mxu0 %v5434
        %6887 = vmatpush1.bf16.msra.mxu0 %v5433
        %6888 = vmatprep.subr.bf16.mxu0 %v5554
        %6889 = vmatpush2.bf16.msra.mxu0 %v5553
        %6890 = vmatprep.subr.bf16.mxu0 %v5546
        %6891 = vmatpush2.bf16.msra.mxu0 %v5545
        %6892 = vmatprep.subr.bf16.mxu0 %v5538
        %6893 = vmatpush2.bf16.msra.mxu0 %v5537
        %6894 = vmatprep.subr.bf16.mxu0 %v5530
        %6895 = vmatpush2.bf16.msra.mxu0 %v5529
        %6896 = vmatprep.subr.bf16.mxu0 %v5522
        %6897 = vmatpush2.bf16.msra.mxu0 %v5521
        %6898 = vmatprep.subr.bf16.mxu0 %v5514
        %6899 = vmatpush2.bf16.msra.mxu0 %v5513
        %6900 = vmatprep.subr.bf16.mxu0 %v5506
        %6901 = vmatpush2.bf16.msra.mxu0 %v5505
        %6902 = vmatprep.subr.bf16.mxu0 %v5498
        %6903 = vmatpush2.bf16.msra.mxu0 %v5497
        %6904 = vmatprep.mubr.bf16.mxu0 %v1448
        %6905 = vmatmul.mubr.bf16.gmra.mxu0 %v1446
        %v6906 = vpop.f32.mrf.mxu0
        %v6907 = vadd.f32 %v6866, %v6906
        %v6908 = vpop.f32.mrf.mxu0
        %v6909 = vadd.f32 %v6868, %v6908
        %v6910 = vpop.f32.mrf.mxu0
        %v6911 = vpop.f32.mrf.mxu0
        %6912 = vdwg.mxu0
        %6913 = vmatprep.subr.bf16.mxu0 %v4596
        %6914 = vmatpush1.bf16.msra.mxu0 %v4595
        %6915 = vmatprep.subr.bf16.mxu0 %v4588
        %6916 = vmatpush1.bf16.msra.mxu0 %v4587
        %6917 = vmatprep.subr.bf16.mxu0 %v4580
        %6918 = vmatpush1.bf16.msra.mxu0 %v4579
        %6919 = vmatprep.subr.bf16.mxu0 %v4572
        %6920 = vmatpush1.bf16.msra.mxu0 %v4571
        %6921 = vmatprep.subr.bf16.mxu0 %v4564
        %6922 = vmatpush1.bf16.msra.mxu0 %v4563
        %6923 = vmatprep.subr.bf16.mxu0 %v4556
        %6924 = vmatpush1.bf16.msra.mxu0 %v4555
        %6925 = vmatprep.subr.bf16.mxu0 %v4548
        %6926 = vmatpush1.bf16.msra.mxu0 %v4547
        %6927 = vmatprep.subr.bf16.mxu0 %v4540
        %6928 = vmatpush1.bf16.msra.mxu0 %v4539
        %6929 = vmatprep.subr.bf16.mxu0 %v4660
        %6930 = vmatpush2.bf16.msra.mxu0 %v4659
        %6931 = vmatprep.subr.bf16.mxu0 %v4652
        %6932 = vmatpush2.bf16.msra.mxu0 %v4651
        %6933 = vmatprep.subr.bf16.mxu0 %v4644
        %6934 = vmatpush2.bf16.msra.mxu0 %v4643
        %6935 = vmatprep.subr.bf16.mxu0 %v4636
        %6936 = vmatpush2.bf16.msra.mxu0 %v4635
        %6937 = vmatprep.subr.bf16.mxu0 %v4628
        %6938 = vmatpush2.bf16.msra.mxu0 %v4627
        %6939 = vmatprep.subr.bf16.mxu0 %v4620
        %6940 = vmatpush2.bf16.msra.mxu0 %v4619
        %6941 = vmatprep.subr.bf16.mxu0 %v4612
        %6942 = vmatpush2.bf16.msra.mxu0 %v4611
        %6943 = vmatprep.subr.bf16.mxu0 %v4604
        %6944 = vmatpush2.bf16.msra.mxu0 %v4603
        %6945 = vmatprep.mubr.bf16.mxu0 %v1388
        %6946 = vmatmul.mubr.bf16.gmra.mxu0 %v1374
        %v6947 = vpop.f32.mrf.mxu0
        %v6948 = vadd.f32 0.0, %v6947
        %v6949 = vpop.f32.mrf.mxu0
        %v6950 = vadd.f32 0.0, %v6949
        %v6951 = vpop.f32.mrf.mxu0
        %v6952 = vpop.f32.mrf.mxu0
        %6953 = vdwg.mxu0
        %6954 = vmatprep.subr.bf16.mxu0 %v4724
        %6955 = vmatpush1.bf16.msra.mxu0 %v4723
        %6956 = vmatprep.subr.bf16.mxu0 %v4716
        %6957 = vmatpush1.bf16.msra.mxu0 %v4715
        %6958 = vmatprep.subr.bf16.mxu0 %v4708
        %6959 = vmatpush1.bf16.msra.mxu0 %v4707
        %6960 = vmatprep.subr.bf16.mxu0 %v4700
        %6961 = vmatpush1.bf16.msra.mxu0 %v4699
        %6962 = vmatprep.subr.bf16.mxu0 %v4692
        %6963 = vmatpush1.bf16.msra.mxu0 %v4691
        %6964 = vmatprep.subr.bf16.mxu0 %v4684
        %6965 = vmatpush1.bf16.msra.mxu0 %v4683
        %6966 = vmatprep.subr.bf16.mxu0 %v4676
        %6967 = vmatpush1.bf16.msra.mxu0 %v4675
        %6968 = vmatprep.subr.bf16.mxu0 %v4668
        %6969 = vmatpush1.bf16.msra.mxu0 %v4667
        %6970 = vmatprep.subr.bf16.mxu0 %v4788
        %6971 = vmatpush2.bf16.msra.mxu0 %v4787
        %6972 = vmatprep.subr.bf16.mxu0 %v4780
        %6973 = vmatpush2.bf16.msra.mxu0 %v4779
        %6974 = vmatprep.subr.bf16.mxu0 %v4772
        %6975 = vmatpush2.bf16.msra.mxu0 %v4771
        %6976 = vmatprep.subr.bf16.mxu0 %v4764
        %6977 = vmatpush2.bf16.msra.mxu0 %v4763
        %6978 = vmatprep.subr.bf16.mxu0 %v4756
        %6979 = vmatpush2.bf16.msra.mxu0 %v4755
        %6980 = vmatprep.subr.bf16.mxu0 %v4748
        %6981 = vmatpush2.bf16.msra.mxu0 %v4747
        %6982 = vmatprep.subr.bf16.mxu0 %v4740
        %6983 = vmatpush2.bf16.msra.mxu0 %v4739
        %6984 = vmatprep.subr.bf16.mxu0 %v4732
        %6985 = vmatpush2.bf16.msra.mxu0 %v4731
        %6986 = vmatprep.mubr.bf16.mxu0 %v1398
        %6987 = vmatmul.mubr.bf16.gmra.mxu0 %v1396
        %v6988 = vpop.f32.mrf.mxu0
        %v6989 = vadd.f32 %v6948, %v6988
        %v6990 = vpop.f32.mrf.mxu0
        %v6991 = vadd.f32 %v6950, %v6990
        %v6992 = vpop.f32.mrf.mxu0
        %v6993 = vpop.f32.mrf.mxu0
        %6994 = vdwg.mxu0
        %6995 = vmatprep.subr.bf16.mxu0 %v4852
        %6996 = vmatpush1.bf16.msra.mxu0 %v4851
        %6997 = vmatprep.subr.bf16.mxu0 %v4844
        %6998 = vmatpush1.bf16.msra.mxu0 %v4843
        %6999 = vmatprep.subr.bf16.mxu0 %v4836
        %7000 = vmatpush1.bf16.msra.mxu0 %v4835
        %7001 = vmatprep.subr.bf16.mxu0 %v4828
        %7002 = vmatpush1.bf16.msra.mxu0 %v4827
        %7003 = vmatprep.subr.bf16.mxu0 %v4820
        %7004 = vmatpush1.bf16.msra.mxu0 %v4819
        %7005 = vmatprep.subr.bf16.mxu0 %v4812
        %7006 = vmatpush1.bf16.msra.mxu0 %v4811
        %7007 = vmatprep.subr.bf16.mxu0 %v4804
        %7008 = vmatpush1.bf16.msra.mxu0 %v4803
        %7009 = vmatprep.subr.bf16.mxu0 %v4796
        %7010 = vmatpush1.bf16.msra.mxu0 %v4795
        %7011 = vmatprep.subr.bf16.mxu0 %v4916
        %7012 = vmatpush2.bf16.msra.mxu0 %v4915
        %7013 = vmatprep.subr.bf16.mxu0 %v4908
        %7014 = vmatpush2.bf16.msra.mxu0 %v4907
        %7015 = vmatprep.subr.bf16.mxu0 %v4900
        %7016 = vmatpush2.bf16.msra.mxu0 %v4899
        %7017 = vmatprep.subr.bf16.mxu0 %v4892
        %7018 = vmatpush2.bf16.msra.mxu0 %v4891
        %7019 = vmatprep.subr.bf16.mxu0 %v4884
        %7020 = vmatpush2.bf16.msra.mxu0 %v4883
        %7021 = vmatprep.subr.bf16.mxu0 %v4876
        %7022 = vmatpush2.bf16.msra.mxu0 %v4875
        %7023 = vmatprep.subr.bf16.mxu0 %v4868
        %7024 = vmatpush2.bf16.msra.mxu0 %v4867
        %7025 = vmatprep.subr.bf16.mxu0 %v4860
        %7026 = vmatpush2.bf16.msra.mxu0 %v4859
        %7027 = vmatprep.mubr.bf16.mxu0 %v1395
        %7028 = vmatmul.mubr.bf16.gmra.mxu0 %v1381
        %v7029 = vpop.f32.mrf.mxu0
        %v7030 = vadd.f32 %v6989, %v7029
        %v7031 = vpop.f32.mrf.mxu0
        %v7032 = vadd.f32 %v6991, %v7031
        %v7033 = vpop.f32.mrf.mxu0
        %v7034 = vpop.f32.mrf.mxu0
        %7035 = vdwg.mxu0
        %7036 = vmatprep.subr.bf16.mxu0 %v4980
        %7037 = vmatpush1.bf16.msra.mxu0 %v4979
        %7038 = vmatprep.subr.bf16.mxu0 %v4972
        %7039 = vmatpush1.bf16.msra.mxu0 %v4971
        %7040 = vmatprep.subr.bf16.mxu0 %v4964
        %7041 = vmatpush1.bf16.msra.mxu0 %v4963
        %7042 = vmatprep.subr.bf16.mxu0 %v4956
        %7043 = vmatpush1.bf16.msra.mxu0 %v4955
        %7044 = vmatprep.subr.bf16.mxu0 %v4948
        %7045 = vmatpush1.bf16.msra.mxu0 %v4947
        %7046 = vmatprep.subr.bf16.mxu0 %v4940
        %7047 = vmatpush1.bf16.msra.mxu0 %v4939
        %7048 = vmatprep.subr.bf16.mxu0 %v4932
        %7049 = vmatpush1.bf16.msra.mxu0 %v4931
        %7050 = vmatprep.subr.bf16.mxu0 %v4924
        %7051 = vmatpush1.bf16.msra.mxu0 %v4923
        %7052 = vmatprep.subr.bf16.mxu0 %v5044
        %7053 = vmatpush2.bf16.msra.mxu0 %v5043
        %7054 = vmatprep.subr.bf16.mxu0 %v5036
        %7055 = vmatpush2.bf16.msra.mxu0 %v5035
        %7056 = vmatprep.subr.bf16.mxu0 %v5028
        %7057 = vmatpush2.bf16.msra.mxu0 %v5027
        %7058 = vmatprep.subr.bf16.mxu0 %v5020
        %7059 = vmatpush2.bf16.msra.mxu0 %v5019
        %7060 = vmatprep.subr.bf16.mxu0 %v5012
        %7061 = vmatpush2.bf16.msra.mxu0 %v5011
        %7062 = vmatprep.subr.bf16.mxu0 %v5004
        %7063 = vmatpush2.bf16.msra.mxu0 %v5003
        %7064 = vmatprep.subr.bf16.mxu0 %v4996
        %7065 = vmatpush2.bf16.msra.mxu0 %v4995
        %7066 = vmatprep.subr.bf16.mxu0 %v4988
        %7067 = vmatpush2.bf16.msra.mxu0 %v4987
        %7068 = vmatprep.mubr.bf16.mxu0 %v1399
        %7069 = vmatmul.mubr.bf16.gmra.mxu0 %v1397
        %v7070 = vpop.f32.mrf.mxu0
        %v7071 = vadd.f32 %v7030, %v7070
        %v7072 = vpop.f32.mrf.mxu0
        %v7073 = vadd.f32 %v7032, %v7072
        %v7074 = vpop.f32.mrf.mxu0
        %v7075 = vpop.f32.mrf.mxu0
        %7076 = vdwg.mxu0
        %7077 = vmatprep.subr.bf16.mxu0 %v5108
        %7078 = vmatpush1.bf16.msra.mxu0 %v5107
        %7079 = vmatprep.subr.bf16.mxu0 %v5100
        %7080 = vmatpush1.bf16.msra.mxu0 %v5099
        %7081 = vmatprep.subr.bf16.mxu0 %v5092
        %7082 = vmatpush1.bf16.msra.mxu0 %v5091
        %7083 = vmatprep.subr.bf16.mxu0 %v5084
        %7084 = vmatpush1.bf16.msra.mxu0 %v5083
        %7085 = vmatprep.subr.bf16.mxu0 %v5076
        %7086 = vmatpush1.bf16.msra.mxu0 %v5075
        %7087 = vmatprep.subr.bf16.mxu0 %v5068
        %7088 = vmatpush1.bf16.msra.mxu0 %v5067
        %7089 = vmatprep.subr.bf16.mxu0 %v5060
        %7090 = vmatpush1.bf16.msra.mxu0 %v5059
        %7091 = vmatprep.subr.bf16.mxu0 %v5052
        %7092 = vmatpush1.bf16.msra.mxu0 %v5051
        %7093 = vmatprep.subr.bf16.mxu0 %v5172
        %7094 = vmatpush2.bf16.msra.mxu0 %v5171
        %7095 = vmatprep.subr.bf16.mxu0 %v5164
        %7096 = vmatpush2.bf16.msra.mxu0 %v5163
        %7097 = vmatprep.subr.bf16.mxu0 %v5156
        %7098 = vmatpush2.bf16.msra.mxu0 %v5155
        %7099 = vmatprep.subr.bf16.mxu0 %v5148
        %7100 = vmatpush2.bf16.msra.mxu0 %v5147
        %7101 = vmatprep.subr.bf16.mxu0 %v5140
        %7102 = vmatpush2.bf16.msra.mxu0 %v5139
        %7103 = vmatprep.subr.bf16.mxu0 %v5132
        %7104 = vmatpush2.bf16.msra.mxu0 %v5131
        %7105 = vmatprep.subr.bf16.mxu0 %v5124
        %7106 = vmatpush2.bf16.msra.mxu0 %v5123
        %7107 = vmatprep.subr.bf16.mxu0 %v5116
        %7108 = vmatpush2.bf16.msra.mxu0 %v5115
        %7109 = vmatprep.mubr.bf16.mxu0 %v1437
        %7110 = vmatmul.mubr.bf16.gmra.mxu0 %v1423
        %v7111 = vpop.f32.mrf.mxu0
        %v7112 = vadd.f32 %v7071, %v7111
        %v7113 = vpop.f32.mrf.mxu0
        %v7114 = vadd.f32 %v7073, %v7113
        %v7115 = vpop.f32.mrf.mxu0
        %v7116 = vpop.f32.mrf.mxu0
        %7117 = vdwg.mxu0
        %7118 = vmatprep.subr.bf16.mxu0 %v5236
        %7119 = vmatpush1.bf16.msra.mxu0 %v5235
        %7120 = vmatprep.subr.bf16.mxu0 %v5228
        %7121 = vmatpush1.bf16.msra.mxu0 %v5227
        %7122 = vmatprep.subr.bf16.mxu0 %v5220
        %7123 = vmatpush1.bf16.msra.mxu0 %v5219
        %7124 = vmatprep.subr.bf16.mxu0 %v5212
        %7125 = vmatpush1.bf16.msra.mxu0 %v5211
        %7126 = vmatprep.subr.bf16.mxu0 %v5204
        %7127 = vmatpush1.bf16.msra.mxu0 %v5203
        %7128 = vmatprep.subr.bf16.mxu0 %v5196
        %7129 = vmatpush1.bf16.msra.mxu0 %v5195
        %7130 = vmatprep.subr.bf16.mxu0 %v5188
        %7131 = vmatpush1.bf16.msra.mxu0 %v5187
        %7132 = vmatprep.subr.bf16.mxu0 %v5180
        %7133 = vmatpush1.bf16.msra.mxu0 %v5179
        %7134 = vmatprep.subr.bf16.mxu0 %v5300
        %7135 = vmatpush2.bf16.msra.mxu0 %v5299
        %7136 = vmatprep.subr.bf16.mxu0 %v5292
        %7137 = vmatpush2.bf16.msra.mxu0 %v5291
        %7138 = vmatprep.subr.bf16.mxu0 %v5284
        %7139 = vmatpush2.bf16.msra.mxu0 %v5283
        %7140 = vmatprep.subr.bf16.mxu0 %v5276
        %7141 = vmatpush2.bf16.msra.mxu0 %v5275
        %7142 = vmatprep.subr.bf16.mxu0 %v5268
        %7143 = vmatpush2.bf16.msra.mxu0 %v5267
        %7144 = vmatprep.subr.bf16.mxu0 %v5260
        %7145 = vmatpush2.bf16.msra.mxu0 %v5259
        %7146 = vmatprep.subr.bf16.mxu0 %v5252
        %7147 = vmatpush2.bf16.msra.mxu0 %v5251
        %7148 = vmatprep.subr.bf16.mxu0 %v5244
        %7149 = vmatpush2.bf16.msra.mxu0 %v5243
        %7150 = vmatprep.mubr.bf16.mxu0 %v1447
        %7151 = vmatmul.mubr.bf16.gmra.mxu0 %v1445
        %v7152 = vpop.f32.mrf.mxu0
        %v7153 = vadd.f32 %v7112, %v7152
        %v7154 = vpop.f32.mrf.mxu0
        %v7155 = vadd.f32 %v7114, %v7154
        %v7156 = vpop.f32.mrf.mxu0
        %v7157 = vpop.f32.mrf.mxu0
        %7158 = vdwg.mxu0
        %7159 = vmatprep.subr.bf16.mxu0 %v5364
        %7160 = vmatpush1.bf16.msra.mxu0 %v5363
        %7161 = vmatprep.subr.bf16.mxu0 %v5356
        %7162 = vmatpush1.bf16.msra.mxu0 %v5355
        %7163 = vmatprep.subr.bf16.mxu0 %v5348
        %7164 = vmatpush1.bf16.msra.mxu0 %v5347
        %7165 = vmatprep.subr.bf16.mxu0 %v5340
        %7166 = vmatpush1.bf16.msra.mxu0 %v5339
        %7167 = vmatprep.subr.bf16.mxu0 %v5332
        %7168 = vmatpush1.bf16.msra.mxu0 %v5331
        %7169 = vmatprep.subr.bf16.mxu0 %v5324
        %7170 = vmatpush1.bf16.msra.mxu0 %v5323
        %7171 = vmatprep.subr.bf16.mxu0 %v5316
        %7172 = vmatpush1.bf16.msra.mxu0 %v5315
        %7173 = vmatprep.subr.bf16.mxu0 %v5308
        %7174 = vmatpush1.bf16.msra.mxu0 %v5307
        %7175 = vmatprep.subr.bf16.mxu0 %v5428
        %7176 = vmatpush2.bf16.msra.mxu0 %v5427
        %7177 = vmatprep.subr.bf16.mxu0 %v5420
        %7178 = vmatpush2.bf16.msra.mxu0 %v5419
        %7179 = vmatprep.subr.bf16.mxu0 %v5412
        %7180 = vmatpush2.bf16.msra.mxu0 %v5411
        %7181 = vmatprep.subr.bf16.mxu0 %v5404
        %7182 = vmatpush2.bf16.msra.mxu0 %v5403
        %7183 = vmatprep.subr.bf16.mxu0 %v5396
        %7184 = vmatpush2.bf16.msra.mxu0 %v5395
        %7185 = vmatprep.subr.bf16.mxu0 %v5388
        %7186 = vmatpush2.bf16.msra.mxu0 %v5387
        %7187 = vmatprep.subr.bf16.mxu0 %v5380
        %7188 = vmatpush2.bf16.msra.mxu0 %v5379
        %7189 = vmatprep.subr.bf16.mxu0 %v5372
        %7190 = vmatpush2.bf16.msra.mxu0 %v5371
        %7191 = vmatprep.mubr.bf16.mxu0 %v1444
        %7192 = vmatmul.mubr.bf16.gmra.mxu0 %v1430
        %v7193 = vpop.f32.mrf.mxu0
        %v7194 = vadd.f32 %v7153, %v7193
        %v7195 = vpop.f32.mrf.mxu0
        %v7196 = vadd.f32 %v7155, %v7195
        %v7197 = vpop.f32.mrf.mxu0
        %v7198 = vpop.f32.mrf.mxu0
        %7199 = vdwg.mxu0
        %7200 = vmatprep.subr.bf16.mxu0 %v5492
        %7201 = vmatpush1.bf16.msra.mxu0 %v5491
        %7202 = vmatprep.subr.bf16.mxu0 %v5484
        %7203 = vmatpush1.bf16.msra.mxu0 %v5483
        %7204 = vmatprep.subr.bf16.mxu0 %v5476
        %7205 = vmatpush1.bf16.msra.mxu0 %v5475
        %7206 = vmatprep.subr.bf16.mxu0 %v5468
        %7207 = vmatpush1.bf16.msra.mxu0 %v5467
        %7208 = vmatprep.subr.bf16.mxu0 %v5460
        %7209 = vmatpush1.bf16.msra.mxu0 %v5459
        %7210 = vmatprep.subr.bf16.mxu0 %v5452
        %7211 = vmatpush1.bf16.msra.mxu0 %v5451
        %7212 = vmatprep.subr.bf16.mxu0 %v5444
        %7213 = vmatpush1.bf16.msra.mxu0 %v5443
        %7214 = vmatprep.subr.bf16.mxu0 %v5436
        %7215 = vmatpush1.bf16.msra.mxu0 %v5435
        %7216 = vmatprep.subr.bf16.mxu0 %v5556
        %7217 = vmatpush2.bf16.msra.mxu0 %v5555
        %7218 = vmatprep.subr.bf16.mxu0 %v5548
        %7219 = vmatpush2.bf16.msra.mxu0 %v5547
        %7220 = vmatprep.subr.bf16.mxu0 %v5540
        %7221 = vmatpush2.bf16.msra.mxu0 %v5539
        %7222 = vmatprep.subr.bf16.mxu0 %v5532
        %7223 = vmatpush2.bf16.msra.mxu0 %v5531
        %7224 = vmatprep.subr.bf16.mxu0 %v5524
        %7225 = vmatpush2.bf16.msra.mxu0 %v5523
        %7226 = vmatprep.subr.bf16.mxu0 %v5516
        %7227 = vmatpush2.bf16.msra.mxu0 %v5515
        %7228 = vmatprep.subr.bf16.mxu0 %v5508
        %7229 = vmatpush2.bf16.msra.mxu0 %v5507
        %7230 = vmatprep.subr.bf16.mxu0 %v5500
        %7231 = vmatpush2.bf16.msra.mxu0 %v5499
        %7232 = vmatprep.mubr.bf16.mxu0 %v1448
        %7233 = vmatmul.mubr.bf16.gmra.mxu0 %v1446
        %v7234 = vpop.f32.mrf.mxu0
        %v7235 = vadd.f32 %v7194, %v7234
        %v7236 = vpop.f32.mrf.mxu0
        %v7237 = vadd.f32 %v7196, %v7236
        %v7238 = vpop.f32.mrf.mxu0
        %v7239 = vpop.f32.mrf.mxu0
        %7240 = vdwg.mxu0
        %7241 = vmatprep.subr.bf16.mxu0 %v4598
        %7242 = vmatpush1.bf16.msra.mxu0 %v4597
        %7243 = vmatprep.subr.bf16.mxu0 %v4590
        %7244 = vmatpush1.bf16.msra.mxu0 %v4589
        %7245 = vmatprep.subr.bf16.mxu0 %v4582
        %7246 = vmatpush1.bf16.msra.mxu0 %v4581
        %7247 = vmatprep.subr.bf16.mxu0 %v4574
        %7248 = vmatpush1.bf16.msra.mxu0 %v4573
        %7249 = vmatprep.subr.bf16.mxu0 %v4566
        %7250 = vmatpush1.bf16.msra.mxu0 %v4565
        %7251 = vmatprep.subr.bf16.mxu0 %v4558
        %7252 = vmatpush1.bf16.msra.mxu0 %v4557
        %7253 = vmatprep.subr.bf16.mxu0 %v4550
        %7254 = vmatpush1.bf16.msra.mxu0 %v4549
        %7255 = vmatprep.subr.bf16.mxu0 %v4542
        %7256 = vmatpush1.bf16.msra.mxu0 %v4541
        %7257 = vmatprep.subr.bf16.mxu0 %v4662
        %7258 = vmatpush2.bf16.msra.mxu0 %v4661
        %7259 = vmatprep.subr.bf16.mxu0 %v4654
        %7260 = vmatpush2.bf16.msra.mxu0 %v4653
        %7261 = vmatprep.subr.bf16.mxu0 %v4646
        %7262 = vmatpush2.bf16.msra.mxu0 %v4645
        %7263 = vmatprep.subr.bf16.mxu0 %v4638
        %7264 = vmatpush2.bf16.msra.mxu0 %v4637
        %7265 = vmatprep.subr.bf16.mxu0 %v4630
        %7266 = vmatpush2.bf16.msra.mxu0 %v4629
        %7267 = vmatprep.subr.bf16.mxu0 %v4622
        %7268 = vmatpush2.bf16.msra.mxu0 %v4621
        %7269 = vmatprep.subr.bf16.mxu0 %v4614
        %7270 = vmatpush2.bf16.msra.mxu0 %v4613
        %7271 = vmatprep.subr.bf16.mxu0 %v4606
        %7272 = vmatpush2.bf16.msra.mxu0 %v4605
        %7273 = vmatprep.mubr.bf16.mxu0 %v1388
        %7274 = vmatmul.mubr.bf16.gmra.mxu0 %v1374
        %v7275 = vpop.f32.mrf.mxu0
        %v7276 = vadd.f32 0.0, %v7275
        %v7277 = vpop.f32.mrf.mxu0
        %v7278 = vadd.f32 0.0, %v7277
        %v7279 = vpop.f32.mrf.mxu0
        %v7280 = vpop.f32.mrf.mxu0
        %7281 = vdwg.mxu0
        %7282 = vmatprep.subr.bf16.mxu0 %v4726
        %7283 = vmatpush1.bf16.msra.mxu0 %v4725
        %7284 = vmatprep.subr.bf16.mxu0 %v4718
        %7285 = vmatpush1.bf16.msra.mxu0 %v4717
        %7286 = vmatprep.subr.bf16.mxu0 %v4710
        %7287 = vmatpush1.bf16.msra.mxu0 %v4709
        %7288 = vmatprep.subr.bf16.mxu0 %v4702
        %7289 = vmatpush1.bf16.msra.mxu0 %v4701
        %7290 = vmatprep.subr.bf16.mxu0 %v4694
        %7291 = vmatpush1.bf16.msra.mxu0 %v4693
        %7292 = vmatprep.subr.bf16.mxu0 %v4686
        %7293 = vmatpush1.bf16.msra.mxu0 %v4685
        %7294 = vmatprep.subr.bf16.mxu0 %v4678
        %7295 = vmatpush1.bf16.msra.mxu0 %v4677
        %7296 = vmatprep.subr.bf16.mxu0 %v4670
        %7297 = vmatpush1.bf16.msra.mxu0 %v4669
        %7298 = vmatprep.subr.bf16.mxu0 %v4790
        %7299 = vmatpush2.bf16.msra.mxu0 %v4789
        %7300 = vmatprep.subr.bf16.mxu0 %v4782
        %7301 = vmatpush2.bf16.msra.mxu0 %v4781
        %7302 = vmatprep.subr.bf16.mxu0 %v4774
        %7303 = vmatpush2.bf16.msra.mxu0 %v4773
        %7304 = vmatprep.subr.bf16.mxu0 %v4766
        %7305 = vmatpush2.bf16.msra.mxu0 %v4765
        %7306 = vmatprep.subr.bf16.mxu0 %v4758
        %7307 = vmatpush2.bf16.msra.mxu0 %v4757
        %7308 = vmatprep.subr.bf16.mxu0 %v4750
        %7309 = vmatpush2.bf16.msra.mxu0 %v4749
        %7310 = vmatprep.subr.bf16.mxu0 %v4742
        %7311 = vmatpush2.bf16.msra.mxu0 %v4741
        %7312 = vmatprep.subr.bf16.mxu0 %v4734
        %7313 = vmatpush2.bf16.msra.mxu0 %v4733
        %7314 = vmatprep.mubr.bf16.mxu0 %v1398
        %7315 = vmatmul.mubr.bf16.gmra.mxu0 %v1396
        %v7316 = vpop.f32.mrf.mxu0
        %v7317 = vadd.f32 %v7276, %v7316
        %v7318 = vpop.f32.mrf.mxu0
        %v7319 = vadd.f32 %v7278, %v7318
        %v7320 = vpop.f32.mrf.mxu0
        %v7321 = vpop.f32.mrf.mxu0
        %7322 = vdwg.mxu0
        %7323 = vmatprep.subr.bf16.mxu0 %v4854
        %7324 = vmatpush1.bf16.msra.mxu0 %v4853
        %7325 = vmatprep.subr.bf16.mxu0 %v4846
        %7326 = vmatpush1.bf16.msra.mxu0 %v4845
        %7327 = vmatprep.subr.bf16.mxu0 %v4838
        %7328 = vmatpush1.bf16.msra.mxu0 %v4837
        %7329 = vmatprep.subr.bf16.mxu0 %v4830
        %7330 = vmatpush1.bf16.msra.mxu0 %v4829
        %7331 = vmatprep.subr.bf16.mxu0 %v4822
        %7332 = vmatpush1.bf16.msra.mxu0 %v4821
        %7333 = vmatprep.subr.bf16.mxu0 %v4814
        %7334 = vmatpush1.bf16.msra.mxu0 %v4813
        %7335 = vmatprep.subr.bf16.mxu0 %v4806
        %7336 = vmatpush1.bf16.msra.mxu0 %v4805
        %7337 = vmatprep.subr.bf16.mxu0 %v4798
        %7338 = vmatpush1.bf16.msra.mxu0 %v4797
        %7339 = vmatprep.subr.bf16.mxu0 %v4918
        %7340 = vmatpush2.bf16.msra.mxu0 %v4917
        %7341 = vmatprep.subr.bf16.mxu0 %v4910
        %7342 = vmatpush2.bf16.msra.mxu0 %v4909
        %7343 = vmatprep.subr.bf16.mxu0 %v4902
        %7344 = vmatpush2.bf16.msra.mxu0 %v4901
        %7345 = vmatprep.subr.bf16.mxu0 %v4894
        %7346 = vmatpush2.bf16.msra.mxu0 %v4893
        %7347 = vmatprep.subr.bf16.mxu0 %v4886
        %7348 = vmatpush2.bf16.msra.mxu0 %v4885
        %7349 = vmatprep.subr.bf16.mxu0 %v4878
        %7350 = vmatpush2.bf16.msra.mxu0 %v4877
        %7351 = vmatprep.subr.bf16.mxu0 %v4870
        %7352 = vmatpush2.bf16.msra.mxu0 %v4869
        %7353 = vmatprep.subr.bf16.mxu0 %v4862
        %7354 = vmatpush2.bf16.msra.mxu0 %v4861
        %7355 = vmatprep.mubr.bf16.mxu0 %v1395
        %7356 = vmatmul.mubr.bf16.gmra.mxu0 %v1381
        %v7357 = vpop.f32.mrf.mxu0
        %v7358 = vadd.f32 %v7317, %v7357
        %v7359 = vpop.f32.mrf.mxu0
        %v7360 = vadd.f32 %v7319, %v7359
        %v7361 = vpop.f32.mrf.mxu0
        %v7362 = vpop.f32.mrf.mxu0
        %7363 = vdwg.mxu0
        %7364 = vmatprep.subr.bf16.mxu0 %v4982
        %7365 = vmatpush1.bf16.msra.mxu0 %v4981
        %7366 = vmatprep.subr.bf16.mxu0 %v4974
        %7367 = vmatpush1.bf16.msra.mxu0 %v4973
        %7368 = vmatprep.subr.bf16.mxu0 %v4966
        %7369 = vmatpush1.bf16.msra.mxu0 %v4965
        %7370 = vmatprep.subr.bf16.mxu0 %v4958
        %7371 = vmatpush1.bf16.msra.mxu0 %v4957
        %7372 = vmatprep.subr.bf16.mxu0 %v4950
        %7373 = vmatpush1.bf16.msra.mxu0 %v4949
        %7374 = vmatprep.subr.bf16.mxu0 %v4942
        %7375 = vmatpush1.bf16.msra.mxu0 %v4941
        %7376 = vmatprep.subr.bf16.mxu0 %v4934
        %7377 = vmatpush1.bf16.msra.mxu0 %v4933
        %7378 = vmatprep.subr.bf16.mxu0 %v4926
        %7379 = vmatpush1.bf16.msra.mxu0 %v4925
        %7380 = vmatprep.subr.bf16.mxu0 %v5046
        %7381 = vmatpush2.bf16.msra.mxu0 %v5045
        %7382 = vmatprep.subr.bf16.mxu0 %v5038
        %7383 = vmatpush2.bf16.msra.mxu0 %v5037
        %7384 = vmatprep.subr.bf16.mxu0 %v5030
        %7385 = vmatpush2.bf16.msra.mxu0 %v5029
        %7386 = vmatprep.subr.bf16.mxu0 %v5022
        %7387 = vmatpush2.bf16.msra.mxu0 %v5021
        %7388 = vmatprep.subr.bf16.mxu0 %v5014
        %7389 = vmatpush2.bf16.msra.mxu0 %v5013
        %7390 = vmatprep.subr.bf16.mxu0 %v5006
        %7391 = vmatpush2.bf16.msra.mxu0 %v5005
        %7392 = vmatprep.subr.bf16.mxu0 %v4998
        %7393 = vmatpush2.bf16.msra.mxu0 %v4997
        %7394 = vmatprep.subr.bf16.mxu0 %v4990
        %7395 = vmatpush2.bf16.msra.mxu0 %v4989
        %7396 = vmatprep.mubr.bf16.mxu0 %v1399
        %7397 = vmatmul.mubr.bf16.gmra.mxu0 %v1397
        %v7398 = vpop.f32.mrf.mxu0
        %v7399 = vadd.f32 %v7358, %v7398
        %v7400 = vpop.f32.mrf.mxu0
        %v7401 = vadd.f32 %v7360, %v7400
        %v7402 = vpop.f32.mrf.mxu0
        %v7403 = vpop.f32.mrf.mxu0
        %7404 = vdwg.mxu0
        %7405 = vmatprep.subr.bf16.mxu0 %v5110
        %7406 = vmatpush1.bf16.msra.mxu0 %v5109
        %7407 = vmatprep.subr.bf16.mxu0 %v5102
        %7408 = vmatpush1.bf16.msra.mxu0 %v5101
        %7409 = vmatprep.subr.bf16.mxu0 %v5094
        %7410 = vmatpush1.bf16.msra.mxu0 %v5093
        %7411 = vmatprep.subr.bf16.mxu0 %v5086
        %7412 = vmatpush1.bf16.msra.mxu0 %v5085
        %7413 = vmatprep.subr.bf16.mxu0 %v5078
        %7414 = vmatpush1.bf16.msra.mxu0 %v5077
        %7415 = vmatprep.subr.bf16.mxu0 %v5070
        %7416 = vmatpush1.bf16.msra.mxu0 %v5069
        %7417 = vmatprep.subr.bf16.mxu0 %v5062
        %7418 = vmatpush1.bf16.msra.mxu0 %v5061
        %7419 = vmatprep.subr.bf16.mxu0 %v5054
        %7420 = vmatpush1.bf16.msra.mxu0 %v5053
        %7421 = vmatprep.subr.bf16.mxu0 %v5174
        %7422 = vmatpush2.bf16.msra.mxu0 %v5173
        %7423 = vmatprep.subr.bf16.mxu0 %v5166
        %7424 = vmatpush2.bf16.msra.mxu0 %v5165
        %7425 = vmatprep.subr.bf16.mxu0 %v5158
        %7426 = vmatpush2.bf16.msra.mxu0 %v5157
        %7427 = vmatprep.subr.bf16.mxu0 %v5150
        %7428 = vmatpush2.bf16.msra.mxu0 %v5149
        %7429 = vmatprep.subr.bf16.mxu0 %v5142
        %7430 = vmatpush2.bf16.msra.mxu0 %v5141
        %7431 = vmatprep.subr.bf16.mxu0 %v5134
        %7432 = vmatpush2.bf16.msra.mxu0 %v5133
        %7433 = vmatprep.subr.bf16.mxu0 %v5126
        %7434 = vmatpush2.bf16.msra.mxu0 %v5125
        %7435 = vmatprep.subr.bf16.mxu0 %v5118
        %7436 = vmatpush2.bf16.msra.mxu0 %v5117
        %7437 = vmatprep.mubr.bf16.mxu0 %v1437
        %7438 = vmatmul.mubr.bf16.gmra.mxu0 %v1423
        %v7439 = vpop.f32.mrf.mxu0
        %v7440 = vadd.f32 %v7399, %v7439
        %v7441 = vpop.f32.mrf.mxu0
        %v7442 = vadd.f32 %v7401, %v7441
        %v7443 = vpop.f32.mrf.mxu0
        %v7444 = vpop.f32.mrf.mxu0
        %7445 = vdwg.mxu0
        %7446 = vmatprep.subr.bf16.mxu0 %v5238
        %7447 = vmatpush1.bf16.msra.mxu0 %v5237
        %7448 = vmatprep.subr.bf16.mxu0 %v5230
        %7449 = vmatpush1.bf16.msra.mxu0 %v5229
        %7450 = vmatprep.subr.bf16.mxu0 %v5222
        %7451 = vmatpush1.bf16.msra.mxu0 %v5221
        %7452 = vmatprep.subr.bf16.mxu0 %v5214
        %7453 = vmatpush1.bf16.msra.mxu0 %v5213
        %7454 = vmatprep.subr.bf16.mxu0 %v5206
        %7455 = vmatpush1.bf16.msra.mxu0 %v5205
        %7456 = vmatprep.subr.bf16.mxu0 %v5198
        %7457 = vmatpush1.bf16.msra.mxu0 %v5197
        %7458 = vmatprep.subr.bf16.mxu0 %v5190
        %7459 = vmatpush1.bf16.msra.mxu0 %v5189
        %7460 = vmatprep.subr.bf16.mxu0 %v5182
        %7461 = vmatpush1.bf16.msra.mxu0 %v5181
        %7462 = vmatprep.subr.bf16.mxu0 %v5302
        %7463 = vmatpush2.bf16.msra.mxu0 %v5301
        %7464 = vmatprep.subr.bf16.mxu0 %v5294
        %7465 = vmatpush2.bf16.msra.mxu0 %v5293
        %7466 = vmatprep.subr.bf16.mxu0 %v5286
        %7467 = vmatpush2.bf16.msra.mxu0 %v5285
        %7468 = vmatprep.subr.bf16.mxu0 %v5278
        %7469 = vmatpush2.bf16.msra.mxu0 %v5277
        %7470 = vmatprep.subr.bf16.mxu0 %v5270
        %7471 = vmatpush2.bf16.msra.mxu0 %v5269
        %7472 = vmatprep.subr.bf16.mxu0 %v5262
        %7473 = vmatpush2.bf16.msra.mxu0 %v5261
        %7474 = vmatprep.subr.bf16.mxu0 %v5254
        %7475 = vmatpush2.bf16.msra.mxu0 %v5253
        %7476 = vmatprep.subr.bf16.mxu0 %v5246
        %7477 = vmatpush2.bf16.msra.mxu0 %v5245
        %7478 = vmatprep.mubr.bf16.mxu0 %v1447
        %7479 = vmatmul.mubr.bf16.gmra.mxu0 %v1445
        %v7480 = vpop.f32.mrf.mxu0
        %v7481 = vadd.f32 %v7440, %v7480
        %v7482 = vpop.f32.mrf.mxu0
        %v7483 = vadd.f32 %v7442, %v7482
        %v7484 = vpop.f32.mrf.mxu0
        %v7485 = vpop.f32.mrf.mxu0
        %7486 = vdwg.mxu0
        %7487 = vmatprep.subr.bf16.mxu0 %v5366
        %7488 = vmatpush1.bf16.msra.mxu0 %v5365
        %7489 = vmatprep.subr.bf16.mxu0 %v5358
        %7490 = vmatpush1.bf16.msra.mxu0 %v5357
        %7491 = vmatprep.subr.bf16.mxu0 %v5350
        %7492 = vmatpush1.bf16.msra.mxu0 %v5349
        %7493 = vmatprep.subr.bf16.mxu0 %v5342
        %7494 = vmatpush1.bf16.msra.mxu0 %v5341
        %7495 = vmatprep.subr.bf16.mxu0 %v5334
        %7496 = vmatpush1.bf16.msra.mxu0 %v5333
        %7497 = vmatprep.subr.bf16.mxu0 %v5326
        %7498 = vmatpush1.bf16.msra.mxu0 %v5325
        %7499 = vmatprep.subr.bf16.mxu0 %v5318
        %7500 = vmatpush1.bf16.msra.mxu0 %v5317
        %7501 = vmatprep.subr.bf16.mxu0 %v5310
        %7502 = vmatpush1.bf16.msra.mxu0 %v5309
        %7503 = vmatprep.subr.bf16.mxu0 %v5430
        %7504 = vmatpush2.bf16.msra.mxu0 %v5429
        %7505 = vmatprep.subr.bf16.mxu0 %v5422
        %7506 = vmatpush2.bf16.msra.mxu0 %v5421
        %7507 = vmatprep.subr.bf16.mxu0 %v5414
        %7508 = vmatpush2.bf16.msra.mxu0 %v5413
        %7509 = vmatprep.subr.bf16.mxu0 %v5406
        %7510 = vmatpush2.bf16.msra.mxu0 %v5405
        %7511 = vmatprep.subr.bf16.mxu0 %v5398
        %7512 = vmatpush2.bf16.msra.mxu0 %v5397
        %7513 = vmatprep.subr.bf16.mxu0 %v5390
        %7514 = vmatpush2.bf16.msra.mxu0 %v5389
        %7515 = vmatprep.subr.bf16.mxu0 %v5382
        %7516 = vmatpush2.bf16.msra.mxu0 %v5381
        %7517 = vmatprep.subr.bf16.mxu0 %v5374
        %7518 = vmatpush2.bf16.msra.mxu0 %v5373
        %7519 = vmatprep.mubr.bf16.mxu0 %v1444
        %7520 = vmatmul.mubr.bf16.gmra.mxu0 %v1430
        %v7521 = vpop.f32.mrf.mxu0
        %v7522 = vadd.f32 %v7481, %v7521
        %v7523 = vpop.f32.mrf.mxu0
        %v7524 = vadd.f32 %v7483, %v7523
        %v7525 = vpop.f32.mrf.mxu0
        %v7526 = vpop.f32.mrf.mxu0
        %7527 = vdwg.mxu0
        %7528 = vmatprep.subr.bf16.mxu0 %v5494
        %7529 = vmatpush1.bf16.msra.mxu0 %v5493
        %7530 = vmatprep.subr.bf16.mxu0 %v5486
        %7531 = vmatpush1.bf16.msra.mxu0 %v5485
        %7532 = vmatprep.subr.bf16.mxu0 %v5478
        %7533 = vmatpush1.bf16.msra.mxu0 %v5477
        %7534 = vmatprep.subr.bf16.mxu0 %v5470
        %7535 = vmatpush1.bf16.msra.mxu0 %v5469
        %7536 = vmatprep.subr.bf16.mxu0 %v5462
        %7537 = vmatpush1.bf16.msra.mxu0 %v5461
        %7538 = vmatprep.subr.bf16.mxu0 %v5454
        %7539 = vmatpush1.bf16.msra.mxu0 %v5453
        %7540 = vmatprep.subr.bf16.mxu0 %v5446
        %7541 = vmatpush1.bf16.msra.mxu0 %v5445
        %7542 = vmatprep.subr.bf16.mxu0 %v5438
        %7543 = vmatpush1.bf16.msra.mxu0 %v5437
        %7544 = vmatprep.subr.bf16.mxu0 %v5558
        %7545 = vmatpush2.bf16.msra.mxu0 %v5557
        %7546 = vmatprep.subr.bf16.mxu0 %v5550
        %7547 = vmatpush2.bf16.msra.mxu0 %v5549
        %7548 = vmatprep.subr.bf16.mxu0 %v5542
        %7549 = vmatpush2.bf16.msra.mxu0 %v5541
        %7550 = vmatprep.subr.bf16.mxu0 %v5534
        %7551 = vmatpush2.bf16.msra.mxu0 %v5533
        %7552 = vmatprep.subr.bf16.mxu0 %v5526
        %7553 = vmatpush2.bf16.msra.mxu0 %v5525
        %7554 = vmatprep.subr.bf16.mxu0 %v5518
        %7555 = vmatpush2.bf16.msra.mxu0 %v5517
        %7556 = vmatprep.subr.bf16.mxu0 %v5510
        %7557 = vmatpush2.bf16.msra.mxu0 %v5509
        %7558 = vmatprep.subr.bf16.mxu0 %v5502
        %7559 = vmatpush2.bf16.msra.mxu0 %v5501
        %7560 = vmatprep.mubr.bf16.mxu0 %v1448
        %7561 = vmatmul.mubr.bf16.gmra.mxu0 %v1446
        %v7562 = vpop.f32.mrf.mxu0
        %v7563 = vadd.f32 %v7522, %v7562
        %v7564 = vpop.f32.mrf.mxu0
        %v7565 = vadd.f32 %v7524, %v7564
        %v7566 = vpop.f32.mrf.mxu0
        %v7567 = vpop.f32.mrf.mxu0
        %7568 = vdwg.mxu0
        %7569 = vmatprep.subr.bf16.mxu0 %v4600
        %7570 = vmatpush1.bf16.msra.mxu0 %v4599
        %7571 = vmatprep.subr.bf16.mxu0 %v4592
        %7572 = vmatpush1.bf16.msra.mxu0 %v4591
        %7573 = vmatprep.subr.bf16.mxu0 %v4584
        %7574 = vmatpush1.bf16.msra.mxu0 %v4583
        %7575 = vmatprep.subr.bf16.mxu0 %v4576
        %7576 = vmatpush1.bf16.msra.mxu0 %v4575
        %7577 = vmatprep.subr.bf16.mxu0 %v4568
        %7578 = vmatpush1.bf16.msra.mxu0 %v4567
        %7579 = vmatprep.subr.bf16.mxu0 %v4560
        %7580 = vmatpush1.bf16.msra.mxu0 %v4559
        %7581 = vmatprep.subr.bf16.mxu0 %v4552
        %7582 = vmatpush1.bf16.msra.mxu0 %v4551
        %7583 = vmatprep.subr.bf16.mxu0 %v4544
        %7584 = vmatpush1.bf16.msra.mxu0 %v4543
        %7585 = vmatprep.subr.bf16.mxu0 %v4664
        %7586 = vmatpush2.bf16.msra.mxu0 %v4663
        %7587 = vmatprep.subr.bf16.mxu0 %v4656
        %7588 = vmatpush2.bf16.msra.mxu0 %v4655
        %7589 = vmatprep.subr.bf16.mxu0 %v4648
        %7590 = vmatpush2.bf16.msra.mxu0 %v4647
        %7591 = vmatprep.subr.bf16.mxu0 %v4640
        %7592 = vmatpush2.bf16.msra.mxu0 %v4639
        %7593 = vmatprep.subr.bf16.mxu0 %v4632
        %7594 = vmatpush2.bf16.msra.mxu0 %v4631
        %7595 = vmatprep.subr.bf16.mxu0 %v4624
        %7596 = vmatpush2.bf16.msra.mxu0 %v4623
        %7597 = vmatprep.subr.bf16.mxu0 %v4616
        %7598 = vmatpush2.bf16.msra.mxu0 %v4615
        %7599 = vmatprep.subr.bf16.mxu0 %v4608
        %7600 = vmatpush2.bf16.msra.mxu0 %v4607
        %7601 = vmatprep.mubr.bf16.mxu0 %v1388
        %7602 = vmatmul.mubr.bf16.gmra.mxu0 %v1374
        %v7603 = vpop.f32.mrf.mxu0
        %v7604 = vadd.f32 0.0, %v7603
        %v7605 = vpop.f32.mrf.mxu0
        %v7606 = vadd.f32 0.0, %v7605
        %v7607 = vpop.f32.mrf.mxu0
        %v7608 = vpop.f32.mrf.mxu0
        %7609 = vdwg.mxu0
        %7610 = vmatprep.subr.bf16.mxu0 %v4728
        %7611 = vmatpush1.bf16.msra.mxu0 %v4727
        %7612 = vmatprep.subr.bf16.mxu0 %v4720
        %7613 = vmatpush1.bf16.msra.mxu0 %v4719
        %7614 = vmatprep.subr.bf16.mxu0 %v4712
        %7615 = vmatpush1.bf16.msra.mxu0 %v4711
        %7616 = vmatprep.subr.bf16.mxu0 %v4704
        %7617 = vmatpush1.bf16.msra.mxu0 %v4703
        %7618 = vmatprep.subr.bf16.mxu0 %v4696
        %7619 = vmatpush1.bf16.msra.mxu0 %v4695
        %7620 = vmatprep.subr.bf16.mxu0 %v4688
        %7621 = vmatpush1.bf16.msra.mxu0 %v4687
        %7622 = vmatprep.subr.bf16.mxu0 %v4680
        %7623 = vmatpush1.bf16.msra.mxu0 %v4679
        %7624 = vmatprep.subr.bf16.mxu0 %v4672
        %7625 = vmatpush1.bf16.msra.mxu0 %v4671
        %7626 = vmatprep.subr.bf16.mxu0 %v4792
        %7627 = vmatpush2.bf16.msra.mxu0 %v4791
        %7628 = vmatprep.subr.bf16.mxu0 %v4784
        %7629 = vmatpush2.bf16.msra.mxu0 %v4783
        %7630 = vmatprep.subr.bf16.mxu0 %v4776
        %7631 = vmatpush2.bf16.msra.mxu0 %v4775
        %7632 = vmatprep.subr.bf16.mxu0 %v4768
        %7633 = vmatpush2.bf16.msra.mxu0 %v4767
        %7634 = vmatprep.subr.bf16.mxu0 %v4760
        %7635 = vmatpush2.bf16.msra.mxu0 %v4759
        %7636 = vmatprep.subr.bf16.mxu0 %v4752
        %7637 = vmatpush2.bf16.msra.mxu0 %v4751
        %7638 = vmatprep.subr.bf16.mxu0 %v4744
        %7639 = vmatpush2.bf16.msra.mxu0 %v4743
        %7640 = vmatprep.subr.bf16.mxu0 %v4736
        %7641 = vmatpush2.bf16.msra.mxu0 %v4735
        %7642 = vmatprep.mubr.bf16.mxu0 %v1398
        %7643 = vmatmul.mubr.bf16.gmra.mxu0 %v1396
        %v7644 = vpop.f32.mrf.mxu0
        %v7645 = vadd.f32 %v7604, %v7644
        %v7646 = vpop.f32.mrf.mxu0
        %v7647 = vadd.f32 %v7606, %v7646
        %v7648 = vpop.f32.mrf.mxu0
        %v7649 = vpop.f32.mrf.mxu0
        %7650 = vdwg.mxu0
        %7651 = vmatprep.subr.bf16.mxu0 %v4856
        %7652 = vmatpush1.bf16.msra.mxu0 %v4855
        %7653 = vmatprep.subr.bf16.mxu0 %v4848
        %7654 = vmatpush1.bf16.msra.mxu0 %v4847
        %7655 = vmatprep.subr.bf16.mxu0 %v4840
        %7656 = vmatpush1.bf16.msra.mxu0 %v4839
        %7657 = vmatprep.subr.bf16.mxu0 %v4832
        %7658 = vmatpush1.bf16.msra.mxu0 %v4831
        %7659 = vmatprep.subr.bf16.mxu0 %v4824
        %7660 = vmatpush1.bf16.msra.mxu0 %v4823
        %7661 = vmatprep.subr.bf16.mxu0 %v4816
        %7662 = vmatpush1.bf16.msra.mxu0 %v4815
        %7663 = vmatprep.subr.bf16.mxu0 %v4808
        %7664 = vmatpush1.bf16.msra.mxu0 %v4807
        %7665 = vmatprep.subr.bf16.mxu0 %v4800
        %7666 = vmatpush1.bf16.msra.mxu0 %v4799
        %7667 = vmatprep.subr.bf16.mxu0 %v4920
        %7668 = vmatpush2.bf16.msra.mxu0 %v4919
        %7669 = vmatprep.subr.bf16.mxu0 %v4912
        %7670 = vmatpush2.bf16.msra.mxu0 %v4911
        %7671 = vmatprep.subr.bf16.mxu0 %v4904
        %7672 = vmatpush2.bf16.msra.mxu0 %v4903
        %7673 = vmatprep.subr.bf16.mxu0 %v4896
        %7674 = vmatpush2.bf16.msra.mxu0 %v4895
        %7675 = vmatprep.subr.bf16.mxu0 %v4888
        %7676 = vmatpush2.bf16.msra.mxu0 %v4887
        %7677 = vmatprep.subr.bf16.mxu0 %v4880
        %7678 = vmatpush2.bf16.msra.mxu0 %v4879
        %7679 = vmatprep.subr.bf16.mxu0 %v4872
        %7680 = vmatpush2.bf16.msra.mxu0 %v4871
        %7681 = vmatprep.subr.bf16.mxu0 %v4864
        %7682 = vmatpush2.bf16.msra.mxu0 %v4863
        %7683 = vmatprep.mubr.bf16.mxu0 %v1395
        %7684 = vmatmul.mubr.bf16.gmra.mxu0 %v1381
        %v7685 = vpop.f32.mrf.mxu0
        %v7686 = vadd.f32 %v7645, %v7685
        %v7687 = vpop.f32.mrf.mxu0
        %v7688 = vadd.f32 %v7647, %v7687
        %v7689 = vpop.f32.mrf.mxu0
        %v7690 = vpop.f32.mrf.mxu0
        %7691 = vdwg.mxu0
        %7692 = vmatprep.subr.bf16.mxu0 %v4984
        %7693 = vmatpush1.bf16.msra.mxu0 %v4983
        %7694 = vmatprep.subr.bf16.mxu0 %v4976
        %7695 = vmatpush1.bf16.msra.mxu0 %v4975
        %7696 = vmatprep.subr.bf16.mxu0 %v4968
        %7697 = vmatpush1.bf16.msra.mxu0 %v4967
        %7698 = vmatprep.subr.bf16.mxu0 %v4960
        %7699 = vmatpush1.bf16.msra.mxu0 %v4959
        %7700 = vmatprep.subr.bf16.mxu0 %v4952
        %7701 = vmatpush1.bf16.msra.mxu0 %v4951
        %7702 = vmatprep.subr.bf16.mxu0 %v4944
        %7703 = vmatpush1.bf16.msra.mxu0 %v4943
        %7704 = vmatprep.subr.bf16.mxu0 %v4936
        %7705 = vmatpush1.bf16.msra.mxu0 %v4935
        %7706 = vmatprep.subr.bf16.mxu0 %v4928
        %7707 = vmatpush1.bf16.msra.mxu0 %v4927
        %7708 = vmatprep.subr.bf16.mxu0 %v5048
        %7709 = vmatpush2.bf16.msra.mxu0 %v5047
        %7710 = vmatprep.subr.bf16.mxu0 %v5040
        %7711 = vmatpush2.bf16.msra.mxu0 %v5039
        %7712 = vmatprep.subr.bf16.mxu0 %v5032
        %7713 = vmatpush2.bf16.msra.mxu0 %v5031
        %7714 = vmatprep.subr.bf16.mxu0 %v5024
        %7715 = vmatpush2.bf16.msra.mxu0 %v5023
        %7716 = vmatprep.subr.bf16.mxu0 %v5016
        %7717 = vmatpush2.bf16.msra.mxu0 %v5015
        %7718 = vmatprep.subr.bf16.mxu0 %v5008
        %7719 = vmatpush2.bf16.msra.mxu0 %v5007
        %7720 = vmatprep.subr.bf16.mxu0 %v5000
        %7721 = vmatpush2.bf16.msra.mxu0 %v4999
        %7722 = vmatprep.subr.bf16.mxu0 %v4992
        %7723 = vmatpush2.bf16.msra.mxu0 %v4991
        %7724 = vmatprep.mubr.bf16.mxu0 %v1399
        %7725 = vmatmul.mubr.bf16.gmra.mxu0 %v1397
        %v7726 = vpop.f32.mrf.mxu0
        %v7727 = vadd.f32 %v7686, %v7726
        %v7728 = vpop.f32.mrf.mxu0
        %v7729 = vadd.f32 %v7688, %v7728
        %v7730 = vpop.f32.mrf.mxu0
        %v7731 = vpop.f32.mrf.mxu0
        %7732 = vdwg.mxu0
        %7733 = vmatprep.subr.bf16.mxu0 %v5112
        %7734 = vmatpush1.bf16.msra.mxu0 %v5111
        %7735 = vmatprep.subr.bf16.mxu0 %v5104
        %7736 = vmatpush1.bf16.msra.mxu0 %v5103
        %7737 = vmatprep.subr.bf16.mxu0 %v5096
        %7738 = vmatpush1.bf16.msra.mxu0 %v5095
        %7739 = vmatprep.subr.bf16.mxu0 %v5088
        %7740 = vmatpush1.bf16.msra.mxu0 %v5087
        %7741 = vmatprep.subr.bf16.mxu0 %v5080
        %7742 = vmatpush1.bf16.msra.mxu0 %v5079
        %7743 = vmatprep.subr.bf16.mxu0 %v5072
        %7744 = vmatpush1.bf16.msra.mxu0 %v5071
        %7745 = vmatprep.subr.bf16.mxu0 %v5064
        %7746 = vmatpush1.bf16.msra.mxu0 %v5063
        %7747 = vmatprep.subr.bf16.mxu0 %v5056
        %7748 = vmatpush1.bf16.msra.mxu0 %v5055
        %7749 = vmatprep.subr.bf16.mxu0 %v5176
        %7750 = vmatpush2.bf16.msra.mxu0 %v5175
        %7751 = vmatprep.subr.bf16.mxu0 %v5168
        %7752 = vmatpush2.bf16.msra.mxu0 %v5167
        %7753 = vmatprep.subr.bf16.mxu0 %v5160
        %7754 = vmatpush2.bf16.msra.mxu0 %v5159
        %7755 = vmatprep.subr.bf16.mxu0 %v5152
        %7756 = vmatpush2.bf16.msra.mxu0 %v5151
        %7757 = vmatprep.subr.bf16.mxu0 %v5144
        %7758 = vmatpush2.bf16.msra.mxu0 %v5143
        %7759 = vmatprep.subr.bf16.mxu0 %v5136
        %7760 = vmatpush2.bf16.msra.mxu0 %v5135
        %7761 = vmatprep.subr.bf16.mxu0 %v5128
        %7762 = vmatpush2.bf16.msra.mxu0 %v5127
        %7763 = vmatprep.subr.bf16.mxu0 %v5120
        %7764 = vmatpush2.bf16.msra.mxu0 %v5119
        %7765 = vmatprep.mubr.bf16.mxu0 %v1437
        %7766 = vmatmul.mubr.bf16.gmra.mxu0 %v1423
        %v7767 = vpop.f32.mrf.mxu0
        %v7768 = vadd.f32 %v7727, %v7767
        %v7769 = vpop.f32.mrf.mxu0
        %v7770 = vadd.f32 %v7729, %v7769
        %v7771 = vpop.f32.mrf.mxu0
        %v7772 = vpop.f32.mrf.mxu0
        %7773 = vdwg.mxu0
        %7774 = vmatprep.subr.bf16.mxu0 %v5240
        %7775 = vmatpush1.bf16.msra.mxu0 %v5239
        %7776 = vmatprep.subr.bf16.mxu0 %v5232
        %7777 = vmatpush1.bf16.msra.mxu0 %v5231
        %7778 = vmatprep.subr.bf16.mxu0 %v5224
        %7779 = vmatpush1.bf16.msra.mxu0 %v5223
        %7780 = vmatprep.subr.bf16.mxu0 %v5216
        %7781 = vmatpush1.bf16.msra.mxu0 %v5215
        %7782 = vmatprep.subr.bf16.mxu0 %v5208
        %7783 = vmatpush1.bf16.msra.mxu0 %v5207
        %7784 = vmatprep.subr.bf16.mxu0 %v5200
        %7785 = vmatpush1.bf16.msra.mxu0 %v5199
        %7786 = vmatprep.subr.bf16.mxu0 %v5192
        %7787 = vmatpush1.bf16.msra.mxu0 %v5191
        %7788 = vmatprep.subr.bf16.mxu0 %v5184
        %7789 = vmatpush1.bf16.msra.mxu0 %v5183
        %7790 = vmatprep.subr.bf16.mxu0 %v5304
        %7791 = vmatpush2.bf16.msra.mxu0 %v5303
        %7792 = vmatprep.subr.bf16.mxu0 %v5296
        %7793 = vmatpush2.bf16.msra.mxu0 %v5295
        %7794 = vmatprep.subr.bf16.mxu0 %v5288
        %7795 = vmatpush2.bf16.msra.mxu0 %v5287
        %7796 = vmatprep.subr.bf16.mxu0 %v5280
        %7797 = vmatpush2.bf16.msra.mxu0 %v5279
        %7798 = vmatprep.subr.bf16.mxu0 %v5272
        %7799 = vmatpush2.bf16.msra.mxu0 %v5271
        %7800 = vmatprep.subr.bf16.mxu0 %v5264
        %7801 = vmatpush2.bf16.msra.mxu0 %v5263
        %7802 = vmatprep.subr.bf16.mxu0 %v5256
        %7803 = vmatpush2.bf16.msra.mxu0 %v5255
        %7804 = vmatprep.subr.bf16.mxu0 %v5248
        %7805 = vmatpush2.bf16.msra.mxu0 %v5247
        %7806 = vmatprep.mubr.bf16.mxu0 %v1447
        %7807 = vmatmul.mubr.bf16.gmra.mxu0 %v1445
        %v7808 = vpop.f32.mrf.mxu0
        %v7809 = vadd.f32 %v7768, %v7808
        %v7810 = vpop.f32.mrf.mxu0
        %v7811 = vadd.f32 %v7770, %v7810
        %v7812 = vpop.f32.mrf.mxu0
        %v7813 = vpop.f32.mrf.mxu0
        %7814 = vdwg.mxu0
        %7815 = vmatprep.subr.bf16.mxu0 %v5368
        %7816 = vmatpush1.bf16.msra.mxu0 %v5367
        %7817 = vmatprep.subr.bf16.mxu0 %v5360
        %7818 = vmatpush1.bf16.msra.mxu0 %v5359
        %7819 = vmatprep.subr.bf16.mxu0 %v5352
        %7820 = vmatpush1.bf16.msra.mxu0 %v5351
        %7821 = vmatprep.subr.bf16.mxu0 %v5344
        %7822 = vmatpush1.bf16.msra.mxu0 %v5343
        %7823 = vmatprep.subr.bf16.mxu0 %v5336
        %7824 = vmatpush1.bf16.msra.mxu0 %v5335
        %7825 = vmatprep.subr.bf16.mxu0 %v5328
        %7826 = vmatpush1.bf16.msra.mxu0 %v5327
        %7827 = vmatprep.subr.bf16.mxu0 %v5320
        %7828 = vmatpush1.bf16.msra.mxu0 %v5319
        %7829 = vmatprep.subr.bf16.mxu0 %v5312
        %7830 = vmatpush1.bf16.msra.mxu0 %v5311
        %7831 = vmatprep.subr.bf16.mxu0 %v5432
        %7832 = vmatpush2.bf16.msra.mxu0 %v5431
        %7833 = vmatprep.subr.bf16.mxu0 %v5424
        %7834 = vmatpush2.bf16.msra.mxu0 %v5423
        %7835 = vmatprep.subr.bf16.mxu0 %v5416
        %7836 = vmatpush2.bf16.msra.mxu0 %v5415
        %7837 = vmatprep.subr.bf16.mxu0 %v5408
        %7838 = vmatpush2.bf16.msra.mxu0 %v5407
        %7839 = vmatprep.subr.bf16.mxu0 %v5400
        %7840 = vmatpush2.bf16.msra.mxu0 %v5399
        %7841 = vmatprep.subr.bf16.mxu0 %v5392
        %7842 = vmatpush2.bf16.msra.mxu0 %v5391
        %7843 = vmatprep.subr.bf16.mxu0 %v5384
        %7844 = vmatpush2.bf16.msra.mxu0 %v5383
        %7845 = vmatprep.subr.bf16.mxu0 %v5376
        %7846 = vmatpush2.bf16.msra.mxu0 %v5375
        %7847 = vmatprep.mubr.bf16.mxu0 %v1444
        %7848 = vmatmul.mubr.bf16.gmra.mxu0 %v1430
        %v7849 = vpop.f32.mrf.mxu0
        %v7850 = vadd.f32 %v7809, %v7849
        %v7851 = vpop.f32.mrf.mxu0
        %v7852 = vadd.f32 %v7811, %v7851
        %v7853 = vpop.f32.mrf.mxu0
        %v7854 = vpop.f32.mrf.mxu0
        %7855 = vdwg.mxu0
        %7856 = vmatprep.subr.bf16.mxu0 %v5496
        %7857 = vmatpush1.bf16.msra.mxu0 %v5495
        %7858 = vmatprep.subr.bf16.mxu0 %v5488
        %7859 = vmatpush1.bf16.msra.mxu0 %v5487
        %7860 = vmatprep.subr.bf16.mxu0 %v5480
        %7861 = vmatpush1.bf16.msra.mxu0 %v5479
        %7862 = vmatprep.subr.bf16.mxu0 %v5472
        %7863 = vmatpush1.bf16.msra.mxu0 %v5471
        %7864 = vmatprep.subr.bf16.mxu0 %v5464
        %7865 = vmatpush1.bf16.msra.mxu0 %v5463
        %7866 = vmatprep.subr.bf16.mxu0 %v5456
        %7867 = vmatpush1.bf16.msra.mxu0 %v5455
        %7868 = vmatprep.subr.bf16.mxu0 %v5448
        %7869 = vmatpush1.bf16.msra.mxu0 %v5447
        %7870 = vmatprep.subr.bf16.mxu0 %v5440
        %7871 = vmatpush1.bf16.msra.mxu0 %v5439
        %7872 = vmatprep.subr.bf16.mxu0 %v5560
        %7873 = vmatpush2.bf16.msra.mxu0 %v5559
        %7874 = vmatprep.subr.bf16.mxu0 %v5552
        %7875 = vmatpush2.bf16.msra.mxu0 %v5551
        %7876 = vmatprep.subr.bf16.mxu0 %v5544
        %7877 = vmatpush2.bf16.msra.mxu0 %v5543
        %7878 = vmatprep.subr.bf16.mxu0 %v5536
        %7879 = vmatpush2.bf16.msra.mxu0 %v5535
        %7880 = vmatprep.subr.bf16.mxu0 %v5528
        %7881 = vmatpush2.bf16.msra.mxu0 %v5527
        %7882 = vmatprep.subr.bf16.mxu0 %v5520
        %7883 = vmatpush2.bf16.msra.mxu0 %v5519
        %7884 = vmatprep.subr.bf16.mxu0 %v5512
        %7885 = vmatpush2.bf16.msra.mxu0 %v5511
        %7886 = vmatprep.subr.bf16.mxu0 %v5504
        %7887 = vmatpush2.bf16.msra.mxu0 %v5503
        %7888 = vmatprep.mubr.bf16.mxu0 %v1448
        %7889 = vmatmul.mubr.bf16.gmra.mxu0 %v1446
        %v7890 = vpop.f32.mrf.mxu0
        %v7891 = vadd.f32 %v7850, %v7890
        %v7892 = vpop.f32.mrf.mxu0
        %v7893 = vadd.f32 %v7852, %v7892
        %v7894 = vpop.f32.mrf.mxu0
        %v7895 = vpop.f32.mrf.mxu0
        %7896 = vdwg.mxu0
        %v7905 = vcombine.low %v6907, %v6909
        %v7906 = vcombine.low %v7235, %v7237
        %v7908 = vunpack.c.l.s4 1983009808
        %v7909 = vunpack.c.0.s8 %v7908
        %v7910 = vlaneseq
        %v7911 = vshrl.u32 %v7910, 7
        %v7912 = vsub.s32 %v7909, %v7911
        %v7913 = vrot.slane %v7905, %v7912
        %v7915 = vunpack.c.l.s4 1983009808
        %v7916 = vunpack.c.0.s8 %v7915
        %v7917 = vlaneseq
        %v7918 = vshrl.u32 %v7917, 7
        %v7919 = vsub.s32 %v7916, %v7918
        %v7920 = vrot.slane %v7906, %v7919
        %v7921 = vcombine.low %v7913, %v7920
        %v7922 = vcombine.low %v7563, %v7565
        %v7923 = vcombine.low %v7891, %v7893
        %v7925 = vunpack.c.l.s4 1983009808
        %v7926 = vunpack.c.0.s8 %v7925
        %v7927 = vlaneseq
        %v7928 = vshrl.u32 %v7927, 7
        %v7929 = vsub.s32 %v7926, %v7928
        %v7930 = vrot.slane %v7922, %v7929
        %v7932 = vunpack.c.l.s4 1983009808
        %v7933 = vunpack.c.0.s8 %v7932
        %v7934 = vlaneseq
        %v7935 = vshrl.u32 %v7934, 7
        %v7936 = vsub.s32 %v7933, %v7935
        %v7937 = vrot.slane %v7923, %v7936
        %v7938 = vcombine.low %v7930, %v7937
        %v7941 = vadd.f32 %v321, %v7921
        %v7942 = vadd.f32 %v322, %v7938
        %7943 = vst [vmem:[#allocation2] sm:$0xff] %v7941
        %7944 = vst [vmem:[#allocation2 + $0x8] sm:$0xff] %v7942
        %p7945 = scmp.eq.s32.totalorder %s22, 1
        // Predicated region
        $region53: #{conv_encoder_forward.9} parent=47 // pred_check
          %p7946 = pneg %p7945
        $region54: #{conv_encoder_forward.9} parent=47 // pred_check_branch
          %7948 = sbr.rel (%p7946) target = $region56
        $region55: #{conv_encoder_forward.9} parent=47 // pred_region
          %v7949 = vld [vmem:[#allocation2] sm:$0xff]
          %v7950 = vld [vmem:[#allocation2 + $0x8] sm:$0xff]
          %v7951 = vld [vmem:[%s2] sm:$0xff]
          %v7953 = vlaneseq
          %v7954 = vshrl.u32 %v7953, 7
          %v7955 = vsub.s32 0, %v7954
          %v7956 = vrot.slane %v7951, %v7955
          %v7957 = vlaneseq
          %v7958 = vshrl.u32 %v7957, 7
          %v7959 = vsub.s32 1, %v7958
          %v7960 = vrot.slane %v7951, %v7959
          %v7961 = vlaneseq
          %v7962 = vshrl.u32 %v7961, 7
          %v7963 = vsub.s32 2, %v7962
          %v7964 = vrot.slane %v7951, %v7963
          %v7965 = vlaneseq
          %v7966 = vshrl.u32 %v7965, 7
          %v7967 = vsub.s32 3, %v7966
          %v7968 = vrot.slane %v7951, %v7967
          %v7969 = vlaneseq
          %v7970 = vshrl.u32 %v7969, 7
          %v7971 = vsub.s32 4, %v7970
          %v7972 = vrot.slane %v7951, %v7971
          %v7973 = vlaneseq
          %v7974 = vshrl.u32 %v7973, 7
          %v7975 = vsub.s32 5, %v7974
          %v7976 = vrot.slane %v7951, %v7975
          %v7977 = vlaneseq
          %v7978 = vshrl.u32 %v7977, 7
          %v7979 = vsub.s32 6, %v7978
          %v7980 = vrot.slane %v7951, %v7979
          %v7981 = vlaneseq
          %v7982 = vshrl.u32 %v7981, 7
          %v7983 = vsub.s32 7, %v7982
          %v7984 = vrot.slane %v7951, %v7983
          %v7985 = vcombine.low %v7956, %v7960
          %v7986 = vcombine.low %v7964, %v7968
          %v7988 = vunpack.c.l.s4 1983009808
          %v7989 = vunpack.c.0.s8 %v7988
          %v7990 = vlaneseq
          %v7991 = vshrl.u32 %v7990, 7
          %v7992 = vsub.s32 %v7989, %v7991
          %v7993 = vrot.slane %v7985, %v7992
          %v7995 = vunpack.c.l.s4 1983009808
          %v7996 = vunpack.c.0.s8 %v7995
          %v7997 = vlaneseq
          %v7998 = vshrl.u32 %v7997, 7
          %v7999 = vsub.s32 %v7996, %v7998
          %v8000 = vrot.slane %v7986, %v7999
          %v8001 = vcombine.low %v7993, %v8000
          %v8002 = vcombine.low %v7972, %v7976
          %v8003 = vcombine.low %v7980, %v7984
          %v8005 = vunpack.c.l.s4 1983009808
          %v8006 = vunpack.c.0.s8 %v8005
          %v8007 = vlaneseq
          %v8008 = vshrl.u32 %v8007, 7
          %v8009 = vsub.s32 %v8006, %v8008
          %v8010 = vrot.slane %v8002, %v8009
          %v8012 = vunpack.c.l.s4 1983009808
          %v8013 = vunpack.c.0.s8 %v8012
          %v8014 = vlaneseq
          %v8015 = vshrl.u32 %v8014, 7
          %v8016 = vsub.s32 %v8013, %v8015
          %v8017 = vrot.slane %v8003, %v8016
          %v8018 = vcombine.low %v8010, %v8017
          %v8021 = vadd.f32 %v7949, %v8001
          %v8022 = vadd.f32 %v7950, %v8018
          %v8023 = vmax.f32 %v8021, 0.0
          %v8024 = vmax.f32 %v8022, 0.0
          %v8027 = vcombine.high %v8023, %v8023
          %v8029 = vunpack.c.l.s4 1983009808
          %v8030 = vunpack.c.0.s8 %v8029
          %v8031 = vlaneseq
          %v8032 = vshrl.u32 %v8031, 7
          %v8033 = vsub.s32 %v8030, %v8032
          %v8034 = vrot.slane %v8023, %v8033
          %v8036 = vunpack.c.l.s4 1983009808
          %v8037 = vunpack.c.0.s8 %v8036
          %v8038 = vlaneseq
          %v8039 = vshrl.u32 %v8038, 7
          %v8040 = vsub.s32 %v8037, %v8039
          %v8041 = vrot.slane %v8027, %v8040
          %v8042 = vcombine.high %v8034, %v8034
          %v8043 = vcombine.high %v8041, %v8041
          %v8044 = vcombine.high %v8024, %v8024
          %v8046 = vunpack.c.l.s4 1983009808
          %v8047 = vunpack.c.0.s8 %v8046
          %v8048 = vlaneseq
          %v8049 = vshrl.u32 %v8048, 7
          %v8050 = vsub.s32 %v8047, %v8049
          %v8051 = vrot.slane %v8024, %v8050
          %v8053 = vunpack.c.l.s4 1983009808
          %v8054 = vunpack.c.0.s8 %v8053
          %v8055 = vlaneseq
          %v8056 = vshrl.u32 %v8055, 7
          %v8057 = vsub.s32 %v8054, %v8056
          %v8058 = vrot.slane %v8044, %v8057
          %v8059 = vcombine.high %v8051, %v8051
          %v8060 = vcombine.high %v8058, %v8058
          %v8069 = vpack.c.bf16 %v8034, %v8034
          %v8070 = vpack.c.bf16 %v8042, %v8042
          %v8071 = vpack.c.bf16 %v8041, %v8041
          %v8072 = vpack.c.bf16 %v8043, %v8043
          %v8073 = vpack.c.bf16 %v8051, %v8051
          %v8074 = vpack.c.bf16 %v8059, %v8059
          %v8075 = vpack.c.bf16 %v8058, %v8058
          %v8076 = vpack.c.bf16 %v8060, %v8060
          %v8077 = vld [vmem:[%s3] sm:$0xff]
          %v8078 = vld [vmem:[%s3 + $0x8] sm:$0xff]
          %v8079 = vld [vmem:[%s3 + $0x10] sm:$0xff]
          %v8080 = vld [vmem:[%s3 + $0x18] sm:$0xff]
          %v8081 = vld [vmem:[%s3 + $0x20] sm:$0xff]
          %v8082 = vld [vmem:[%s3 + $0x28] sm:$0xff]
          %v8083 = vld [vmem:[%s3 + $0x30] sm:$0xff]
          %v8084 = vld [vmem:[%s3 + $0x38] sm:$0xff]
          %v8085 = vld [vmem:[%s3 + $0x40] sm:$0xff]
          %v8086 = vld [vmem:[%s3 + $0x48] sm:$0xff]
          %v8087 = vld [vmem:[%s3 + $0x50] sm:$0xff]
          %v8088 = vld [vmem:[%s3 + $0x58] sm:$0xff]
          %v8089 = vld [vmem:[%s3 + $0x60] sm:$0xff]
          %v8090 = vld [vmem:[%s3 + $0x68] sm:$0xff]
          %v8091 = vld [vmem:[%s3 + $0x70] sm:$0xff]
          %v8092 = vld [vmem:[%s3 + $0x78] sm:$0xff]
          %v8093 = vld [vmem:[%s3 + $0x80] sm:$0xff]
          %v8094 = vld [vmem:[%s3 + $0x88] sm:$0xff]
          %v8095 = vld [vmem:[%s3 + $0x90] sm:$0xff]
          %v8096 = vld [vmem:[%s3 + $0x98] sm:$0xff]
          %v8097 = vld [vmem:[%s3 + $0xa0] sm:$0xff]
          %v8098 = vld [vmem:[%s3 + $0xa8] sm:$0xff]
          %v8099 = vld [vmem:[%s3 + $0xb0] sm:$0xff]
          %v8100 = vld [vmem:[%s3 + $0xb8] sm:$0xff]
          %v8101 = vld [vmem:[%s3 + $0xc0] sm:$0xff]
          %v8102 = vld [vmem:[%s3 + $0xc8] sm:$0xff]
          %v8103 = vld [vmem:[%s3 + $0xd0] sm:$0xff]
          %v8104 = vld [vmem:[%s3 + $0xd8] sm:$0xff]
          %v8105 = vld [vmem:[%s3 + $0xe0] sm:$0xff]
          %v8106 = vld [vmem:[%s3 + $0xe8] sm:$0xff]
          %v8107 = vld [vmem:[%s3 + $0xf0] sm:$0xff]
          %v8108 = vld [vmem:[%s3 + $0xf8] sm:$0xff]
          %v8109 = vld [vmem:[%s3 + $0x100] sm:$0xff]
          %v8110 = vld [vmem:[%s3 + $0x108] sm:$0xff]
          %v8111 = vld [vmem:[%s3 + $0x110] sm:$0xff]
          %v8112 = vld [vmem:[%s3 + $0x118] sm:$0xff]
          %v8113 = vld [vmem:[%s3 + $0x120] sm:$0xff]
          %v8114 = vld [vmem:[%s3 + $0x128] sm:$0xff]
          %v8115 = vld [vmem:[%s3 + $0x130] sm:$0xff]
          %v8116 = vld [vmem:[%s3 + $0x138] sm:$0xff]
          %v8117 = vld [vmem:[%s3 + $0x140] sm:$0xff]
          %v8118 = vld [vmem:[%s3 + $0x148] sm:$0xff]
          %v8119 = vld [vmem:[%s3 + $0x150] sm:$0xff]
          %v8120 = vld [vmem:[%s3 + $0x158] sm:$0xff]
          %v8121 = vld [vmem:[%s3 + $0x160] sm:$0xff]
          %v8122 = vld [vmem:[%s3 + $0x168] sm:$0xff]
          %v8123 = vld [vmem:[%s3 + $0x170] sm:$0xff]
          %v8124 = vld [vmem:[%s3 + $0x178] sm:$0xff]
          %v8125 = vld [vmem:[%s3 + $0x180] sm:$0xff]
          %v8126 = vld [vmem:[%s3 + $0x188] sm:$0xff]
          %v8127 = vld [vmem:[%s3 + $0x190] sm:$0xff]
          %v8128 = vld [vmem:[%s3 + $0x198] sm:$0xff]
          %v8129 = vld [vmem:[%s3 + $0x1a0] sm:$0xff]
          %v8130 = vld [vmem:[%s3 + $0x1a8] sm:$0xff]
          %v8131 = vld [vmem:[%s3 + $0x1b0] sm:$0xff]
          %v8132 = vld [vmem:[%s3 + $0x1b8] sm:$0xff]
          %v8133 = vld [vmem:[%s3 + $0x1c0] sm:$0xff]
          %v8134 = vld [vmem:[%s3 + $0x1c8] sm:$0xff]
          %v8135 = vld [vmem:[%s3 + $0x1d0] sm:$0xff]
          %v8136 = vld [vmem:[%s3 + $0x1d8] sm:$0xff]
          %v8137 = vld [vmem:[%s3 + $0x1e0] sm:$0xff]
          %v8138 = vld [vmem:[%s3 + $0x1e8] sm:$0xff]
          %v8139 = vld [vmem:[%s3 + $0x1f0] sm:$0xff]
          %v8140 = vld [vmem:[%s3 + $0x1f8] sm:$0xff]
          %v8141 = vld [vmem:[%s3 + $0x200] sm:$0xff]
          %v8142 = vld [vmem:[%s3 + $0x208] sm:$0xff]
          %v8143 = vld [vmem:[%s3 + $0x210] sm:$0xff]
          %v8144 = vld [vmem:[%s3 + $0x218] sm:$0xff]
          %v8145 = vld [vmem:[%s3 + $0x220] sm:$0xff]
          %v8146 = vld [vmem:[%s3 + $0x228] sm:$0xff]
          %v8147 = vld [vmem:[%s3 + $0x230] sm:$0xff]
          %v8148 = vld [vmem:[%s3 + $0x238] sm:$0xff]
          %v8149 = vld [vmem:[%s3 + $0x240] sm:$0xff]
          %v8150 = vld [vmem:[%s3 + $0x248] sm:$0xff]
          %v8151 = vld [vmem:[%s3 + $0x250] sm:$0xff]
          %v8152 = vld [vmem:[%s3 + $0x258] sm:$0xff]
          %v8153 = vld [vmem:[%s3 + $0x260] sm:$0xff]
          %v8154 = vld [vmem:[%s3 + $0x268] sm:$0xff]
          %v8155 = vld [vmem:[%s3 + $0x270] sm:$0xff]
          %v8156 = vld [vmem:[%s3 + $0x278] sm:$0xff]
          %v8157 = vld [vmem:[%s3 + $0x280] sm:$0xff]
          %v8158 = vld [vmem:[%s3 + $0x288] sm:$0xff]
          %v8159 = vld [vmem:[%s3 + $0x290] sm:$0xff]
          %v8160 = vld [vmem:[%s3 + $0x298] sm:$0xff]
          %v8161 = vld [vmem:[%s3 + $0x2a0] sm:$0xff]
          %v8162 = vld [vmem:[%s3 + $0x2a8] sm:$0xff]
          %v8163 = vld [vmem:[%s3 + $0x2b0] sm:$0xff]
          %v8164 = vld [vmem:[%s3 + $0x2b8] sm:$0xff]
          %v8165 = vld [vmem:[%s3 + $0x2c0] sm:$0xff]
          %v8166 = vld [vmem:[%s3 + $0x2c8] sm:$0xff]
          %v8167 = vld [vmem:[%s3 + $0x2d0] sm:$0xff]
          %v8168 = vld [vmem:[%s3 + $0x2d8] sm:$0xff]
          %v8169 = vld [vmem:[%s3 + $0x2e0] sm:$0xff]
          %v8170 = vld [vmem:[%s3 + $0x2e8] sm:$0xff]
          %v8171 = vld [vmem:[%s3 + $0x2f0] sm:$0xff]
          %v8172 = vld [vmem:[%s3 + $0x2f8] sm:$0xff]
          %v8173 = vld [vmem:[%s3 + $0x300] sm:$0xff]
          %v8174 = vld [vmem:[%s3 + $0x308] sm:$0xff]
          %v8175 = vld [vmem:[%s3 + $0x310] sm:$0xff]
          %v8176 = vld [vmem:[%s3 + $0x318] sm:$0xff]
          %v8177 = vld [vmem:[%s3 + $0x320] sm:$0xff]
          %v8178 = vld [vmem:[%s3 + $0x328] sm:$0xff]
          %v8179 = vld [vmem:[%s3 + $0x330] sm:$0xff]
          %v8180 = vld [vmem:[%s3 + $0x338] sm:$0xff]
          %v8181 = vld [vmem:[%s3 + $0x340] sm:$0xff]
          %v8182 = vld [vmem:[%s3 + $0x348] sm:$0xff]
          %v8183 = vld [vmem:[%s3 + $0x350] sm:$0xff]
          %v8184 = vld [vmem:[%s3 + $0x358] sm:$0xff]
          %v8185 = vld [vmem:[%s3 + $0x360] sm:$0xff]
          %v8186 = vld [vmem:[%s3 + $0x368] sm:$0xff]
          %v8187 = vld [vmem:[%s3 + $0x370] sm:$0xff]
          %v8188 = vld [vmem:[%s3 + $0x378] sm:$0xff]
          %v8189 = vld [vmem:[%s3 + $0x380] sm:$0xff]
          %v8190 = vld [vmem:[%s3 + $0x388] sm:$0xff]
          %v8191 = vld [vmem:[%s3 + $0x390] sm:$0xff]
          %v8192 = vld [vmem:[%s3 + $0x398] sm:$0xff]
          %v8193 = vld [vmem:[%s3 + $0x3a0] sm:$0xff]
          %v8194 = vld [vmem:[%s3 + $0x3a8] sm:$0xff]
          %v8195 = vld [vmem:[%s3 + $0x3b0] sm:$0xff]
          %v8196 = vld [vmem:[%s3 + $0x3b8] sm:$0xff]
          %v8197 = vld [vmem:[%s3 + $0x3c0] sm:$0xff]
          %v8198 = vld [vmem:[%s3 + $0x3c8] sm:$0xff]
          %v8199 = vld [vmem:[%s3 + $0x3d0] sm:$0xff]
          %v8200 = vld [vmem:[%s3 + $0x3d8] sm:$0xff]
          %v8201 = vld [vmem:[%s3 + $0x3e0] sm:$0xff]
          %v8202 = vld [vmem:[%s3 + $0x3e8] sm:$0xff]
          %v8203 = vld [vmem:[%s3 + $0x3f0] sm:$0xff]
          %v8204 = vld [vmem:[%s3 + $0x3f8] sm:$0xff]
          %v8205 = vld [vmem:[%s3 + $0x400] sm:$0xff]
          %v8206 = vld [vmem:[%s3 + $0x408] sm:$0xff]
          %v8207 = vld [vmem:[%s3 + $0x410] sm:$0xff]
          %v8208 = vld [vmem:[%s3 + $0x418] sm:$0xff]
          %v8209 = vld [vmem:[%s3 + $0x420] sm:$0xff]
          %v8210 = vld [vmem:[%s3 + $0x428] sm:$0xff]
          %v8211 = vld [vmem:[%s3 + $0x430] sm:$0xff]
          %v8212 = vld [vmem:[%s3 + $0x438] sm:$0xff]
          %v8213 = vld [vmem:[%s3 + $0x440] sm:$0xff]
          %v8214 = vld [vmem:[%s3 + $0x448] sm:$0xff]
          %v8215 = vld [vmem:[%s3 + $0x450] sm:$0xff]
          %v8216 = vld [vmem:[%s3 + $0x458] sm:$0xff]
          %v8217 = vld [vmem:[%s3 + $0x460] sm:$0xff]
          %v8218 = vld [vmem:[%s3 + $0x468] sm:$0xff]
          %v8219 = vld [vmem:[%s3 + $0x470] sm:$0xff]
          %v8220 = vld [vmem:[%s3 + $0x478] sm:$0xff]
          %v8221 = vld [vmem:[%s3 + $0x480] sm:$0xff]
          %v8222 = vld [vmem:[%s3 + $0x488] sm:$0xff]
          %v8223 = vld [vmem:[%s3 + $0x490] sm:$0xff]
          %v8224 = vld [vmem:[%s3 + $0x498] sm:$0xff]
          %v8225 = vld [vmem:[%s3 + $0x4a0] sm:$0xff]
          %v8226 = vld [vmem:[%s3 + $0x4a8] sm:$0xff]
          %v8227 = vld [vmem:[%s3 + $0x4b0] sm:$0xff]
          %v8228 = vld [vmem:[%s3 + $0x4b8] sm:$0xff]
          %v8229 = vld [vmem:[%s3 + $0x4c0] sm:$0xff]
          %v8230 = vld [vmem:[%s3 + $0x4c8] sm:$0xff]
          %v8231 = vld [vmem:[%s3 + $0x4d0] sm:$0xff]
          %v8232 = vld [vmem:[%s3 + $0x4d8] sm:$0xff]
          %v8233 = vld [vmem:[%s3 + $0x4e0] sm:$0xff]
          %v8234 = vld [vmem:[%s3 + $0x4e8] sm:$0xff]
          %v8235 = vld [vmem:[%s3 + $0x4f0] sm:$0xff]
          %v8236 = vld [vmem:[%s3 + $0x4f8] sm:$0xff]
          %v8237 = vld [vmem:[%s3 + $0x500] sm:$0xff]
          %v8238 = vld [vmem:[%s3 + $0x508] sm:$0xff]
          %v8239 = vld [vmem:[%s3 + $0x510] sm:$0xff]
          %v8240 = vld [vmem:[%s3 + $0x518] sm:$0xff]
          %v8241 = vld [vmem:[%s3 + $0x520] sm:$0xff]
          %v8242 = vld [vmem:[%s3 + $0x528] sm:$0xff]
          %v8243 = vld [vmem:[%s3 + $0x530] sm:$0xff]
          %v8244 = vld [vmem:[%s3 + $0x538] sm:$0xff]
          %v8245 = vld [vmem:[%s3 + $0x540] sm:$0xff]
          %v8246 = vld [vmem:[%s3 + $0x548] sm:$0xff]
          %v8247 = vld [vmem:[%s3 + $0x550] sm:$0xff]
          %v8248 = vld [vmem:[%s3 + $0x558] sm:$0xff]
          %v8249 = vld [vmem:[%s3 + $0x560] sm:$0xff]
          %v8250 = vld [vmem:[%s3 + $0x568] sm:$0xff]
          %v8251 = vld [vmem:[%s3 + $0x570] sm:$0xff]
          %v8252 = vld [vmem:[%s3 + $0x578] sm:$0xff]
          %v8253 = vld [vmem:[%s3 + $0x580] sm:$0xff]
          %v8254 = vld [vmem:[%s3 + $0x588] sm:$0xff]
          %v8255 = vld [vmem:[%s3 + $0x590] sm:$0xff]
          %v8256 = vld [vmem:[%s3 + $0x598] sm:$0xff]
          %v8257 = vld [vmem:[%s3 + $0x5a0] sm:$0xff]
          %v8258 = vld [vmem:[%s3 + $0x5a8] sm:$0xff]
          %v8259 = vld [vmem:[%s3 + $0x5b0] sm:$0xff]
          %v8260 = vld [vmem:[%s3 + $0x5b8] sm:$0xff]
          %v8261 = vld [vmem:[%s3 + $0x5c0] sm:$0xff]
          %v8262 = vld [vmem:[%s3 + $0x5c8] sm:$0xff]
          %v8263 = vld [vmem:[%s3 + $0x5d0] sm:$0xff]
          %v8264 = vld [vmem:[%s3 + $0x5d8] sm:$0xff]
          %v8265 = vld [vmem:[%s3 + $0x5e0] sm:$0xff]
          %v8266 = vld [vmem:[%s3 + $0x5e8] sm:$0xff]
          %v8267 = vld [vmem:[%s3 + $0x5f0] sm:$0xff]
          %v8268 = vld [vmem:[%s3 + $0x5f8] sm:$0xff]
          %v8269 = vld [vmem:[%s3 + $0x600] sm:$0xff]
          %v8270 = vld [vmem:[%s3 + $0x608] sm:$0xff]
          %v8271 = vld [vmem:[%s3 + $0x610] sm:$0xff]
          %v8272 = vld [vmem:[%s3 + $0x618] sm:$0xff]
          %v8273 = vld [vmem:[%s3 + $0x620] sm:$0xff]
          %v8274 = vld [vmem:[%s3 + $0x628] sm:$0xff]
          %v8275 = vld [vmem:[%s3 + $0x630] sm:$0xff]
          %v8276 = vld [vmem:[%s3 + $0x638] sm:$0xff]
          %v8277 = vld [vmem:[%s3 + $0x640] sm:$0xff]
          %v8278 = vld [vmem:[%s3 + $0x648] sm:$0xff]
          %v8279 = vld [vmem:[%s3 + $0x650] sm:$0xff]
          %v8280 = vld [vmem:[%s3 + $0x658] sm:$0xff]
          %v8281 = vld [vmem:[%s3 + $0x660] sm:$0xff]
          %v8282 = vld [vmem:[%s3 + $0x668] sm:$0xff]
          %v8283 = vld [vmem:[%s3 + $0x670] sm:$0xff]
          %v8284 = vld [vmem:[%s3 + $0x678] sm:$0xff]
          %v8285 = vld [vmem:[%s3 + $0x680] sm:$0xff]
          %v8286 = vld [vmem:[%s3 + $0x688] sm:$0xff]
          %v8287 = vld [vmem:[%s3 + $0x690] sm:$0xff]
          %v8288 = vld [vmem:[%s3 + $0x698] sm:$0xff]
          %v8289 = vld [vmem:[%s3 + $0x6a0] sm:$0xff]
          %v8290 = vld [vmem:[%s3 + $0x6a8] sm:$0xff]
          %v8291 = vld [vmem:[%s3 + $0x6b0] sm:$0xff]
          %v8292 = vld [vmem:[%s3 + $0x6b8] sm:$0xff]
          %v8293 = vld [vmem:[%s3 + $0x6c0] sm:$0xff]
          %v8294 = vld [vmem:[%s3 + $0x6c8] sm:$0xff]
          %v8295 = vld [vmem:[%s3 + $0x6d0] sm:$0xff]
          %v8296 = vld [vmem:[%s3 + $0x6d8] sm:$0xff]
          %v8297 = vld [vmem:[%s3 + $0x6e0] sm:$0xff]
          %v8298 = vld [vmem:[%s3 + $0x6e8] sm:$0xff]
          %v8299 = vld [vmem:[%s3 + $0x6f0] sm:$0xff]
          %v8300 = vld [vmem:[%s3 + $0x6f8] sm:$0xff]
          %v8301 = vld [vmem:[%s3 + $0x700] sm:$0xff]
          %v8302 = vld [vmem:[%s3 + $0x708] sm:$0xff]
          %v8303 = vld [vmem:[%s3 + $0x710] sm:$0xff]
          %v8304 = vld [vmem:[%s3 + $0x718] sm:$0xff]
          %v8305 = vld [vmem:[%s3 + $0x720] sm:$0xff]
          %v8306 = vld [vmem:[%s3 + $0x728] sm:$0xff]
          %v8307 = vld [vmem:[%s3 + $0x730] sm:$0xff]
          %v8308 = vld [vmem:[%s3 + $0x738] sm:$0xff]
          %v8309 = vld [vmem:[%s3 + $0x740] sm:$0xff]
          %v8310 = vld [vmem:[%s3 + $0x748] sm:$0xff]
          %v8311 = vld [vmem:[%s3 + $0x750] sm:$0xff]
          %v8312 = vld [vmem:[%s3 + $0x758] sm:$0xff]
          %v8313 = vld [vmem:[%s3 + $0x760] sm:$0xff]
          %v8314 = vld [vmem:[%s3 + $0x768] sm:$0xff]
          %v8315 = vld [vmem:[%s3 + $0x770] sm:$0xff]
          %v8316 = vld [vmem:[%s3 + $0x778] sm:$0xff]
          %v8317 = vld [vmem:[%s3 + $0x780] sm:$0xff]
          %v8318 = vld [vmem:[%s3 + $0x788] sm:$0xff]
          %v8319 = vld [vmem:[%s3 + $0x790] sm:$0xff]
          %v8320 = vld [vmem:[%s3 + $0x798] sm:$0xff]
          %v8321 = vld [vmem:[%s3 + $0x7a0] sm:$0xff]
          %v8322 = vld [vmem:[%s3 + $0x7a8] sm:$0xff]
          %v8323 = vld [vmem:[%s3 + $0x7b0] sm:$0xff]
          %v8324 = vld [vmem:[%s3 + $0x7b8] sm:$0xff]
          %v8325 = vld [vmem:[%s3 + $0x7c0] sm:$0xff]
          %v8326 = vld [vmem:[%s3 + $0x7c8] sm:$0xff]
          %v8327 = vld [vmem:[%s3 + $0x7d0] sm:$0xff]
          %v8328 = vld [vmem:[%s3 + $0x7d8] sm:$0xff]
          %v8329 = vld [vmem:[%s3 + $0x7e0] sm:$0xff]
          %v8330 = vld [vmem:[%s3 + $0x7e8] sm:$0xff]
          %v8331 = vld [vmem:[%s3 + $0x7f0] sm:$0xff]
          %v8332 = vld [vmem:[%s3 + $0x7f8] sm:$0xff]
          %v8333 = vld [vmem:[%s4] sm:$0xf]
          %v8335 = vlaneseq
          %v8336 = vshrl.u32 %v8335, 7
          %v8337 = vsub.s32 0, %v8336
          %v8338 = vrot.slane %v8333, %v8337
          %v8339 = vlaneseq
          %v8340 = vshrl.u32 %v8339, 7
          %v8341 = vsub.s32 1, %v8340
          %v8342 = vrot.slane %v8333, %v8341
          %v8343 = vlaneseq
          %v8344 = vshrl.u32 %v8343, 7
          %v8345 = vsub.s32 2, %v8344
          %v8346 = vrot.slane %v8333, %v8345
          %v8347 = vlaneseq
          %v8348 = vshrl.u32 %v8347, 7
          %v8349 = vsub.s32 3, %v8348
          %v8350 = vrot.slane %v8333, %v8349
          %v8611 = vunpack.c.l.b16 %v8077
          %v8612 = vunpack.c.h.b16 %v8077
          %v8613 = vunpack.c.l.b16 %v8078
          %v8614 = vunpack.c.h.b16 %v8078
          %v8615 = vunpack.c.l.b16 %v8079
          %v8616 = vunpack.c.h.b16 %v8079
          %v8617 = vunpack.c.l.b16 %v8080
          %v8618 = vunpack.c.h.b16 %v8080
          %v8619 = vunpack.c.l.b16 %v8081
          %v8620 = vunpack.c.h.b16 %v8081
          %v8621 = vunpack.c.l.b16 %v8082
          %v8622 = vunpack.c.h.b16 %v8082
          %v8623 = vunpack.c.l.b16 %v8083
          %v8624 = vunpack.c.h.b16 %v8083
          %v8625 = vunpack.c.l.b16 %v8084
          %v8626 = vunpack.c.h.b16 %v8084
          %v8627 = vunpack.c.l.b16 %v8085
          %v8628 = vunpack.c.h.b16 %v8085
          %v8629 = vunpack.c.l.b16 %v8086
          %v8630 = vunpack.c.h.b16 %v8086
          %v8631 = vunpack.c.l.b16 %v8087
          %v8632 = vunpack.c.h.b16 %v8087
          %v8633 = vunpack.c.l.b16 %v8088
          %v8634 = vunpack.c.h.b16 %v8088
          %v8635 = vunpack.c.l.b16 %v8089
          %v8636 = vunpack.c.h.b16 %v8089
          %v8637 = vunpack.c.l.b16 %v8090
          %v8638 = vunpack.c.h.b16 %v8090
          %v8639 = vunpack.c.l.b16 %v8091
          %v8640 = vunpack.c.h.b16 %v8091
          %v8641 = vunpack.c.l.b16 %v8092
          %v8642 = vunpack.c.h.b16 %v8092
          %v8643 = vunpack.c.l.b16 %v8093
          %v8644 = vunpack.c.h.b16 %v8093
          %v8645 = vunpack.c.l.b16 %v8094
          %v8646 = vunpack.c.h.b16 %v8094
          %v8647 = vunpack.c.l.b16 %v8095
          %v8648 = vunpack.c.h.b16 %v8095
          %v8649 = vunpack.c.l.b16 %v8096
          %v8650 = vunpack.c.h.b16 %v8096
          %v8651 = vunpack.c.l.b16 %v8097
          %v8652 = vunpack.c.h.b16 %v8097
          %v8653 = vunpack.c.l.b16 %v8098
          %v8654 = vunpack.c.h.b16 %v8098
          %v8655 = vunpack.c.l.b16 %v8099
          %v8656 = vunpack.c.h.b16 %v8099
          %v8657 = vunpack.c.l.b16 %v8100
          %v8658 = vunpack.c.h.b16 %v8100
          %v8659 = vunpack.c.l.b16 %v8101
          %v8660 = vunpack.c.h.b16 %v8101
          %v8661 = vunpack.c.l.b16 %v8102
          %v8662 = vunpack.c.h.b16 %v8102
          %v8663 = vunpack.c.l.b16 %v8103
          %v8664 = vunpack.c.h.b16 %v8103
          %v8665 = vunpack.c.l.b16 %v8104
          %v8666 = vunpack.c.h.b16 %v8104
          %v8667 = vunpack.c.l.b16 %v8105
          %v8668 = vunpack.c.h.b16 %v8105
          %v8669 = vunpack.c.l.b16 %v8106
          %v8670 = vunpack.c.h.b16 %v8106
          %v8671 = vunpack.c.l.b16 %v8107
          %v8672 = vunpack.c.h.b16 %v8107
          %v8673 = vunpack.c.l.b16 %v8108
          %v8674 = vunpack.c.h.b16 %v8108
          %v8675 = vunpack.c.l.b16 %v8109
          %v8676 = vunpack.c.h.b16 %v8109
          %v8677 = vunpack.c.l.b16 %v8110
          %v8678 = vunpack.c.h.b16 %v8110
          %v8679 = vunpack.c.l.b16 %v8111
          %v8680 = vunpack.c.h.b16 %v8111
          %v8681 = vunpack.c.l.b16 %v8112
          %v8682 = vunpack.c.h.b16 %v8112
          %v8683 = vunpack.c.l.b16 %v8113
          %v8684 = vunpack.c.h.b16 %v8113
          %v8685 = vunpack.c.l.b16 %v8114
          %v8686 = vunpack.c.h.b16 %v8114
          %v8687 = vunpack.c.l.b16 %v8115
          %v8688 = vunpack.c.h.b16 %v8115
          %v8689 = vunpack.c.l.b16 %v8116
          %v8690 = vunpack.c.h.b16 %v8116
          %v8691 = vunpack.c.l.b16 %v8117
          %v8692 = vunpack.c.h.b16 %v8117
          %v8693 = vunpack.c.l.b16 %v8118
          %v8694 = vunpack.c.h.b16 %v8118
          %v8695 = vunpack.c.l.b16 %v8119
          %v8696 = vunpack.c.h.b16 %v8119
          %v8697 = vunpack.c.l.b16 %v8120
          %v8698 = vunpack.c.h.b16 %v8120
          %v8699 = vunpack.c.l.b16 %v8121
          %v8700 = vunpack.c.h.b16 %v8121
          %v8701 = vunpack.c.l.b16 %v8122
          %v8702 = vunpack.c.h.b16 %v8122
          %v8703 = vunpack.c.l.b16 %v8123
          %v8704 = vunpack.c.h.b16 %v8123
          %v8705 = vunpack.c.l.b16 %v8124
          %v8706 = vunpack.c.h.b16 %v8124
          %v8707 = vunpack.c.l.b16 %v8125
          %v8708 = vunpack.c.h.b16 %v8125
          %v8709 = vunpack.c.l.b16 %v8126
          %v8710 = vunpack.c.h.b16 %v8126
          %v8711 = vunpack.c.l.b16 %v8127
          %v8712 = vunpack.c.h.b16 %v8127
          %v8713 = vunpack.c.l.b16 %v8128
          %v8714 = vunpack.c.h.b16 %v8128
          %v8715 = vunpack.c.l.b16 %v8129
          %v8716 = vunpack.c.h.b16 %v8129
          %v8717 = vunpack.c.l.b16 %v8130
          %v8718 = vunpack.c.h.b16 %v8130
          %v8719 = vunpack.c.l.b16 %v8131
          %v8720 = vunpack.c.h.b16 %v8131
          %v8721 = vunpack.c.l.b16 %v8132
          %v8722 = vunpack.c.h.b16 %v8132
          %v8723 = vunpack.c.l.b16 %v8133
          %v8724 = vunpack.c.h.b16 %v8133
          %v8725 = vunpack.c.l.b16 %v8134
          %v8726 = vunpack.c.h.b16 %v8134
          %v8727 = vunpack.c.l.b16 %v8135
          %v8728 = vunpack.c.h.b16 %v8135
          %v8729 = vunpack.c.l.b16 %v8136
          %v8730 = vunpack.c.h.b16 %v8136
          %v8731 = vunpack.c.l.b16 %v8137
          %v8732 = vunpack.c.h.b16 %v8137
          %v8733 = vunpack.c.l.b16 %v8138
          %v8734 = vunpack.c.h.b16 %v8138
          %v8735 = vunpack.c.l.b16 %v8139
          %v8736 = vunpack.c.h.b16 %v8139
          %v8737 = vunpack.c.l.b16 %v8140
          %v8738 = vunpack.c.h.b16 %v8140
          %v8739 = vunpack.c.l.b16 %v8141
          %v8740 = vunpack.c.h.b16 %v8141
          %v8741 = vunpack.c.l.b16 %v8142
          %v8742 = vunpack.c.h.b16 %v8142
          %v8743 = vunpack.c.l.b16 %v8143
          %v8744 = vunpack.c.h.b16 %v8143
          %v8745 = vunpack.c.l.b16 %v8144
          %v8746 = vunpack.c.h.b16 %v8144
          %v8747 = vunpack.c.l.b16 %v8145
          %v8748 = vunpack.c.h.b16 %v8145
          %v8749 = vunpack.c.l.b16 %v8146
          %v8750 = vunpack.c.h.b16 %v8146
          %v8751 = vunpack.c.l.b16 %v8147
          %v8752 = vunpack.c.h.b16 %v8147
          %v8753 = vunpack.c.l.b16 %v8148
          %v8754 = vunpack.c.h.b16 %v8148
          %v8755 = vunpack.c.l.b16 %v8149
          %v8756 = vunpack.c.h.b16 %v8149
          %v8757 = vunpack.c.l.b16 %v8150
          %v8758 = vunpack.c.h.b16 %v8150
          %v8759 = vunpack.c.l.b16 %v8151
          %v8760 = vunpack.c.h.b16 %v8151
          %v8761 = vunpack.c.l.b16 %v8152
          %v8762 = vunpack.c.h.b16 %v8152
          %v8763 = vunpack.c.l.b16 %v8153
          %v8764 = vunpack.c.h.b16 %v8153
          %v8765 = vunpack.c.l.b16 %v8154
          %v8766 = vunpack.c.h.b16 %v8154
          %v8767 = vunpack.c.l.b16 %v8155
          %v8768 = vunpack.c.h.b16 %v8155
          %v8769 = vunpack.c.l.b16 %v8156
          %v8770 = vunpack.c.h.b16 %v8156
          %v8771 = vunpack.c.l.b16 %v8157
          %v8772 = vunpack.c.h.b16 %v8157
          %v8773 = vunpack.c.l.b16 %v8158
          %v8774 = vunpack.c.h.b16 %v8158
          %v8775 = vunpack.c.l.b16 %v8159
          %v8776 = vunpack.c.h.b16 %v8159
          %v8777 = vunpack.c.l.b16 %v8160
          %v8778 = vunpack.c.h.b16 %v8160
          %v8779 = vunpack.c.l.b16 %v8161
          %v8780 = vunpack.c.h.b16 %v8161
          %v8781 = vunpack.c.l.b16 %v8162
          %v8782 = vunpack.c.h.b16 %v8162
          %v8783 = vunpack.c.l.b16 %v8163
          %v8784 = vunpack.c.h.b16 %v8163
          %v8785 = vunpack.c.l.b16 %v8164
          %v8786 = vunpack.c.h.b16 %v8164
          %v8787 = vunpack.c.l.b16 %v8165
          %v8788 = vunpack.c.h.b16 %v8165
          %v8789 = vunpack.c.l.b16 %v8166
          %v8790 = vunpack.c.h.b16 %v8166
          %v8791 = vunpack.c.l.b16 %v8167
          %v8792 = vunpack.c.h.b16 %v8167
          %v8793 = vunpack.c.l.b16 %v8168
          %v8794 = vunpack.c.h.b16 %v8168
          %v8795 = vunpack.c.l.b16 %v8169
          %v8796 = vunpack.c.h.b16 %v8169
          %v8797 = vunpack.c.l.b16 %v8170
          %v8798 = vunpack.c.h.b16 %v8170
          %v8799 = vunpack.c.l.b16 %v8171
          %v8800 = vunpack.c.h.b16 %v8171
          %v8801 = vunpack.c.l.b16 %v8172
          %v8802 = vunpack.c.h.b16 %v8172
          %v8803 = vunpack.c.l.b16 %v8173
          %v8804 = vunpack.c.h.b16 %v8173
          %v8805 = vunpack.c.l.b16 %v8174
          %v8806 = vunpack.c.h.b16 %v8174
          %v8807 = vunpack.c.l.b16 %v8175
          %v8808 = vunpack.c.h.b16 %v8175
          %v8809 = vunpack.c.l.b16 %v8176
          %v8810 = vunpack.c.h.b16 %v8176
          %v8811 = vunpack.c.l.b16 %v8177
          %v8812 = vunpack.c.h.b16 %v8177
          %v8813 = vunpack.c.l.b16 %v8178
          %v8814 = vunpack.c.h.b16 %v8178
          %v8815 = vunpack.c.l.b16 %v8179
          %v8816 = vunpack.c.h.b16 %v8179
          %v8817 = vunpack.c.l.b16 %v8180
          %v8818 = vunpack.c.h.b16 %v8180
          %v8819 = vunpack.c.l.b16 %v8181
          %v8820 = vunpack.c.h.b16 %v8181
          %v8821 = vunpack.c.l.b16 %v8182
          %v8822 = vunpack.c.h.b16 %v8182
          %v8823 = vunpack.c.l.b16 %v8183
          %v8824 = vunpack.c.h.b16 %v8183
          %v8825 = vunpack.c.l.b16 %v8184
          %v8826 = vunpack.c.h.b16 %v8184
          %v8827 = vunpack.c.l.b16 %v8185
          %v8828 = vunpack.c.h.b16 %v8185
          %v8829 = vunpack.c.l.b16 %v8186
          %v8830 = vunpack.c.h.b16 %v8186
          %v8831 = vunpack.c.l.b16 %v8187
          %v8832 = vunpack.c.h.b16 %v8187
          %v8833 = vunpack.c.l.b16 %v8188
          %v8834 = vunpack.c.h.b16 %v8188
          %v8835 = vunpack.c.l.b16 %v8189
          %v8836 = vunpack.c.h.b16 %v8189
          %v8837 = vunpack.c.l.b16 %v8190
          %v8838 = vunpack.c.h.b16 %v8190
          %v8839 = vunpack.c.l.b16 %v8191
          %v8840 = vunpack.c.h.b16 %v8191
          %v8841 = vunpack.c.l.b16 %v8192
          %v8842 = vunpack.c.h.b16 %v8192
          %v8843 = vunpack.c.l.b16 %v8193
          %v8844 = vunpack.c.h.b16 %v8193
          %v8845 = vunpack.c.l.b16 %v8194
          %v8846 = vunpack.c.h.b16 %v8194
          %v8847 = vunpack.c.l.b16 %v8195
          %v8848 = vunpack.c.h.b16 %v8195
          %v8849 = vunpack.c.l.b16 %v8196
          %v8850 = vunpack.c.h.b16 %v8196
          %v8851 = vunpack.c.l.b16 %v8197
          %v8852 = vunpack.c.h.b16 %v8197
          %v8853 = vunpack.c.l.b16 %v8198
          %v8854 = vunpack.c.h.b16 %v8198
          %v8855 = vunpack.c.l.b16 %v8199
          %v8856 = vunpack.c.h.b16 %v8199
          %v8857 = vunpack.c.l.b16 %v8200
          %v8858 = vunpack.c.h.b16 %v8200
          %v8859 = vunpack.c.l.b16 %v8201
          %v8860 = vunpack.c.h.b16 %v8201
          %v8861 = vunpack.c.l.b16 %v8202
          %v8862 = vunpack.c.h.b16 %v8202
          %v8863 = vunpack.c.l.b16 %v8203
          %v8864 = vunpack.c.h.b16 %v8203
          %v8865 = vunpack.c.l.b16 %v8204
          %v8866 = vunpack.c.h.b16 %v8204
          %v8867 = vunpack.c.l.b16 %v8205
          %v8868 = vunpack.c.h.b16 %v8205
          %v8869 = vunpack.c.l.b16 %v8206
          %v8870 = vunpack.c.h.b16 %v8206
          %v8871 = vunpack.c.l.b16 %v8207
          %v8872 = vunpack.c.h.b16 %v8207
          %v8873 = vunpack.c.l.b16 %v8208
          %v8874 = vunpack.c.h.b16 %v8208
          %v8875 = vunpack.c.l.b16 %v8209
          %v8876 = vunpack.c.h.b16 %v8209
          %v8877 = vunpack.c.l.b16 %v8210
          %v8878 = vunpack.c.h.b16 %v8210
          %v8879 = vunpack.c.l.b16 %v8211
          %v8880 = vunpack.c.h.b16 %v8211
          %v8881 = vunpack.c.l.b16 %v8212
          %v8882 = vunpack.c.h.b16 %v8212
          %v8883 = vunpack.c.l.b16 %v8213
          %v8884 = vunpack.c.h.b16 %v8213
          %v8885 = vunpack.c.l.b16 %v8214
          %v8886 = vunpack.c.h.b16 %v8214
          %v8887 = vunpack.c.l.b16 %v8215
          %v8888 = vunpack.c.h.b16 %v8215
          %v8889 = vunpack.c.l.b16 %v8216
          %v8890 = vunpack.c.h.b16 %v8216
          %v8891 = vunpack.c.l.b16 %v8217
          %v8892 = vunpack.c.h.b16 %v8217
          %v8893 = vunpack.c.l.b16 %v8218
          %v8894 = vunpack.c.h.b16 %v8218
          %v8895 = vunpack.c.l.b16 %v8219
          %v8896 = vunpack.c.h.b16 %v8219
          %v8897 = vunpack.c.l.b16 %v8220
          %v8898 = vunpack.c.h.b16 %v8220
          %v8899 = vunpack.c.l.b16 %v8221
          %v8900 = vunpack.c.h.b16 %v8221
          %v8901 = vunpack.c.l.b16 %v8222
          %v8902 = vunpack.c.h.b16 %v8222
          %v8903 = vunpack.c.l.b16 %v8223
          %v8904 = vunpack.c.h.b16 %v8223
          %v8905 = vunpack.c.l.b16 %v8224
          %v8906 = vunpack.c.h.b16 %v8224
          %v8907 = vunpack.c.l.b16 %v8225
          %v8908 = vunpack.c.h.b16 %v8225
          %v8909 = vunpack.c.l.b16 %v8226
          %v8910 = vunpack.c.h.b16 %v8226
          %v8911 = vunpack.c.l.b16 %v8227
          %v8912 = vunpack.c.h.b16 %v8227
          %v8913 = vunpack.c.l.b16 %v8228
          %v8914 = vunpack.c.h.b16 %v8228
          %v8915 = vunpack.c.l.b16 %v8229
          %v8916 = vunpack.c.h.b16 %v8229
          %v8917 = vunpack.c.l.b16 %v8230
          %v8918 = vunpack.c.h.b16 %v8230
          %v8919 = vunpack.c.l.b16 %v8231
          %v8920 = vunpack.c.h.b16 %v8231
          %v8921 = vunpack.c.l.b16 %v8232
          %v8922 = vunpack.c.h.b16 %v8232
          %v8923 = vunpack.c.l.b16 %v8233
          %v8924 = vunpack.c.h.b16 %v8233
          %v8925 = vunpack.c.l.b16 %v8234
          %v8926 = vunpack.c.h.b16 %v8234
          %v8927 = vunpack.c.l.b16 %v8235
          %v8928 = vunpack.c.h.b16 %v8235
          %v8929 = vunpack.c.l.b16 %v8236
          %v8930 = vunpack.c.h.b16 %v8236
          %v8931 = vunpack.c.l.b16 %v8237
          %v8932 = vunpack.c.h.b16 %v8237
          %v8933 = vunpack.c.l.b16 %v8238
          %v8934 = vunpack.c.h.b16 %v8238
          %v8935 = vunpack.c.l.b16 %v8239
          %v8936 = vunpack.c.h.b16 %v8239
          %v8937 = vunpack.c.l.b16 %v8240
          %v8938 = vunpack.c.h.b16 %v8240
          %v8939 = vunpack.c.l.b16 %v8241
          %v8940 = vunpack.c.h.b16 %v8241
          %v8941 = vunpack.c.l.b16 %v8242
          %v8942 = vunpack.c.h.b16 %v8242
          %v8943 = vunpack.c.l.b16 %v8243
          %v8944 = vunpack.c.h.b16 %v8243
          %v8945 = vunpack.c.l.b16 %v8244
          %v8946 = vunpack.c.h.b16 %v8244
          %v8947 = vunpack.c.l.b16 %v8245
          %v8948 = vunpack.c.h.b16 %v8245
          %v8949 = vunpack.c.l.b16 %v8246
          %v8950 = vunpack.c.h.b16 %v8246
          %v8951 = vunpack.c.l.b16 %v8247
          %v8952 = vunpack.c.h.b16 %v8247
          %v8953 = vunpack.c.l.b16 %v8248
          %v8954 = vunpack.c.h.b16 %v8248
          %v8955 = vunpack.c.l.b16 %v8249
          %v8956 = vunpack.c.h.b16 %v8249
          %v8957 = vunpack.c.l.b16 %v8250
          %v8958 = vunpack.c.h.b16 %v8250
          %v8959 = vunpack.c.l.b16 %v8251
          %v8960 = vunpack.c.h.b16 %v8251
          %v8961 = vunpack.c.l.b16 %v8252
          %v8962 = vunpack.c.h.b16 %v8252
          %v8963 = vunpack.c.l.b16 %v8253
          %v8964 = vunpack.c.h.b16 %v8253
          %v8965 = vunpack.c.l.b16 %v8254
          %v8966 = vunpack.c.h.b16 %v8254
          %v8967 = vunpack.c.l.b16 %v8255
          %v8968 = vunpack.c.h.b16 %v8255
          %v8969 = vunpack.c.l.b16 %v8256
          %v8970 = vunpack.c.h.b16 %v8256
          %v8971 = vunpack.c.l.b16 %v8257
          %v8972 = vunpack.c.h.b16 %v8257
          %v8973 = vunpack.c.l.b16 %v8258
          %v8974 = vunpack.c.h.b16 %v8258
          %v8975 = vunpack.c.l.b16 %v8259
          %v8976 = vunpack.c.h.b16 %v8259
          %v8977 = vunpack.c.l.b16 %v8260
          %v8978 = vunpack.c.h.b16 %v8260
          %v8979 = vunpack.c.l.b16 %v8261
          %v8980 = vunpack.c.h.b16 %v8261
          %v8981 = vunpack.c.l.b16 %v8262
          %v8982 = vunpack.c.h.b16 %v8262
          %v8983 = vunpack.c.l.b16 %v8263
          %v8984 = vunpack.c.h.b16 %v8263
          %v8985 = vunpack.c.l.b16 %v8264
          %v8986 = vunpack.c.h.b16 %v8264
          %v8987 = vunpack.c.l.b16 %v8265
          %v8988 = vunpack.c.h.b16 %v8265
          %v8989 = vunpack.c.l.b16 %v8266
          %v8990 = vunpack.c.h.b16 %v8266
          %v8991 = vunpack.c.l.b16 %v8267
          %v8992 = vunpack.c.h.b16 %v8267
          %v8993 = vunpack.c.l.b16 %v8268
          %v8994 = vunpack.c.h.b16 %v8268
          %v8995 = vunpack.c.l.b16 %v8269
          %v8996 = vunpack.c.h.b16 %v8269
          %v8997 = vunpack.c.l.b16 %v8270
          %v8998 = vunpack.c.h.b16 %v8270
          %v8999 = vunpack.c.l.b16 %v8271
          %v9000 = vunpack.c.h.b16 %v8271
          %v9001 = vunpack.c.l.b16 %v8272
          %v9002 = vunpack.c.h.b16 %v8272
          %v9003 = vunpack.c.l.b16 %v8273
          %v9004 = vunpack.c.h.b16 %v8273
          %v9005 = vunpack.c.l.b16 %v8274
          %v9006 = vunpack.c.h.b16 %v8274
          %v9007 = vunpack.c.l.b16 %v8275
          %v9008 = vunpack.c.h.b16 %v8275
          %v9009 = vunpack.c.l.b16 %v8276
          %v9010 = vunpack.c.h.b16 %v8276
          %v9011 = vunpack.c.l.b16 %v8277
          %v9012 = vunpack.c.h.b16 %v8277
          %v9013 = vunpack.c.l.b16 %v8278
          %v9014 = vunpack.c.h.b16 %v8278
          %v9015 = vunpack.c.l.b16 %v8279
          %v9016 = vunpack.c.h.b16 %v8279
          %v9017 = vunpack.c.l.b16 %v8280
          %v9018 = vunpack.c.h.b16 %v8280
          %v9019 = vunpack.c.l.b16 %v8281
          %v9020 = vunpack.c.h.b16 %v8281
          %v9021 = vunpack.c.l.b16 %v8282
          %v9022 = vunpack.c.h.b16 %v8282
          %v9023 = vunpack.c.l.b16 %v8283
          %v9024 = vunpack.c.h.b16 %v8283
          %v9025 = vunpack.c.l.b16 %v8284
          %v9026 = vunpack.c.h.b16 %v8284
          %v9027 = vunpack.c.l.b16 %v8285
          %v9028 = vunpack.c.h.b16 %v8285
          %v9029 = vunpack.c.l.b16 %v8286
          %v9030 = vunpack.c.h.b16 %v8286
          %v9031 = vunpack.c.l.b16 %v8287
          %v9032 = vunpack.c.h.b16 %v8287
          %v9033 = vunpack.c.l.b16 %v8288
          %v9034 = vunpack.c.h.b16 %v8288
          %v9035 = vunpack.c.l.b16 %v8289
          %v9036 = vunpack.c.h.b16 %v8289
          %v9037 = vunpack.c.l.b16 %v8290
          %v9038 = vunpack.c.h.b16 %v8290
          %v9039 = vunpack.c.l.b16 %v8291
          %v9040 = vunpack.c.h.b16 %v8291
          %v9041 = vunpack.c.l.b16 %v8292
          %v9042 = vunpack.c.h.b16 %v8292
          %v9043 = vunpack.c.l.b16 %v8293
          %v9044 = vunpack.c.h.b16 %v8293
          %v9045 = vunpack.c.l.b16 %v8294
          %v9046 = vunpack.c.h.b16 %v8294
          %v9047 = vunpack.c.l.b16 %v8295
          %v9048 = vunpack.c.h.b16 %v8295
          %v9049 = vunpack.c.l.b16 %v8296
          %v9050 = vunpack.c.h.b16 %v8296
          %v9051 = vunpack.c.l.b16 %v8297
          %v9052 = vunpack.c.h.b16 %v8297
          %v9053 = vunpack.c.l.b16 %v8298
          %v9054 = vunpack.c.h.b16 %v8298
          %v9055 = vunpack.c.l.b16 %v8299
          %v9056 = vunpack.c.h.b16 %v8299
          %v9057 = vunpack.c.l.b16 %v8300
          %v9058 = vunpack.c.h.b16 %v8300
          %v9059 = vunpack.c.l.b16 %v8301
          %v9060 = vunpack.c.h.b16 %v8301
          %v9061 = vunpack.c.l.b16 %v8302
          %v9062 = vunpack.c.h.b16 %v8302
          %v9063 = vunpack.c.l.b16 %v8303
          %v9064 = vunpack.c.h.b16 %v8303
          %v9065 = vunpack.c.l.b16 %v8304
          %v9066 = vunpack.c.h.b16 %v8304
          %v9067 = vunpack.c.l.b16 %v8305
          %v9068 = vunpack.c.h.b16 %v8305
          %v9069 = vunpack.c.l.b16 %v8306
          %v9070 = vunpack.c.h.b16 %v8306
          %v9071 = vunpack.c.l.b16 %v8307
          %v9072 = vunpack.c.h.b16 %v8307
          %v9073 = vunpack.c.l.b16 %v8308
          %v9074 = vunpack.c.h.b16 %v8308
          %v9075 = vunpack.c.l.b16 %v8309
          %v9076 = vunpack.c.h.b16 %v8309
          %v9077 = vunpack.c.l.b16 %v8310
          %v9078 = vunpack.c.h.b16 %v8310
          %v9079 = vunpack.c.l.b16 %v8311
          %v9080 = vunpack.c.h.b16 %v8311
          %v9081 = vunpack.c.l.b16 %v8312
          %v9082 = vunpack.c.h.b16 %v8312
          %v9083 = vunpack.c.l.b16 %v8313
          %v9084 = vunpack.c.h.b16 %v8313
          %v9085 = vunpack.c.l.b16 %v8314
          %v9086 = vunpack.c.h.b16 %v8314
          %v9087 = vunpack.c.l.b16 %v8315
          %v9088 = vunpack.c.h.b16 %v8315
          %v9089 = vunpack.c.l.b16 %v8316
          %v9090 = vunpack.c.h.b16 %v8316
          %v9091 = vunpack.c.l.b16 %v8317
          %v9092 = vunpack.c.h.b16 %v8317
          %v9093 = vunpack.c.l.b16 %v8318
          %v9094 = vunpack.c.h.b16 %v8318
          %v9095 = vunpack.c.l.b16 %v8319
          %v9096 = vunpack.c.h.b16 %v8319
          %v9097 = vunpack.c.l.b16 %v8320
          %v9098 = vunpack.c.h.b16 %v8320
          %v9099 = vunpack.c.l.b16 %v8321
          %v9100 = vunpack.c.h.b16 %v8321
          %v9101 = vunpack.c.l.b16 %v8322
          %v9102 = vunpack.c.h.b16 %v8322
          %v9103 = vunpack.c.l.b16 %v8323
          %v9104 = vunpack.c.h.b16 %v8323
          %v9105 = vunpack.c.l.b16 %v8324
          %v9106 = vunpack.c.h.b16 %v8324
          %v9107 = vunpack.c.l.b16 %v8325
          %v9108 = vunpack.c.h.b16 %v8325
          %v9109 = vunpack.c.l.b16 %v8326
          %v9110 = vunpack.c.h.b16 %v8326
          %v9111 = vunpack.c.l.b16 %v8327
          %v9112 = vunpack.c.h.b16 %v8327
          %v9113 = vunpack.c.l.b16 %v8328
          %v9114 = vunpack.c.h.b16 %v8328
          %v9115 = vunpack.c.l.b16 %v8329
          %v9116 = vunpack.c.h.b16 %v8329
          %v9117 = vunpack.c.l.b16 %v8330
          %v9118 = vunpack.c.h.b16 %v8330
          %v9119 = vunpack.c.l.b16 %v8331
          %v9120 = vunpack.c.h.b16 %v8331
          %v9121 = vunpack.c.l.b16 %v8332
          %v9122 = vunpack.c.h.b16 %v8332
          %v9123 = vpack.c.b16 %v8615, %v8611
          %v9124 = vpack.c.b16 %v8616, %v8612
          %v9125 = vpack.c.b16 %v8617, %v8613
          %v9126 = vpack.c.b16 %v8618, %v8614
          %v9127 = vpack.c.b16 %v8623, %v8619
          %v9128 = vpack.c.b16 %v8624, %v8620
          %v9129 = vpack.c.b16 %v8625, %v8621
          %v9130 = vpack.c.b16 %v8626, %v8622
          %v9131 = vpack.c.b16 %v8631, %v8627
          %v9132 = vpack.c.b16 %v8632, %v8628
          %v9133 = vpack.c.b16 %v8633, %v8629
          %v9134 = vpack.c.b16 %v8634, %v8630
          %v9135 = vpack.c.b16 %v8639, %v8635
          %v9136 = vpack.c.b16 %v8640, %v8636
          %v9137 = vpack.c.b16 %v8641, %v8637
          %v9138 = vpack.c.b16 %v8642, %v8638
          %v9139 = vpack.c.b16 %v8647, %v8643
          %v9140 = vpack.c.b16 %v8648, %v8644
          %v9141 = vpack.c.b16 %v8649, %v8645
          %v9142 = vpack.c.b16 %v8650, %v8646
          %v9143 = vpack.c.b16 %v8655, %v8651
          %v9144 = vpack.c.b16 %v8656, %v8652
          %v9145 = vpack.c.b16 %v8657, %v8653
          %v9146 = vpack.c.b16 %v8658, %v8654
          %v9147 = vpack.c.b16 %v8663, %v8659
          %v9148 = vpack.c.b16 %v8664, %v8660
          %v9149 = vpack.c.b16 %v8665, %v8661
          %v9150 = vpack.c.b16 %v8666, %v8662
          %v9151 = vpack.c.b16 %v8671, %v8667
          %v9152 = vpack.c.b16 %v8672, %v8668
          %v9153 = vpack.c.b16 %v8673, %v8669
          %v9154 = vpack.c.b16 %v8674, %v8670
          %v9155 = vpack.c.b16 %v8679, %v8675
          %v9156 = vpack.c.b16 %v8680, %v8676
          %v9157 = vpack.c.b16 %v8681, %v8677
          %v9158 = vpack.c.b16 %v8682, %v8678
          %v9159 = vpack.c.b16 %v8687, %v8683
          %v9160 = vpack.c.b16 %v8688, %v8684
          %v9161 = vpack.c.b16 %v8689, %v8685
          %v9162 = vpack.c.b16 %v8690, %v8686
          %v9163 = vpack.c.b16 %v8695, %v8691
          %v9164 = vpack.c.b16 %v8696, %v8692
          %v9165 = vpack.c.b16 %v8697, %v8693
          %v9166 = vpack.c.b16 %v8698, %v8694
          %v9167 = vpack.c.b16 %v8703, %v8699
          %v9168 = vpack.c.b16 %v8704, %v8700
          %v9169 = vpack.c.b16 %v8705, %v8701
          %v9170 = vpack.c.b16 %v8706, %v8702
          %v9171 = vpack.c.b16 %v8711, %v8707
          %v9172 = vpack.c.b16 %v8712, %v8708
          %v9173 = vpack.c.b16 %v8713, %v8709
          %v9174 = vpack.c.b16 %v8714, %v8710
          %v9175 = vpack.c.b16 %v8719, %v8715
          %v9176 = vpack.c.b16 %v8720, %v8716
          %v9177 = vpack.c.b16 %v8721, %v8717
          %v9178 = vpack.c.b16 %v8722, %v8718
          %v9179 = vpack.c.b16 %v8727, %v8723
          %v9180 = vpack.c.b16 %v8728, %v8724
          %v9181 = vpack.c.b16 %v8729, %v8725
          %v9182 = vpack.c.b16 %v8730, %v8726
          %v9183 = vpack.c.b16 %v8735, %v8731
          %v9184 = vpack.c.b16 %v8736, %v8732
          %v9185 = vpack.c.b16 %v8737, %v8733
          %v9186 = vpack.c.b16 %v8738, %v8734
          %v9187 = vpack.c.b16 %v8743, %v8739
          %v9188 = vpack.c.b16 %v8744, %v8740
          %v9189 = vpack.c.b16 %v8745, %v8741
          %v9190 = vpack.c.b16 %v8746, %v8742
          %v9191 = vpack.c.b16 %v8751, %v8747
          %v9192 = vpack.c.b16 %v8752, %v8748
          %v9193 = vpack.c.b16 %v8753, %v8749
          %v9194 = vpack.c.b16 %v8754, %v8750
          %v9195 = vpack.c.b16 %v8759, %v8755
          %v9196 = vpack.c.b16 %v8760, %v8756
          %v9197 = vpack.c.b16 %v8761, %v8757
          %v9198 = vpack.c.b16 %v8762, %v8758
          %v9199 = vpack.c.b16 %v8767, %v8763
          %v9200 = vpack.c.b16 %v8768, %v8764
          %v9201 = vpack.c.b16 %v8769, %v8765
          %v9202 = vpack.c.b16 %v8770, %v8766
          %v9203 = vpack.c.b16 %v8775, %v8771
          %v9204 = vpack.c.b16 %v8776, %v8772
          %v9205 = vpack.c.b16 %v8777, %v8773
          %v9206 = vpack.c.b16 %v8778, %v8774
          %v9207 = vpack.c.b16 %v8783, %v8779
          %v9208 = vpack.c.b16 %v8784, %v8780
          %v9209 = vpack.c.b16 %v8785, %v8781
          %v9210 = vpack.c.b16 %v8786, %v8782
          %v9211 = vpack.c.b16 %v8791, %v8787
          %v9212 = vpack.c.b16 %v8792, %v8788
          %v9213 = vpack.c.b16 %v8793, %v8789
          %v9214 = vpack.c.b16 %v8794, %v8790
          %v9215 = vpack.c.b16 %v8799, %v8795
          %v9216 = vpack.c.b16 %v8800, %v8796
          %v9217 = vpack.c.b16 %v8801, %v8797
          %v9218 = vpack.c.b16 %v8802, %v8798
          %v9219 = vpack.c.b16 %v8807, %v8803
          %v9220 = vpack.c.b16 %v8808, %v8804
          %v9221 = vpack.c.b16 %v8809, %v8805
          %v9222 = vpack.c.b16 %v8810, %v8806
          %v9223 = vpack.c.b16 %v8815, %v8811
          %v9224 = vpack.c.b16 %v8816, %v8812
          %v9225 = vpack.c.b16 %v8817, %v8813
          %v9226 = vpack.c.b16 %v8818, %v8814
          %v9227 = vpack.c.b16 %v8823, %v8819
          %v9228 = vpack.c.b16 %v8824, %v8820
          %v9229 = vpack.c.b16 %v8825, %v8821
          %v9230 = vpack.c.b16 %v8826, %v8822
          %v9231 = vpack.c.b16 %v8831, %v8827
          %v9232 = vpack.c.b16 %v8832, %v8828
          %v9233 = vpack.c.b16 %v8833, %v8829
          %v9234 = vpack.c.b16 %v8834, %v8830
          %v9235 = vpack.c.b16 %v8839, %v8835
          %v9236 = vpack.c.b16 %v8840, %v8836
          %v9237 = vpack.c.b16 %v8841, %v8837
          %v9238 = vpack.c.b16 %v8842, %v8838
          %v9239 = vpack.c.b16 %v8847, %v8843
          %v9240 = vpack.c.b16 %v8848, %v8844
          %v9241 = vpack.c.b16 %v8849, %v8845
          %v9242 = vpack.c.b16 %v8850, %v8846
          %v9243 = vpack.c.b16 %v8855, %v8851
          %v9244 = vpack.c.b16 %v8856, %v8852
          %v9245 = vpack.c.b16 %v8857, %v8853
          %v9246 = vpack.c.b16 %v8858, %v8854
          %v9247 = vpack.c.b16 %v8863, %v8859
          %v9248 = vpack.c.b16 %v8864, %v8860
          %v9249 = vpack.c.b16 %v8865, %v8861
          %v9250 = vpack.c.b16 %v8866, %v8862
          %v9251 = vpack.c.b16 %v8871, %v8867
          %v9252 = vpack.c.b16 %v8872, %v8868
          %v9253 = vpack.c.b16 %v8873, %v8869
          %v9254 = vpack.c.b16 %v8874, %v8870
          %v9255 = vpack.c.b16 %v8879, %v8875
          %v9256 = vpack.c.b16 %v8880, %v8876
          %v9257 = vpack.c.b16 %v8881, %v8877
          %v9258 = vpack.c.b16 %v8882, %v8878
          %v9259 = vpack.c.b16 %v8887, %v8883
          %v9260 = vpack.c.b16 %v8888, %v8884
          %v9261 = vpack.c.b16 %v8889, %v8885
          %v9262 = vpack.c.b16 %v8890, %v8886
          %v9263 = vpack.c.b16 %v8895, %v8891
          %v9264 = vpack.c.b16 %v8896, %v8892
          %v9265 = vpack.c.b16 %v8897, %v8893
          %v9266 = vpack.c.b16 %v8898, %v8894
          %v9267 = vpack.c.b16 %v8903, %v8899
          %v9268 = vpack.c.b16 %v8904, %v8900
          %v9269 = vpack.c.b16 %v8905, %v8901
          %v9270 = vpack.c.b16 %v8906, %v8902
          %v9271 = vpack.c.b16 %v8911, %v8907
          %v9272 = vpack.c.b16 %v8912, %v8908
          %v9273 = vpack.c.b16 %v8913, %v8909
          %v9274 = vpack.c.b16 %v8914, %v8910
          %v9275 = vpack.c.b16 %v8919, %v8915
          %v9276 = vpack.c.b16 %v8920, %v8916
          %v9277 = vpack.c.b16 %v8921, %v8917
          %v9278 = vpack.c.b16 %v8922, %v8918
          %v9279 = vpack.c.b16 %v8927, %v8923
          %v9280 = vpack.c.b16 %v8928, %v8924
          %v9281 = vpack.c.b16 %v8929, %v8925
          %v9282 = vpack.c.b16 %v8930, %v8926
          %v9283 = vpack.c.b16 %v8935, %v8931
          %v9284 = vpack.c.b16 %v8936, %v8932
          %v9285 = vpack.c.b16 %v8937, %v8933
          %v9286 = vpack.c.b16 %v8938, %v8934
          %v9287 = vpack.c.b16 %v8943, %v8939
          %v9288 = vpack.c.b16 %v8944, %v8940
          %v9289 = vpack.c.b16 %v8945, %v8941
          %v9290 = vpack.c.b16 %v8946, %v8942
          %v9291 = vpack.c.b16 %v8951, %v8947
          %v9292 = vpack.c.b16 %v8952, %v8948
          %v9293 = vpack.c.b16 %v8953, %v8949
          %v9294 = vpack.c.b16 %v8954, %v8950
          %v9295 = vpack.c.b16 %v8959, %v8955
          %v9296 = vpack.c.b16 %v8960, %v8956
          %v9297 = vpack.c.b16 %v8961, %v8957
          %v9298 = vpack.c.b16 %v8962, %v8958
          %v9299 = vpack.c.b16 %v8967, %v8963
          %v9300 = vpack.c.b16 %v8968, %v8964
          %v9301 = vpack.c.b16 %v8969, %v8965
          %v9302 = vpack.c.b16 %v8970, %v8966
          %v9303 = vpack.c.b16 %v8975, %v8971
          %v9304 = vpack.c.b16 %v8976, %v8972
          %v9305 = vpack.c.b16 %v8977, %v8973
          %v9306 = vpack.c.b16 %v8978, %v8974
          %v9307 = vpack.c.b16 %v8983, %v8979
          %v9308 = vpack.c.b16 %v8984, %v8980
          %v9309 = vpack.c.b16 %v8985, %v8981
          %v9310 = vpack.c.b16 %v8986, %v8982
          %v9311 = vpack.c.b16 %v8991, %v8987
          %v9312 = vpack.c.b16 %v8992, %v8988
          %v9313 = vpack.c.b16 %v8993, %v8989
          %v9314 = vpack.c.b16 %v8994, %v8990
          %v9315 = vpack.c.b16 %v8999, %v8995
          %v9316 = vpack.c.b16 %v9000, %v8996
          %v9317 = vpack.c.b16 %v9001, %v8997
          %v9318 = vpack.c.b16 %v9002, %v8998
          %v9319 = vpack.c.b16 %v9007, %v9003
          %v9320 = vpack.c.b16 %v9008, %v9004
          %v9321 = vpack.c.b16 %v9009, %v9005
          %v9322 = vpack.c.b16 %v9010, %v9006
          %v9323 = vpack.c.b16 %v9015, %v9011
          %v9324 = vpack.c.b16 %v9016, %v9012
          %v9325 = vpack.c.b16 %v9017, %v9013
          %v9326 = vpack.c.b16 %v9018, %v9014
          %v9327 = vpack.c.b16 %v9023, %v9019
          %v9328 = vpack.c.b16 %v9024, %v9020
          %v9329 = vpack.c.b16 %v9025, %v9021
          %v9330 = vpack.c.b16 %v9026, %v9022
          %v9331 = vpack.c.b16 %v9031, %v9027
          %v9332 = vpack.c.b16 %v9032, %v9028
          %v9333 = vpack.c.b16 %v9033, %v9029
          %v9334 = vpack.c.b16 %v9034, %v9030
          %v9335 = vpack.c.b16 %v9039, %v9035
          %v9336 = vpack.c.b16 %v9040, %v9036
          %v9337 = vpack.c.b16 %v9041, %v9037
          %v9338 = vpack.c.b16 %v9042, %v9038
          %v9339 = vpack.c.b16 %v9047, %v9043
          %v9340 = vpack.c.b16 %v9048, %v9044
          %v9341 = vpack.c.b16 %v9049, %v9045
          %v9342 = vpack.c.b16 %v9050, %v9046
          %v9343 = vpack.c.b16 %v9055, %v9051
          %v9344 = vpack.c.b16 %v9056, %v9052
          %v9345 = vpack.c.b16 %v9057, %v9053
          %v9346 = vpack.c.b16 %v9058, %v9054
          %v9347 = vpack.c.b16 %v9063, %v9059
          %v9348 = vpack.c.b16 %v9064, %v9060
          %v9349 = vpack.c.b16 %v9065, %v9061
          %v9350 = vpack.c.b16 %v9066, %v9062
          %v9351 = vpack.c.b16 %v9071, %v9067
          %v9352 = vpack.c.b16 %v9072, %v9068
          %v9353 = vpack.c.b16 %v9073, %v9069
          %v9354 = vpack.c.b16 %v9074, %v9070
          %v9355 = vpack.c.b16 %v9079, %v9075
          %v9356 = vpack.c.b16 %v9080, %v9076
          %v9357 = vpack.c.b16 %v9081, %v9077
          %v9358 = vpack.c.b16 %v9082, %v9078
          %v9359 = vpack.c.b16 %v9087, %v9083
          %v9360 = vpack.c.b16 %v9088, %v9084
          %v9361 = vpack.c.b16 %v9089, %v9085
          %v9362 = vpack.c.b16 %v9090, %v9086
          %v9363 = vpack.c.b16 %v9095, %v9091
          %v9364 = vpack.c.b16 %v9096, %v9092
          %v9365 = vpack.c.b16 %v9097, %v9093
          %v9366 = vpack.c.b16 %v9098, %v9094
          %v9367 = vpack.c.b16 %v9103, %v9099
          %v9368 = vpack.c.b16 %v9104, %v9100
          %v9369 = vpack.c.b16 %v9105, %v9101
          %v9370 = vpack.c.b16 %v9106, %v9102
          %v9371 = vpack.c.b16 %v9111, %v9107
          %v9372 = vpack.c.b16 %v9112, %v9108
          %v9373 = vpack.c.b16 %v9113, %v9109
          %v9374 = vpack.c.b16 %v9114, %v9110
          %v9375 = vpack.c.b16 %v9119, %v9115
          %v9376 = vpack.c.b16 %v9120, %v9116
          %v9377 = vpack.c.b16 %v9121, %v9117
          %v9378 = vpack.c.b16 %v9122, %v9118
          %9635 = vmatprep.subr.bf16.mxu0 %v9152
          %9636 = vmatpush1.bf16.msra.mxu0 %v9151
          %9637 = vmatprep.subr.bf16.mxu0 %v9148
          %9638 = vmatpush1.bf16.msra.mxu0 %v9147
          %9639 = vmatprep.subr.bf16.mxu0 %v9144
          %9640 = vmatpush1.bf16.msra.mxu0 %v9143
          %9641 = vmatprep.subr.bf16.mxu0 %v9140
          %9642 = vmatpush1.bf16.msra.mxu0 %v9139
          %9643 = vmatprep.subr.bf16.mxu0 %v9136
          %9644 = vmatpush1.bf16.msra.mxu0 %v9135
          %9645 = vmatprep.subr.bf16.mxu0 %v9132
          %9646 = vmatpush1.bf16.msra.mxu0 %v9131
          %9647 = vmatprep.subr.bf16.mxu0 %v9128
          %9648 = vmatpush1.bf16.msra.mxu0 %v9127
          %9649 = vmatprep.subr.bf16.mxu0 %v9124
          %9650 = vmatpush1.bf16.msra.mxu0 %v9123
          %9651 = vmatprep.subr.bf16.mxu0 %v9184
          %9652 = vmatpush2.bf16.msra.mxu0 %v9183
          %9653 = vmatprep.subr.bf16.mxu0 %v9180
          %9654 = vmatpush2.bf16.msra.mxu0 %v9179
          %9655 = vmatprep.subr.bf16.mxu0 %v9176
          %9656 = vmatpush2.bf16.msra.mxu0 %v9175
          %9657 = vmatprep.subr.bf16.mxu0 %v9172
          %9658 = vmatpush2.bf16.msra.mxu0 %v9171
          %9659 = vmatprep.subr.bf16.mxu0 %v9168
          %9660 = vmatpush2.bf16.msra.mxu0 %v9167
          %9661 = vmatprep.subr.bf16.mxu0 %v9164
          %9662 = vmatpush2.bf16.msra.mxu0 %v9163
          %9663 = vmatprep.subr.bf16.mxu0 %v9160
          %9664 = vmatpush2.bf16.msra.mxu0 %v9159
          %9665 = vmatprep.subr.bf16.mxu0 %v9156
          %9666 = vmatpush2.bf16.msra.mxu0 %v9155
          %9667 = vmatprep.mubr.bf16.mxu0 %v8070
          %9668 = vmatmul.mubr.bf16.gmra.mxu0 %v8069
          %v9669 = vpop.f32.mrf.mxu0
          %v9670 = vadd.f32 %v8338, %v9669
          %v9671 = vpop.f32.mrf.mxu0
          %v9672 = vadd.f32 %v8342, %v9671
          %v9673 = vpop.f32.mrf.mxu0
          %v9674 = vpop.f32.mrf.mxu0
          %9675 = vdwg.mxu0
          %9676 = vmatprep.subr.bf16.mxu0 %v9216
          %9677 = vmatpush1.bf16.msra.mxu0 %v9215
          %9678 = vmatprep.subr.bf16.mxu0 %v9212
          %9679 = vmatpush1.bf16.msra.mxu0 %v9211
          %9680 = vmatprep.subr.bf16.mxu0 %v9208
          %9681 = vmatpush1.bf16.msra.mxu0 %v9207
          %9682 = vmatprep.subr.bf16.mxu0 %v9204
          %9683 = vmatpush1.bf16.msra.mxu0 %v9203
          %9684 = vmatprep.subr.bf16.mxu0 %v9200
          %9685 = vmatpush1.bf16.msra.mxu0 %v9199
          %9686 = vmatprep.subr.bf16.mxu0 %v9196
          %9687 = vmatpush1.bf16.msra.mxu0 %v9195
          %9688 = vmatprep.subr.bf16.mxu0 %v9192
          %9689 = vmatpush1.bf16.msra.mxu0 %v9191
          %9690 = vmatprep.subr.bf16.mxu0 %v9188
          %9691 = vmatpush1.bf16.msra.mxu0 %v9187
          %9692 = vmatprep.subr.bf16.mxu0 %v9248
          %9693 = vmatpush2.bf16.msra.mxu0 %v9247
          %9694 = vmatprep.subr.bf16.mxu0 %v9244
          %9695 = vmatpush2.bf16.msra.mxu0 %v9243
          %9696 = vmatprep.subr.bf16.mxu0 %v9240
          %9697 = vmatpush2.bf16.msra.mxu0 %v9239
          %9698 = vmatprep.subr.bf16.mxu0 %v9236
          %9699 = vmatpush2.bf16.msra.mxu0 %v9235
          %9700 = vmatprep.subr.bf16.mxu0 %v9232
          %9701 = vmatpush2.bf16.msra.mxu0 %v9231
          %9702 = vmatprep.subr.bf16.mxu0 %v9228
          %9703 = vmatpush2.bf16.msra.mxu0 %v9227
          %9704 = vmatprep.subr.bf16.mxu0 %v9224
          %9705 = vmatpush2.bf16.msra.mxu0 %v9223
          %9706 = vmatprep.subr.bf16.mxu0 %v9220
          %9707 = vmatpush2.bf16.msra.mxu0 %v9219
          %9708 = vmatprep.mubr.bf16.mxu0 %v8072
          %9709 = vmatmul.mubr.bf16.gmra.mxu0 %v8071
          %v9710 = vpop.f32.mrf.mxu0
          %v9711 = vadd.f32 %v9670, %v9710
          %v9712 = vpop.f32.mrf.mxu0
          %v9713 = vadd.f32 %v9672, %v9712
          %v9714 = vpop.f32.mrf.mxu0
          %v9715 = vpop.f32.mrf.mxu0
          %9716 = vdwg.mxu0
          %9717 = vmatprep.subr.bf16.mxu0 %v9280
          %9718 = vmatpush1.bf16.msra.mxu0 %v9279
          %9719 = vmatprep.subr.bf16.mxu0 %v9276
          %9720 = vmatpush1.bf16.msra.mxu0 %v9275
          %9721 = vmatprep.subr.bf16.mxu0 %v9272
          %9722 = vmatpush1.bf16.msra.mxu0 %v9271
          %9723 = vmatprep.subr.bf16.mxu0 %v9268
          %9724 = vmatpush1.bf16.msra.mxu0 %v9267
          %9725 = vmatprep.subr.bf16.mxu0 %v9264
          %9726 = vmatpush1.bf16.msra.mxu0 %v9263
          %9727 = vmatprep.subr.bf16.mxu0 %v9260
          %9728 = vmatpush1.bf16.msra.mxu0 %v9259
          %9729 = vmatprep.subr.bf16.mxu0 %v9256
          %9730 = vmatpush1.bf16.msra.mxu0 %v9255
          %9731 = vmatprep.subr.bf16.mxu0 %v9252
          %9732 = vmatpush1.bf16.msra.mxu0 %v9251
          %9733 = vmatprep.subr.bf16.mxu0 %v9312
          %9734 = vmatpush2.bf16.msra.mxu0 %v9311
          %9735 = vmatprep.subr.bf16.mxu0 %v9308
          %9736 = vmatpush2.bf16.msra.mxu0 %v9307
          %9737 = vmatprep.subr.bf16.mxu0 %v9304
          %9738 = vmatpush2.bf16.msra.mxu0 %v9303
          %9739 = vmatprep.subr.bf16.mxu0 %v9300
          %9740 = vmatpush2.bf16.msra.mxu0 %v9299
          %9741 = vmatprep.subr.bf16.mxu0 %v9296
          %9742 = vmatpush2.bf16.msra.mxu0 %v9295
          %9743 = vmatprep.subr.bf16.mxu0 %v9292
          %9744 = vmatpush2.bf16.msra.mxu0 %v9291
          %9745 = vmatprep.subr.bf16.mxu0 %v9288
          %9746 = vmatpush2.bf16.msra.mxu0 %v9287
          %9747 = vmatprep.subr.bf16.mxu0 %v9284
          %9748 = vmatpush2.bf16.msra.mxu0 %v9283
          %9749 = vmatprep.mubr.bf16.mxu0 %v8074
          %9750 = vmatmul.mubr.bf16.gmra.mxu0 %v8073
          %v9751 = vpop.f32.mrf.mxu0
          %v9752 = vadd.f32 %v9711, %v9751
          %v9753 = vpop.f32.mrf.mxu0
          %v9754 = vadd.f32 %v9713, %v9753
          %v9755 = vpop.f32.mrf.mxu0
          %v9756 = vpop.f32.mrf.mxu0
          %9757 = vdwg.mxu0
          %9758 = vmatprep.subr.bf16.mxu0 %v9344
          %9759 = vmatpush1.bf16.msra.mxu0 %v9343
          %9760 = vmatprep.subr.bf16.mxu0 %v9340
          %9761 = vmatpush1.bf16.msra.mxu0 %v9339
          %9762 = vmatprep.subr.bf16.mxu0 %v9336
          %9763 = vmatpush1.bf16.msra.mxu0 %v9335
          %9764 = vmatprep.subr.bf16.mxu0 %v9332
          %9765 = vmatpush1.bf16.msra.mxu0 %v9331
          %9766 = vmatprep.subr.bf16.mxu0 %v9328
          %9767 = vmatpush1.bf16.msra.mxu0 %v9327
          %9768 = vmatprep.subr.bf16.mxu0 %v9324
          %9769 = vmatpush1.bf16.msra.mxu0 %v9323
          %9770 = vmatprep.subr.bf16.mxu0 %v9320
          %9771 = vmatpush1.bf16.msra.mxu0 %v9319
          %9772 = vmatprep.subr.bf16.mxu0 %v9316
          %9773 = vmatpush1.bf16.msra.mxu0 %v9315
          %9774 = vmatprep.subr.bf16.mxu0 %v9376
          %9775 = vmatpush2.bf16.msra.mxu0 %v9375
          %9776 = vmatprep.subr.bf16.mxu0 %v9372
          %9777 = vmatpush2.bf16.msra.mxu0 %v9371
          %9778 = vmatprep.subr.bf16.mxu0 %v9368
          %9779 = vmatpush2.bf16.msra.mxu0 %v9367
          %9780 = vmatprep.subr.bf16.mxu0 %v9364
          %9781 = vmatpush2.bf16.msra.mxu0 %v9363
          %9782 = vmatprep.subr.bf16.mxu0 %v9360
          %9783 = vmatpush2.bf16.msra.mxu0 %v9359
          %9784 = vmatprep.subr.bf16.mxu0 %v9356
          %9785 = vmatpush2.bf16.msra.mxu0 %v9355
          %9786 = vmatprep.subr.bf16.mxu0 %v9352
          %9787 = vmatpush2.bf16.msra.mxu0 %v9351
          %9788 = vmatprep.subr.bf16.mxu0 %v9348
          %9789 = vmatpush2.bf16.msra.mxu0 %v9347
          %9790 = vmatprep.mubr.bf16.mxu0 %v8076
          %9791 = vmatmul.mubr.bf16.gmra.mxu0 %v8075
          %v9792 = vpop.f32.mrf.mxu0
          %v9793 = vadd.f32 %v9752, %v9792
          %v9794 = vpop.f32.mrf.mxu0
          %v9795 = vadd.f32 %v9754, %v9794
          %v9796 = vpop.f32.mrf.mxu0
          %v9797 = vpop.f32.mrf.mxu0
          %9798 = vdwg.mxu0
          %9799 = vmatprep.subr.bf16.mxu0 %v9154
          %9800 = vmatpush1.bf16.msra.mxu0 %v9153
          %9801 = vmatprep.subr.bf16.mxu0 %v9150
          %9802 = vmatpush1.bf16.msra.mxu0 %v9149
          %9803 = vmatprep.subr.bf16.mxu0 %v9146
          %9804 = vmatpush1.bf16.msra.mxu0 %v9145
          %9805 = vmatprep.subr.bf16.mxu0 %v9142
          %9806 = vmatpush1.bf16.msra.mxu0 %v9141
          %9807 = vmatprep.subr.bf16.mxu0 %v9138
          %9808 = vmatpush1.bf16.msra.mxu0 %v9137
          %9809 = vmatprep.subr.bf16.mxu0 %v9134
          %9810 = vmatpush1.bf16.msra.mxu0 %v9133
          %9811 = vmatprep.subr.bf16.mxu0 %v9130
          %9812 = vmatpush1.bf16.msra.mxu0 %v9129
          %9813 = vmatprep.subr.bf16.mxu0 %v9126
          %9814 = vmatpush1.bf16.msra.mxu0 %v9125
          %9815 = vmatprep.subr.bf16.mxu0 %v9186
          %9816 = vmatpush2.bf16.msra.mxu0 %v9185
          %9817 = vmatprep.subr.bf16.mxu0 %v9182
          %9818 = vmatpush2.bf16.msra.mxu0 %v9181
          %9819 = vmatprep.subr.bf16.mxu0 %v9178
          %9820 = vmatpush2.bf16.msra.mxu0 %v9177
          %9821 = vmatprep.subr.bf16.mxu0 %v9174
          %9822 = vmatpush2.bf16.msra.mxu0 %v9173
          %9823 = vmatprep.subr.bf16.mxu0 %v9170
          %9824 = vmatpush2.bf16.msra.mxu0 %v9169
          %9825 = vmatprep.subr.bf16.mxu0 %v9166
          %9826 = vmatpush2.bf16.msra.mxu0 %v9165
          %9827 = vmatprep.subr.bf16.mxu0 %v9162
          %9828 = vmatpush2.bf16.msra.mxu0 %v9161
          %9829 = vmatprep.subr.bf16.mxu0 %v9158
          %9830 = vmatpush2.bf16.msra.mxu0 %v9157
          %9831 = vmatprep.mubr.bf16.mxu0 %v8070
          %9832 = vmatmul.mubr.bf16.gmra.mxu0 %v8069
          %v9833 = vpop.f32.mrf.mxu0
          %v9834 = vadd.f32 %v8346, %v9833
          %v9835 = vpop.f32.mrf.mxu0
          %v9836 = vadd.f32 %v8350, %v9835
          %v9837 = vpop.f32.mrf.mxu0
          %v9838 = vpop.f32.mrf.mxu0
          %9839 = vdwg.mxu0
          %9840 = vmatprep.subr.bf16.mxu0 %v9218
          %9841 = vmatpush1.bf16.msra.mxu0 %v9217
          %9842 = vmatprep.subr.bf16.mxu0 %v9214
          %9843 = vmatpush1.bf16.msra.mxu0 %v9213
          %9844 = vmatprep.subr.bf16.mxu0 %v9210
          %9845 = vmatpush1.bf16.msra.mxu0 %v9209
          %9846 = vmatprep.subr.bf16.mxu0 %v9206
          %9847 = vmatpush1.bf16.msra.mxu0 %v9205
          %9848 = vmatprep.subr.bf16.mxu0 %v9202
          %9849 = vmatpush1.bf16.msra.mxu0 %v9201
          %9850 = vmatprep.subr.bf16.mxu0 %v9198
          %9851 = vmatpush1.bf16.msra.mxu0 %v9197
          %9852 = vmatprep.subr.bf16.mxu0 %v9194
          %9853 = vmatpush1.bf16.msra.mxu0 %v9193
          %9854 = vmatprep.subr.bf16.mxu0 %v9190
          %9855 = vmatpush1.bf16.msra.mxu0 %v9189
          %9856 = vmatprep.subr.bf16.mxu0 %v9250
          %9857 = vmatpush2.bf16.msra.mxu0 %v9249
          %9858 = vmatprep.subr.bf16.mxu0 %v9246
          %9859 = vmatpush2.bf16.msra.mxu0 %v9245
          %9860 = vmatprep.subr.bf16.mxu0 %v9242
          %9861 = vmatpush2.bf16.msra.mxu0 %v9241
          %9862 = vmatprep.subr.bf16.mxu0 %v9238
          %9863 = vmatpush2.bf16.msra.mxu0 %v9237
          %9864 = vmatprep.subr.bf16.mxu0 %v9234
          %9865 = vmatpush2.bf16.msra.mxu0 %v9233
          %9866 = vmatprep.subr.bf16.mxu0 %v9230
          %9867 = vmatpush2.bf16.msra.mxu0 %v9229
          %9868 = vmatprep.subr.bf16.mxu0 %v9226
          %9869 = vmatpush2.bf16.msra.mxu0 %v9225
          %9870 = vmatprep.subr.bf16.mxu0 %v9222
          %9871 = vmatpush2.bf16.msra.mxu0 %v9221
          %9872 = vmatprep.mubr.bf16.mxu0 %v8072
          %9873 = vmatmul.mubr.bf16.gmra.mxu0 %v8071
          %v9874 = vpop.f32.mrf.mxu0
          %v9875 = vadd.f32 %v9834, %v9874
          %v9876 = vpop.f32.mrf.mxu0
          %v9877 = vadd.f32 %v9836, %v9876
          %v9878 = vpop.f32.mrf.mxu0
          %v9879 = vpop.f32.mrf.mxu0
          %9880 = vdwg.mxu0
          %9881 = vmatprep.subr.bf16.mxu0 %v9282
          %9882 = vmatpush1.bf16.msra.mxu0 %v9281
          %9883 = vmatprep.subr.bf16.mxu0 %v9278
          %9884 = vmatpush1.bf16.msra.mxu0 %v9277
          %9885 = vmatprep.subr.bf16.mxu0 %v9274
          %9886 = vmatpush1.bf16.msra.mxu0 %v9273
          %9887 = vmatprep.subr.bf16.mxu0 %v9270
          %9888 = vmatpush1.bf16.msra.mxu0 %v9269
          %9889 = vmatprep.subr.bf16.mxu0 %v9266
          %9890 = vmatpush1.bf16.msra.mxu0 %v9265
          %9891 = vmatprep.subr.bf16.mxu0 %v9262
          %9892 = vmatpush1.bf16.msra.mxu0 %v9261
          %9893 = vmatprep.subr.bf16.mxu0 %v9258
          %9894 = vmatpush1.bf16.msra.mxu0 %v9257
          %9895 = vmatprep.subr.bf16.mxu0 %v9254
          %9896 = vmatpush1.bf16.msra.mxu0 %v9253
          %9897 = vmatprep.subr.bf16.mxu0 %v9314
          %9898 = vmatpush2.bf16.msra.mxu0 %v9313
          %9899 = vmatprep.subr.bf16.mxu0 %v9310
          %9900 = vmatpush2.bf16.msra.mxu0 %v9309
          %9901 = vmatprep.subr.bf16.mxu0 %v9306
          %9902 = vmatpush2.bf16.msra.mxu0 %v9305
          %9903 = vmatprep.subr.bf16.mxu0 %v9302
          %9904 = vmatpush2.bf16.msra.mxu0 %v9301
          %9905 = vmatprep.subr.bf16.mxu0 %v9298
          %9906 = vmatpush2.bf16.msra.mxu0 %v9297
          %9907 = vmatprep.subr.bf16.mxu0 %v9294
          %9908 = vmatpush2.bf16.msra.mxu0 %v9293
          %9909 = vmatprep.subr.bf16.mxu0 %v9290
          %9910 = vmatpush2.bf16.msra.mxu0 %v9289
          %9911 = vmatprep.subr.bf16.mxu0 %v9286
          %9912 = vmatpush2.bf16.msra.mxu0 %v9285
          %9913 = vmatprep.mubr.bf16.mxu0 %v8074
          %9914 = vmatmul.mubr.bf16.gmra.mxu0 %v8073
          %v9915 = vpop.f32.mrf.mxu0
          %v9916 = vadd.f32 %v9875, %v9915
          %v9917 = vpop.f32.mrf.mxu0
          %v9918 = vadd.f32 %v9877, %v9917
          %v9919 = vpop.f32.mrf.mxu0
          %v9920 = vpop.f32.mrf.mxu0
          %9921 = vdwg.mxu0
          %9922 = vmatprep.subr.bf16.mxu0 %v9346
          %9923 = vmatpush1.bf16.msra.mxu0 %v9345
          %9924 = vmatprep.subr.bf16.mxu0 %v9342
          %9925 = vmatpush1.bf16.msra.mxu0 %v9341
          %9926 = vmatprep.subr.bf16.mxu0 %v9338
          %9927 = vmatpush1.bf16.msra.mxu0 %v9337
          %9928 = vmatprep.subr.bf16.mxu0 %v9334
          %9929 = vmatpush1.bf16.msra.mxu0 %v9333
          %9930 = vmatprep.subr.bf16.mxu0 %v9330
          %9931 = vmatpush1.bf16.msra.mxu0 %v9329
          %9932 = vmatprep.subr.bf16.mxu0 %v9326
          %9933 = vmatpush1.bf16.msra.mxu0 %v9325
          %9934 = vmatprep.subr.bf16.mxu0 %v9322
          %9935 = vmatpush1.bf16.msra.mxu0 %v9321
          %9936 = vmatprep.subr.bf16.mxu0 %v9318
          %9937 = vmatpush1.bf16.msra.mxu0 %v9317
          %9938 = vmatprep.subr.bf16.mxu0 %v9378
          %9939 = vmatpush2.bf16.msra.mxu0 %v9377
          %9940 = vmatprep.subr.bf16.mxu0 %v9374
          %9941 = vmatpush2.bf16.msra.mxu0 %v9373
          %9942 = vmatprep.subr.bf16.mxu0 %v9370
          %9943 = vmatpush2.bf16.msra.mxu0 %v9369
          %9944 = vmatprep.subr.bf16.mxu0 %v9366
          %9945 = vmatpush2.bf16.msra.mxu0 %v9365
          %9946 = vmatprep.subr.bf16.mxu0 %v9362
          %9947 = vmatpush2.bf16.msra.mxu0 %v9361
          %9948 = vmatprep.subr.bf16.mxu0 %v9358
          %9949 = vmatpush2.bf16.msra.mxu0 %v9357
          %9950 = vmatprep.subr.bf16.mxu0 %v9354
          %9951 = vmatpush2.bf16.msra.mxu0 %v9353
          %9952 = vmatprep.subr.bf16.mxu0 %v9350
          %9953 = vmatpush2.bf16.msra.mxu0 %v9349
          %9954 = vmatprep.mubr.bf16.mxu0 %v8076
          %9955 = vmatmul.mubr.bf16.gmra.mxu0 %v8075
          %v9956 = vpop.f32.mrf.mxu0
          %v9957 = vadd.f32 %v9916, %v9956
          %v9958 = vpop.f32.mrf.mxu0
          %v9959 = vadd.f32 %v9918, %v9958
          %v9960 = vpop.f32.mrf.mxu0
          %v9961 = vpop.f32.mrf.mxu0
          %9962 = vdwg.mxu0
          %v9963 = vmax.f32 %v9793, 0.0
          %v9964 = vmax.f32 %v9795, 0.0
          %v9965 = vmax.f32 %v9957, 0.0
          %v9966 = vmax.f32 %v9959, 0.0
          %v9967 = vld [vmem:[%s5] sm:$0xff]
          %v9968 = vld [vmem:[%s5 + $0x8] sm:$0xff]
          %v9969 = vld [vmem:[%s5 + $0x10] sm:$0xff]
          %v9970 = vld [vmem:[%s5 + $0x18] sm:$0xff]
          %v9971 = vld [vmem:[%s5 + $0x20] sm:$0xff]
          %v9972 = vld [vmem:[%s5 + $0x28] sm:$0xff]
          %v9973 = vld [vmem:[%s5 + $0x30] sm:$0xff]
          %v9974 = vld [vmem:[%s5 + $0x38] sm:$0xff]
          %v9975 = vld [vmem:[%s5 + $0x40] sm:$0xff]
          %v9976 = vld [vmem:[%s5 + $0x48] sm:$0xff]
          %v9977 = vld [vmem:[%s5 + $0x50] sm:$0xff]
          %v9978 = vld [vmem:[%s5 + $0x58] sm:$0xff]
          %v9979 = vld [vmem:[%s5 + $0x60] sm:$0xff]
          %v9980 = vld [vmem:[%s5 + $0x68] sm:$0xff]
          %v9981 = vld [vmem:[%s5 + $0x70] sm:$0xff]
          %v9982 = vld [vmem:[%s5 + $0x78] sm:$0xff]
          %v9983 = vld [vmem:[%s5 + $0x80] sm:$0xff]
          %v9984 = vld [vmem:[%s5 + $0x88] sm:$0xff]
          %v9985 = vld [vmem:[%s5 + $0x90] sm:$0xff]
          %v9986 = vld [vmem:[%s5 + $0x98] sm:$0xff]
          %v9987 = vld [vmem:[%s5 + $0xa0] sm:$0xff]
          %v9988 = vld [vmem:[%s5 + $0xa8] sm:$0xff]
          %v9989 = vld [vmem:[%s5 + $0xb0] sm:$0xff]
          %v9990 = vld [vmem:[%s5 + $0xb8] sm:$0xff]
          %v9991 = vld [vmem:[%s5 + $0xc0] sm:$0xff]
          %v9992 = vld [vmem:[%s5 + $0xc8] sm:$0xff]
          %v9993 = vld [vmem:[%s5 + $0xd0] sm:$0xff]
          %v9994 = vld [vmem:[%s5 + $0xd8] sm:$0xff]
          %v9995 = vld [vmem:[%s5 + $0xe0] sm:$0xff]
          %v9996 = vld [vmem:[%s5 + $0xe8] sm:$0xff]
          %v9997 = vld [vmem:[%s5 + $0xf0] sm:$0xff]
          %v9998 = vld [vmem:[%s5 + $0xf8] sm:$0xff]
          %v9999 = vld [vmem:[%s5 + $0x100] sm:$0xff]
          %v10000 = vld [vmem:[%s5 + $0x108] sm:$0xff]
          %v10001 = vld [vmem:[%s5 + $0x110] sm:$0xff]
          %v10002 = vld [vmem:[%s5 + $0x118] sm:$0xff]
          %v10003 = vld [vmem:[%s5 + $0x120] sm:$0xff]
          %v10004 = vld [vmem:[%s5 + $0x128] sm:$0xff]
          %v10005 = vld [vmem:[%s5 + $0x130] sm:$0xff]
          %v10006 = vld [vmem:[%s5 + $0x138] sm:$0xff]
          %v10007 = vld [vmem:[%s5 + $0x140] sm:$0xff]
          %v10008 = vld [vmem:[%s5 + $0x148] sm:$0xff]
          %v10009 = vld [vmem:[%s5 + $0x150] sm:$0xff]
          %v10010 = vld [vmem:[%s5 + $0x158] sm:$0xff]
          %v10011 = vld [vmem:[%s5 + $0x160] sm:$0xff]
          %v10012 = vld [vmem:[%s5 + $0x168] sm:$0xff]
          %v10013 = vld [vmem:[%s5 + $0x170] sm:$0xff]
          %v10014 = vld [vmem:[%s5 + $0x178] sm:$0xff]
          %v10015 = vld [vmem:[%s5 + $0x180] sm:$0xff]
          %v10016 = vld [vmem:[%s5 + $0x188] sm:$0xff]
          %v10017 = vld [vmem:[%s5 + $0x190] sm:$0xff]
          %v10018 = vld [vmem:[%s5 + $0x198] sm:$0xff]
          %v10019 = vld [vmem:[%s5 + $0x1a0] sm:$0xff]
          %v10020 = vld [vmem:[%s5 + $0x1a8] sm:$0xff]
          %v10021 = vld [vmem:[%s5 + $0x1b0] sm:$0xff]
          %v10022 = vld [vmem:[%s5 + $0x1b8] sm:$0xff]
          %v10023 = vld [vmem:[%s5 + $0x1c0] sm:$0xff]
          %v10024 = vld [vmem:[%s5 + $0x1c8] sm:$0xff]
          %v10025 = vld [vmem:[%s5 + $0x1d0] sm:$0xff]
          %v10026 = vld [vmem:[%s5 + $0x1d8] sm:$0xff]
          %v10027 = vld [vmem:[%s5 + $0x1e0] sm:$0xff]
          %v10028 = vld [vmem:[%s5 + $0x1e8] sm:$0xff]
          %v10029 = vld [vmem:[%s5 + $0x1f0] sm:$0xff]
          %v10030 = vld [vmem:[%s5 + $0x1f8] sm:$0xff]
          %v10031 = vld [vmem:[%s6] sm:$0x1]
          %v10033 = vlaneseq
          %v10034 = vshrl.u32 %v10033, 7
          %v10035 = vsub.s32 0, %v10034
          %v10036 = vrot.slane %v10031, %v10035
          %10038 = vmatprep.subr.mxu0 0.0
          %10039 = vmatpush1.msra.mxu0 %v9982
          %10040 = vmatprep.subr.mxu0 0.0
          %10041 = vmatpush1.msra.mxu0 %v9981
          %10042 = vmatprep.subr.mxu0 0.0
          %10043 = vmatpush1.msra.mxu0 %v9980
          %10044 = vmatprep.subr.mxu0 0.0
          %10045 = vmatpush1.msra.mxu0 %v9979
          %10046 = vmatprep.subr.mxu0 0.0
          %10047 = vmatpush1.msra.mxu0 %v9978
          %10048 = vmatprep.subr.mxu0 0.0
          %10049 = vmatpush1.msra.mxu0 %v9977
          %10050 = vmatprep.subr.mxu0 0.0
          %10051 = vmatpush1.msra.mxu0 %v9976
          %10052 = vmatprep.subr.mxu0 0.0
          %10053 = vmatpush1.msra.mxu0 %v9975
          %10054 = vmatprep.subr.mxu0 0.0
          %10055 = vmatpush1.msra.mxu0 %v9974
          %10056 = vmatprep.subr.mxu0 0.0
          %10057 = vmatpush1.msra.mxu0 %v9973
          %10058 = vmatprep.subr.mxu0 0.0
          %10059 = vmatpush1.msra.mxu0 %v9972
          %10060 = vmatprep.subr.mxu0 0.0
          %10061 = vmatpush1.msra.mxu0 %v9971
          %10062 = vmatprep.subr.mxu0 0.0
          %10063 = vmatpush1.msra.mxu0 %v9970
          %10064 = vmatprep.subr.mxu0 0.0
          %10065 = vmatpush1.msra.mxu0 %v9969
          %10066 = vmatprep.subr.mxu0 0.0
          %10067 = vmatpush1.msra.mxu0 %v9968
          %10068 = vmatprep.subr.mxu0 0.0
          %10069 = vmatpush1.msra.mxu0 %v9967
          %10070 = vmatprep.subr.mxu0 0.0
          %10071 = vmatpush2.msra.mxu0 %v9998
          %10072 = vmatprep.subr.mxu0 0.0
          %10073 = vmatpush2.msra.mxu0 %v9997
          %10074 = vmatprep.subr.mxu0 0.0
          %10075 = vmatpush2.msra.mxu0 %v9996
          %10076 = vmatprep.subr.mxu0 0.0
          %10077 = vmatpush2.msra.mxu0 %v9995
          %10078 = vmatprep.subr.mxu0 0.0
          %10079 = vmatpush2.msra.mxu0 %v9994
          %10080 = vmatprep.subr.mxu0 0.0
          %10081 = vmatpush2.msra.mxu0 %v9993
          %10082 = vmatprep.subr.mxu0 0.0
          %10083 = vmatpush2.msra.mxu0 %v9992
          %10084 = vmatprep.subr.mxu0 0.0
          %10085 = vmatpush2.msra.mxu0 %v9991
          %10086 = vmatprep.subr.mxu0 0.0
          %10087 = vmatpush2.msra.mxu0 %v9990
          %10088 = vmatprep.subr.mxu0 0.0
          %10089 = vmatpush2.msra.mxu0 %v9989
          %10090 = vmatprep.subr.mxu0 0.0
          %10091 = vmatpush2.msra.mxu0 %v9988
          %10092 = vmatprep.subr.mxu0 0.0
          %10093 = vmatpush2.msra.mxu0 %v9987
          %10094 = vmatprep.subr.mxu0 0.0
          %10095 = vmatpush2.msra.mxu0 %v9986
          %10096 = vmatprep.subr.mxu0 0.0
          %10097 = vmatpush2.msra.mxu0 %v9985
          %10098 = vmatprep.subr.mxu0 0.0
          %10099 = vmatpush2.msra.mxu0 %v9984
          %10100 = vmatprep.subr.mxu0 0.0
          %10101 = vmatpush2.msra.mxu0 %v9983
          %10102 = vmatprep.mubr.f32.mxu0 %v9964
          %10103 = vmatmul.mubr.f32.gmra.mxu0 %v9963
          %v10104 = vpop.f32.mrf.mxu0
          %v10105 = vadd.f32 %v10036, %v10104
          %v10106 = vpop.f32.mrf.mxu0
          %10107 = vdwg.mxu0
          %10108 = vmatprep.subr.mxu0 0.0
          %10109 = vmatpush1.msra.mxu0 %v10014
          %10110 = vmatprep.subr.mxu0 0.0
          %10111 = vmatpush1.msra.mxu0 %v10013
          %10112 = vmatprep.subr.mxu0 0.0
          %10113 = vmatpush1.msra.mxu0 %v10012
          %10114 = vmatprep.subr.mxu0 0.0
          %10115 = vmatpush1.msra.mxu0 %v10011
          %10116 = vmatprep.subr.mxu0 0.0
          %10117 = vmatpush1.msra.mxu0 %v10010
          %10118 = vmatprep.subr.mxu0 0.0
          %10119 = vmatpush1.msra.mxu0 %v10009
          %10120 = vmatprep.subr.mxu0 0.0
          %10121 = vmatpush1.msra.mxu0 %v10008
          %10122 = vmatprep.subr.mxu0 0.0
          %10123 = vmatpush1.msra.mxu0 %v10007
          %10124 = vmatprep.subr.mxu0 0.0
          %10125 = vmatpush1.msra.mxu0 %v10006
          %10126 = vmatprep.subr.mxu0 0.0
          %10127 = vmatpush1.msra.mxu0 %v10005
          %10128 = vmatprep.subr.mxu0 0.0
          %10129 = vmatpush1.msra.mxu0 %v10004
          %10130 = vmatprep.subr.mxu0 0.0
          %10131 = vmatpush1.msra.mxu0 %v10003
          %10132 = vmatprep.subr.mxu0 0.0
          %10133 = vmatpush1.msra.mxu0 %v10002
          %10134 = vmatprep.subr.mxu0 0.0
          %10135 = vmatpush1.msra.mxu0 %v10001
          %10136 = vmatprep.subr.mxu0 0.0
          %10137 = vmatpush1.msra.mxu0 %v10000
          %10138 = vmatprep.subr.mxu0 0.0
          %10139 = vmatpush1.msra.mxu0 %v9999
          %10140 = vmatprep.subr.mxu0 0.0
          %10141 = vmatpush2.msra.mxu0 %v10030
          %10142 = vmatprep.subr.mxu0 0.0
          %10143 = vmatpush2.msra.mxu0 %v10029
          %10144 = vmatprep.subr.mxu0 0.0
          %10145 = vmatpush2.msra.mxu0 %v10028
          %10146 = vmatprep.subr.mxu0 0.0
          %10147 = vmatpush2.msra.mxu0 %v10027
          %10148 = vmatprep.subr.mxu0 0.0
          %10149 = vmatpush2.msra.mxu0 %v10026
          %10150 = vmatprep.subr.mxu0 0.0
          %10151 = vmatpush2.msra.mxu0 %v10025
          %10152 = vmatprep.subr.mxu0 0.0
          %10153 = vmatpush2.msra.mxu0 %v10024
          %10154 = vmatprep.subr.mxu0 0.0
          %10155 = vmatpush2.msra.mxu0 %v10023
          %10156 = vmatprep.subr.mxu0 0.0
          %10157 = vmatpush2.msra.mxu0 %v10022
          %10158 = vmatprep.subr.mxu0 0.0
          %10159 = vmatpush2.msra.mxu0 %v10021
          %10160 = vmatprep.subr.mxu0 0.0
          %10161 = vmatpush2.msra.mxu0 %v10020
          %10162 = vmatprep.subr.mxu0 0.0
          %10163 = vmatpush2.msra.mxu0 %v10019
          %10164 = vmatprep.subr.mxu0 0.0
          %10165 = vmatpush2.msra.mxu0 %v10018
          %10166 = vmatprep.subr.mxu0 0.0
          %10167 = vmatpush2.msra.mxu0 %v10017
          %10168 = vmatprep.subr.mxu0 0.0
          %10169 = vmatpush2.msra.mxu0 %v10016
          %10170 = vmatprep.subr.mxu0 0.0
          %10171 = vmatpush2.msra.mxu0 %v10015
          %10172 = vmatprep.mubr.f32.mxu0 %v9966
          %10173 = vmatmul.mubr.f32.gmra.mxu0 %v9965
          %v10174 = vpop.f32.mrf.mxu0
          %v10175 = vadd.f32 %v10105, %v10174
          %v10176 = vpop.f32.mrf.mxu0
          %10177 = vdwg.mxu0
          %v10178 = vmul.f32 %v10175, 10.0
          %vm10179 = vcmask 197632
          %10180 = vst.msk [vmem:[#allocation3] sm:$0x3] %vm10179, %v10178
          %10182 = vrot.lane.b32.xlu0 %v10178, 103
          %v10183 = vpop.permute.xlu0 %10182
          %10185 = vst.msk [vmem:[#allocation5] sm:$0x3] %vm10179, %v10183
        $region56: #{conv_encoder_forward.9} parent=47 // pred_fallthru
          _
        // Predicated region
        $region57: #{conv_encoder_forward.9} parent=47 // pred_check
          %p10186 = pneg %p192
        $region58: #{conv_encoder_forward.9} parent=47 // pred_check_branch
          %10188 = sbr.rel (%p10186) target = $region60
        $region59: #{conv_encoder_forward.9} parent=47 // pred_region
          %s10190 = ssub.s32 32, 32
          %10191 = vsyncadd [#allocation4], %s10190
          %s10193 = sshll.u32 [#allocation3], 4
          %s10194 = int_to_ptr.vmem [resolvable:$true] %s10193
          %10196 = dma.vmem_to_hbm [thread:$0]  %s10194, 32, %s7, [#allocation4]
        $region60: #{conv_encoder_forward.9} parent=47 // pred_fallthru
          _
        // Predicated region
        $region61: #{conv_encoder_forward.9} parent=47 // pred_check
          %p10197 = pneg %p213
        $region62: #{conv_encoder_forward.9} parent=47 // pred_check_branch
          %10199 = sbr.rel (%p10197) target = $region64
        $region63: #{conv_encoder_forward.9} parent=47 // pred_region
          %s10201 = ssub.s32 32, 32
          %10202 = vsyncadd [#allocation6], %s10201
          %s10204 = sshll.u32 [#allocation5], 4
          %s10205 = int_to_ptr.vmem [resolvable:$true] %s10204
          %10207 = dma.vmem_to_hbm [thread:$0]  %s10205, 32, %s8, [#allocation6]
        $region64: #{conv_encoder_forward.9} parent=47 // pred_fallthru
          _
        // Predicated region
        $region65: #{conv_encoder_forward.9} parent=47 // pred_check
          %p10208 = pneg %p192
        $region66: #{conv_encoder_forward.9} parent=47 // pred_check_branch
          %10210 = sbr.rel (%p10208) target = $region68
        $region67: #{conv_encoder_forward.9} parent=47 // pred_region
          %10211 = dma.done [#allocation4], 32
        $region68: #{conv_encoder_forward.9} parent=47 // pred_fallthru
          _
        // Predicated region
        $region69: #{conv_encoder_forward.9} parent=47 // pred_check
          %p10212 = pneg %p213
        $region70: #{conv_encoder_forward.9} parent=47 // pred_check_branch
          %10214 = sbr.rel (%p10212) target = $region72
        $region71: #{conv_encoder_forward.9} parent=47 // pred_region
          %10215 = dma.done [#allocation6], 32
        $region72: #{conv_encoder_forward.9} parent=47 // pred_fallthru
          _
      $region48: #{conv_encoder_forward.9} parent=5 // pred_fallthru
        _
      %p10216 = scmp.le.s32.totalorder 2, %s17
      // Predicated region
      $region73: #{conv_encoder_forward.9} parent=5 // pred_check
        %p10217 = pneg %p10216
      $region74: #{conv_encoder_forward.9} parent=5 // pred_check_branch
        %10219 = sbr.rel (%p10217) target = $region76
      $region75: #{conv_encoder_forward.9} parent=5 // pred_region
        %s10220 = ssub.s32 %s17, 2
      $region76: #{conv_encoder_forward.9} parent=5 // pred_fallthru
        _
    $region6: #{conv_encoder_forward.9} parent=1 // loop_footer
      %s21 = sadd.s32 1, %s17
    $region7: #{conv_encoder_forward.9} parent=1 // loop_footer_branch
      %16 = sbr.rel target = $region3
    $region8: #{conv_encoder_forward.9} parent=1 // loop_exit
      _
    %10221 = vsyncpa [#allocation4], 1
    %s10222 = scalar_lea.sflag [#allocation4], 1
    %10223 = vsyncpa %s10222, 1
    %10224 = vsyncpa [#allocation6], 1

</llo_original>
